<compile_context>
chip_gen: v7x
topology: tpu7x:2x2x1
jax: 0.10.0
libtpu: 0.0.40
codegen_flags: <defaults>
</compile_context>

<pallas_src>
import functools

import jax
import jax.numpy as jnp
from jax import lax
from jax.experimental import pallas as pl
from jax.experimental.pallas import tpu as pltpu


# ----------------------------------------------------------------------------
# Fused kernel: folded GCN + per-device 2-layer GRU + InstanceNorm + heads +
# reparameterization, one batch chunk per grid step.
# ----------------------------------------------------------------------------
def _encoder_kernel(x_ref, w_in_ref, b_in_ref, w_gi0_ref, b_gi0_ref,
                    w_rec_ref, b_rec_ref, pm_ref, w_head_ref, b_head_ref,
                    eps_ref, out_ref,
                    gi0_ref, h0_ref, gi1_ref, h1_ref, *, seq, bc):
    f32 = jnp.float32
    bf16 = jnp.bfloat16
    DH = pm_ref.shape[0]            # num_devices * gru_dim (multiple of 128)
    DZ = w_head_ref.shape[2]        # num_devices * z_dim
    M = x_ref.shape[0]              # seq * batch_chunk rows, (t, b)-major

    def mm(a, w):
        # Weights are stored bf16; casting the LHS matches the rounding the
        # MXU applies at default f32 precision anyway.  Accumulate in f32.
        return jnp.dot(a.astype(bf16), w, preferred_element_type=f32)

    # ---- GCN (both layers) + layer-0 GRU input projection: 2 batched matmuls
    hcn = jnp.maximum(mm(x_ref[...], w_in_ref[...]) + b_in_ref[...], 0.0)
    gi0_ref[...] = mm(hcn, w_gi0_ref[...]) + b_gi0_ref[...]

    def gates(gi, gh, h):
        # PyTorch gate order [r, z, n]; columns are gate-major so every slice
        # is 128-lane aligned.  n = tanh(gi_n + r * (W_hn h + b_hn)).
        r = jax.nn.sigmoid(gi[:, :DH] + gh[:, :DH])
        zg = jax.nn.sigmoid(gi[:, DH:2 * DH] + gh[:, DH:2 * DH])
        n = jnp.tanh(gi[:, 2 * DH:] + r * gh[:, 2 * DH:])
        return (1.0 - zg) * n + zg * h

    h_init = jnp.zeros((bc, DH), f32)

    # ---- GRU layer 0: one (bc, DH) x (DH, 3*DH) matmul per serial step -----
    def body0(t, h0):
        gh0 = mm(h0, w_rec_ref[0]) + b_rec_ref[0]
        h0 = gates(gi0_ref[pl.ds(t * bc, bc), :], gh0, h0)
        h0_ref[pl.ds(t * bc, bc), :] = h0
        return h0
    lax.fori_loop(0, seq, body0, h_init, unroll=True)

    # ---- ALL layer-1 input gates in one batched matmul (off critical path) --
    gi1_ref[...] = mm(h0_ref[...], w_rec_ref[1]) + b_rec_ref[1]

    # ---- GRU layer 1: again one matmul per serial step ----------------------
    def body1(t, h1):
        gh1 = mm(h1, w_rec_ref[2]) + b_rec_ref[2]
        h1 = gates(gi1_ref[pl.ds(t * bc, bc), :], gh1, h1)
        h1_ref[pl.ds(t * bc, bc), :] = h1
        return h1
    lax.fori_loop(0, seq, body1, h_init, unroll=True)

    # ---- InstanceNorm1d(gru_dim) fed a (B, S, H) tensor: normalize over the
    # hidden axis per (batch, timestep, device); biased var, eps=1e-5, no
    # affine.  Block mean/var via a block-averaging matmul (keeps lane layout).
    hs = h1_ref[...]
    m = mm(hs, pm_ref[...])
    c = hs - m
    v = mm(c * c, pm_ref[...])
    y = c * lax.rsqrt(v + 1e-5)

    # ---- per-device mu / log_var heads + reparameterization -----------------
    mu = mm(y, w_head_ref[0]) + b_head_ref[0]
    lv = mm(y, w_head_ref[1]) + b_head_ref[1]
    z = mu + jnp.exp(0.5 * lv) * eps_ref[...]

    # Lane-dense packed store: (M, 256) = [z | mu | log_var | zero pad].
    pieces = [z, mu, lv]
    pad = out_ref.shape[1] - 3 * DZ
    if pad > 0:
        pieces.append(jnp.zeros((M, pad), f32))
    out_ref[...] = jnp.concatenate(pieces, axis=-1)


# ----------------------------------------------------------------------------
# Host-side weight packing helpers (done once in the JAX wrapper).
# ----------------------------------------------------------------------------
def _gru_w_big(w):
    """(D, 3H, Cin) stacked PyTorch W_ih/W_hh -> block matrix (D*Cin, 3*D*H).

    Columns are gate-major, then device, then hidden unit, so in-kernel gate
    slices are 128-lane aligned.  Off-device blocks are zero."""
    D, three_h, c_in = w.shape
    H = three_h // 3
    wt = jnp.transpose(w, (0, 2, 1)).reshape(D, c_in, 3, H)        # (D,Cin,g,H)
    eye = jnp.eye(D, dtype=w.dtype)
    big = wt[:, :, :, None, :] * eye[:, None, None, :, None]       # (D,Cin,g,D,H)
    return big.reshape(D * c_in, 3 * D * H)


def _gru_b_big(b):
    """(D, 3H) stacked biases -> (1, 3*D*H) matching _gru_w_big columns."""
    D, three_h = b.shape
    H = three_h // 3
    return jnp.transpose(b.reshape(D, 3, H), (1, 0, 2)).reshape(1, 3 * D * H)


def _linear_w_bd(w):
    """(D, out, in) per-device Linear weights -> block-diagonal (D*in, D*out)."""
    D, o, i = w.shape
    wt = jnp.transpose(w, (0, 2, 1))                               # (D, in, out)
    eye = jnp.eye(D, dtype=w.dtype)
    big = wt[:, :, None, :] * eye[:, None, :, None]                # (D,in,D,out)
    return big.reshape(D * i, D * o)


def _pick_chunk(b, cap=8):
    """Largest divisor of the batch that is <= cap (batch chunk per grid step)."""
    for c in range(min(b, cap), 0, -1):
        if b % c == 0:
            return c
    return 1


# ----------------------------------------------------------------------------
# Encoder forward
# ----------------------------------------------------------------------------
def encoder_forward(x, x_adj, params, eps, *, max_batch_chunk=8):
    B, S, D, F = x.shape
    Hg = params["gcn_w1"].shape[1]
    Fo = params["gcn_w2"].shape[1]
    H = params["whh0"].shape[2]
    Z = params["wmu"].shape[1]
    DF, DH, DZ = D * F, D * H, D * Z
    f32, bf16 = jnp.float32, jnp.bfloat16
    hp = lax.Precision.HIGHEST

    # Lane-aligned gate slicing in the kernel assumes D*H is a 128 multiple.
    assert DH % 128 == 0, "num_devices * gru_dim must be a multiple of 128"

    Bc = _pick_chunk(B, max_batch_chunk)      # batch rows folded into matmul M
    C = B // Bc                               # grid steps (parallel on v7x)
    M = S * Bc                                # rows per chunk, (t, b)-major
    assert C == 1 or M % 8 == 0, "per-chunk row count must be sublane aligned"

    # ---- adjacency normalization: A' = Deg^{-1/2} (I + A) Deg^{-1/2} --------
    a = x_adj[0].astype(f32)
    a = jnp.eye(D, dtype=f32) + a
    dih = 1.0 / jnp.sqrt(jnp.sum(a, axis=1))
    an = dih[:, None] * a * dih[None, :]

    eye_d = jnp.eye(D, dtype=f32)

    # GCN layer 1 folded:  hcn = relu(x @ (kron(A'^T, I_F) @ kron(I_D, W1)) + b1)
    w_in = jnp.dot(jnp.kron(an.T, jnp.eye(F, dtype=f32)),
                   jnp.kron(eye_d, params["gcn_w1"]), precision=hp)
    b_in = jnp.tile(params["gcn_b1"], D).reshape(1, D * Hg)

    # GCN layer 2 + layer-0 GRU input projection folded into one matrix:
    #   gi0 = hcn @ (kron(A'^T,I) @ kron(I,W2) @ Wih0_big) + (b2_tile@Wih0 + bih0)
    wih0b = _gru_w_big(params["wih0"])
    w_gi0 = jnp.dot(jnp.dot(jnp.kron(an.T, jnp.eye(Hg, dtype=f32)),
                            jnp.kron(eye_d, params["gcn_w2"]), precision=hp),
                    wih0b, precision=hp)
    b_gi0 = (jnp.dot(jnp.tile(params["gcn_b2"], D).reshape(1, D * Fo),
                     wih0b, precision=hp) + _gru_b_big(params["bih0"]))

    # Recurrence weights stacked into single operands (fewer DMA streams).
    w_rec = jnp.stack([_gru_w_big(params["whh0"]),
                       _gru_w_big(params["wih1"]),
                       _gru_w_big(params["whh1"])])                # (3, DH, 3DH)
    b_rec = jnp.stack([_gru_b_big(params["bhh0"]),
                       _gru_b_big(params["bih1"]),
                       _gru_b_big(params["bhh1"])])                # (3, 1, 3DH)

    pm = jnp.kron(eye_d, jnp.full((H, H), 1.0 / H, f32))           # (DH, DH)
    w_head = jnp.stack([_linear_w_bd(params["wmu"]),
                        _linear_w_bd(params["wvar"])])             # (2, DH, DZ)
    b_head = jnp.stack([params["bmu"].reshape(1, DZ),
                        params["bvar"].reshape(1, DZ)])            # (2, 1, DZ)

    # (t, b)-major row packing per batch chunk.
    def pack(arr3, last):
        return (arr3.reshape(C, Bc, S, last).transpose(0, 2, 1, 3)
                .reshape(C * M, last).astype(f32))

    x_p = pack(x.reshape(B, S, DF), DF)
    eps_p = pack(eps.reshape(B, S, DZ), DZ)

    P = ((3 * DZ + 127) // 128) * 128          # lane-dense packed output width

    operands = (x_p,
                w_in.astype(bf16), b_in,
                w_gi0.astype(bf16), b_gi0,
                w_rec.astype(bf16), b_rec,
                pm.astype(bf16),
                w_head.astype(bf16), b_head,
                eps_p)

    def const_spec(arr):
        # Whole-array, grid-invariant BlockSpec (weight stays VMEM-resident).
        return pl.BlockSpec(arr.shape, lambda c, n=arr.ndim: (0,) * n)

    in_specs = [pl.BlockSpec((M, DF), lambda c: (c, 0))]
    in_specs += [const_spec(op) for op in operands[1:-1]]
    in_specs += [pl.BlockSpec((M, DZ), lambda c: (c, 0))]

    kernel = functools.partial(_encoder_kernel, seq=S, bc=Bc)

    out = pl.pallas_call(
        kernel,
        out_shape=jax.ShapeDtypeStruct((C * M, P), f32),
        grid_spec=pltpu.PrefetchScalarGridSpec(
            num_scalar_prefetch=0,
            grid=(C,),
            in_specs=in_specs,
            out_specs=pl.BlockSpec((M, P), lambda c: (c, 0)),
            scratch_shapes=[pltpu.VMEM((M, 3 * DH), f32),   # gi0 table
                            pltpu.VMEM((M, DH), f32),       # h0 sequence
                            pltpu.VMEM((M, 3 * DH), f32),   # gi1 table
                            pltpu.VMEM((M, DH), f32)]),     # h1 sequence
        compiler_params=pltpu.CompilerParams(
            dimension_semantics=("parallel",)),   # chunk-parallel (v7x 2 TCs)
    )(*operands)

    out = out.reshape(C, S, Bc, P).transpose(0, 2, 1, 3).reshape(B, S, P)
    all_z = out[:, :, :DZ].reshape(B, S, D, Z)
    all_mu = out[:, :, DZ:2 * DZ].reshape(B, S, D, Z)
    all_log_var = out[:, :, 2 * DZ:3 * DZ].reshape(B, S, D, Z)
    return all_z, all_mu, all_log_var


# ----------------------------------------------------------------------------
# Plain-JAX reference (mirrors the PyTorch per-device structure) for checking.
# ----------------------------------------------------------------------------
def encoder_reference(x, x_adj, params, eps):
    B, S, D, F = x.shape
    H = params["whh0"].shape[2]
    hp = lax.Precision.HIGHEST

    a = x_adj[0]
    a = jnp.eye(D, dtype=a.dtype) + a
    dih = 1.0 / jnp.sqrt(jnp.sum(a, axis=1))
    an = dih[:, None] * a * dih[None, :]

    ax = jnp.einsum("de,bsef->bsdf", an, x, precision=hp)
    h = jnp.maximum(jnp.einsum("bsdf,fk->bsdk", ax, params["gcn_w1"],
                               precision=hp) + params["gcn_b1"], 0.0)
    ah = jnp.einsum("de,bsek->bsdk", an, h, precision=hp)
    g = jnp.einsum("bsdk,ko->bsdo", ah, params["gcn_w2"],
                   precision=hp) + params["gcn_b2"]

    def cell(xt, hprev, wih, whh, bih, bhh):
        gi = jnp.dot(xt, wih.T, precision=hp) + bih
        gh = jnp.dot(hprev, whh.T, precision=hp) + bhh
        r = jax.nn.sigmoid(gi[:, :H] + gh[:, :H])
        zg = jax.nn.sigmoid(gi[:, H:2 * H] + gh[:, H:2 * H])
        n = jnp.tanh(gi[:, 2 * H:] + r * gh[:, 2 * H:])
        return (1.0 - zg) * n + zg * hprev

    zs, mus, lvs = [], [], []
    for d in range(D):
        h0 = jnp.zeros((B, H), jnp.float32)
        h1 = jnp.zeros((B, H), jnp.float32)
        hts = []
        for t in range(S):
            h0 = cell(g[:, t, d, :], h0, params["wih0"][d], params["whh0"][d],
                      params["bih0"][d], params["bhh0"][d])
            h1 = cell(h0, h1, params["wih1"][d], params["whh1"][d],
                      params["bih1"][d], params["bhh1"][d])
            hts.append(h1)
        hs = jnp.stack(hts, axis=1)                                 # (B, S, H)
        m = jnp.mean(hs, axis=-1, keepdims=True)
        v = jnp.mean((hs - m) ** 2, axis=-1, keepdims=True)
        y = (hs - m) * lax.rsqrt(v + 1e-5)
        mu = jnp.dot(y, params["wmu"][d].T, precision=hp) + params["bmu"][d]
        lv = jnp.dot(y, params["wvar"][d].T, precision=hp) + params["bvar"][d]
        zs.append(mu + jnp.exp(0.5 * lv) * eps[:, :, d, :])
        mus.append(mu)
        lvs.append(lv)
    return (jnp.stack(zs, axis=2), jnp.stack(mus, axis=2), jnp.stack(lvs, axis=2))


def init_params(key, num_sensors, gcn_hidden, gcn_out, num_devices, gru_dim, z_dim):
    F, Hg, Fo, D, H, Z = num_sensors, gcn_hidden, gcn_out, num_devices, gru_dim, z_dim
    ks = jax.random.split(key, 14)
    s = 0.1

    def n(k, shape):
        return jax.random.normal(k, shape, jnp.float32) * s

    return dict(
        gcn_w1=n(ks[0], (F, Hg)), gcn_b1=jnp.zeros((Hg,), jnp.float32),
        gcn_w2=n(ks[1], (Hg, Fo)), gcn_b2=jnp.zeros((Fo,), jnp.float32),
        # per-device 2-layer GRU weights (PyTorch layout (3H, in), gate order r,z,n)
        wih0=n(ks[2], (D, 3 * H, Fo)), whh0=n(ks[3], (D, 3 * H, H)),
        bih0=n(ks[4], (D, 3 * H)), bhh0=n(ks[5], (D, 3 * H)),
        wih1=n(ks[6], (D, 3 * H, H)), whh1=n(ks[7], (D, 3 * H, H)),
        bih1=n(ks[8], (D, 3 * H)), bhh1=n(ks[9], (D, 3 * H)),
        # per-device mu / log_var heads (PyTorch Linear layout (out, in))
        wmu=n(ks[10], (D, Z, H)), bmu=n(ks[11], (D, Z)),
        wvar=n(ks[12], (D, Z, H)), bvar=n(ks[13], (D, Z)),
    )


if __name__ == "__main__":
    # Small shapes consistent with the module.
    B, S, D, F = 2, 8, 4, 8          # batch, seq_len, num_devices, num_sensors
    Hg, Fo = 16, 8                   # gcn_hidden_dim, gcn_out_dim (= num_sensors)
    H, Z = 32, 16                    # gru_dim, z_dim

    key = jax.random.PRNGKey(0)
    k_x, k_adj, k_eps, k_par = jax.random.split(key, 4)

    x = jax.random.normal(k_x, (B, S, D, F), jnp.float32)
    adj_raw = jax.random.uniform(k_adj, (D, D), jnp.float32)
    x_adj = (0.5 * (adj_raw + adj_raw.T))[None]     # (1, D, D); forward uses x_adj[0]
    eps = jax.random.normal(k_eps, (B, S, D, Z), jnp.float32)
    params = init_params(k_par, F, Hg, Fo, D, H, Z)

    fwd = jax.jit(encoder_forward)
    all_z, all_mu, all_log_var = fwd(x, x_adj, params, eps)
    jax.block_until_ready((all_z, all_mu, all_log_var))

    assert all_z.shape == (B, S, D, Z)
    assert all_mu.shape == (B, S, D, Z)
    assert all_log_var.shape == (B, S, D, Z)
    assert bool(jnp.all(jnp.isfinite(all_z)))

    # Numerical check against the straightforward per-device JAX port (which
    # runs at HIGHEST precision; the kernel uses bf16 MXU passes).
    rz, rmu, rlv = encoder_reference(x, x_adj, params, eps)
    for got, want in ((all_z, rz), (all_mu, rmu), (all_log_var, rlv)):
        err = float(jnp.max(jnp.abs(got - want)))
        assert err < 2e-2, f"mismatch vs reference: max abs err {err}"

    print("KERNEL_OK")
</pallas_src>

<mosaic_0001>
module attributes {stable_mosaic.version = 11 : i64} {
  func.func @_encoder_kernel(%arg0: i32, %arg1: memref<16x32xf32, #tpu.memory_space<vmem>>, %arg2: memref<32x64xbf16, #tpu.memory_space<vmem>>, %arg3: memref<1x64xf32, #tpu.memory_space<vmem>>, %arg4: memref<64x384xbf16, #tpu.memory_space<vmem>>, %arg5: memref<1x384xf32, #tpu.memory_space<vmem>>, %arg6: memref<3x128x384xbf16, #tpu.memory_space<vmem>>, %arg7: memref<3x1x384xf32, #tpu.memory_space<vmem>>, %arg8: memref<128x128xbf16, #tpu.memory_space<vmem>>, %arg9: memref<2x128x64xbf16, #tpu.memory_space<vmem>>, %arg10: memref<2x1x64xf32, #tpu.memory_space<vmem>>, %arg11: memref<16x64xf32, #tpu.memory_space<vmem>>, %arg12: memref<16x256xf32, #tpu.memory_space<vmem>>, %arg13: memref<16x384xf32, #tpu.memory_space<vmem>>, %arg14: memref<16x128xf32, #tpu.memory_space<vmem>>, %arg15: memref<16x384xf32, #tpu.memory_space<vmem>>, %arg16: memref<16x128xf32, #tpu.memory_space<vmem>>) attributes {dimension_semantics = [#tpu.dimension_semantics<parallel>], iteration_bounds = array<i64: 1>, scalar_prefetch = 0 : i64, scratch_operands = 4 : i64, tpu.core_type = #tpu.core_type<tc>, window_params = [{transform_indices = @transform_0, window_bounds = array<i64: 16, 32>}, {pipeline_mode = #tpu.pipeline_mode<synchronous>, transform_indices = @transform_1, window_bounds = array<i64: 32, 64>}, {pipeline_mode = #tpu.pipeline_mode<synchronous>, transform_indices = @transform_2, window_bounds = array<i64: 1, 64>}, {pipeline_mode = #tpu.pipeline_mode<synchronous>, transform_indices = @transform_3, window_bounds = array<i64: 64, 384>}, {pipeline_mode = #tpu.pipeline_mode<synchronous>, transform_indices = @transform_4, window_bounds = array<i64: 1, 384>}, {pipeline_mode = #tpu.pipeline_mode<synchronous>, transform_indices = @transform_5, window_bounds = array<i64: 3, 128, 384>}, {pipeline_mode = #tpu.pipeline_mode<synchronous>, transform_indices = @transform_6, window_bounds = array<i64: 3, 1, 384>}, {pipeline_mode = #tpu.pipeline_mode<synchronous>, transform_indices = @transform_7, window_bounds = array<i64: 128, 128>}, {pipeline_mode = #tpu.pipeline_mode<synchronous>, transform_indices = @transform_8, window_bounds = array<i64: 2, 128, 64>}, {pipeline_mode = #tpu.pipeline_mode<synchronous>, transform_indices = @transform_9, window_bounds = array<i64: 2, 1, 64>}, {transform_indices = @transform_10, window_bounds = array<i64: 16, 64>}, {transform_indices = @transform_11, window_bounds = array<i64: 16, 256>}]} {
    %c0 = arith.constant 0 : index
    %c0_0 = arith.constant 0 : index
    %0 = vector.load %arg1[%c0, %c0_0] : memref<16x32xf32, #tpu.memory_space<vmem>>, vector<16x32xf32>
    %c0_1 = arith.constant 0 : index
    %c0_2 = arith.constant 0 : index
    %1 = vector.load %arg2[%c0_1, %c0_2] : memref<32x64xbf16, #tpu.memory_space<vmem>>, vector<32x64xbf16>
    %2 = arith.truncf %0 : vector<16x32xf32> to vector<16x32xbf16>
    %cst = arith.constant dense<0.000000e+00> : vector<16x64xf32>
    %3 = tpu.matmul %2, %1, %cst {dimension_numbers = #tpu.dot_dimension_numbers<[1], [0], [0], [1], [0, 0, 1, 1], [], []>} : vector<16x32xbf16>, vector<32x64xbf16>, vector<16x64xf32> -> vector<16x64xf32>
    %c0_3 = arith.constant 0 : index
    %c0_4 = arith.constant 0 : index
    %4 = vector.load %arg3[%c0_3, %c0_4] : memref<1x64xf32, #tpu.memory_space<vmem>>, vector<1x64xf32>
    %5 = vector.broadcast %4 : vector<1x64xf32> to vector<16x64xf32>
    %6 = arith.addf %3, %5 : vector<16x64xf32>
    %cst_5 = arith.constant 0.000000e+00 : f32
    %7 = vector.broadcast %cst_5 : f32 to vector<16x64xf32>
    %8 = arith.maximumf %6, %7 : vector<16x64xf32>
    %c0_6 = arith.constant 0 : index
    %c0_7 = arith.constant 0 : index
    %9 = vector.load %arg4[%c0_6, %c0_7] : memref<64x384xbf16, #tpu.memory_space<vmem>>, vector<64x384xbf16>
    %10 = arith.truncf %8 : vector<16x64xf32> to vector<16x64xbf16>
    %cst_8 = arith.constant dense<0.000000e+00> : vector<16x384xf32>
    %11 = tpu.matmul %10, %9, %cst_8 {dimension_numbers = #tpu.dot_dimension_numbers<[1], [0], [0], [1], [0, 0, 1, 1], [], []>} : vector<16x64xbf16>, vector<64x384xbf16>, vector<16x384xf32> -> vector<16x384xf32>
    %c0_9 = arith.constant 0 : index
    %c0_10 = arith.constant 0 : index
    %12 = vector.load %arg5[%c0_9, %c0_10] : memref<1x384xf32, #tpu.memory_space<vmem>>, vector<1x384xf32>
    %13 = vector.broadcast %12 : vector<1x384xf32> to vector<16x384xf32>
    %14 = arith.addf %11, %13 : vector<16x384xf32>
    %c0_11 = arith.constant 0 : index
    %c0_12 = arith.constant 0 : index
    %15 = vector.load %arg13[%c0_11, %c0_12] : memref<16x384xf32, #tpu.memory_space<vmem>>, vector<16x384xf32>
    tpu.vector_store %arg13[%c0_11, %c0_12], %14 {strides = array<i32>} : memref<16x384xf32, #tpu.memory_space<vmem>>, vector<16x384xf32>,
    %cst_13 = arith.constant 0.000000e+00 : f32
    %16 = vector.broadcast %cst_13 : f32 to vector<2x128xf32>
    %c0_i32 = arith.constant 0 : i32
    %c0_14 = arith.constant 0 : index
    %c0_15 = arith.constant 0 : index
    %c0_16 = arith.constant 0 : index
    %17 = vector.load %arg6[%c0_14, %c0_15, %c0_16] : memref<3x128x384xbf16, #tpu.memory_space<vmem>>, vector<1x128x384xbf16>
    %18 = vector.shape_cast %17 : vector<1x128x384xbf16> to vector<128x384xbf16>
    %19 = arith.truncf %16 : vector<2x128xf32> to vector<2x128xbf16>
    %cst_17 = arith.constant dense<0.000000e+00> : vector<2x384xf32>
    %20 = tpu.matmul %19, %18, %cst_17 {dimension_numbers = #tpu.dot_dimension_numbers<[1], [0], [0], [1], [0, 0, 1, 1], [], []>} : vector<2x128xbf16>, vector<128x384xbf16>, vector<2x384xf32> -> vector<2x384xf32>
    %c0_18 = arith.constant 0 : index
    %c0_19 = arith.constant 0 : index
    %c0_20 = arith.constant 0 : index
    %21 = vector.load %arg7[%c0_18, %c0_19, %c0_20] : memref<3x1x384xf32, #tpu.memory_space<vmem>>, vector<1x1x384xf32>
    %22 = vector.shape_cast %21 : vector<1x1x384xf32> to vector<1x384xf32>
    %23 = vector.broadcast %22 : vector<1x384xf32> to vector<2x384xf32>
    %24 = arith.addf %20, %23 : vector<2x384xf32>
    %c2_i32 = arith.constant 2 : i32
    %25 = arith.muli %c0_i32, %c2_i32 : i32
    %26 = arith.index_cast %25 : i32 to index
    %c0_21 = arith.constant 0 : index
    %27 = vector.load %arg13[%26, %c0_21] : memref<16x384xf32, #tpu.memory_space<vmem>>, vector<2x384xf32>
    %28 = vector.extract_strided_slice %27 {offsets = [0, 0], sizes = [2, 128], strides = [1, 1]} : vector<2x384xf32> to vector<2x128xf32>
    %29 = vector.extract_strided_slice %24 {offsets = [0, 0], sizes = [2, 128], strides = [1, 1]} : vector<2x384xf32> to vector<2x128xf32>
    %30 = arith.addf %28, %29 : vector<2x128xf32>
    %31 = arith.negf %30 : vector<2x128xf32>
    %32 = math.exp %31 : vector<2x128xf32>
    %cst_22 = arith.constant 1.000000e+00 : f32
    %33 = vector.broadcast %cst_22 : f32 to vector<2x128xf32>
    %34 = arith.addf %33, %32 : vector<2x128xf32>
    %35 = arith.divf %33, %34 : vector<2x128xf32>
    %36 = vector.extract_strided_slice %27 {offsets = [0, 128], sizes = [2, 128], strides = [1, 1]} : vector<2x384xf32> to vector<2x128xf32>
    %37 = vector.extract_strided_slice %24 {offsets = [0, 128], sizes = [2, 128], strides = [1, 1]} : vector<2x384xf32> to vector<2x128xf32>
    %38 = arith.addf %36, %37 : vector<2x128xf32>
    %39 = arith.negf %38 : vector<2x128xf32>
    %40 = math.exp %39 : vector<2x128xf32>
    %cst_23 = arith.constant 1.000000e+00 : f32
    %41 = vector.broadcast %cst_23 : f32 to vector<2x128xf32>
    %42 = arith.addf %41, %40 : vector<2x128xf32>
    %43 = arith.divf %41, %42 : vector<2x128xf32>
    %44 = vector.extract_strided_slice %27 {offsets = [0, 256], sizes = [2, 128], strides = [1, 1]} : vector<2x384xf32> to vector<2x128xf32>
    %45 = vector.extract_strided_slice %24 {offsets = [0, 256], sizes = [2, 128], strides = [1, 1]} : vector<2x384xf32> to vector<2x128xf32>
    %46 = arith.mulf %35, %45 : vector<2x128xf32>
    %47 = arith.addf %44, %46 : vector<2x128xf32>
    %48 = math.tanh %47 : vector<2x128xf32>
    %cst_24 = arith.constant 1.000000e+00 : f32
    %49 = vector.broadcast %cst_24 : f32 to vector<2x128xf32>
    %50 = arith.subf %49, %43 : vector<2x128xf32>
    %51 = arith.mulf %50, %48 : vector<2x128xf32>
    %52 = arith.mulf %43, %16 : vector<2x128xf32>
    %53 = arith.addf %51, %52 : vector<2x128xf32>
    %c2_i32_25 = arith.constant 2 : i32
    %54 = arith.muli %c0_i32, %c2_i32_25 : i32
    %55 = arith.index_cast %54 : i32 to index
    %c0_26 = arith.constant 0 : index
    %56 = vector.load %arg14[%55, %c0_26] : memref<16x128xf32, #tpu.memory_space<vmem>>, vector<2x128xf32>
    tpu.vector_store %arg14[%55, %c0_26], %53 {strides = array<i32>} : memref<16x128xf32, #tpu.memory_space<vmem>>, vector<2x128xf32>,
    %c1_i32 = arith.constant 1 : i32
    %c0_27 = arith.constant 0 : index
    %c0_28 = arith.constant 0 : index
    %c0_29 = arith.constant 0 : index
    %57 = vector.load %arg6[%c0_27, %c0_28, %c0_29] : memref<3x128x384xbf16, #tpu.memory_space<vmem>>, vector<1x128x384xbf16>
    %58 = vector.shape_cast %57 : vector<1x128x384xbf16> to vector<128x384xbf16>
    %59 = arith.truncf %53 : vector<2x128xf32> to vector<2x128xbf16>
    %cst_30 = arith.constant dense<0.000000e+00> : vector<2x384xf32>
    %60 = tpu.matmul %59, %58, %cst_30 {dimension_numbers = #tpu.dot_dimension_numbers<[1], [0], [0], [1], [0, 0, 1, 1], [], []>} : vector<2x128xbf16>, vector<128x384xbf16>, vector<2x384xf32> -> vector<2x384xf32>
    %c0_31 = arith.constant 0 : index
    %c0_32 = arith.constant 0 : index
    %c0_33 = arith.constant 0 : index
    %61 = vector.load %arg7[%c0_31, %c0_32, %c0_33] : memref<3x1x384xf32, #tpu.memory_space<vmem>>, vector<1x1x384xf32>
    %62 = vector.shape_cast %61 : vector<1x1x384xf32> to vector<1x384xf32>
    %63 = vector.broadcast %62 : vector<1x384xf32> to vector<2x384xf32>
    %64 = arith.addf %60, %63 : vector<2x384xf32>
    %c2_i32_34 = arith.constant 2 : i32
    %65 = arith.muli %c1_i32, %c2_i32_34 : i32
    %66 = arith.index_cast %65 : i32 to index
    %c0_35 = arith.constant 0 : index
    %67 = vector.load %arg13[%66, %c0_35] : memref<16x384xf32, #tpu.memory_space<vmem>>, vector<2x384xf32>
    %68 = vector.extract_strided_slice %67 {offsets = [0, 0], sizes = [2, 128], strides = [1, 1]} : vector<2x384xf32> to vector<2x128xf32>
    %69 = vector.extract_strided_slice %64 {offsets = [0, 0], sizes = [2, 128], strides = [1, 1]} : vector<2x384xf32> to vector<2x128xf32>
    %70 = arith.addf %68, %69 : vector<2x128xf32>
    %71 = arith.negf %70 : vector<2x128xf32>
    %72 = math.exp %71 : vector<2x128xf32>
    %cst_36 = arith.constant 1.000000e+00 : f32
    %73 = vector.broadcast %cst_36 : f32 to vector<2x128xf32>
    %74 = arith.addf %73, %72 : vector<2x128xf32>
    %75 = arith.divf %73, %74 : vector<2x128xf32>
    %76 = vector.extract_strided_slice %67 {offsets = [0, 128], sizes = [2, 128], strides = [1, 1]} : vector<2x384xf32> to vector<2x128xf32>
    %77 = vector.extract_strided_slice %64 {offsets = [0, 128], sizes = [2, 128], strides = [1, 1]} : vector<2x384xf32> to vector<2x128xf32>
    %78 = arith.addf %76, %77 : vector<2x128xf32>
    %79 = arith.negf %78 : vector<2x128xf32>
    %80 = math.exp %79 : vector<2x128xf32>
    %cst_37 = arith.constant 1.000000e+00 : f32
    %81 = vector.broadcast %cst_37 : f32 to vector<2x128xf32>
    %82 = arith.addf %81, %80 : vector<2x128xf32>
    %83 = arith.divf %81, %82 : vector<2x128xf32>
    %84 = vector.extract_strided_slice %67 {offsets = [0, 256], sizes = [2, 128], strides = [1, 1]} : vector<2x384xf32> to vector<2x128xf32>
    %85 = vector.extract_strided_slice %64 {offsets = [0, 256], sizes = [2, 128], strides = [1, 1]} : vector<2x384xf32> to vector<2x128xf32>
    %86 = arith.mulf %75, %85 : vector<2x128xf32>
    %87 = arith.addf %84, %86 : vector<2x128xf32>
    %88 = math.tanh %87 : vector<2x128xf32>
    %cst_38 = arith.constant 1.000000e+00 : f32
    %89 = vector.broadcast %cst_38 : f32 to vector<2x128xf32>
    %90 = arith.subf %89, %83 : vector<2x128xf32>
    %91 = arith.mulf %90, %88 : vector<2x128xf32>
    %92 = arith.mulf %83, %53 : vector<2x128xf32>
    %93 = arith.addf %91, %92 : vector<2x128xf32>
    %c2_i32_39 = arith.constant 2 : i32
    %94 = arith.muli %c1_i32, %c2_i32_39 : i32
    %95 = arith.index_cast %94 : i32 to index
    %c0_40 = arith.constant 0 : index
    %96 = vector.load %arg14[%95, %c0_40] : memref<16x128xf32, #tpu.memory_space<vmem>>, vector<2x128xf32>
    tpu.vector_store %arg14[%95, %c0_40], %93 {strides = array<i32>} : memref<16x128xf32, #tpu.memory_space<vmem>>, vector<2x128xf32>,
    %c2_i32_41 = arith.constant 2 : i32
    %c0_42 = arith.constant 0 : index
    %c0_43 = arith.constant 0 : index
    %c0_44 = arith.constant 0 : index
    %97 = vector.load %arg6[%c0_42, %c0_43, %c0_44] : memref<3x128x384xbf16, #tpu.memory_space<vmem>>, vector<1x128x384xbf16>
    %98 = vector.shape_cast %97 : vector<1x128x384xbf16> to vector<128x384xbf16>
    %99 = arith.truncf %93 : vector<2x128xf32> to vector<2x128xbf16>
    %cst_45 = arith.constant dense<0.000000e+00> : vector<2x384xf32>
    %100 = tpu.matmul %99, %98, %cst_45 {dimension_numbers = #tpu.dot_dimension_numbers<[1], [0], [0], [1], [0, 0, 1, 1], [], []>} : vector<2x128xbf16>, vector<128x384xbf16>, vector<2x384xf32> -> vector<2x384xf32>
    %c0_46 = arith.constant 0 : index
    %c0_47 = arith.constant 0 : index
    %c0_48 = arith.constant 0 : index
    %101 = vector.load %arg7[%c0_46, %c0_47, %c0_48] : memref<3x1x384xf32, #tpu.memory_space<vmem>>, vector<1x1x384xf32>
    %102 = vector.shape_cast %101 : vector<1x1x384xf32> to vector<1x384xf32>
    %103 = vector.broadcast %102 : vector<1x384xf32> to vector<2x384xf32>
    %104 = arith.addf %100, %103 : vector<2x384xf32>
    %c2_i32_49 = arith.constant 2 : i32
    %105 = arith.muli %c2_i32_41, %c2_i32_49 : i32
    %106 = arith.index_cast %105 : i32 to index
    %c0_50 = arith.constant 0 : index
    %107 = vector.load %arg13[%106, %c0_50] : memref<16x384xf32, #tpu.memory_space<vmem>>, vector<2x384xf32>
    %108 = vector.extract_strided_slice %107 {offsets = [0, 0], sizes = [2, 128], strides = [1, 1]} : vector<2x384xf32> to vector<2x128xf32>
    %109 = vector.extract_strided_slice %104 {offsets = [0, 0], sizes = [2, 128], strides = [1, 1]} : vector<2x384xf32> to vector<2x128xf32>
    %110 = arith.addf %108, %109 : vector<2x128xf32>
    %111 = arith.negf %110 : vector<2x128xf32>
    %112 = math.exp %111 : vector<2x128xf32>
    %cst_51 = arith.constant 1.000000e+00 : f32
    %113 = vector.broadcast %cst_51 : f32 to vector<2x128xf32>
    %114 = arith.addf %113, %112 : vector<2x128xf32>
    %115 = arith.divf %113, %114 : vector<2x128xf32>
    %116 = vector.extract_strided_slice %107 {offsets = [0, 128], sizes = [2, 128], strides = [1, 1]} : vector<2x384xf32> to vector<2x128xf32>
    %117 = vector.extract_strided_slice %104 {offsets = [0, 128], sizes = [2, 128], strides = [1, 1]} : vector<2x384xf32> to vector<2x128xf32>
    %118 = arith.addf %116, %117 : vector<2x128xf32>
    %119 = arith.negf %118 : vector<2x128xf32>
    %120 = math.exp %119 : vector<2x128xf32>
    %cst_52 = arith.constant 1.000000e+00 : f32
    %121 = vector.broadcast %cst_52 : f32 to vector<2x128xf32>
    %122 = arith.addf %121, %120 : vector<2x128xf32>
    %123 = arith.divf %121, %122 : vector<2x128xf32>
    %124 = vector.extract_strided_slice %107 {offsets = [0, 256], sizes = [2, 128], strides = [1, 1]} : vector<2x384xf32> to vector<2x128xf32>
    %125 = vector.extract_strided_slice %104 {offsets = [0, 256], sizes = [2, 128], strides = [1, 1]} : vector<2x384xf32> to vector<2x128xf32>
    %126 = arith.mulf %115, %125 : vector<2x128xf32>
    %127 = arith.addf %124, %126 : vector<2x128xf32>
    %128 = math.tanh %127 : vector<2x128xf32>
    %cst_53 = arith.constant 1.000000e+00 : f32
    %129 = vector.broadcast %cst_53 : f32 to vector<2x128xf32>
    %130 = arith.subf %129, %123 : vector<2x128xf32>
    %131 = arith.mulf %130, %128 : vector<2x128xf32>
    %132 = arith.mulf %123, %93 : vector<2x128xf32>
    %133 = arith.addf %131, %132 : vector<2x128xf32>
    %c2_i32_54 = arith.constant 2 : i32
    %134 = arith.muli %c2_i32_41, %c2_i32_54 : i32
    %135 = arith.index_cast %134 : i32 to index
    %c0_55 = arith.constant 0 : index
    %136 = vector.load %arg14[%135, %c0_55] : memref<16x128xf32, #tpu.memory_space<vmem>>, vector<2x128xf32>
    tpu.vector_store %arg14[%135, %c0_55], %133 {strides = array<i32>} : memref<16x128xf32, #tpu.memory_space<vmem>>, vector<2x128xf32>,
    %c3_i32 = arith.constant 3 : i32
    %c0_56 = arith.constant 0 : index
    %c0_57 = arith.constant 0 : index
    %c0_58 = arith.constant 0 : index
    %137 = vector.load %arg6[%c0_56, %c0_57, %c0_58] : memref<3x128x384xbf16, #tpu.memory_space<vmem>>, vector<1x128x384xbf16>
    %138 = vector.shape_cast %137 : vector<1x128x384xbf16> to vector<128x384xbf16>
    %139 = arith.truncf %133 : vector<2x128xf32> to vector<2x128xbf16>
    %cst_59 = arith.constant dense<0.000000e+00> : vector<2x384xf32>
    %140 = tpu.matmul %139, %138, %cst_59 {dimension_numbers = #tpu.dot_dimension_numbers<[1], [0], [0], [1], [0, 0, 1, 1], [], []>} : vector<2x128xbf16>, vector<128x384xbf16>, vector<2x384xf32> -> vector<2x384xf32>
    %c0_60 = arith.constant 0 : index
    %c0_61 = arith.constant 0 : index
    %c0_62 = arith.constant 0 : index
    %141 = vector.load %arg7[%c0_60, %c0_61, %c0_62] : memref<3x1x384xf32, #tpu.memory_space<vmem>>, vector<1x1x384xf32>
    %142 = vector.shape_cast %141 : vector<1x1x384xf32> to vector<1x384xf32>
    %143 = vector.broadcast %142 : vector<1x384xf32> to vector<2x384xf32>
    %144 = arith.addf %140, %143 : vector<2x384xf32>
    %c2_i32_63 = arith.constant 2 : i32
    %145 = arith.muli %c3_i32, %c2_i32_63 : i32
    %146 = arith.index_cast %145 : i32 to index
    %c0_64 = arith.constant 0 : index
    %147 = vector.load %arg13[%146, %c0_64] : memref<16x384xf32, #tpu.memory_space<vmem>>, vector<2x384xf32>
    %148 = vector.extract_strided_slice %147 {offsets = [0, 0], sizes = [2, 128], strides = [1, 1]} : vector<2x384xf32> to vector<2x128xf32>
    %149 = vector.extract_strided_slice %144 {offsets = [0, 0], sizes = [2, 128], strides = [1, 1]} : vector<2x384xf32> to vector<2x128xf32>
    %150 = arith.addf %148, %149 : vector<2x128xf32>
    %151 = arith.negf %150 : vector<2x128xf32>
    %152 = math.exp %151 : vector<2x128xf32>
    %cst_65 = arith.constant 1.000000e+00 : f32
    %153 = vector.broadcast %cst_65 : f32 to vector<2x128xf32>
    %154 = arith.addf %153, %152 : vector<2x128xf32>
    %155 = arith.divf %153, %154 : vector<2x128xf32>
    %156 = vector.extract_strided_slice %147 {offsets = [0, 128], sizes = [2, 128], strides = [1, 1]} : vector<2x384xf32> to vector<2x128xf32>
    %157 = vector.extract_strided_slice %144 {offsets = [0, 128], sizes = [2, 128], strides = [1, 1]} : vector<2x384xf32> to vector<2x128xf32>
    %158 = arith.addf %156, %157 : vector<2x128xf32>
    %159 = arith.negf %158 : vector<2x128xf32>
    %160 = math.exp %159 : vector<2x128xf32>
    %cst_66 = arith.constant 1.000000e+00 : f32
    %161 = vector.broadcast %cst_66 : f32 to vector<2x128xf32>
    %162 = arith.addf %161, %160 : vector<2x128xf32>
    %163 = arith.divf %161, %162 : vector<2x128xf32>
    %164 = vector.extract_strided_slice %147 {offsets = [0, 256], sizes = [2, 128], strides = [1, 1]} : vector<2x384xf32> to vector<2x128xf32>
    %165 = vector.extract_strided_slice %144 {offsets = [0, 256], sizes = [2, 128], strides = [1, 1]} : vector<2x384xf32> to vector<2x128xf32>
    %166 = arith.mulf %155, %165 : vector<2x128xf32>
    %167 = arith.addf %164, %166 : vector<2x128xf32>
    %168 = math.tanh %167 : vector<2x128xf32>
    %cst_67 = arith.constant 1.000000e+00 : f32
    %169 = vector.broadcast %cst_67 : f32 to vector<2x128xf32>
    %170 = arith.subf %169, %163 : vector<2x128xf32>
    %171 = arith.mulf %170, %168 : vector<2x128xf32>
    %172 = arith.mulf %163, %133 : vector<2x128xf32>
    %173 = arith.addf %171, %172 : vector<2x128xf32>
    %c2_i32_68 = arith.constant 2 : i32
    %174 = arith.muli %c3_i32, %c2_i32_68 : i32
    %175 = arith.index_cast %174 : i32 to index
    %c0_69 = arith.constant 0 : index
    %176 = vector.load %arg14[%175, %c0_69] : memref<16x128xf32, #tpu.memory_space<vmem>>, vector<2x128xf32>
    tpu.vector_store %arg14[%175, %c0_69], %173 {strides = array<i32>} : memref<16x128xf32, #tpu.memory_space<vmem>>, vector<2x128xf32>,
    %c4_i32 = arith.constant 4 : i32
    %c0_70 = arith.constant 0 : index
    %c0_71 = arith.constant 0 : index
    %c0_72 = arith.constant 0 : index
    %177 = vector.load %arg6[%c0_70, %c0_71, %c0_72] : memref<3x128x384xbf16, #tpu.memory_space<vmem>>, vector<1x128x384xbf16>
    %178 = vector.shape_cast %177 : vector<1x128x384xbf16> to vector<128x384xbf16>
    %179 = arith.truncf %173 : vector<2x128xf32> to vector<2x128xbf16>
    %cst_73 = arith.constant dense<0.000000e+00> : vector<2x384xf32>
    %180 = tpu.matmul %179, %178, %cst_73 {dimension_numbers = #tpu.dot_dimension_numbers<[1], [0], [0], [1], [0, 0, 1, 1], [], []>} : vector<2x128xbf16>, vector<128x384xbf16>, vector<2x384xf32> -> vector<2x384xf32>
    %c0_74 = arith.constant 0 : index
    %c0_75 = arith.constant 0 : index
    %c0_76 = arith.constant 0 : index
    %181 = vector.load %arg7[%c0_74, %c0_75, %c0_76] : memref<3x1x384xf32, #tpu.memory_space<vmem>>, vector<1x1x384xf32>
    %182 = vector.shape_cast %181 : vector<1x1x384xf32> to vector<1x384xf32>
    %183 = vector.broadcast %182 : vector<1x384xf32> to vector<2x384xf32>
    %184 = arith.addf %180, %183 : vector<2x384xf32>
    %c2_i32_77 = arith.constant 2 : i32
    %185 = arith.muli %c4_i32, %c2_i32_77 : i32
    %186 = arith.index_cast %185 : i32 to index
    %c0_78 = arith.constant 0 : index
    %187 = vector.load %arg13[%186, %c0_78] : memref<16x384xf32, #tpu.memory_space<vmem>>, vector<2x384xf32>
    %188 = vector.extract_strided_slice %187 {offsets = [0, 0], sizes = [2, 128], strides = [1, 1]} : vector<2x384xf32> to vector<2x128xf32>
    %189 = vector.extract_strided_slice %184 {offsets = [0, 0], sizes = [2, 128], strides = [1, 1]} : vector<2x384xf32> to vector<2x128xf32>
    %190 = arith.addf %188, %189 : vector<2x128xf32>
    %191 = arith.negf %190 : vector<2x128xf32>
    %192 = math.exp %191 : vector<2x128xf32>
    %cst_79 = arith.constant 1.000000e+00 : f32
    %193 = vector.broadcast %cst_79 : f32 to vector<2x128xf32>
    %194 = arith.addf %193, %192 : vector<2x128xf32>
    %195 = arith.divf %193, %194 : vector<2x128xf32>
    %196 = vector.extract_strided_slice %187 {offsets = [0, 128], sizes = [2, 128], strides = [1, 1]} : vector<2x384xf32> to vector<2x128xf32>
    %197 = vector.extract_strided_slice %184 {offsets = [0, 128], sizes = [2, 128], strides = [1, 1]} : vector<2x384xf32> to vector<2x128xf32>
    %198 = arith.addf %196, %197 : vector<2x128xf32>
    %199 = arith.negf %198 : vector<2x128xf32>
    %200 = math.exp %199 : vector<2x128xf32>
    %cst_80 = arith.constant 1.000000e+00 : f32
    %201 = vector.broadcast %cst_80 : f32 to vector<2x128xf32>
    %202 = arith.addf %201, %200 : vector<2x128xf32>
    %203 = arith.divf %201, %202 : vector<2x128xf32>
    %204 = vector.extract_strided_slice %187 {offsets = [0, 256], sizes = [2, 128], strides = [1, 1]} : vector<2x384xf32> to vector<2x128xf32>
    %205 = vector.extract_strided_slice %184 {offsets = [0, 256], sizes = [2, 128], strides = [1, 1]} : vector<2x384xf32> to vector<2x128xf32>
    %206 = arith.mulf %195, %205 : vector<2x128xf32>
    %207 = arith.addf %204, %206 : vector<2x128xf32>
    %208 = math.tanh %207 : vector<2x128xf32>
    %cst_81 = arith.constant 1.000000e+00 : f32
    %209 = vector.broadcast %cst_81 : f32 to vector<2x128xf32>
    %210 = arith.subf %209, %203 : vector<2x128xf32>
    %211 = arith.mulf %210, %208 : vector<2x128xf32>
    %212 = arith.mulf %203, %173 : vector<2x128xf32>
    %213 = arith.addf %211, %212 : vector<2x128xf32>
    %c2_i32_82 = arith.constant 2 : i32
    %214 = arith.muli %c4_i32, %c2_i32_82 : i32
    %215 = arith.index_cast %214 : i32 to index
    %c0_83 = arith.constant 0 : index
    %216 = vector.load %arg14[%215, %c0_83] : memref<16x128xf32, #tpu.memory_space<vmem>>, vector<2x128xf32>
    tpu.vector_store %arg14[%215, %c0_83], %213 {strides = array<i32>} : memref<16x128xf32, #tpu.memory_space<vmem>>, vector<2x128xf32>,
    %c5_i32 = arith.constant 5 : i32
    %c0_84 = arith.constant 0 : index
    %c0_85 = arith.constant 0 : index
    %c0_86 = arith.constant 0 : index
    %217 = vector.load %arg6[%c0_84, %c0_85, %c0_86] : memref<3x128x384xbf16, #tpu.memory_space<vmem>>, vector<1x128x384xbf16>
    %218 = vector.shape_cast %217 : vector<1x128x384xbf16> to vector<128x384xbf16>
    %219 = arith.truncf %213 : vector<2x128xf32> to vector<2x128xbf16>
    %cst_87 = arith.constant dense<0.000000e+00> : vector<2x384xf32>
    %220 = tpu.matmul %219, %218, %cst_87 {dimension_numbers = #tpu.dot_dimension_numbers<[1], [0], [0], [1], [0, 0, 1, 1], [], []>} : vector<2x128xbf16>, vector<128x384xbf16>, vector<2x384xf32> -> vector<2x384xf32>
    %c0_88 = arith.constant 0 : index
    %c0_89 = arith.constant 0 : index
    %c0_90 = arith.constant 0 : index
    %221 = vector.load %arg7[%c0_88, %c0_89, %c0_90] : memref<3x1x384xf32, #tpu.memory_space<vmem>>, vector<1x1x384xf32>
    %222 = vector.shape_cast %221 : vector<1x1x384xf32> to vector<1x384xf32>
    %223 = vector.broadcast %222 : vector<1x384xf32> to vector<2x384xf32>
    %224 = arith.addf %220, %223 : vector<2x384xf32>
    %c2_i32_91 = arith.constant 2 : i32
    %225 = arith.muli %c5_i32, %c2_i32_91 : i32
    %226 = arith.index_cast %225 : i32 to index
    %c0_92 = arith.constant 0 : index
    %227 = vector.load %arg13[%226, %c0_92] : memref<16x384xf32, #tpu.memory_space<vmem>>, vector<2x384xf32>
    %228 = vector.extract_strided_slice %227 {offsets = [0, 0], sizes = [2, 128], strides = [1, 1]} : vector<2x384xf32> to vector<2x128xf32>
    %229 = vector.extract_strided_slice %224 {offsets = [0, 0], sizes = [2, 128], strides = [1, 1]} : vector<2x384xf32> to vector<2x128xf32>
    %230 = arith.addf %228, %229 : vector<2x128xf32>
    %231 = arith.negf %230 : vector<2x128xf32>
    %232 = math.exp %231 : vector<2x128xf32>
    %cst_93 = arith.constant 1.000000e+00 : f32
    %233 = vector.broadcast %cst_93 : f32 to vector<2x128xf32>
    %234 = arith.addf %233, %232 : vector<2x128xf32>
    %235 = arith.divf %233, %234 : vector<2x128xf32>
    %236 = vector.extract_strided_slice %227 {offsets = [0, 128], sizes = [2, 128], strides = [1, 1]} : vector<2x384xf32> to vector<2x128xf32>
    %237 = vector.extract_strided_slice %224 {offsets = [0, 128], sizes = [2, 128], strides = [1, 1]} : vector<2x384xf32> to vector<2x128xf32>
    %238 = arith.addf %236, %237 : vector<2x128xf32>
    %239 = arith.negf %238 : vector<2x128xf32>
    %240 = math.exp %239 : vector<2x128xf32>
    %cst_94 = arith.constant 1.000000e+00 : f32
    %241 = vector.broadcast %cst_94 : f32 to vector<2x128xf32>
    %242 = arith.addf %241, %240 : vector<2x128xf32>
    %243 = arith.divf %241, %242 : vector<2x128xf32>
    %244 = vector.extract_strided_slice %227 {offsets = [0, 256], sizes = [2, 128], strides = [1, 1]} : vector<2x384xf32> to vector<2x128xf32>
    %245 = vector.extract_strided_slice %224 {offsets = [0, 256], sizes = [2, 128], strides = [1, 1]} : vector<2x384xf32> to vector<2x128xf32>
    %246 = arith.mulf %235, %245 : vector<2x128xf32>
    %247 = arith.addf %244, %246 : vector<2x128xf32>
    %248 = math.tanh %247 : vector<2x128xf32>
    %cst_95 = arith.constant 1.000000e+00 : f32
    %249 = vector.broadcast %cst_95 : f32 to vector<2x128xf32>
    %250 = arith.subf %249, %243 : vector<2x128xf32>
    %251 = arith.mulf %250, %248 : vector<2x128xf32>
    %252 = arith.mulf %243, %213 : vector<2x128xf32>
    %253 = arith.addf %251, %252 : vector<2x128xf32>
    %c2_i32_96 = arith.constant 2 : i32
    %254 = arith.muli %c5_i32, %c2_i32_96 : i32
    %255 = arith.index_cast %254 : i32 to index
    %c0_97 = arith.constant 0 : index
    %256 = vector.load %arg14[%255, %c0_97] : memref<16x128xf32, #tpu.memory_space<vmem>>, vector<2x128xf32>
    tpu.vector_store %arg14[%255, %c0_97], %253 {strides = array<i32>} : memref<16x128xf32, #tpu.memory_space<vmem>>, vector<2x128xf32>,
    %c6_i32 = arith.constant 6 : i32
    %c0_98 = arith.constant 0 : index
    %c0_99 = arith.constant 0 : index
    %c0_100 = arith.constant 0 : index
    %257 = vector.load %arg6[%c0_98, %c0_99, %c0_100] : memref<3x128x384xbf16, #tpu.memory_space<vmem>>, vector<1x128x384xbf16>
    %258 = vector.shape_cast %257 : vector<1x128x384xbf16> to vector<128x384xbf16>
    %259 = arith.truncf %253 : vector<2x128xf32> to vector<2x128xbf16>
    %cst_101 = arith.constant dense<0.000000e+00> : vector<2x384xf32>
    %260 = tpu.matmul %259, %258, %cst_101 {dimension_numbers = #tpu.dot_dimension_numbers<[1], [0], [0], [1], [0, 0, 1, 1], [], []>} : vector<2x128xbf16>, vector<128x384xbf16>, vector<2x384xf32> -> vector<2x384xf32>
    %c0_102 = arith.constant 0 : index
    %c0_103 = arith.constant 0 : index
    %c0_104 = arith.constant 0 : index
    %261 = vector.load %arg7[%c0_102, %c0_103, %c0_104] : memref<3x1x384xf32, #tpu.memory_space<vmem>>, vector<1x1x384xf32>
    %262 = vector.shape_cast %261 : vector<1x1x384xf32> to vector<1x384xf32>
    %263 = vector.broadcast %262 : vector<1x384xf32> to vector<2x384xf32>
    %264 = arith.addf %260, %263 : vector<2x384xf32>
    %c2_i32_105 = arith.constant 2 : i32
    %265 = arith.muli %c6_i32, %c2_i32_105 : i32
    %266 = arith.index_cast %265 : i32 to index
    %c0_106 = arith.constant 0 : index
    %267 = vector.load %arg13[%266, %c0_106] : memref<16x384xf32, #tpu.memory_space<vmem>>, vector<2x384xf32>
    %268 = vector.extract_strided_slice %267 {offsets = [0, 0], sizes = [2, 128], strides = [1, 1]} : vector<2x384xf32> to vector<2x128xf32>
    %269 = vector.extract_strided_slice %264 {offsets = [0, 0], sizes = [2, 128], strides = [1, 1]} : vector<2x384xf32> to vector<2x128xf32>
    %270 = arith.addf %268, %269 : vector<2x128xf32>
    %271 = arith.negf %270 : vector<2x128xf32>
    %272 = math.exp %271 : vector<2x128xf32>
    %cst_107 = arith.constant 1.000000e+00 : f32
    %273 = vector.broadcast %cst_107 : f32 to vector<2x128xf32>
    %274 = arith.addf %273, %272 : vector<2x128xf32>
    %275 = arith.divf %273, %274 : vector<2x128xf32>
    %276 = vector.extract_strided_slice %267 {offsets = [0, 128], sizes = [2, 128], strides = [1, 1]} : vector<2x384xf32> to vector<2x128xf32>
    %277 = vector.extract_strided_slice %264 {offsets = [0, 128], sizes = [2, 128], strides = [1, 1]} : vector<2x384xf32> to vector<2x128xf32>
    %278 = arith.addf %276, %277 : vector<2x128xf32>
    %279 = arith.negf %278 : vector<2x128xf32>
    %280 = math.exp %279 : vector<2x128xf32>
    %cst_108 = arith.constant 1.000000e+00 : f32
    %281 = vector.broadcast %cst_108 : f32 to vector<2x128xf32>
    %282 = arith.addf %281, %280 : vector<2x128xf32>
    %283 = arith.divf %281, %282 : vector<2x128xf32>
    %284 = vector.extract_strided_slice %267 {offsets = [0, 256], sizes = [2, 128], strides = [1, 1]} : vector<2x384xf32> to vector<2x128xf32>
    %285 = vector.extract_strided_slice %264 {offsets = [0, 256], sizes = [2, 128], strides = [1, 1]} : vector<2x384xf32> to vector<2x128xf32>
    %286 = arith.mulf %275, %285 : vector<2x128xf32>
    %287 = arith.addf %284, %286 : vector<2x128xf32>
    %288 = math.tanh %287 : vector<2x128xf32>
    %cst_109 = arith.constant 1.000000e+00 : f32
    %289 = vector.broadcast %cst_109 : f32 to vector<2x128xf32>
    %290 = arith.subf %289, %283 : vector<2x128xf32>
    %291 = arith.mulf %290, %288 : vector<2x128xf32>
    %292 = arith.mulf %283, %253 : vector<2x128xf32>
    %293 = arith.addf %291, %292 : vector<2x128xf32>
    %c2_i32_110 = arith.constant 2 : i32
    %294 = arith.muli %c6_i32, %c2_i32_110 : i32
    %295 = arith.index_cast %294 : i32 to index
    %c0_111 = arith.constant 0 : index
    %296 = vector.load %arg14[%295, %c0_111] : memref<16x128xf32, #tpu.memory_space<vmem>>, vector<2x128xf32>
    tpu.vector_store %arg14[%295, %c0_111], %293 {strides = array<i32>} : memref<16x128xf32, #tpu.memory_space<vmem>>, vector<2x128xf32>,
    %c7_i32 = arith.constant 7 : i32
    %c0_112 = arith.constant 0 : index
    %c0_113 = arith.constant 0 : index
    %c0_114 = arith.constant 0 : index
    %297 = vector.load %arg6[%c0_112, %c0_113, %c0_114] : memref<3x128x384xbf16, #tpu.memory_space<vmem>>, vector<1x128x384xbf16>
    %298 = vector.shape_cast %297 : vector<1x128x384xbf16> to vector<128x384xbf16>
    %299 = arith.truncf %293 : vector<2x128xf32> to vector<2x128xbf16>
    %cst_115 = arith.constant dense<0.000000e+00> : vector<2x384xf32>
    %300 = tpu.matmul %299, %298, %cst_115 {dimension_numbers = #tpu.dot_dimension_numbers<[1], [0], [0], [1], [0, 0, 1, 1], [], []>} : vector<2x128xbf16>, vector<128x384xbf16>, vector<2x384xf32> -> vector<2x384xf32>
    %c0_116 = arith.constant 0 : index
    %c0_117 = arith.constant 0 : index
    %c0_118 = arith.constant 0 : index
    %301 = vector.load %arg7[%c0_116, %c0_117, %c0_118] : memref<3x1x384xf32, #tpu.memory_space<vmem>>, vector<1x1x384xf32>
    %302 = vector.shape_cast %301 : vector<1x1x384xf32> to vector<1x384xf32>
    %303 = vector.broadcast %302 : vector<1x384xf32> to vector<2x384xf32>
    %304 = arith.addf %300, %303 : vector<2x384xf32>
    %c2_i32_119 = arith.constant 2 : i32
    %305 = arith.muli %c7_i32, %c2_i32_119 : i32
    %306 = arith.index_cast %305 : i32 to index
    %c0_120 = arith.constant 0 : index
    %307 = vector.load %arg13[%306, %c0_120] : memref<16x384xf32, #tpu.memory_space<vmem>>, vector<2x384xf32>
    %308 = vector.extract_strided_slice %307 {offsets = [0, 0], sizes = [2, 128], strides = [1, 1]} : vector<2x384xf32> to vector<2x128xf32>
    %309 = vector.extract_strided_slice %304 {offsets = [0, 0], sizes = [2, 128], strides = [1, 1]} : vector<2x384xf32> to vector<2x128xf32>
    %310 = arith.addf %308, %309 : vector<2x128xf32>
    %311 = arith.negf %310 : vector<2x128xf32>
    %312 = math.exp %311 : vector<2x128xf32>
    %cst_121 = arith.constant 1.000000e+00 : f32
    %313 = vector.broadcast %cst_121 : f32 to vector<2x128xf32>
    %314 = arith.addf %313, %312 : vector<2x128xf32>
    %315 = arith.divf %313, %314 : vector<2x128xf32>
    %316 = vector.extract_strided_slice %307 {offsets = [0, 128], sizes = [2, 128], strides = [1, 1]} : vector<2x384xf32> to vector<2x128xf32>
    %317 = vector.extract_strided_slice %304 {offsets = [0, 128], sizes = [2, 128], strides = [1, 1]} : vector<2x384xf32> to vector<2x128xf32>
    %318 = arith.addf %316, %317 : vector<2x128xf32>
    %319 = arith.negf %318 : vector<2x128xf32>
    %320 = math.exp %319 : vector<2x128xf32>
    %cst_122 = arith.constant 1.000000e+00 : f32
    %321 = vector.broadcast %cst_122 : f32 to vector<2x128xf32>
    %322 = arith.addf %321, %320 : vector<2x128xf32>
    %323 = arith.divf %321, %322 : vector<2x128xf32>
    %324 = vector.extract_strided_slice %307 {offsets = [0, 256], sizes = [2, 128], strides = [1, 1]} : vector<2x384xf32> to vector<2x128xf32>
    %325 = vector.extract_strided_slice %304 {offsets = [0, 256], sizes = [2, 128], strides = [1, 1]} : vector<2x384xf32> to vector<2x128xf32>
    %326 = arith.mulf %315, %325 : vector<2x128xf32>
    %327 = arith.addf %324, %326 : vector<2x128xf32>
    %328 = math.tanh %327 : vector<2x128xf32>
    %cst_123 = arith.constant 1.000000e+00 : f32
    %329 = vector.broadcast %cst_123 : f32 to vector<2x128xf32>
    %330 = arith.subf %329, %323 : vector<2x128xf32>
    %331 = arith.mulf %330, %328 : vector<2x128xf32>
    %332 = arith.mulf %323, %293 : vector<2x128xf32>
    %333 = arith.addf %331, %332 : vector<2x128xf32>
    %c2_i32_124 = arith.constant 2 : i32
    %334 = arith.muli %c7_i32, %c2_i32_124 : i32
    %335 = arith.index_cast %334 : i32 to index
    %c0_125 = arith.constant 0 : index
    %336 = vector.load %arg14[%335, %c0_125] : memref<16x128xf32, #tpu.memory_space<vmem>>, vector<2x128xf32>
    tpu.vector_store %arg14[%335, %c0_125], %333 {strides = array<i32>} : memref<16x128xf32, #tpu.memory_space<vmem>>, vector<2x128xf32>,
    %c8_i32 = arith.constant 8 : i32
    %c0_126 = arith.constant 0 : index
    %c0_127 = arith.constant 0 : index
    %337 = vector.load %arg14[%c0_126, %c0_127] : memref<16x128xf32, #tpu.memory_space<vmem>>, vector<16x128xf32>
    %c1 = arith.constant 1 : index
    %c0_128 = arith.constant 0 : index
    %c0_129 = arith.constant 0 : index
    %338 = vector.load %arg6[%c1, %c0_128, %c0_129] : memref<3x128x384xbf16, #tpu.memory_space<vmem>>, vector<1x128x384xbf16>
    %339 = vector.shape_cast %338 : vector<1x128x384xbf16> to vector<128x384xbf16>
    %340 = arith.truncf %337 : vector<16x128xf32> to vector<16x128xbf16>
    %cst_130 = arith.constant dense<0.000000e+00> : vector<16x384xf32>
    %341 = tpu.matmul %340, %339, %cst_130 {dimension_numbers = #tpu.dot_dimension_numbers<[1], [0], [0], [1], [0, 0, 1, 1], [], []>} : vector<16x128xbf16>, vector<128x384xbf16>, vector<16x384xf32> -> vector<16x384xf32>
    %c1_131 = arith.constant 1 : index
    %c0_132 = arith.constant 0 : index
    %c0_133 = arith.constant 0 : index
    %342 = vector.load %arg7[%c1_131, %c0_132, %c0_133] : memref<3x1x384xf32, #tpu.memory_space<vmem>>, vector<1x1x384xf32>
    %343 = vector.shape_cast %342 : vector<1x1x384xf32> to vector<1x384xf32>
    %344 = vector.broadcast %343 : vector<1x384xf32> to vector<16x384xf32>
    %345 = arith.addf %341, %344 : vector<16x384xf32>
    %c0_134 = arith.constant 0 : index
    %c0_135 = arith.constant 0 : index
    %346 = vector.load %arg15[%c0_134, %c0_135] : memref<16x384xf32, #tpu.memory_space<vmem>>, vector<16x384xf32>
    tpu.vector_store %arg15[%c0_134, %c0_135], %345 {strides = array<i32>} : memref<16x384xf32, #tpu.memory_space<vmem>>, vector<16x384xf32>,
    %c0_i32_136 = arith.constant 0 : i32
    %c2 = arith.constant 2 : index
    %c0_137 = arith.constant 0 : index
    %c0_138 = arith.constant 0 : index
    %347 = vector.load %arg6[%c2, %c0_137, %c0_138] : memref<3x128x384xbf16, #tpu.memory_space<vmem>>, vector<1x128x384xbf16>
    %348 = vector.shape_cast %347 : vector<1x128x384xbf16> to vector<128x384xbf16>
    %349 = arith.truncf %16 : vector<2x128xf32> to vector<2x128xbf16>
    %cst_139 = arith.constant dense<0.000000e+00> : vector<2x384xf32>
    %350 = tpu.matmul %349, %348, %cst_139 {dimension_numbers = #tpu.dot_dimension_numbers<[1], [0], [0], [1], [0, 0, 1, 1], [], []>} : vector<2x128xbf16>, vector<128x384xbf16>, vector<2x384xf32> -> vector<2x384xf32>
    %c2_140 = arith.constant 2 : index
    %c0_141 = arith.constant 0 : index
    %c0_142 = arith.constant 0 : index
    %351 = vector.load %arg7[%c2_140, %c0_141, %c0_142] : memref<3x1x384xf32, #tpu.memory_space<vmem>>, vector<1x1x384xf32>
    %352 = vector.shape_cast %351 : vector<1x1x384xf32> to vector<1x384xf32>
    %353 = vector.broadcast %352 : vector<1x384xf32> to vector<2x384xf32>
    %354 = arith.addf %350, %353 : vector<2x384xf32>
    %c2_i32_143 = arith.constant 2 : i32
    %355 = arith.muli %c0_i32_136, %c2_i32_143 : i32
    %356 = arith.index_cast %355 : i32 to index
    %c0_144 = arith.constant 0 : index
    %357 = vector.load %arg15[%356, %c0_144] : memref<16x384xf32, #tpu.memory_space<vmem>>, vector<2x384xf32>
    %358 = vector.extract_strided_slice %357 {offsets = [0, 0], sizes = [2, 128], strides = [1, 1]} : vector<2x384xf32> to vector<2x128xf32>
    %359 = vector.extract_strided_slice %354 {offsets = [0, 0], sizes = [2, 128], strides = [1, 1]} : vector<2x384xf32> to vector<2x128xf32>
    %360 = arith.addf %358, %359 : vector<2x128xf32>
    %361 = arith.negf %360 : vector<2x128xf32>
    %362 = math.exp %361 : vector<2x128xf32>
    %cst_145 = arith.constant 1.000000e+00 : f32
    %363 = vector.broadcast %cst_145 : f32 to vector<2x128xf32>
    %364 = arith.addf %363, %362 : vector<2x128xf32>
    %365 = arith.divf %363, %364 : vector<2x128xf32>
    %366 = vector.extract_strided_slice %357 {offsets = [0, 128], sizes = [2, 128], strides = [1, 1]} : vector<2x384xf32> to vector<2x128xf32>
    %367 = vector.extract_strided_slice %354 {offsets = [0, 128], sizes = [2, 128], strides = [1, 1]} : vector<2x384xf32> to vector<2x128xf32>
    %368 = arith.addf %366, %367 : vector<2x128xf32>
    %369 = arith.negf %368 : vector<2x128xf32>
    %370 = math.exp %369 : vector<2x128xf32>
    %cst_146 = arith.constant 1.000000e+00 : f32
    %371 = vector.broadcast %cst_146 : f32 to vector<2x128xf32>
    %372 = arith.addf %371, %370 : vector<2x128xf32>
    %373 = arith.divf %371, %372 : vector<2x128xf32>
    %374 = vector.extract_strided_slice %357 {offsets = [0, 256], sizes = [2, 128], strides = [1, 1]} : vector<2x384xf32> to vector<2x128xf32>
    %375 = vector.extract_strided_slice %354 {offsets = [0, 256], sizes = [2, 128], strides = [1, 1]} : vector<2x384xf32> to vector<2x128xf32>
    %376 = arith.mulf %365, %375 : vector<2x128xf32>
    %377 = arith.addf %374, %376 : vector<2x128xf32>
    %378 = math.tanh %377 : vector<2x128xf32>
    %cst_147 = arith.constant 1.000000e+00 : f32
    %379 = vector.broadcast %cst_147 : f32 to vector<2x128xf32>
    %380 = arith.subf %379, %373 : vector<2x128xf32>
    %381 = arith.mulf %380, %378 : vector<2x128xf32>
    %382 = arith.mulf %373, %16 : vector<2x128xf32>
    %383 = arith.addf %381, %382 : vector<2x128xf32>
    %c2_i32_148 = arith.constant 2 : i32
    %384 = arith.muli %c0_i32_136, %c2_i32_148 : i32
    %385 = arith.index_cast %384 : i32 to index
    %c0_149 = arith.constant 0 : index
    %386 = vector.load %arg16[%385, %c0_149] : memref<16x128xf32, #tpu.memory_space<vmem>>, vector<2x128xf32>
    tpu.vector_store %arg16[%385, %c0_149], %383 {strides = array<i32>} : memref<16x128xf32, #tpu.memory_space<vmem>>, vector<2x128xf32>,
    %c1_i32_150 = arith.constant 1 : i32
    %c2_151 = arith.constant 2 : index
    %c0_152 = arith.constant 0 : index
    %c0_153 = arith.constant 0 : index
    %387 = vector.load %arg6[%c2_151, %c0_152, %c0_153] : memref<3x128x384xbf16, #tpu.memory_space<vmem>>, vector<1x128x384xbf16>
    %388 = vector.shape_cast %387 : vector<1x128x384xbf16> to vector<128x384xbf16>
    %389 = arith.truncf %383 : vector<2x128xf32> to vector<2x128xbf16>
    %cst_154 = arith.constant dense<0.000000e+00> : vector<2x384xf32>
    %390 = tpu.matmul %389, %388, %cst_154 {dimension_numbers = #tpu.dot_dimension_numbers<[1], [0], [0], [1], [0, 0, 1, 1], [], []>} : vector<2x128xbf16>, vector<128x384xbf16>, vector<2x384xf32> -> vector<2x384xf32>
    %c2_155 = arith.constant 2 : index
    %c0_156 = arith.constant 0 : index
    %c0_157 = arith.constant 0 : index
    %391 = vector.load %arg7[%c2_155, %c0_156, %c0_157] : memref<3x1x384xf32, #tpu.memory_space<vmem>>, vector<1x1x384xf32>
    %392 = vector.shape_cast %391 : vector<1x1x384xf32> to vector<1x384xf32>
    %393 = vector.broadcast %392 : vector<1x384xf32> to vector<2x384xf32>
    %394 = arith.addf %390, %393 : vector<2x384xf32>
    %c2_i32_158 = arith.constant 2 : i32
    %395 = arith.muli %c1_i32_150, %c2_i32_158 : i32
    %396 = arith.index_cast %395 : i32 to index
    %c0_159 = arith.constant 0 : index
    %397 = vector.load %arg15[%396, %c0_159] : memref<16x384xf32, #tpu.memory_space<vmem>>, vector<2x384xf32>
    %398 = vector.extract_strided_slice %397 {offsets = [0, 0], sizes = [2, 128], strides = [1, 1]} : vector<2x384xf32> to vector<2x128xf32>
    %399 = vector.extract_strided_slice %394 {offsets = [0, 0], sizes = [2, 128], strides = [1, 1]} : vector<2x384xf32> to vector<2x128xf32>
    %400 = arith.addf %398, %399 : vector<2x128xf32>
    %401 = arith.negf %400 : vector<2x128xf32>
    %402 = math.exp %401 : vector<2x128xf32>
    %cst_160 = arith.constant 1.000000e+00 : f32
    %403 = vector.broadcast %cst_160 : f32 to vector<2x128xf32>
    %404 = arith.addf %403, %402 : vector<2x128xf32>
    %405 = arith.divf %403, %404 : vector<2x128xf32>
    %406 = vector.extract_strided_slice %397 {offsets = [0, 128], sizes = [2, 128], strides = [1, 1]} : vector<2x384xf32> to vector<2x128xf32>
    %407 = vector.extract_strided_slice %394 {offsets = [0, 128], sizes = [2, 128], strides = [1, 1]} : vector<2x384xf32> to vector<2x128xf32>
    %408 = arith.addf %406, %407 : vector<2x128xf32>
    %409 = arith.negf %408 : vector<2x128xf32>
    %410 = math.exp %409 : vector<2x128xf32>
    %cst_161 = arith.constant 1.000000e+00 : f32
    %411 = vector.broadcast %cst_161 : f32 to vector<2x128xf32>
    %412 = arith.addf %411, %410 : vector<2x128xf32>
    %413 = arith.divf %411, %412 : vector<2x128xf32>
    %414 = vector.extract_strided_slice %397 {offsets = [0, 256], sizes = [2, 128], strides = [1, 1]} : vector<2x384xf32> to vector<2x128xf32>
    %415 = vector.extract_strided_slice %394 {offsets = [0, 256], sizes = [2, 128], strides = [1, 1]} : vector<2x384xf32> to vector<2x128xf32>
    %416 = arith.mulf %405, %415 : vector<2x128xf32>
    %417 = arith.addf %414, %416 : vector<2x128xf32>
    %418 = math.tanh %417 : vector<2x128xf32>
    %cst_162 = arith.constant 1.000000e+00 : f32
    %419 = vector.broadcast %cst_162 : f32 to vector<2x128xf32>
    %420 = arith.subf %419, %413 : vector<2x128xf32>
    %421 = arith.mulf %420, %418 : vector<2x128xf32>
    %422 = arith.mulf %413, %383 : vector<2x128xf32>
    %423 = arith.addf %421, %422 : vector<2x128xf32>
    %c2_i32_163 = arith.constant 2 : i32
    %424 = arith.muli %c1_i32_150, %c2_i32_163 : i32
    %425 = arith.index_cast %424 : i32 to index
    %c0_164 = arith.constant 0 : index
    %426 = vector.load %arg16[%425, %c0_164] : memref<16x128xf32, #tpu.memory_space<vmem>>, vector<2x128xf32>
    tpu.vector_store %arg16[%425, %c0_164], %423 {strides = array<i32>} : memref<16x128xf32, #tpu.memory_space<vmem>>, vector<2x128xf32>,
    %c2_i32_165 = arith.constant 2 : i32
    %c2_166 = arith.constant 2 : index
    %c0_167 = arith.constant 0 : index
    %c0_168 = arith.constant 0 : index
    %427 = vector.load %arg6[%c2_166, %c0_167, %c0_168] : memref<3x128x384xbf16, #tpu.memory_space<vmem>>, vector<1x128x384xbf16>
    %428 = vector.shape_cast %427 : vector<1x128x384xbf16> to vector<128x384xbf16>
    %429 = arith.truncf %423 : vector<2x128xf32> to vector<2x128xbf16>
    %cst_169 = arith.constant dense<0.000000e+00> : vector<2x384xf32>
    %430 = tpu.matmul %429, %428, %cst_169 {dimension_numbers = #tpu.dot_dimension_numbers<[1], [0], [0], [1], [0, 0, 1, 1], [], []>} : vector<2x128xbf16>, vector<128x384xbf16>, vector<2x384xf32> -> vector<2x384xf32>
    %c2_170 = arith.constant 2 : index
    %c0_171 = arith.constant 0 : index
    %c0_172 = arith.constant 0 : index
    %431 = vector.load %arg7[%c2_170, %c0_171, %c0_172] : memref<3x1x384xf32, #tpu.memory_space<vmem>>, vector<1x1x384xf32>
    %432 = vector.shape_cast %431 : vector<1x1x384xf32> to vector<1x384xf32>
    %433 = vector.broadcast %432 : vector<1x384xf32> to vector<2x384xf32>
    %434 = arith.addf %430, %433 : vector<2x384xf32>
    %c2_i32_173 = arith.constant 2 : i32
    %435 = arith.muli %c2_i32_165, %c2_i32_173 : i32
    %436 = arith.index_cast %435 : i32 to index
    %c0_174 = arith.constant 0 : index
    %437 = vector.load %arg15[%436, %c0_174] : memref<16x384xf32, #tpu.memory_space<vmem>>, vector<2x384xf32>
    %438 = vector.extract_strided_slice %437 {offsets = [0, 0], sizes = [2, 128], strides = [1, 1]} : vector<2x384xf32> to vector<2x128xf32>
    %439 = vector.extract_strided_slice %434 {offsets = [0, 0], sizes = [2, 128], strides = [1, 1]} : vector<2x384xf32> to vector<2x128xf32>
    %440 = arith.addf %438, %439 : vector<2x128xf32>
    %441 = arith.negf %440 : vector<2x128xf32>
    %442 = math.exp %441 : vector<2x128xf32>
    %cst_175 = arith.constant 1.000000e+00 : f32
    %443 = vector.broadcast %cst_175 : f32 to vector<2x128xf32>
    %444 = arith.addf %443, %442 : vector<2x128xf32>
    %445 = arith.divf %443, %444 : vector<2x128xf32>
    %446 = vector.extract_strided_slice %437 {offsets = [0, 128], sizes = [2, 128], strides = [1, 1]} : vector<2x384xf32> to vector<2x128xf32>
    %447 = vector.extract_strided_slice %434 {offsets = [0, 128], sizes = [2, 128], strides = [1, 1]} : vector<2x384xf32> to vector<2x128xf32>
    %448 = arith.addf %446, %447 : vector<2x128xf32>
    %449 = arith.negf %448 : vector<2x128xf32>
    %450 = math.exp %449 : vector<2x128xf32>
    %cst_176 = arith.constant 1.000000e+00 : f32
    %451 = vector.broadcast %cst_176 : f32 to vector<2x128xf32>
    %452 = arith.addf %451, %450 : vector<2x128xf32>
    %453 = arith.divf %451, %452 : vector<2x128xf32>
    %454 = vector.extract_strided_slice %437 {offsets = [0, 256], sizes = [2, 128], strides = [1, 1]} : vector<2x384xf32> to vector<2x128xf32>
    %455 = vector.extract_strided_slice %434 {offsets = [0, 256], sizes = [2, 128], strides = [1, 1]} : vector<2x384xf32> to vector<2x128xf32>
    %456 = arith.mulf %445, %455 : vector<2x128xf32>
    %457 = arith.addf %454, %456 : vector<2x128xf32>
    %458 = math.tanh %457 : vector<2x128xf32>
    %cst_177 = arith.constant 1.000000e+00 : f32
    %459 = vector.broadcast %cst_177 : f32 to vector<2x128xf32>
    %460 = arith.subf %459, %453 : vector<2x128xf32>
    %461 = arith.mulf %460, %458 : vector<2x128xf32>
    %462 = arith.mulf %453, %423 : vector<2x128xf32>
    %463 = arith.addf %461, %462 : vector<2x128xf32>
    %c2_i32_178 = arith.constant 2 : i32
    %464 = arith.muli %c2_i32_165, %c2_i32_178 : i32
    %465 = arith.index_cast %464 : i32 to index
    %c0_179 = arith.constant 0 : index
    %466 = vector.load %arg16[%465, %c0_179] : memref<16x128xf32, #tpu.memory_space<vmem>>, vector<2x128xf32>
    tpu.vector_store %arg16[%465, %c0_179], %463 {strides = array<i32>} : memref<16x128xf32, #tpu.memory_space<vmem>>, vector<2x128xf32>,
    %c3_i32_180 = arith.constant 3 : i32
    %c2_181 = arith.constant 2 : index
    %c0_182 = arith.constant 0 : index
    %c0_183 = arith.constant 0 : index
    %467 = vector.load %arg6[%c2_181, %c0_182, %c0_183] : memref<3x128x384xbf16, #tpu.memory_space<vmem>>, vector<1x128x384xbf16>
    %468 = vector.shape_cast %467 : vector<1x128x384xbf16> to vector<128x384xbf16>
    %469 = arith.truncf %463 : vector<2x128xf32> to vector<2x128xbf16>
    %cst_184 = arith.constant dense<0.000000e+00> : vector<2x384xf32>
    %470 = tpu.matmul %469, %468, %cst_184 {dimension_numbers = #tpu.dot_dimension_numbers<[1], [0], [0], [1], [0, 0, 1, 1], [], []>} : vector<2x128xbf16>, vector<128x384xbf16>, vector<2x384xf32> -> vector<2x384xf32>
    %c2_185 = arith.constant 2 : index
    %c0_186 = arith.constant 0 : index
    %c0_187 = arith.constant 0 : index
    %471 = vector.load %arg7[%c2_185, %c0_186, %c0_187] : memref<3x1x384xf32, #tpu.memory_space<vmem>>, vector<1x1x384xf32>
    %472 = vector.shape_cast %471 : vector<1x1x384xf32> to vector<1x384xf32>
    %473 = vector.broadcast %472 : vector<1x384xf32> to vector<2x384xf32>
    %474 = arith.addf %470, %473 : vector<2x384xf32>
    %c2_i32_188 = arith.constant 2 : i32
    %475 = arith.muli %c3_i32_180, %c2_i32_188 : i32
    %476 = arith.index_cast %475 : i32 to index
    %c0_189 = arith.constant 0 : index
    %477 = vector.load %arg15[%476, %c0_189] : memref<16x384xf32, #tpu.memory_space<vmem>>, vector<2x384xf32>
    %478 = vector.extract_strided_slice %477 {offsets = [0, 0], sizes = [2, 128], strides = [1, 1]} : vector<2x384xf32> to vector<2x128xf32>
    %479 = vector.extract_strided_slice %474 {offsets = [0, 0], sizes = [2, 128], strides = [1, 1]} : vector<2x384xf32> to vector<2x128xf32>
    %480 = arith.addf %478, %479 : vector<2x128xf32>
    %481 = arith.negf %480 : vector<2x128xf32>
    %482 = math.exp %481 : vector<2x128xf32>
    %cst_190 = arith.constant 1.000000e+00 : f32
    %483 = vector.broadcast %cst_190 : f32 to vector<2x128xf32>
    %484 = arith.addf %483, %482 : vector<2x128xf32>
    %485 = arith.divf %483, %484 : vector<2x128xf32>
    %486 = vector.extract_strided_slice %477 {offsets = [0, 128], sizes = [2, 128], strides = [1, 1]} : vector<2x384xf32> to vector<2x128xf32>
    %487 = vector.extract_strided_slice %474 {offsets = [0, 128], sizes = [2, 128], strides = [1, 1]} : vector<2x384xf32> to vector<2x128xf32>
    %488 = arith.addf %486, %487 : vector<2x128xf32>
    %489 = arith.negf %488 : vector<2x128xf32>
    %490 = math.exp %489 : vector<2x128xf32>
    %cst_191 = arith.constant 1.000000e+00 : f32
    %491 = vector.broadcast %cst_191 : f32 to vector<2x128xf32>
    %492 = arith.addf %491, %490 : vector<2x128xf32>
    %493 = arith.divf %491, %492 : vector<2x128xf32>
    %494 = vector.extract_strided_slice %477 {offsets = [0, 256], sizes = [2, 128], strides = [1, 1]} : vector<2x384xf32> to vector<2x128xf32>
    %495 = vector.extract_strided_slice %474 {offsets = [0, 256], sizes = [2, 128], strides = [1, 1]} : vector<2x384xf32> to vector<2x128xf32>
    %496 = arith.mulf %485, %495 : vector<2x128xf32>
    %497 = arith.addf %494, %496 : vector<2x128xf32>
    %498 = math.tanh %497 : vector<2x128xf32>
    %cst_192 = arith.constant 1.000000e+00 : f32
    %499 = vector.broadcast %cst_192 : f32 to vector<2x128xf32>
    %500 = arith.subf %499, %493 : vector<2x128xf32>
    %501 = arith.mulf %500, %498 : vector<2x128xf32>
    %502 = arith.mulf %493, %463 : vector<2x128xf32>
    %503 = arith.addf %501, %502 : vector<2x128xf32>
    %c2_i32_193 = arith.constant 2 : i32
    %504 = arith.muli %c3_i32_180, %c2_i32_193 : i32
    %505 = arith.index_cast %504 : i32 to index
    %c0_194 = arith.constant 0 : index
    %506 = vector.load %arg16[%505, %c0_194] : memref<16x128xf32, #tpu.memory_space<vmem>>, vector<2x128xf32>
    tpu.vector_store %arg16[%505, %c0_194], %503 {strides = array<i32>} : memref<16x128xf32, #tpu.memory_space<vmem>>, vector<2x128xf32>,
    %c4_i32_195 = arith.constant 4 : i32
    %c2_196 = arith.constant 2 : index
    %c0_197 = arith.constant 0 : index
    %c0_198 = arith.constant 0 : index
    %507 = vector.load %arg6[%c2_196, %c0_197, %c0_198] : memref<3x128x384xbf16, #tpu.memory_space<vmem>>, vector<1x128x384xbf16>
    %508 = vector.shape_cast %507 : vector<1x128x384xbf16> to vector<128x384xbf16>
    %509 = arith.truncf %503 : vector<2x128xf32> to vector<2x128xbf16>
    %cst_199 = arith.constant dense<0.000000e+00> : vector<2x384xf32>
    %510 = tpu.matmul %509, %508, %cst_199 {dimension_numbers = #tpu.dot_dimension_numbers<[1], [0], [0], [1], [0, 0, 1, 1], [], []>} : vector<2x128xbf16>, vector<128x384xbf16>, vector<2x384xf32> -> vector<2x384xf32>
    %c2_200 = arith.constant 2 : index
    %c0_201 = arith.constant 0 : index
    %c0_202 = arith.constant 0 : index
    %511 = vector.load %arg7[%c2_200, %c0_201, %c0_202] : memref<3x1x384xf32, #tpu.memory_space<vmem>>, vector<1x1x384xf32>
    %512 = vector.shape_cast %511 : vector<1x1x384xf32> to vector<1x384xf32>
    %513 = vector.broadcast %512 : vector<1x384xf32> to vector<2x384xf32>
    %514 = arith.addf %510, %513 : vector<2x384xf32>
    %c2_i32_203 = arith.constant 2 : i32
    %515 = arith.muli %c4_i32_195, %c2_i32_203 : i32
    %516 = arith.index_cast %515 : i32 to index
    %c0_204 = arith.constant 0 : index
    %517 = vector.load %arg15[%516, %c0_204] : memref<16x384xf32, #tpu.memory_space<vmem>>, vector<2x384xf32>
    %518 = vector.extract_strided_slice %517 {offsets = [0, 0], sizes = [2, 128], strides = [1, 1]} : vector<2x384xf32> to vector<2x128xf32>
    %519 = vector.extract_strided_slice %514 {offsets = [0, 0], sizes = [2, 128], strides = [1, 1]} : vector<2x384xf32> to vector<2x128xf32>
    %520 = arith.addf %518, %519 : vector<2x128xf32>
    %521 = arith.negf %520 : vector<2x128xf32>
    %522 = math.exp %521 : vector<2x128xf32>
    %cst_205 = arith.constant 1.000000e+00 : f32
    %523 = vector.broadcast %cst_205 : f32 to vector<2x128xf32>
    %524 = arith.addf %523, %522 : vector<2x128xf32>
    %525 = arith.divf %523, %524 : vector<2x128xf32>
    %526 = vector.extract_strided_slice %517 {offsets = [0, 128], sizes = [2, 128], strides = [1, 1]} : vector<2x384xf32> to vector<2x128xf32>
    %527 = vector.extract_strided_slice %514 {offsets = [0, 128], sizes = [2, 128], strides = [1, 1]} : vector<2x384xf32> to vector<2x128xf32>
    %528 = arith.addf %526, %527 : vector<2x128xf32>
    %529 = arith.negf %528 : vector<2x128xf32>
    %530 = math.exp %529 : vector<2x128xf32>
    %cst_206 = arith.constant 1.000000e+00 : f32
    %531 = vector.broadcast %cst_206 : f32 to vector<2x128xf32>
    %532 = arith.addf %531, %530 : vector<2x128xf32>
    %533 = arith.divf %531, %532 : vector<2x128xf32>
    %534 = vector.extract_strided_slice %517 {offsets = [0, 256], sizes = [2, 128], strides = [1, 1]} : vector<2x384xf32> to vector<2x128xf32>
    %535 = vector.extract_strided_slice %514 {offsets = [0, 256], sizes = [2, 128], strides = [1, 1]} : vector<2x384xf32> to vector<2x128xf32>
    %536 = arith.mulf %525, %535 : vector<2x128xf32>
    %537 = arith.addf %534, %536 : vector<2x128xf32>
    %538 = math.tanh %537 : vector<2x128xf32>
    %cst_207 = arith.constant 1.000000e+00 : f32
    %539 = vector.broadcast %cst_207 : f32 to vector<2x128xf32>
    %540 = arith.subf %539, %533 : vector<2x128xf32>
    %541 = arith.mulf %540, %538 : vector<2x128xf32>
    %542 = arith.mulf %533, %503 : vector<2x128xf32>
    %543 = arith.addf %541, %542 : vector<2x128xf32>
    %c2_i32_208 = arith.constant 2 : i32
    %544 = arith.muli %c4_i32_195, %c2_i32_208 : i32
    %545 = arith.index_cast %544 : i32 to index
    %c0_209 = arith.constant 0 : index
    %546 = vector.load %arg16[%545, %c0_209] : memref<16x128xf32, #tpu.memory_space<vmem>>, vector<2x128xf32>
    tpu.vector_store %arg16[%545, %c0_209], %543 {strides = array<i32>} : memref<16x128xf32, #tpu.memory_space<vmem>>, vector<2x128xf32>,
    %c5_i32_210 = arith.constant 5 : i32
    %c2_211 = arith.constant 2 : index
    %c0_212 = arith.constant 0 : index
    %c0_213 = arith.constant 0 : index
    %547 = vector.load %arg6[%c2_211, %c0_212, %c0_213] : memref<3x128x384xbf16, #tpu.memory_space<vmem>>, vector<1x128x384xbf16>
    %548 = vector.shape_cast %547 : vector<1x128x384xbf16> to vector<128x384xbf16>
    %549 = arith.truncf %543 : vector<2x128xf32> to vector<2x128xbf16>
    %cst_214 = arith.constant dense<0.000000e+00> : vector<2x384xf32>
    %550 = tpu.matmul %549, %548, %cst_214 {dimension_numbers = #tpu.dot_dimension_numbers<[1], [0], [0], [1], [0, 0, 1, 1], [], []>} : vector<2x128xbf16>, vector<128x384xbf16>, vector<2x384xf32> -> vector<2x384xf32>
    %c2_215 = arith.constant 2 : index
    %c0_216 = arith.constant 0 : index
    %c0_217 = arith.constant 0 : index
    %551 = vector.load %arg7[%c2_215, %c0_216, %c0_217] : memref<3x1x384xf32, #tpu.memory_space<vmem>>, vector<1x1x384xf32>
    %552 = vector.shape_cast %551 : vector<1x1x384xf32> to vector<1x384xf32>
    %553 = vector.broadcast %552 : vector<1x384xf32> to vector<2x384xf32>
    %554 = arith.addf %550, %553 : vector<2x384xf32>
    %c2_i32_218 = arith.constant 2 : i32
    %555 = arith.muli %c5_i32_210, %c2_i32_218 : i32
    %556 = arith.index_cast %555 : i32 to index
    %c0_219 = arith.constant 0 : index
    %557 = vector.load %arg15[%556, %c0_219] : memref<16x384xf32, #tpu.memory_space<vmem>>, vector<2x384xf32>
    %558 = vector.extract_strided_slice %557 {offsets = [0, 0], sizes = [2, 128], strides = [1, 1]} : vector<2x384xf32> to vector<2x128xf32>
    %559 = vector.extract_strided_slice %554 {offsets = [0, 0], sizes = [2, 128], strides = [1, 1]} : vector<2x384xf32> to vector<2x128xf32>
    %560 = arith.addf %558, %559 : vector<2x128xf32>
    %561 = arith.negf %560 : vector<2x128xf32>
    %562 = math.exp %561 : vector<2x128xf32>
    %cst_220 = arith.constant 1.000000e+00 : f32
    %563 = vector.broadcast %cst_220 : f32 to vector<2x128xf32>
    %564 = arith.addf %563, %562 : vector<2x128xf32>
    %565 = arith.divf %563, %564 : vector<2x128xf32>
    %566 = vector.extract_strided_slice %557 {offsets = [0, 128], sizes = [2, 128], strides = [1, 1]} : vector<2x384xf32> to vector<2x128xf32>
    %567 = vector.extract_strided_slice %554 {offsets = [0, 128], sizes = [2, 128], strides = [1, 1]} : vector<2x384xf32> to vector<2x128xf32>
    %568 = arith.addf %566, %567 : vector<2x128xf32>
    %569 = arith.negf %568 : vector<2x128xf32>
    %570 = math.exp %569 : vector<2x128xf32>
    %cst_221 = arith.constant 1.000000e+00 : f32
    %571 = vector.broadcast %cst_221 : f32 to vector<2x128xf32>
    %572 = arith.addf %571, %570 : vector<2x128xf32>
    %573 = arith.divf %571, %572 : vector<2x128xf32>
    %574 = vector.extract_strided_slice %557 {offsets = [0, 256], sizes = [2, 128], strides = [1, 1]} : vector<2x384xf32> to vector<2x128xf32>
    %575 = vector.extract_strided_slice %554 {offsets = [0, 256], sizes = [2, 128], strides = [1, 1]} : vector<2x384xf32> to vector<2x128xf32>
    %576 = arith.mulf %565, %575 : vector<2x128xf32>
    %577 = arith.addf %574, %576 : vector<2x128xf32>
    %578 = math.tanh %577 : vector<2x128xf32>
    %cst_222 = arith.constant 1.000000e+00 : f32
    %579 = vector.broadcast %cst_222 : f32 to vector<2x128xf32>
    %580 = arith.subf %579, %573 : vector<2x128xf32>
    %581 = arith.mulf %580, %578 : vector<2x128xf32>
    %582 = arith.mulf %573, %543 : vector<2x128xf32>
    %583 = arith.addf %581, %582 : vector<2x128xf32>
    %c2_i32_223 = arith.constant 2 : i32
    %584 = arith.muli %c5_i32_210, %c2_i32_223 : i32
    %585 = arith.index_cast %584 : i32 to index
    %c0_224 = arith.constant 0 : index
    %586 = vector.load %arg16[%585, %c0_224] : memref<16x128xf32, #tpu.memory_space<vmem>>, vector<2x128xf32>
    tpu.vector_store %arg16[%585, %c0_224], %583 {strides = array<i32>} : memref<16x128xf32, #tpu.memory_space<vmem>>, vector<2x128xf32>,
    %c6_i32_225 = arith.constant 6 : i32
    %c2_226 = arith.constant 2 : index
    %c0_227 = arith.constant 0 : index
    %c0_228 = arith.constant 0 : index
    %587 = vector.load %arg6[%c2_226, %c0_227, %c0_228] : memref<3x128x384xbf16, #tpu.memory_space<vmem>>, vector<1x128x384xbf16>
    %588 = vector.shape_cast %587 : vector<1x128x384xbf16> to vector<128x384xbf16>
    %589 = arith.truncf %583 : vector<2x128xf32> to vector<2x128xbf16>
    %cst_229 = arith.constant dense<0.000000e+00> : vector<2x384xf32>
    %590 = tpu.matmul %589, %588, %cst_229 {dimension_numbers = #tpu.dot_dimension_numbers<[1], [0], [0], [1], [0, 0, 1, 1], [], []>} : vector<2x128xbf16>, vector<128x384xbf16>, vector<2x384xf32> -> vector<2x384xf32>
    %c2_230 = arith.constant 2 : index
    %c0_231 = arith.constant 0 : index
    %c0_232 = arith.constant 0 : index
    %591 = vector.load %arg7[%c2_230, %c0_231, %c0_232] : memref<3x1x384xf32, #tpu.memory_space<vmem>>, vector<1x1x384xf32>
    %592 = vector.shape_cast %591 : vector<1x1x384xf32> to vector<1x384xf32>
    %593 = vector.broadcast %592 : vector<1x384xf32> to vector<2x384xf32>
    %594 = arith.addf %590, %593 : vector<2x384xf32>
    %c2_i32_233 = arith.constant 2 : i32
    %595 = arith.muli %c6_i32_225, %c2_i32_233 : i32
    %596 = arith.index_cast %595 : i32 to index
    %c0_234 = arith.constant 0 : index
    %597 = vector.load %arg15[%596, %c0_234] : memref<16x384xf32, #tpu.memory_space<vmem>>, vector<2x384xf32>
    %598 = vector.extract_strided_slice %597 {offsets = [0, 0], sizes = [2, 128], strides = [1, 1]} : vector<2x384xf32> to vector<2x128xf32>
    %599 = vector.extract_strided_slice %594 {offsets = [0, 0], sizes = [2, 128], strides = [1, 1]} : vector<2x384xf32> to vector<2x128xf32>
    %600 = arith.addf %598, %599 : vector<2x128xf32>
    %601 = arith.negf %600 : vector<2x128xf32>
    %602 = math.exp %601 : vector<2x128xf32>
    %cst_235 = arith.constant 1.000000e+00 : f32
    %603 = vector.broadcast %cst_235 : f32 to vector<2x128xf32>
    %604 = arith.addf %603, %602 : vector<2x128xf32>
    %605 = arith.divf %603, %604 : vector<2x128xf32>
    %606 = vector.extract_strided_slice %597 {offsets = [0, 128], sizes = [2, 128], strides = [1, 1]} : vector<2x384xf32> to vector<2x128xf32>
    %607 = vector.extract_strided_slice %594 {offsets = [0, 128], sizes = [2, 128], strides = [1, 1]} : vector<2x384xf32> to vector<2x128xf32>
    %608 = arith.addf %606, %607 : vector<2x128xf32>
    %609 = arith.negf %608 : vector<2x128xf32>
    %610 = math.exp %609 : vector<2x128xf32>
    %cst_236 = arith.constant 1.000000e+00 : f32
    %611 = vector.broadcast %cst_236 : f32 to vector<2x128xf32>
    %612 = arith.addf %611, %610 : vector<2x128xf32>
    %613 = arith.divf %611, %612 : vector<2x128xf32>
    %614 = vector.extract_strided_slice %597 {offsets = [0, 256], sizes = [2, 128], strides = [1, 1]} : vector<2x384xf32> to vector<2x128xf32>
    %615 = vector.extract_strided_slice %594 {offsets = [0, 256], sizes = [2, 128], strides = [1, 1]} : vector<2x384xf32> to vector<2x128xf32>
    %616 = arith.mulf %605, %615 : vector<2x128xf32>
    %617 = arith.addf %614, %616 : vector<2x128xf32>
    %618 = math.tanh %617 : vector<2x128xf32>
    %cst_237 = arith.constant 1.000000e+00 : f32
    %619 = vector.broadcast %cst_237 : f32 to vector<2x128xf32>
    %620 = arith.subf %619, %613 : vector<2x128xf32>
    %621 = arith.mulf %620, %618 : vector<2x128xf32>
    %622 = arith.mulf %613, %583 : vector<2x128xf32>
    %623 = arith.addf %621, %622 : vector<2x128xf32>
    %c2_i32_238 = arith.constant 2 : i32
    %624 = arith.muli %c6_i32_225, %c2_i32_238 : i32
    %625 = arith.index_cast %624 : i32 to index
    %c0_239 = arith.constant 0 : index
    %626 = vector.load %arg16[%625, %c0_239] : memref<16x128xf32, #tpu.memory_space<vmem>>, vector<2x128xf32>
    tpu.vector_store %arg16[%625, %c0_239], %623 {strides = array<i32>} : memref<16x128xf32, #tpu.memory_space<vmem>>, vector<2x128xf32>,
    %c7_i32_240 = arith.constant 7 : i32
    %c2_241 = arith.constant 2 : index
    %c0_242 = arith.constant 0 : index
    %c0_243 = arith.constant 0 : index
    %627 = vector.load %arg6[%c2_241, %c0_242, %c0_243] : memref<3x128x384xbf16, #tpu.memory_space<vmem>>, vector<1x128x384xbf16>
    %628 = vector.shape_cast %627 : vector<1x128x384xbf16> to vector<128x384xbf16>
    %629 = arith.truncf %623 : vector<2x128xf32> to vector<2x128xbf16>
    %cst_244 = arith.constant dense<0.000000e+00> : vector<2x384xf32>
    %630 = tpu.matmul %629, %628, %cst_244 {dimension_numbers = #tpu.dot_dimension_numbers<[1], [0], [0], [1], [0, 0, 1, 1], [], []>} : vector<2x128xbf16>, vector<128x384xbf16>, vector<2x384xf32> -> vector<2x384xf32>
    %c2_245 = arith.constant 2 : index
    %c0_246 = arith.constant 0 : index
    %c0_247 = arith.constant 0 : index
    %631 = vector.load %arg7[%c2_245, %c0_246, %c0_247] : memref<3x1x384xf32, #tpu.memory_space<vmem>>, vector<1x1x384xf32>
    %632 = vector.shape_cast %631 : vector<1x1x384xf32> to vector<1x384xf32>
    %633 = vector.broadcast %632 : vector<1x384xf32> to vector<2x384xf32>
    %634 = arith.addf %630, %633 : vector<2x384xf32>
    %c2_i32_248 = arith.constant 2 : i32
    %635 = arith.muli %c7_i32_240, %c2_i32_248 : i32
    %636 = arith.index_cast %635 : i32 to index
    %c0_249 = arith.constant 0 : index
    %637 = vector.load %arg15[%636, %c0_249] : memref<16x384xf32, #tpu.memory_space<vmem>>, vector<2x384xf32>
    %638 = vector.extract_strided_slice %637 {offsets = [0, 0], sizes = [2, 128], strides = [1, 1]} : vector<2x384xf32> to vector<2x128xf32>
    %639 = vector.extract_strided_slice %634 {offsets = [0, 0], sizes = [2, 128], strides = [1, 1]} : vector<2x384xf32> to vector<2x128xf32>
    %640 = arith.addf %638, %639 : vector<2x128xf32>
    %641 = arith.negf %640 : vector<2x128xf32>
    %642 = math.exp %641 : vector<2x128xf32>
    %cst_250 = arith.constant 1.000000e+00 : f32
    %643 = vector.broadcast %cst_250 : f32 to vector<2x128xf32>
    %644 = arith.addf %643, %642 : vector<2x128xf32>
    %645 = arith.divf %643, %644 : vector<2x128xf32>
    %646 = vector.extract_strided_slice %637 {offsets = [0, 128], sizes = [2, 128], strides = [1, 1]} : vector<2x384xf32> to vector<2x128xf32>
    %647 = vector.extract_strided_slice %634 {offsets = [0, 128], sizes = [2, 128], strides = [1, 1]} : vector<2x384xf32> to vector<2x128xf32>
    %648 = arith.addf %646, %647 : vector<2x128xf32>
    %649 = arith.negf %648 : vector<2x128xf32>
    %650 = math.exp %649 : vector<2x128xf32>
    %cst_251 = arith.constant 1.000000e+00 : f32
    %651 = vector.broadcast %cst_251 : f32 to vector<2x128xf32>
    %652 = arith.addf %651, %650 : vector<2x128xf32>
    %653 = arith.divf %651, %652 : vector<2x128xf32>
    %654 = vector.extract_strided_slice %637 {offsets = [0, 256], sizes = [2, 128], strides = [1, 1]} : vector<2x384xf32> to vector<2x128xf32>
    %655 = vector.extract_strided_slice %634 {offsets = [0, 256], sizes = [2, 128], strides = [1, 1]} : vector<2x384xf32> to vector<2x128xf32>
    %656 = arith.mulf %645, %655 : vector<2x128xf32>
    %657 = arith.addf %654, %656 : vector<2x128xf32>
    %658 = math.tanh %657 : vector<2x128xf32>
    %cst_252 = arith.constant 1.000000e+00 : f32
    %659 = vector.broadcast %cst_252 : f32 to vector<2x128xf32>
    %660 = arith.subf %659, %653 : vector<2x128xf32>
    %661 = arith.mulf %660, %658 : vector<2x128xf32>
    %662 = arith.mulf %653, %623 : vector<2x128xf32>
    %663 = arith.addf %661, %662 : vector<2x128xf32>
    %c2_i32_253 = arith.constant 2 : i32
    %664 = arith.muli %c7_i32_240, %c2_i32_253 : i32
    %665 = arith.index_cast %664 : i32 to index
    %c0_254 = arith.constant 0 : index
    %666 = vector.load %arg16[%665, %c0_254] : memref<16x128xf32, #tpu.memory_space<vmem>>, vector<2x128xf32>
    tpu.vector_store %arg16[%665, %c0_254], %663 {strides = array<i32>} : memref<16x128xf32, #tpu.memory_space<vmem>>, vector<2x128xf32>,
    %c8_i32_255 = arith.constant 8 : i32
    %c0_256 = arith.constant 0 : index
    %c0_257 = arith.constant 0 : index
    %667 = vector.load %arg16[%c0_256, %c0_257] : memref<16x128xf32, #tpu.memory_space<vmem>>, vector<16x128xf32>
    %c0_258 = arith.constant 0 : index
    %c0_259 = arith.constant 0 : index
    %668 = vector.load %arg8[%c0_258, %c0_259] : memref<128x128xbf16, #tpu.memory_space<vmem>>, vector<128x128xbf16>
    %669 = arith.truncf %667 : vector<16x128xf32> to vector<16x128xbf16>
    %cst_260 = arith.constant dense<0.000000e+00> : vector<16x128xf32>
    %670 = tpu.matmul %669, %668, %cst_260 {dimension_numbers = #tpu.dot_dimension_numbers<[1], [0], [0], [1], [0, 0, 1, 1], [], []>} : vector<16x128xbf16>, vector<128x128xbf16>, vector<16x128xf32> -> vector<16x128xf32>
    %671 = arith.subf %667, %670 : vector<16x128xf32>
    %672 = arith.mulf %671, %671 : vector<16x128xf32>
    %c0_261 = arith.constant 0 : index
    %c0_262 = arith.constant 0 : index
    %673 = vector.load %arg8[%c0_261, %c0_262] : memref<128x128xbf16, #tpu.memory_space<vmem>>, vector<128x128xbf16>
    %674 = arith.truncf %672 : vector<16x128xf32> to vector<16x128xbf16>
    %cst_263 = arith.constant dense<0.000000e+00> : vector<16x128xf32>
    %675 = tpu.matmul %674, %673, %cst_263 {dimension_numbers = #tpu.dot_dimension_numbers<[1], [0], [0], [1], [0, 0, 1, 1], [], []>} : vector<16x128xbf16>, vector<128x128xbf16>, vector<16x128xf32> -> vector<16x128xf32>
    %cst_264 = arith.constant 9.99999974E-6 : f32
    %676 = vector.broadcast %cst_264 : f32 to vector<16x128xf32>
    %677 = arith.addf %675, %676 : vector<16x128xf32>
    %678 = math.rsqrt %677 : vector<16x128xf32>
    %679 = arith.mulf %671, %678 : vector<16x128xf32>
    %c0_265 = arith.constant 0 : index
    %c0_266 = arith.constant 0 : index
    %c0_267 = arith.constant 0 : index
    %680 = vector.load %arg9[%c0_265, %c0_266, %c0_267] : memref<2x128x64xbf16, #tpu.memory_space<vmem>>, vector<1x128x64xbf16>
    %681 = vector.shape_cast %680 : vector<1x128x64xbf16> to vector<128x64xbf16>
    %682 = arith.truncf %679 : vector<16x128xf32> to vector<16x128xbf16>
    %cst_268 = arith.constant dense<0.000000e+00> : vector<16x64xf32>
    %683 = tpu.matmul %682, %681, %cst_268 {dimension_numbers = #tpu.dot_dimension_numbers<[1], [0], [0], [1], [0, 0, 1, 1], [], []>} : vector<16x128xbf16>, vector<128x64xbf16>, vector<16x64xf32> -> vector<16x64xf32>
    %c0_269 = arith.constant 0 : index
    %c0_270 = arith.constant 0 : index
    %c0_271 = arith.constant 0 : index
    %684 = vector.load %arg10[%c0_269, %c0_270, %c0_271] : memref<2x1x64xf32, #tpu.memory_space<vmem>>, vector<1x1x64xf32>
    %685 = vector.shape_cast %684 : vector<1x1x64xf32> to vector<1x64xf32>
    %686 = vector.broadcast %685 : vector<1x64xf32> to vector<16x64xf32>
    %687 = arith.addf %683, %686 : vector<16x64xf32>
    %c1_272 = arith.constant 1 : index
    %c0_273 = arith.constant 0 : index
    %c0_274 = arith.constant 0 : index
    %688 = vector.load %arg9[%c1_272, %c0_273, %c0_274] : memref<2x128x64xbf16, #tpu.memory_space<vmem>>, vector<1x128x64xbf16>
    %689 = vector.shape_cast %688 : vector<1x128x64xbf16> to vector<128x64xbf16>
    %690 = arith.truncf %679 : vector<16x128xf32> to vector<16x128xbf16>
    %cst_275 = arith.constant dense<0.000000e+00> : vector<16x64xf32>
    %691 = tpu.matmul %690, %689, %cst_275 {dimension_numbers = #tpu.dot_dimension_numbers<[1], [0], [0], [1], [0, 0, 1, 1], [], []>} : vector<16x128xbf16>, vector<128x64xbf16>, vector<16x64xf32> -> vector<16x64xf32>
    %c1_276 = arith.constant 1 : index
    %c0_277 = arith.constant 0 : index
    %c0_278 = arith.constant 0 : index
    %692 = vector.load %arg10[%c1_276, %c0_277, %c0_278] : memref<2x1x64xf32, #tpu.memory_space<vmem>>, vector<1x1x64xf32>
    %693 = vector.shape_cast %692 : vector<1x1x64xf32> to vector<1x64xf32>
    %694 = vector.broadcast %693 : vector<1x64xf32> to vector<16x64xf32>
    %695 = arith.addf %691, %694 : vector<16x64xf32>
    %cst_279 = arith.constant 5.000000e-01 : f32
    %696 = vector.broadcast %cst_279 : f32 to vector<16x64xf32>
    %697 = arith.mulf %696, %695 : vector<16x64xf32>
    %698 = math.exp %697 : vector<16x64xf32>
    %c0_280 = arith.constant 0 : index
    %c0_281 = arith.constant 0 : index
    %699 = vector.load %arg11[%c0_280, %c0_281] : memref<16x64xf32, #tpu.memory_space<vmem>>, vector<16x64xf32>
    %700 = arith.mulf %698, %699 : vector<16x64xf32>
    %701 = arith.addf %687, %700 : vector<16x64xf32>
    %cst_282 = arith.constant 0.000000e+00 : f32
    %702 = vector.broadcast %cst_282 : f32 to vector<16x64xf32>
    %703 = tpu.concatenate %701, %687, %695, %702 in 1 : vector<16x64xf32>, vector<16x64xf32>, vector<16x64xf32>, vector<16x64xf32> -> vector<16x256xf32>
    %c0_283 = arith.constant 0 : index
    %c0_284 = arith.constant 0 : index
    %704 = vector.load %arg12[%c0_283, %c0_284] : memref<16x256xf32, #tpu.memory_space<vmem>>, vector<16x256xf32>
    tpu.vector_store %arg12[%c0_283, %c0_284], %703 {strides = array<i32>} : memref<16x256xf32, #tpu.memory_space<vmem>>, vector<16x256xf32>,
    return
  }
  func.func @transform_0(%arg0: i32) -> (i32, i32) {
    %c0_i32 = arith.constant 0 : i32
    %c0_i32_0 = arith.constant 0 : i32
    return %arg0, %c0_i32 : i32, i32
  }
  func.func @transform_1(%arg0: i32) -> (i32, i32) {
    %c0_i32 = arith.constant 0 : i32
    %c0_i32_0 = arith.constant 0 : i32
    %c0_i32_1 = arith.constant 0 : i32
    return %c0_i32, %c0_i32_0 : i32, i32
  }
  func.func @transform_2(%arg0: i32) -> (i32, i32) {
    %c0_i32 = arith.constant 0 : i32
    %c0_i32_0 = arith.constant 0 : i32
    %c0_i32_1 = arith.constant 0 : i32
    return %c0_i32, %c0_i32_0 : i32, i32
  }
  func.func @transform_3(%arg0: i32) -> (i32, i32) {
    %c0_i32 = arith.constant 0 : i32
    %c0_i32_0 = arith.constant 0 : i32
    %c0_i32_1 = arith.constant 0 : i32
    return %c0_i32, %c0_i32_0 : i32, i32
  }
  func.func @transform_4(%arg0: i32) -> (i32, i32) {
    %c0_i32 = arith.constant 0 : i32
    %c0_i32_0 = arith.constant 0 : i32
    %c0_i32_1 = arith.constant 0 : i32
    return %c0_i32, %c0_i32_0 : i32, i32
  }
  func.func @transform_5(%arg0: i32) -> (i32, i32, i32) {
    %c0_i32 = arith.constant 0 : i32
    %c0_i32_0 = arith.constant 0 : i32
    %c0_i32_1 = arith.constant 0 : i32
    %c0_i32_2 = arith.constant 0 : i32
    return %c0_i32, %c0_i32_0, %c0_i32_1 : i32, i32, i32
  }
  func.func @transform_6(%arg0: i32) -> (i32, i32, i32) {
    %c0_i32 = arith.constant 0 : i32
    %c0_i32_0 = arith.constant 0 : i32
    %c0_i32_1 = arith.constant 0 : i32
    %c0_i32_2 = arith.constant 0 : i32
    return %c0_i32, %c0_i32_0, %c0_i32_1 : i32, i32, i32
  }
  func.func @transform_7(%arg0: i32) -> (i32, i32) {
    %c0_i32 = arith.constant 0 : i32
    %c0_i32_0 = arith.constant 0 : i32
    %c0_i32_1 = arith.constant 0 : i32
    return %c0_i32, %c0_i32_0 : i32, i32
  }
  func.func @transform_8(%arg0: i32) -> (i32, i32, i32) {
    %c0_i32 = arith.constant 0 : i32
    %c0_i32_0 = arith.constant 0 : i32
    %c0_i32_1 = arith.constant 0 : i32
    %c0_i32_2 = arith.constant 0 : i32
    return %c0_i32, %c0_i32_0, %c0_i32_1 : i32, i32, i32
  }
  func.func @transform_9(%arg0: i32) -> (i32, i32, i32) {
    %c0_i32 = arith.constant 0 : i32
    %c0_i32_0 = arith.constant 0 : i32
    %c0_i32_1 = arith.constant 0 : i32
    %c0_i32_2 = arith.constant 0 : i32
    return %c0_i32, %c0_i32_0, %c0_i32_1 : i32, i32, i32
  }
  func.func @transform_10(%arg0: i32) -> (i32, i32) {
    %c0_i32 = arith.constant 0 : i32
    %c0_i32_0 = arith.constant 0 : i32
    return %arg0, %c0_i32 : i32, i32
  }
  func.func @transform_11(%arg0: i32) -> (i32, i32) {
    %c0_i32 = arith.constant 0 : i32
    %c0_i32_0 = arith.constant 0 : i32
    return %arg0, %c0_i32 : i32, i32
  }
}

</mosaic_0001>

<llo_original>
// kernel: mul.143
$region0: #{mul.143}
  %s0 = inlined_call_operand.vmem [shape: f32[4,32,96], index: 0, kind: input, shape index: {}]
  %s1 = inlined_call_operand.vmem [shape: f32[4,32,3,32], index: 1, kind: output, shape index: {}]
  $region1: #{mul.143} parent=0
    #allocation0 [shape = 'u8[524288]{0}', space=vmem, size = 0x80000, scoped, tag = 'scoped mem for output reshape']
    %v2 = vld [vmem:[%s0] sm:$0xff]
    %vm3 = vcmask 261120
    %4 = vst.msk [vmem:[#allocation0] ss:$8 sm:$0xf] %vm3, %v2
    %5 = vst.msk [vmem:[#allocation0] ss:$8 sm:$0xf0] %vm3, %v2
    %s6 = scalar_lea.vmem %s0, 8
    %v7 = vld [vmem:[%s6] sm:$0xff]
    %vm8 = vcmask 261120
    %s9 = scalar_lea.vmem [#allocation0], 64
    %10 = vst.msk [vmem:[%s9] ss:$8 sm:$0xf] %vm8, %v7
    %s11 = scalar_lea.vmem [#allocation0], 64
    %12 = vst.msk [vmem:[%s11] ss:$8 sm:$0xf0] %vm8, %v7
    %s13 = scalar_lea.vmem %s0, 16
    %v14 = vld [vmem:[%s13] sm:$0xff]
    %vm15 = vcmask 261120
    %s16 = scalar_lea.vmem [#allocation0], 128
    %17 = vst.msk [vmem:[%s16] ss:$8 sm:$0xf] %vm15, %v14
    %s18 = scalar_lea.vmem [#allocation0], 128
    %19 = vst.msk [vmem:[%s18] ss:$8 sm:$0xf0] %vm15, %v14
    %s20 = scalar_lea.vmem %s0, 24
    %v21 = vld [vmem:[%s20] sm:$0xff]
    %vm22 = vcmask 261120
    %s23 = scalar_lea.vmem [#allocation0], 192
    %24 = vst.msk [vmem:[%s23] ss:$8 sm:$0xf] %vm22, %v21
    %s25 = scalar_lea.vmem [#allocation0], 192
    %26 = vst.msk [vmem:[%s25] ss:$8 sm:$0xf0] %vm22, %v21
    %s27 = scalar_lea.vmem %s0, 32
    %v28 = vld [vmem:[%s27] sm:$0xff]
    %vm29 = vcmask 261120
    %s30 = scalar_lea.vmem [#allocation0], 256
    %31 = vst.msk [vmem:[%s30] ss:$8 sm:$0xf] %vm29, %v28
    %s32 = scalar_lea.vmem [#allocation0], 256
    %33 = vst.msk [vmem:[%s32] ss:$8 sm:$0xf0] %vm29, %v28
    %s34 = scalar_lea.vmem %s0, 40
    %v35 = vld [vmem:[%s34] sm:$0xff]
    %vm36 = vcmask 261120
    %s37 = scalar_lea.vmem [#allocation0], 320
    %38 = vst.msk [vmem:[%s37] ss:$8 sm:$0xf] %vm36, %v35
    %s39 = scalar_lea.vmem [#allocation0], 320
    %40 = vst.msk [vmem:[%s39] ss:$8 sm:$0xf0] %vm36, %v35
    %s41 = scalar_lea.vmem %s0, 48
    %v42 = vld [vmem:[%s41] sm:$0xff]
    %vm43 = vcmask 261120
    %s44 = scalar_lea.vmem [#allocation0], 384
    %45 = vst.msk [vmem:[%s44] ss:$8 sm:$0xf] %vm43, %v42
    %s46 = scalar_lea.vmem [#allocation0], 384
    %47 = vst.msk [vmem:[%s46] ss:$8 sm:$0xf0] %vm43, %v42
    %s48 = scalar_lea.vmem %s0, 56
    %v49 = vld [vmem:[%s48] sm:$0xff]
    %vm50 = vcmask 261120
    %s51 = scalar_lea.vmem [#allocation0], 448
    %52 = vst.msk [vmem:[%s51] ss:$8 sm:$0xf] %vm50, %v49
    %s53 = scalar_lea.vmem [#allocation0], 448
    %54 = vst.msk [vmem:[%s53] ss:$8 sm:$0xf0] %vm50, %v49
    %s55 = scalar_lea.vmem %s0, 64
    %v56 = vld [vmem:[%s55] sm:$0xff]
    %vm57 = vcmask 261120
    %s58 = scalar_lea.vmem [#allocation0], 512
    %59 = vst.msk [vmem:[%s58] ss:$8 sm:$0xf] %vm57, %v56
    %s60 = scalar_lea.vmem [#allocation0], 512
    %61 = vst.msk [vmem:[%s60] ss:$8 sm:$0xf0] %vm57, %v56
    %s62 = scalar_lea.vmem %s0, 72
    %v63 = vld [vmem:[%s62] sm:$0xff]
    %vm64 = vcmask 261120
    %s65 = scalar_lea.vmem [#allocation0], 576
    %66 = vst.msk [vmem:[%s65] ss:$8 sm:$0xf] %vm64, %v63
    %s67 = scalar_lea.vmem [#allocation0], 576
    %68 = vst.msk [vmem:[%s67] ss:$8 sm:$0xf0] %vm64, %v63
    %s69 = scalar_lea.vmem %s0, 80
    %v70 = vld [vmem:[%s69] sm:$0xff]
    %vm71 = vcmask 261120
    %s72 = scalar_lea.vmem [#allocation0], 640
    %73 = vst.msk [vmem:[%s72] ss:$8 sm:$0xf] %vm71, %v70
    %s74 = scalar_lea.vmem [#allocation0], 640
    %75 = vst.msk [vmem:[%s74] ss:$8 sm:$0xf0] %vm71, %v70
    %s76 = scalar_lea.vmem %s0, 88
    %v77 = vld [vmem:[%s76] sm:$0xff]
    %vm78 = vcmask 261120
    %s79 = scalar_lea.vmem [#allocation0], 704
    %80 = vst.msk [vmem:[%s79] ss:$8 sm:$0xf] %vm78, %v77
    %s81 = scalar_lea.vmem [#allocation0], 704
    %82 = vst.msk [vmem:[%s81] ss:$8 sm:$0xf0] %vm78, %v77
    %s83 = scalar_lea.vmem %s0, 96
    %v84 = vld [vmem:[%s83] sm:$0xff]
    %vm85 = vcmask 261120
    %s86 = scalar_lea.vmem [#allocation0], 768
    %87 = vst.msk [vmem:[%s86] ss:$8 sm:$0xf] %vm85, %v84
    %s88 = scalar_lea.vmem [#allocation0], 768
    %89 = vst.msk [vmem:[%s88] ss:$8 sm:$0xf0] %vm85, %v84
    %s90 = scalar_lea.vmem %s0, 104
    %v91 = vld [vmem:[%s90] sm:$0xff]
    %vm92 = vcmask 261120
    %s93 = scalar_lea.vmem [#allocation0], 832
    %94 = vst.msk [vmem:[%s93] ss:$8 sm:$0xf] %vm92, %v91
    %s95 = scalar_lea.vmem [#allocation0], 832
    %96 = vst.msk [vmem:[%s95] ss:$8 sm:$0xf0] %vm92, %v91
    %s97 = scalar_lea.vmem %s0, 112
    %v98 = vld [vmem:[%s97] sm:$0xff]
    %vm99 = vcmask 261120
    %s100 = scalar_lea.vmem [#allocation0], 896
    %101 = vst.msk [vmem:[%s100] ss:$8 sm:$0xf] %vm99, %v98
    %s102 = scalar_lea.vmem [#allocation0], 896
    %103 = vst.msk [vmem:[%s102] ss:$8 sm:$0xf0] %vm99, %v98
    %s104 = scalar_lea.vmem %s0, 120
    %v105 = vld [vmem:[%s104] sm:$0xff]
    %vm106 = vcmask 261120
    %s107 = scalar_lea.vmem [#allocation0], 960
    %108 = vst.msk [vmem:[%s107] ss:$8 sm:$0xf] %vm106, %v105
    %s109 = scalar_lea.vmem [#allocation0], 960
    %110 = vst.msk [vmem:[%s109] ss:$8 sm:$0xf0] %vm106, %v105
    %v111 = vld [vmem:[%s0] sm:$0xff]
    %112 = vrot.lane.b32.xlu0 %v111, 96
    %v113 = vpop.permute.xlu0 %112
    %vm114 = vcmask 261120
    %s115 = scalar_lea.vmem [#allocation0], 1
    %116 = vst.msk [vmem:[%s115] ss:$8 sm:$0xf] %vm114, %v113
    %s117 = scalar_lea.vmem [#allocation0], 1
    %118 = vst.msk [vmem:[%s117] ss:$8 sm:$0xf0] %vm114, %v113
    %s119 = scalar_lea.vmem %s0, 8
    %v120 = vld [vmem:[%s119] sm:$0xff]
    %121 = vrot.lane.b32.xlu0 %v120, 96
    %v122 = vpop.permute.xlu0 %121
    %vm123 = vcmask 261120
    %s124 = scalar_lea.vmem [#allocation0], 65
    %125 = vst.msk [vmem:[%s124] ss:$8 sm:$0xf] %vm123, %v122
    %s126 = scalar_lea.vmem [#allocation0], 65
    %127 = vst.msk [vmem:[%s126] ss:$8 sm:$0xf0] %vm123, %v122
    %s128 = scalar_lea.vmem %s0, 16
    %v129 = vld [vmem:[%s128] sm:$0xff]
    %130 = vrot.lane.b32.xlu0 %v129, 96
    %v131 = vpop.permute.xlu0 %130
    %vm132 = vcmask 261120
    %s133 = scalar_lea.vmem [#allocation0], 129
    %134 = vst.msk [vmem:[%s133] ss:$8 sm:$0xf] %vm132, %v131
    %s135 = scalar_lea.vmem [#allocation0], 129
    %136 = vst.msk [vmem:[%s135] ss:$8 sm:$0xf0] %vm132, %v131
    %s137 = scalar_lea.vmem %s0, 24
    %v138 = vld [vmem:[%s137] sm:$0xff]
    %139 = vrot.lane.b32.xlu0 %v138, 96
    %v140 = vpop.permute.xlu0 %139
    %vm141 = vcmask 261120
    %s142 = scalar_lea.vmem [#allocation0], 193
    %143 = vst.msk [vmem:[%s142] ss:$8 sm:$0xf] %vm141, %v140
    %s144 = scalar_lea.vmem [#allocation0], 193
    %145 = vst.msk [vmem:[%s144] ss:$8 sm:$0xf0] %vm141, %v140
    %s146 = scalar_lea.vmem %s0, 32
    %v147 = vld [vmem:[%s146] sm:$0xff]
    %148 = vrot.lane.b32.xlu0 %v147, 96
    %v149 = vpop.permute.xlu0 %148
    %vm150 = vcmask 261120
    %s151 = scalar_lea.vmem [#allocation0], 257
    %152 = vst.msk [vmem:[%s151] ss:$8 sm:$0xf] %vm150, %v149
    %s153 = scalar_lea.vmem [#allocation0], 257
    %154 = vst.msk [vmem:[%s153] ss:$8 sm:$0xf0] %vm150, %v149
    %s155 = scalar_lea.vmem %s0, 40
    %v156 = vld [vmem:[%s155] sm:$0xff]
    %157 = vrot.lane.b32.xlu0 %v156, 96
    %v158 = vpop.permute.xlu0 %157
    %vm159 = vcmask 261120
    %s160 = scalar_lea.vmem [#allocation0], 321
    %161 = vst.msk [vmem:[%s160] ss:$8 sm:$0xf] %vm159, %v158
    %s162 = scalar_lea.vmem [#allocation0], 321
    %163 = vst.msk [vmem:[%s162] ss:$8 sm:$0xf0] %vm159, %v158
    %s164 = scalar_lea.vmem %s0, 48
    %v165 = vld [vmem:[%s164] sm:$0xff]
    %166 = vrot.lane.b32.xlu0 %v165, 96
    %v167 = vpop.permute.xlu0 %166
    %vm168 = vcmask 261120
    %s169 = scalar_lea.vmem [#allocation0], 385
    %170 = vst.msk [vmem:[%s169] ss:$8 sm:$0xf] %vm168, %v167
    %s171 = scalar_lea.vmem [#allocation0], 385
    %172 = vst.msk [vmem:[%s171] ss:$8 sm:$0xf0] %vm168, %v167
    %s173 = scalar_lea.vmem %s0, 56
    %v174 = vld [vmem:[%s173] sm:$0xff]
    %175 = vrot.lane.b32.xlu0 %v174, 96
    %v176 = vpop.permute.xlu0 %175
    %vm177 = vcmask 261120
    %s178 = scalar_lea.vmem [#allocation0], 449
    %179 = vst.msk [vmem:[%s178] ss:$8 sm:$0xf] %vm177, %v176
    %s180 = scalar_lea.vmem [#allocation0], 449
    %181 = vst.msk [vmem:[%s180] ss:$8 sm:$0xf0] %vm177, %v176
    %s182 = scalar_lea.vmem %s0, 64
    %v183 = vld [vmem:[%s182] sm:$0xff]
    %184 = vrot.lane.b32.xlu0 %v183, 96
    %v185 = vpop.permute.xlu0 %184
    %vm186 = vcmask 261120
    %s187 = scalar_lea.vmem [#allocation0], 513
    %188 = vst.msk [vmem:[%s187] ss:$8 sm:$0xf] %vm186, %v185
    %s189 = scalar_lea.vmem [#allocation0], 513
    %190 = vst.msk [vmem:[%s189] ss:$8 sm:$0xf0] %vm186, %v185
    %s191 = scalar_lea.vmem %s0, 72
    %v192 = vld [vmem:[%s191] sm:$0xff]
    %193 = vrot.lane.b32.xlu0 %v192, 96
    %v194 = vpop.permute.xlu0 %193
    %vm195 = vcmask 261120
    %s196 = scalar_lea.vmem [#allocation0], 577
    %197 = vst.msk [vmem:[%s196] ss:$8 sm:$0xf] %vm195, %v194
    %s198 = scalar_lea.vmem [#allocation0], 577
    %199 = vst.msk [vmem:[%s198] ss:$8 sm:$0xf0] %vm195, %v194
    %s200 = scalar_lea.vmem %s0, 80
    %v201 = vld [vmem:[%s200] sm:$0xff]
    %202 = vrot.lane.b32.xlu0 %v201, 96
    %v203 = vpop.permute.xlu0 %202
    %vm204 = vcmask 261120
    %s205 = scalar_lea.vmem [#allocation0], 641
    %206 = vst.msk [vmem:[%s205] ss:$8 sm:$0xf] %vm204, %v203
    %s207 = scalar_lea.vmem [#allocation0], 641
    %208 = vst.msk [vmem:[%s207] ss:$8 sm:$0xf0] %vm204, %v203
    %s209 = scalar_lea.vmem %s0, 88
    %v210 = vld [vmem:[%s209] sm:$0xff]
    %211 = vrot.lane.b32.xlu0 %v210, 96
    %v212 = vpop.permute.xlu0 %211
    %vm213 = vcmask 261120
    %s214 = scalar_lea.vmem [#allocation0], 705
    %215 = vst.msk [vmem:[%s214] ss:$8 sm:$0xf] %vm213, %v212
    %s216 = scalar_lea.vmem [#allocation0], 705
    %217 = vst.msk [vmem:[%s216] ss:$8 sm:$0xf0] %vm213, %v212
    %s218 = scalar_lea.vmem %s0, 96
    %v219 = vld [vmem:[%s218] sm:$0xff]
    %220 = vrot.lane.b32.xlu0 %v219, 96
    %v221 = vpop.permute.xlu0 %220
    %vm222 = vcmask 261120
    %s223 = scalar_lea.vmem [#allocation0], 769
    %224 = vst.msk [vmem:[%s223] ss:$8 sm:$0xf] %vm222, %v221
    %s225 = scalar_lea.vmem [#allocation0], 769
    %226 = vst.msk [vmem:[%s225] ss:$8 sm:$0xf0] %vm222, %v221
    %s227 = scalar_lea.vmem %s0, 104
    %v228 = vld [vmem:[%s227] sm:$0xff]
    %229 = vrot.lane.b32.xlu0 %v228, 96
    %v230 = vpop.permute.xlu0 %229
    %vm231 = vcmask 261120
    %s232 = scalar_lea.vmem [#allocation0], 833
    %233 = vst.msk [vmem:[%s232] ss:$8 sm:$0xf] %vm231, %v230
    %s234 = scalar_lea.vmem [#allocation0], 833
    %235 = vst.msk [vmem:[%s234] ss:$8 sm:$0xf0] %vm231, %v230
    %s236 = scalar_lea.vmem %s0, 112
    %v237 = vld [vmem:[%s236] sm:$0xff]
    %238 = vrot.lane.b32.xlu0 %v237, 96
    %v239 = vpop.permute.xlu0 %238
    %vm240 = vcmask 261120
    %s241 = scalar_lea.vmem [#allocation0], 897
    %242 = vst.msk [vmem:[%s241] ss:$8 sm:$0xf] %vm240, %v239
    %s243 = scalar_lea.vmem [#allocation0], 897
    %244 = vst.msk [vmem:[%s243] ss:$8 sm:$0xf0] %vm240, %v239
    %s245 = scalar_lea.vmem %s0, 120
    %v246 = vld [vmem:[%s245] sm:$0xff]
    %247 = vrot.lane.b32.xlu0 %v246, 96
    %v248 = vpop.permute.xlu0 %247
    %vm249 = vcmask 261120
    %s250 = scalar_lea.vmem [#allocation0], 961
    %251 = vst.msk [vmem:[%s250] ss:$8 sm:$0xf] %vm249, %v248
    %s252 = scalar_lea.vmem [#allocation0], 961
    %253 = vst.msk [vmem:[%s252] ss:$8 sm:$0xf0] %vm249, %v248
    %v254 = vld [vmem:[%s0] sm:$0xff]
    %255 = vrot.lane.b32.xlu0 %v254, 64
    %v256 = vpop.permute.xlu0 %255
    %vm257 = vcmask 261120
    %s258 = scalar_lea.vmem [#allocation0], 2
    %259 = vst.msk [vmem:[%s258] ss:$8 sm:$0xf] %vm257, %v256
    %s260 = scalar_lea.vmem [#allocation0], 2
    %261 = vst.msk [vmem:[%s260] ss:$8 sm:$0xf0] %vm257, %v256
    %s262 = scalar_lea.vmem %s0, 8
    %v263 = vld [vmem:[%s262] sm:$0xff]
    %264 = vrot.lane.b32.xlu0 %v263, 64
    %v265 = vpop.permute.xlu0 %264
    %vm266 = vcmask 261120
    %s267 = scalar_lea.vmem [#allocation0], 66
    %268 = vst.msk [vmem:[%s267] ss:$8 sm:$0xf] %vm266, %v265
    %s269 = scalar_lea.vmem [#allocation0], 66
    %270 = vst.msk [vmem:[%s269] ss:$8 sm:$0xf0] %vm266, %v265
    %s271 = scalar_lea.vmem %s0, 16
    %v272 = vld [vmem:[%s271] sm:$0xff]
    %273 = vrot.lane.b32.xlu0 %v272, 64
    %v274 = vpop.permute.xlu0 %273
    %vm275 = vcmask 261120
    %s276 = scalar_lea.vmem [#allocation0], 130
    %277 = vst.msk [vmem:[%s276] ss:$8 sm:$0xf] %vm275, %v274
    %s278 = scalar_lea.vmem [#allocation0], 130
    %279 = vst.msk [vmem:[%s278] ss:$8 sm:$0xf0] %vm275, %v274
    %s280 = scalar_lea.vmem %s0, 24
    %v281 = vld [vmem:[%s280] sm:$0xff]
    %282 = vrot.lane.b32.xlu0 %v281, 64
    %v283 = vpop.permute.xlu0 %282
    %vm284 = vcmask 261120
    %s285 = scalar_lea.vmem [#allocation0], 194
    %286 = vst.msk [vmem:[%s285] ss:$8 sm:$0xf] %vm284, %v283
    %s287 = scalar_lea.vmem [#allocation0], 194
    %288 = vst.msk [vmem:[%s287] ss:$8 sm:$0xf0] %vm284, %v283
    %s289 = scalar_lea.vmem %s0, 32
    %v290 = vld [vmem:[%s289] sm:$0xff]
    %291 = vrot.lane.b32.xlu0 %v290, 64
    %v292 = vpop.permute.xlu0 %291
    %vm293 = vcmask 261120
    %s294 = scalar_lea.vmem [#allocation0], 258
    %295 = vst.msk [vmem:[%s294] ss:$8 sm:$0xf] %vm293, %v292
    %s296 = scalar_lea.vmem [#allocation0], 258
    %297 = vst.msk [vmem:[%s296] ss:$8 sm:$0xf0] %vm293, %v292
    %s298 = scalar_lea.vmem %s0, 40
    %v299 = vld [vmem:[%s298] sm:$0xff]
    %300 = vrot.lane.b32.xlu0 %v299, 64
    %v301 = vpop.permute.xlu0 %300
    %vm302 = vcmask 261120
    %s303 = scalar_lea.vmem [#allocation0], 322
    %304 = vst.msk [vmem:[%s303] ss:$8 sm:$0xf] %vm302, %v301
    %s305 = scalar_lea.vmem [#allocation0], 322
    %306 = vst.msk [vmem:[%s305] ss:$8 sm:$0xf0] %vm302, %v301
    %s307 = scalar_lea.vmem %s0, 48
    %v308 = vld [vmem:[%s307] sm:$0xff]
    %309 = vrot.lane.b32.xlu0 %v308, 64
    %v310 = vpop.permute.xlu0 %309
    %vm311 = vcmask 261120
    %s312 = scalar_lea.vmem [#allocation0], 386
    %313 = vst.msk [vmem:[%s312] ss:$8 sm:$0xf] %vm311, %v310
    %s314 = scalar_lea.vmem [#allocation0], 386
    %315 = vst.msk [vmem:[%s314] ss:$8 sm:$0xf0] %vm311, %v310
    %s316 = scalar_lea.vmem %s0, 56
    %v317 = vld [vmem:[%s316] sm:$0xff]
    %318 = vrot.lane.b32.xlu0 %v317, 64
    %v319 = vpop.permute.xlu0 %318
    %vm320 = vcmask 261120
    %s321 = scalar_lea.vmem [#allocation0], 450
    %322 = vst.msk [vmem:[%s321] ss:$8 sm:$0xf] %vm320, %v319
    %s323 = scalar_lea.vmem [#allocation0], 450
    %324 = vst.msk [vmem:[%s323] ss:$8 sm:$0xf0] %vm320, %v319
    %s325 = scalar_lea.vmem %s0, 64
    %v326 = vld [vmem:[%s325] sm:$0xff]
    %327 = vrot.lane.b32.xlu0 %v326, 64
    %v328 = vpop.permute.xlu0 %327
    %vm329 = vcmask 261120
    %s330 = scalar_lea.vmem [#allocation0], 514
    %331 = vst.msk [vmem:[%s330] ss:$8 sm:$0xf] %vm329, %v328
    %s332 = scalar_lea.vmem [#allocation0], 514
    %333 = vst.msk [vmem:[%s332] ss:$8 sm:$0xf0] %vm329, %v328
    %s334 = scalar_lea.vmem %s0, 72
    %v335 = vld [vmem:[%s334] sm:$0xff]
    %336 = vrot.lane.b32.xlu0 %v335, 64
    %v337 = vpop.permute.xlu0 %336
    %vm338 = vcmask 261120
    %s339 = scalar_lea.vmem [#allocation0], 578
    %340 = vst.msk [vmem:[%s339] ss:$8 sm:$0xf] %vm338, %v337
    %s341 = scalar_lea.vmem [#allocation0], 578
    %342 = vst.msk [vmem:[%s341] ss:$8 sm:$0xf0] %vm338, %v337
    %s343 = scalar_lea.vmem %s0, 80
    %v344 = vld [vmem:[%s343] sm:$0xff]
    %345 = vrot.lane.b32.xlu0 %v344, 64
    %v346 = vpop.permute.xlu0 %345
    %vm347 = vcmask 261120
    %s348 = scalar_lea.vmem [#allocation0], 642
    %349 = vst.msk [vmem:[%s348] ss:$8 sm:$0xf] %vm347, %v346
    %s350 = scalar_lea.vmem [#allocation0], 642
    %351 = vst.msk [vmem:[%s350] ss:$8 sm:$0xf0] %vm347, %v346
    %s352 = scalar_lea.vmem %s0, 88
    %v353 = vld [vmem:[%s352] sm:$0xff]
    %354 = vrot.lane.b32.xlu0 %v353, 64
    %v355 = vpop.permute.xlu0 %354
    %vm356 = vcmask 261120
    %s357 = scalar_lea.vmem [#allocation0], 706
    %358 = vst.msk [vmem:[%s357] ss:$8 sm:$0xf] %vm356, %v355
    %s359 = scalar_lea.vmem [#allocation0], 706
    %360 = vst.msk [vmem:[%s359] ss:$8 sm:$0xf0] %vm356, %v355
    %s361 = scalar_lea.vmem %s0, 96
    %v362 = vld [vmem:[%s361] sm:$0xff]
    %363 = vrot.lane.b32.xlu0 %v362, 64
    %v364 = vpop.permute.xlu0 %363
    %vm365 = vcmask 261120
    %s366 = scalar_lea.vmem [#allocation0], 770
    %367 = vst.msk [vmem:[%s366] ss:$8 sm:$0xf] %vm365, %v364
    %s368 = scalar_lea.vmem [#allocation0], 770
    %369 = vst.msk [vmem:[%s368] ss:$8 sm:$0xf0] %vm365, %v364
    %s370 = scalar_lea.vmem %s0, 104
    %v371 = vld [vmem:[%s370] sm:$0xff]
    %372 = vrot.lane.b32.xlu0 %v371, 64
    %v373 = vpop.permute.xlu0 %372
    %vm374 = vcmask 261120
    %s375 = scalar_lea.vmem [#allocation0], 834
    %376 = vst.msk [vmem:[%s375] ss:$8 sm:$0xf] %vm374, %v373
    %s377 = scalar_lea.vmem [#allocation0], 834
    %378 = vst.msk [vmem:[%s377] ss:$8 sm:$0xf0] %vm374, %v373
    %s379 = scalar_lea.vmem %s0, 112
    %v380 = vld [vmem:[%s379] sm:$0xff]
    %381 = vrot.lane.b32.xlu0 %v380, 64
    %v382 = vpop.permute.xlu0 %381
    %vm383 = vcmask 261120
    %s384 = scalar_lea.vmem [#allocation0], 898
    %385 = vst.msk [vmem:[%s384] ss:$8 sm:$0xf] %vm383, %v382
    %s386 = scalar_lea.vmem [#allocation0], 898
    %387 = vst.msk [vmem:[%s386] ss:$8 sm:$0xf0] %vm383, %v382
    %s388 = scalar_lea.vmem %s0, 120
    %v389 = vld [vmem:[%s388] sm:$0xff]
    %390 = vrot.lane.b32.xlu0 %v389, 64
    %v391 = vpop.permute.xlu0 %390
    %vm392 = vcmask 261120
    %s393 = scalar_lea.vmem [#allocation0], 962
    %394 = vst.msk [vmem:[%s393] ss:$8 sm:$0xf] %vm392, %v391
    %s395 = scalar_lea.vmem [#allocation0], 962
    %396 = vst.msk [vmem:[%s395] ss:$8 sm:$0xf0] %vm392, %v391
    %s398 = sshllo.u32 0, 4
    %v400 = vld [vmem:[#allocation0] sm:%s398]
    %s401 = sshllo.u32 0, 4
    %402 = vst [vmem:[%s1] sm:%s401] %v400
    %s403 = scalar_lea.vmem [#allocation0], 8
    %v404 = vld [vmem:[%s403] sm:%s398]
    %s405 = sshllo.u32 0, 4
    %s406 = scalar_lea.vmem %s1, 4
    %407 = vst [vmem:[%s406] sm:%s405] %v404
    %s408 = scalar_lea.vmem [#allocation0], 16
    %v409 = vld [vmem:[%s408] sm:%s398]
    %s410 = sshllo.u32 0, 4
    %s411 = smul.addr 4, 2
    %s412 = scalar_lea.vmem %s1, %s411
    %413 = vst [vmem:[%s412] sm:%s410] %v409
    %s414 = scalar_lea.vmem [#allocation0], 24
    %v415 = vld [vmem:[%s414] sm:%s398]
    %s416 = sshllo.u32 0, 4
    %s417 = smul.addr 4, 3
    %s418 = scalar_lea.vmem %s1, %s417
    %419 = vst [vmem:[%s418] sm:%s416] %v415
    %s420 = scalar_lea.vmem [#allocation0], 32
    %v421 = vld [vmem:[%s420] sm:%s398]
    %s422 = sshllo.u32 0, 4
    %s423 = smul.addr 4, 4
    %s424 = scalar_lea.vmem %s1, %s423
    %425 = vst [vmem:[%s424] sm:%s422] %v421
    %s426 = scalar_lea.vmem [#allocation0], 40
    %v427 = vld [vmem:[%s426] sm:%s398]
    %s428 = sshllo.u32 0, 4
    %s429 = smul.addr 4, 5
    %s430 = scalar_lea.vmem %s1, %s429
    %431 = vst [vmem:[%s430] sm:%s428] %v427
    %s432 = scalar_lea.vmem [#allocation0], 48
    %v433 = vld [vmem:[%s432] sm:%s398]
    %s434 = sshllo.u32 0, 4
    %s435 = smul.addr 4, 6
    %s436 = scalar_lea.vmem %s1, %s435
    %437 = vst [vmem:[%s436] sm:%s434] %v433
    %s438 = scalar_lea.vmem [#allocation0], 56
    %v439 = vld [vmem:[%s438] sm:%s398]
    %s440 = sshllo.u32 0, 4
    %s441 = smul.addr 4, 7
    %s442 = scalar_lea.vmem %s1, %s441
    %443 = vst [vmem:[%s442] sm:%s440] %v439
    %s444 = scalar_lea.vmem [#allocation0], 64
    %v445 = vld [vmem:[%s444] sm:%s398]
    %s446 = sshllo.u32 0, 4
    %s447 = smul.addr 4, 8
    %s448 = scalar_lea.vmem %s1, %s447
    %449 = vst [vmem:[%s448] sm:%s446] %v445
    %s450 = scalar_lea.vmem [#allocation0], 72
    %v451 = vld [vmem:[%s450] sm:%s398]
    %s452 = sshllo.u32 0, 4
    %s453 = smul.addr 4, 9
    %s454 = scalar_lea.vmem %s1, %s453
    %455 = vst [vmem:[%s454] sm:%s452] %v451
    %s456 = scalar_lea.vmem [#allocation0], 80
    %v457 = vld [vmem:[%s456] sm:%s398]
    %s458 = sshllo.u32 0, 4
    %s459 = smul.addr 4, 10
    %s460 = scalar_lea.vmem %s1, %s459
    %461 = vst [vmem:[%s460] sm:%s458] %v457
    %s462 = scalar_lea.vmem [#allocation0], 88
    %v463 = vld [vmem:[%s462] sm:%s398]
    %s464 = sshllo.u32 0, 4
    %s465 = smul.addr 4, 11
    %s466 = scalar_lea.vmem %s1, %s465
    %467 = vst [vmem:[%s466] sm:%s464] %v463
    %s468 = scalar_lea.vmem [#allocation0], 96
    %v469 = vld [vmem:[%s468] sm:%s398]
    %s470 = sshllo.u32 0, 4
    %s471 = smul.addr 4, 12
    %s472 = scalar_lea.vmem %s1, %s471
    %473 = vst [vmem:[%s472] sm:%s470] %v469
    %s474 = scalar_lea.vmem [#allocation0], 104
    %v475 = vld [vmem:[%s474] sm:%s398]
    %s476 = sshllo.u32 0, 4
    %s477 = smul.addr 4, 13
    %s478 = scalar_lea.vmem %s1, %s477
    %479 = vst [vmem:[%s478] sm:%s476] %v475
    %s480 = scalar_lea.vmem [#allocation0], 112
    %v481 = vld [vmem:[%s480] sm:%s398]
    %s482 = sshllo.u32 0, 4
    %s483 = smul.addr 4, 14
    %s484 = scalar_lea.vmem %s1, %s483
    %485 = vst [vmem:[%s484] sm:%s482] %v481
    %s486 = scalar_lea.vmem [#allocation0], 120
    %v487 = vld [vmem:[%s486] sm:%s398]
    %s488 = sshllo.u32 0, 4
    %s489 = smul.addr 4, 15
    %s490 = scalar_lea.vmem %s1, %s489
    %491 = vst [vmem:[%s490] sm:%s488] %v487
    %s492 = scalar_lea.vmem [#allocation0], 128
    %v493 = vld [vmem:[%s492] sm:%s398]
    %s494 = sshllo.u32 0, 4
    %s495 = smul.addr 4, 16
    %s496 = scalar_lea.vmem %s1, %s495
    %497 = vst [vmem:[%s496] sm:%s494] %v493
    %s498 = scalar_lea.vmem [#allocation0], 136
    %v499 = vld [vmem:[%s498] sm:%s398]
    %s500 = sshllo.u32 0, 4
    %s501 = smul.addr 4, 17
    %s502 = scalar_lea.vmem %s1, %s501
    %503 = vst [vmem:[%s502] sm:%s500] %v499
    %s504 = scalar_lea.vmem [#allocation0], 144
    %v505 = vld [vmem:[%s504] sm:%s398]
    %s506 = sshllo.u32 0, 4
    %s507 = smul.addr 4, 18
    %s508 = scalar_lea.vmem %s1, %s507
    %509 = vst [vmem:[%s508] sm:%s506] %v505
    %s510 = scalar_lea.vmem [#allocation0], 152
    %v511 = vld [vmem:[%s510] sm:%s398]
    %s512 = sshllo.u32 0, 4
    %s513 = smul.addr 4, 19
    %s514 = scalar_lea.vmem %s1, %s513
    %515 = vst [vmem:[%s514] sm:%s512] %v511
    %s516 = scalar_lea.vmem [#allocation0], 160
    %v517 = vld [vmem:[%s516] sm:%s398]
    %s518 = sshllo.u32 0, 4
    %s519 = smul.addr 4, 20
    %s520 = scalar_lea.vmem %s1, %s519
    %521 = vst [vmem:[%s520] sm:%s518] %v517
    %s522 = scalar_lea.vmem [#allocation0], 168
    %v523 = vld [vmem:[%s522] sm:%s398]
    %s524 = sshllo.u32 0, 4
    %s525 = smul.addr 4, 21
    %s526 = scalar_lea.vmem %s1, %s525
    %527 = vst [vmem:[%s526] sm:%s524] %v523
    %s528 = scalar_lea.vmem [#allocation0], 176
    %v529 = vld [vmem:[%s528] sm:%s398]
    %s530 = sshllo.u32 0, 4
    %s531 = smul.addr 4, 22
    %s532 = scalar_lea.vmem %s1, %s531
    %533 = vst [vmem:[%s532] sm:%s530] %v529
    %s534 = scalar_lea.vmem [#allocation0], 184
    %v535 = vld [vmem:[%s534] sm:%s398]
    %s536 = sshllo.u32 0, 4
    %s537 = smul.addr 4, 23
    %s538 = scalar_lea.vmem %s1, %s537
    %539 = vst [vmem:[%s538] sm:%s536] %v535
    %s540 = scalar_lea.vmem [#allocation0], 192
    %v541 = vld [vmem:[%s540] sm:%s398]
    %s542 = sshllo.u32 0, 4
    %s543 = smul.addr 4, 24
    %s544 = scalar_lea.vmem %s1, %s543
    %545 = vst [vmem:[%s544] sm:%s542] %v541
    %s546 = scalar_lea.vmem [#allocation0], 200
    %v547 = vld [vmem:[%s546] sm:%s398]
    %s548 = sshllo.u32 0, 4
    %s549 = smul.addr 4, 25
    %s550 = scalar_lea.vmem %s1, %s549
    %551 = vst [vmem:[%s550] sm:%s548] %v547
    %s552 = scalar_lea.vmem [#allocation0], 208
    %v553 = vld [vmem:[%s552] sm:%s398]
    %s554 = sshllo.u32 0, 4
    %s555 = smul.addr 4, 26
    %s556 = scalar_lea.vmem %s1, %s555
    %557 = vst [vmem:[%s556] sm:%s554] %v553
    %s558 = scalar_lea.vmem [#allocation0], 216
    %v559 = vld [vmem:[%s558] sm:%s398]
    %s560 = sshllo.u32 0, 4
    %s561 = smul.addr 4, 27
    %s562 = scalar_lea.vmem %s1, %s561
    %563 = vst [vmem:[%s562] sm:%s560] %v559
    %s564 = scalar_lea.vmem [#allocation0], 224
    %v565 = vld [vmem:[%s564] sm:%s398]
    %s566 = sshllo.u32 0, 4
    %s567 = smul.addr 4, 28
    %s568 = scalar_lea.vmem %s1, %s567
    %569 = vst [vmem:[%s568] sm:%s566] %v565
    %s570 = scalar_lea.vmem [#allocation0], 232
    %v571 = vld [vmem:[%s570] sm:%s398]
    %s572 = sshllo.u32 0, 4
    %s573 = smul.addr 4, 29
    %s574 = scalar_lea.vmem %s1, %s573
    %575 = vst [vmem:[%s574] sm:%s572] %v571
    %s576 = scalar_lea.vmem [#allocation0], 240
    %v577 = vld [vmem:[%s576] sm:%s398]
    %s578 = sshllo.u32 0, 4
    %s579 = smul.addr 4, 30
    %s580 = scalar_lea.vmem %s1, %s579
    %581 = vst [vmem:[%s580] sm:%s578] %v577
    %s582 = scalar_lea.vmem [#allocation0], 248
    %v583 = vld [vmem:[%s582] sm:%s398]
    %s584 = sshllo.u32 0, 4
    %s585 = smul.addr 4, 31
    %s586 = scalar_lea.vmem %s1, %s585
    %587 = vst [vmem:[%s586] sm:%s584] %v583
    %s588 = scalar_lea.vmem [#allocation0], 256
    %v589 = vld [vmem:[%s588] sm:%s398]
    %s590 = sshllo.u32 0, 4
    %s591 = smul.addr 4, 32
    %s592 = scalar_lea.vmem %s1, %s591
    %593 = vst [vmem:[%s592] sm:%s590] %v589
    %s594 = scalar_lea.vmem [#allocation0], 264
    %v595 = vld [vmem:[%s594] sm:%s398]
    %s596 = sshllo.u32 0, 4
    %s597 = smul.addr 4, 33
    %s598 = scalar_lea.vmem %s1, %s597
    %599 = vst [vmem:[%s598] sm:%s596] %v595
    %s600 = scalar_lea.vmem [#allocation0], 272
    %v601 = vld [vmem:[%s600] sm:%s398]
    %s602 = sshllo.u32 0, 4
    %s603 = smul.addr 4, 34
    %s604 = scalar_lea.vmem %s1, %s603
    %605 = vst [vmem:[%s604] sm:%s602] %v601
    %s606 = scalar_lea.vmem [#allocation0], 280
    %v607 = vld [vmem:[%s606] sm:%s398]
    %s608 = sshllo.u32 0, 4
    %s609 = smul.addr 4, 35
    %s610 = scalar_lea.vmem %s1, %s609
    %611 = vst [vmem:[%s610] sm:%s608] %v607
    %s612 = scalar_lea.vmem [#allocation0], 288
    %v613 = vld [vmem:[%s612] sm:%s398]
    %s614 = sshllo.u32 0, 4
    %s615 = smul.addr 4, 36
    %s616 = scalar_lea.vmem %s1, %s615
    %617 = vst [vmem:[%s616] sm:%s614] %v613
    %s618 = scalar_lea.vmem [#allocation0], 296
    %v619 = vld [vmem:[%s618] sm:%s398]
    %s620 = sshllo.u32 0, 4
    %s621 = smul.addr 4, 37
    %s622 = scalar_lea.vmem %s1, %s621
    %623 = vst [vmem:[%s622] sm:%s620] %v619
    %s624 = scalar_lea.vmem [#allocation0], 304
    %v625 = vld [vmem:[%s624] sm:%s398]
    %s626 = sshllo.u32 0, 4
    %s627 = smul.addr 4, 38
    %s628 = scalar_lea.vmem %s1, %s627
    %629 = vst [vmem:[%s628] sm:%s626] %v625
    %s630 = scalar_lea.vmem [#allocation0], 312
    %v631 = vld [vmem:[%s630] sm:%s398]
    %s632 = sshllo.u32 0, 4
    %s633 = smul.addr 4, 39
    %s634 = scalar_lea.vmem %s1, %s633
    %635 = vst [vmem:[%s634] sm:%s632] %v631
    %s636 = scalar_lea.vmem [#allocation0], 320
    %v637 = vld [vmem:[%s636] sm:%s398]
    %s638 = sshllo.u32 0, 4
    %s639 = smul.addr 4, 40
    %s640 = scalar_lea.vmem %s1, %s639
    %641 = vst [vmem:[%s640] sm:%s638] %v637
    %s642 = scalar_lea.vmem [#allocation0], 328
    %v643 = vld [vmem:[%s642] sm:%s398]
    %s644 = sshllo.u32 0, 4
    %s645 = smul.addr 4, 41
    %s646 = scalar_lea.vmem %s1, %s645
    %647 = vst [vmem:[%s646] sm:%s644] %v643
    %s648 = scalar_lea.vmem [#allocation0], 336
    %v649 = vld [vmem:[%s648] sm:%s398]
    %s650 = sshllo.u32 0, 4
    %s651 = smul.addr 4, 42
    %s652 = scalar_lea.vmem %s1, %s651
    %653 = vst [vmem:[%s652] sm:%s650] %v649
    %s654 = scalar_lea.vmem [#allocation0], 344
    %v655 = vld [vmem:[%s654] sm:%s398]
    %s656 = sshllo.u32 0, 4
    %s657 = smul.addr 4, 43
    %s658 = scalar_lea.vmem %s1, %s657
    %659 = vst [vmem:[%s658] sm:%s656] %v655
    %s660 = scalar_lea.vmem [#allocation0], 352
    %v661 = vld [vmem:[%s660] sm:%s398]
    %s662 = sshllo.u32 0, 4
    %s663 = smul.addr 4, 44
    %s664 = scalar_lea.vmem %s1, %s663
    %665 = vst [vmem:[%s664] sm:%s662] %v661
    %s666 = scalar_lea.vmem [#allocation0], 360
    %v667 = vld [vmem:[%s666] sm:%s398]
    %s668 = sshllo.u32 0, 4
    %s669 = smul.addr 4, 45
    %s670 = scalar_lea.vmem %s1, %s669
    %671 = vst [vmem:[%s670] sm:%s668] %v667
    %s672 = scalar_lea.vmem [#allocation0], 368
    %v673 = vld [vmem:[%s672] sm:%s398]
    %s674 = sshllo.u32 0, 4
    %s675 = smul.addr 4, 46
    %s676 = scalar_lea.vmem %s1, %s675
    %677 = vst [vmem:[%s676] sm:%s674] %v673
    %s678 = scalar_lea.vmem [#allocation0], 376
    %v679 = vld [vmem:[%s678] sm:%s398]
    %s680 = sshllo.u32 0, 4
    %s681 = smul.addr 4, 47
    %s682 = scalar_lea.vmem %s1, %s681
    %683 = vst [vmem:[%s682] sm:%s680] %v679
    %s684 = scalar_lea.vmem [#allocation0], 384
    %v685 = vld [vmem:[%s684] sm:%s398]
    %s686 = sshllo.u32 0, 4
    %s687 = smul.addr 4, 48
    %s688 = scalar_lea.vmem %s1, %s687
    %689 = vst [vmem:[%s688] sm:%s686] %v685
    %s690 = scalar_lea.vmem [#allocation0], 392
    %v691 = vld [vmem:[%s690] sm:%s398]
    %s692 = sshllo.u32 0, 4
    %s693 = smul.addr 4, 49
    %s694 = scalar_lea.vmem %s1, %s693
    %695 = vst [vmem:[%s694] sm:%s692] %v691
    %s696 = scalar_lea.vmem [#allocation0], 400
    %v697 = vld [vmem:[%s696] sm:%s398]
    %s698 = sshllo.u32 0, 4
    %s699 = smul.addr 4, 50
    %s700 = scalar_lea.vmem %s1, %s699
    %701 = vst [vmem:[%s700] sm:%s698] %v697
    %s702 = scalar_lea.vmem [#allocation0], 408
    %v703 = vld [vmem:[%s702] sm:%s398]
    %s704 = sshllo.u32 0, 4
    %s705 = smul.addr 4, 51
    %s706 = scalar_lea.vmem %s1, %s705
    %707 = vst [vmem:[%s706] sm:%s704] %v703
    %s708 = scalar_lea.vmem [#allocation0], 416
    %v709 = vld [vmem:[%s708] sm:%s398]
    %s710 = sshllo.u32 0, 4
    %s711 = smul.addr 4, 52
    %s712 = scalar_lea.vmem %s1, %s711
    %713 = vst [vmem:[%s712] sm:%s710] %v709
    %s714 = scalar_lea.vmem [#allocation0], 424
    %v715 = vld [vmem:[%s714] sm:%s398]
    %s716 = sshllo.u32 0, 4
    %s717 = smul.addr 4, 53
    %s718 = scalar_lea.vmem %s1, %s717
    %719 = vst [vmem:[%s718] sm:%s716] %v715
    %s720 = scalar_lea.vmem [#allocation0], 432
    %v721 = vld [vmem:[%s720] sm:%s398]
    %s722 = sshllo.u32 0, 4
    %s723 = smul.addr 4, 54
    %s724 = scalar_lea.vmem %s1, %s723
    %725 = vst [vmem:[%s724] sm:%s722] %v721
    %s726 = scalar_lea.vmem [#allocation0], 440
    %v727 = vld [vmem:[%s726] sm:%s398]
    %s728 = sshllo.u32 0, 4
    %s729 = smul.addr 4, 55
    %s730 = scalar_lea.vmem %s1, %s729
    %731 = vst [vmem:[%s730] sm:%s728] %v727
    %s732 = scalar_lea.vmem [#allocation0], 448
    %v733 = vld [vmem:[%s732] sm:%s398]
    %s734 = sshllo.u32 0, 4
    %s735 = smul.addr 4, 56
    %s736 = scalar_lea.vmem %s1, %s735
    %737 = vst [vmem:[%s736] sm:%s734] %v733
    %s738 = scalar_lea.vmem [#allocation0], 456
    %v739 = vld [vmem:[%s738] sm:%s398]
    %s740 = sshllo.u32 0, 4
    %s741 = smul.addr 4, 57
    %s742 = scalar_lea.vmem %s1, %s741
    %743 = vst [vmem:[%s742] sm:%s740] %v739
    %s744 = scalar_lea.vmem [#allocation0], 464
    %v745 = vld [vmem:[%s744] sm:%s398]
    %s746 = sshllo.u32 0, 4
    %s747 = smul.addr 4, 58
    %s748 = scalar_lea.vmem %s1, %s747
    %749 = vst [vmem:[%s748] sm:%s746] %v745
    %s750 = scalar_lea.vmem [#allocation0], 472
    %v751 = vld [vmem:[%s750] sm:%s398]
    %s752 = sshllo.u32 0, 4
    %s753 = smul.addr 4, 59
    %s754 = scalar_lea.vmem %s1, %s753
    %755 = vst [vmem:[%s754] sm:%s752] %v751
    %s756 = scalar_lea.vmem [#allocation0], 480
    %v757 = vld [vmem:[%s756] sm:%s398]
    %s758 = sshllo.u32 0, 4
    %s759 = smul.addr 4, 60
    %s760 = scalar_lea.vmem %s1, %s759
    %761 = vst [vmem:[%s760] sm:%s758] %v757
    %s762 = scalar_lea.vmem [#allocation0], 488
    %v763 = vld [vmem:[%s762] sm:%s398]
    %s764 = sshllo.u32 0, 4
    %s765 = smul.addr 4, 61
    %s766 = scalar_lea.vmem %s1, %s765
    %767 = vst [vmem:[%s766] sm:%s764] %v763
    %s768 = scalar_lea.vmem [#allocation0], 496
    %v769 = vld [vmem:[%s768] sm:%s398]
    %s770 = sshllo.u32 0, 4
    %s771 = smul.addr 4, 62
    %s772 = scalar_lea.vmem %s1, %s771
    %773 = vst [vmem:[%s772] sm:%s770] %v769
    %s774 = scalar_lea.vmem [#allocation0], 504
    %v775 = vld [vmem:[%s774] sm:%s398]
    %s776 = sshllo.u32 0, 4
    %s777 = smul.addr 4, 63
    %s778 = scalar_lea.vmem %s1, %s777
    %779 = vst [vmem:[%s778] sm:%s776] %v775
    %s780 = scalar_lea.vmem [#allocation0], 512
    %v781 = vld [vmem:[%s780] sm:%s398]
    %s782 = sshllo.u32 0, 4
    %s783 = smul.addr 4, 64
    %s784 = scalar_lea.vmem %s1, %s783
    %785 = vst [vmem:[%s784] sm:%s782] %v781
    %s786 = scalar_lea.vmem [#allocation0], 520
    %v787 = vld [vmem:[%s786] sm:%s398]
    %s788 = sshllo.u32 0, 4
    %s789 = smul.addr 4, 65
    %s790 = scalar_lea.vmem %s1, %s789
    %791 = vst [vmem:[%s790] sm:%s788] %v787
    %s792 = scalar_lea.vmem [#allocation0], 528
    %v793 = vld [vmem:[%s792] sm:%s398]
    %s794 = sshllo.u32 0, 4
    %s795 = smul.addr 4, 66
    %s796 = scalar_lea.vmem %s1, %s795
    %797 = vst [vmem:[%s796] sm:%s794] %v793
    %s798 = scalar_lea.vmem [#allocation0], 536
    %v799 = vld [vmem:[%s798] sm:%s398]
    %s800 = sshllo.u32 0, 4
    %s801 = smul.addr 4, 67
    %s802 = scalar_lea.vmem %s1, %s801
    %803 = vst [vmem:[%s802] sm:%s800] %v799
    %s804 = scalar_lea.vmem [#allocation0], 544
    %v805 = vld [vmem:[%s804] sm:%s398]
    %s806 = sshllo.u32 0, 4
    %s807 = smul.addr 4, 68
    %s808 = scalar_lea.vmem %s1, %s807
    %809 = vst [vmem:[%s808] sm:%s806] %v805
    %s810 = scalar_lea.vmem [#allocation0], 552
    %v811 = vld [vmem:[%s810] sm:%s398]
    %s812 = sshllo.u32 0, 4
    %s813 = smul.addr 4, 69
    %s814 = scalar_lea.vmem %s1, %s813
    %815 = vst [vmem:[%s814] sm:%s812] %v811
    %s816 = scalar_lea.vmem [#allocation0], 560
    %v817 = vld [vmem:[%s816] sm:%s398]
    %s818 = sshllo.u32 0, 4
    %s819 = smul.addr 4, 70
    %s820 = scalar_lea.vmem %s1, %s819
    %821 = vst [vmem:[%s820] sm:%s818] %v817
    %s822 = scalar_lea.vmem [#allocation0], 568
    %v823 = vld [vmem:[%s822] sm:%s398]
    %s824 = sshllo.u32 0, 4
    %s825 = smul.addr 4, 71
    %s826 = scalar_lea.vmem %s1, %s825
    %827 = vst [vmem:[%s826] sm:%s824] %v823
    %s828 = scalar_lea.vmem [#allocation0], 576
    %v829 = vld [vmem:[%s828] sm:%s398]
    %s830 = sshllo.u32 0, 4
    %s831 = smul.addr 4, 72
    %s832 = scalar_lea.vmem %s1, %s831
    %833 = vst [vmem:[%s832] sm:%s830] %v829
    %s834 = scalar_lea.vmem [#allocation0], 584
    %v835 = vld [vmem:[%s834] sm:%s398]
    %s836 = sshllo.u32 0, 4
    %s837 = smul.addr 4, 73
    %s838 = scalar_lea.vmem %s1, %s837
    %839 = vst [vmem:[%s838] sm:%s836] %v835
    %s840 = scalar_lea.vmem [#allocation0], 592
    %v841 = vld [vmem:[%s840] sm:%s398]
    %s842 = sshllo.u32 0, 4
    %s843 = smul.addr 4, 74
    %s844 = scalar_lea.vmem %s1, %s843
    %845 = vst [vmem:[%s844] sm:%s842] %v841
    %s846 = scalar_lea.vmem [#allocation0], 600
    %v847 = vld [vmem:[%s846] sm:%s398]
    %s848 = sshllo.u32 0, 4
    %s849 = smul.addr 4, 75
    %s850 = scalar_lea.vmem %s1, %s849
    %851 = vst [vmem:[%s850] sm:%s848] %v847
    %s852 = scalar_lea.vmem [#allocation0], 608
    %v853 = vld [vmem:[%s852] sm:%s398]
    %s854 = sshllo.u32 0, 4
    %s855 = smul.addr 4, 76
    %s856 = scalar_lea.vmem %s1, %s855
    %857 = vst [vmem:[%s856] sm:%s854] %v853
    %s858 = scalar_lea.vmem [#allocation0], 616
    %v859 = vld [vmem:[%s858] sm:%s398]
    %s860 = sshllo.u32 0, 4
    %s861 = smul.addr 4, 77
    %s862 = scalar_lea.vmem %s1, %s861
    %863 = vst [vmem:[%s862] sm:%s860] %v859
    %s864 = scalar_lea.vmem [#allocation0], 624
    %v865 = vld [vmem:[%s864] sm:%s398]
    %s866 = sshllo.u32 0, 4
    %s867 = smul.addr 4, 78
    %s868 = scalar_lea.vmem %s1, %s867
    %869 = vst [vmem:[%s868] sm:%s866] %v865
    %s870 = scalar_lea.vmem [#allocation0], 632
    %v871 = vld [vmem:[%s870] sm:%s398]
    %s872 = sshllo.u32 0, 4
    %s873 = smul.addr 4, 79
    %s874 = scalar_lea.vmem %s1, %s873
    %875 = vst [vmem:[%s874] sm:%s872] %v871
    %s876 = scalar_lea.vmem [#allocation0], 640
    %v877 = vld [vmem:[%s876] sm:%s398]
    %s878 = sshllo.u32 0, 4
    %s879 = smul.addr 4, 80
    %s880 = scalar_lea.vmem %s1, %s879
    %881 = vst [vmem:[%s880] sm:%s878] %v877
    %s882 = scalar_lea.vmem [#allocation0], 648
    %v883 = vld [vmem:[%s882] sm:%s398]
    %s884 = sshllo.u32 0, 4
    %s885 = smul.addr 4, 81
    %s886 = scalar_lea.vmem %s1, %s885
    %887 = vst [vmem:[%s886] sm:%s884] %v883
    %s888 = scalar_lea.vmem [#allocation0], 656
    %v889 = vld [vmem:[%s888] sm:%s398]
    %s890 = sshllo.u32 0, 4
    %s891 = smul.addr 4, 82
    %s892 = scalar_lea.vmem %s1, %s891
    %893 = vst [vmem:[%s892] sm:%s890] %v889
    %s894 = scalar_lea.vmem [#allocation0], 664
    %v895 = vld [vmem:[%s894] sm:%s398]
    %s896 = sshllo.u32 0, 4
    %s897 = smul.addr 4, 83
    %s898 = scalar_lea.vmem %s1, %s897
    %899 = vst [vmem:[%s898] sm:%s896] %v895
    %s900 = scalar_lea.vmem [#allocation0], 672
    %v901 = vld [vmem:[%s900] sm:%s398]
    %s902 = sshllo.u32 0, 4
    %s903 = smul.addr 4, 84
    %s904 = scalar_lea.vmem %s1, %s903
    %905 = vst [vmem:[%s904] sm:%s902] %v901
    %s906 = scalar_lea.vmem [#allocation0], 680
    %v907 = vld [vmem:[%s906] sm:%s398]
    %s908 = sshllo.u32 0, 4
    %s909 = smul.addr 4, 85
    %s910 = scalar_lea.vmem %s1, %s909
    %911 = vst [vmem:[%s910] sm:%s908] %v907
    %s912 = scalar_lea.vmem [#allocation0], 688
    %v913 = vld [vmem:[%s912] sm:%s398]
    %s914 = sshllo.u32 0, 4
    %s915 = smul.addr 4, 86
    %s916 = scalar_lea.vmem %s1, %s915
    %917 = vst [vmem:[%s916] sm:%s914] %v913
    %s918 = scalar_lea.vmem [#allocation0], 696
    %v919 = vld [vmem:[%s918] sm:%s398]
    %s920 = sshllo.u32 0, 4
    %s921 = smul.addr 4, 87
    %s922 = scalar_lea.vmem %s1, %s921
    %923 = vst [vmem:[%s922] sm:%s920] %v919
    %s924 = scalar_lea.vmem [#allocation0], 704
    %v925 = vld [vmem:[%s924] sm:%s398]
    %s926 = sshllo.u32 0, 4
    %s927 = smul.addr 4, 88
    %s928 = scalar_lea.vmem %s1, %s927
    %929 = vst [vmem:[%s928] sm:%s926] %v925
    %s930 = scalar_lea.vmem [#allocation0], 712
    %v931 = vld [vmem:[%s930] sm:%s398]
    %s932 = sshllo.u32 0, 4
    %s933 = smul.addr 4, 89
    %s934 = scalar_lea.vmem %s1, %s933
    %935 = vst [vmem:[%s934] sm:%s932] %v931
    %s936 = scalar_lea.vmem [#allocation0], 720
    %v937 = vld [vmem:[%s936] sm:%s398]
    %s938 = sshllo.u32 0, 4
    %s939 = smul.addr 4, 90
    %s940 = scalar_lea.vmem %s1, %s939
    %941 = vst [vmem:[%s940] sm:%s938] %v937
    %s942 = scalar_lea.vmem [#allocation0], 728
    %v943 = vld [vmem:[%s942] sm:%s398]
    %s944 = sshllo.u32 0, 4
    %s945 = smul.addr 4, 91
    %s946 = scalar_lea.vmem %s1, %s945
    %947 = vst [vmem:[%s946] sm:%s944] %v943
    %s948 = scalar_lea.vmem [#allocation0], 736
    %v949 = vld [vmem:[%s948] sm:%s398]
    %s950 = sshllo.u32 0, 4
    %s951 = smul.addr 4, 92
    %s952 = scalar_lea.vmem %s1, %s951
    %953 = vst [vmem:[%s952] sm:%s950] %v949
    %s954 = scalar_lea.vmem [#allocation0], 744
    %v955 = vld [vmem:[%s954] sm:%s398]
    %s956 = sshllo.u32 0, 4
    %s957 = smul.addr 4, 93
    %s958 = scalar_lea.vmem %s1, %s957
    %959 = vst [vmem:[%s958] sm:%s956] %v955
    %s960 = scalar_lea.vmem [#allocation0], 752
    %v961 = vld [vmem:[%s960] sm:%s398]
    %s962 = sshllo.u32 0, 4
    %s963 = smul.addr 4, 94
    %s964 = scalar_lea.vmem %s1, %s963
    %965 = vst [vmem:[%s964] sm:%s962] %v961
    %s966 = scalar_lea.vmem [#allocation0], 760
    %v967 = vld [vmem:[%s966] sm:%s398]
    %s968 = sshllo.u32 0, 4
    %s969 = smul.addr 4, 95
    %s970 = scalar_lea.vmem %s1, %s969
    %971 = vst [vmem:[%s970] sm:%s968] %v967
    %s972 = scalar_lea.vmem [#allocation0], 768
    %v973 = vld [vmem:[%s972] sm:%s398]
    %s974 = sshllo.u32 0, 4
    %s975 = smul.addr 4, 96
    %s976 = scalar_lea.vmem %s1, %s975
    %977 = vst [vmem:[%s976] sm:%s974] %v973
    %s978 = scalar_lea.vmem [#allocation0], 776
    %v979 = vld [vmem:[%s978] sm:%s398]
    %s980 = sshllo.u32 0, 4
    %s981 = smul.addr 4, 97
    %s982 = scalar_lea.vmem %s1, %s981
    %983 = vst [vmem:[%s982] sm:%s980] %v979
    %s984 = scalar_lea.vmem [#allocation0], 784
    %v985 = vld [vmem:[%s984] sm:%s398]
    %s986 = sshllo.u32 0, 4
    %s987 = smul.addr 4, 98
    %s988 = scalar_lea.vmem %s1, %s987
    %989 = vst [vmem:[%s988] sm:%s986] %v985
    %s990 = scalar_lea.vmem [#allocation0], 792
    %v991 = vld [vmem:[%s990] sm:%s398]
    %s992 = sshllo.u32 0, 4
    %s993 = smul.addr 4, 99
    %s994 = scalar_lea.vmem %s1, %s993
    %995 = vst [vmem:[%s994] sm:%s992] %v991
    %s996 = scalar_lea.vmem [#allocation0], 800
    %v997 = vld [vmem:[%s996] sm:%s398]
    %s998 = sshllo.u32 0, 4
    %s999 = smul.addr 4, 100
    %s1000 = scalar_lea.vmem %s1, %s999
    %1001 = vst [vmem:[%s1000] sm:%s998] %v997
    %s1002 = scalar_lea.vmem [#allocation0], 808
    %v1003 = vld [vmem:[%s1002] sm:%s398]
    %s1004 = sshllo.u32 0, 4
    %s1005 = smul.addr 4, 101
    %s1006 = scalar_lea.vmem %s1, %s1005
    %1007 = vst [vmem:[%s1006] sm:%s1004] %v1003
    %s1008 = scalar_lea.vmem [#allocation0], 816
    %v1009 = vld [vmem:[%s1008] sm:%s398]
    %s1010 = sshllo.u32 0, 4
    %s1011 = smul.addr 4, 102
    %s1012 = scalar_lea.vmem %s1, %s1011
    %1013 = vst [vmem:[%s1012] sm:%s1010] %v1009
    %s1014 = scalar_lea.vmem [#allocation0], 824
    %v1015 = vld [vmem:[%s1014] sm:%s398]
    %s1016 = sshllo.u32 0, 4
    %s1017 = smul.addr 4, 103
    %s1018 = scalar_lea.vmem %s1, %s1017
    %1019 = vst [vmem:[%s1018] sm:%s1016] %v1015
    %s1020 = scalar_lea.vmem [#allocation0], 832
    %v1021 = vld [vmem:[%s1020] sm:%s398]
    %s1022 = sshllo.u32 0, 4
    %s1023 = smul.addr 4, 104
    %s1024 = scalar_lea.vmem %s1, %s1023
    %1025 = vst [vmem:[%s1024] sm:%s1022] %v1021
    %s1026 = scalar_lea.vmem [#allocation0], 840
    %v1027 = vld [vmem:[%s1026] sm:%s398]
    %s1028 = sshllo.u32 0, 4
    %s1029 = smul.addr 4, 105
    %s1030 = scalar_lea.vmem %s1, %s1029
    %1031 = vst [vmem:[%s1030] sm:%s1028] %v1027
    %s1032 = scalar_lea.vmem [#allocation0], 848
    %v1033 = vld [vmem:[%s1032] sm:%s398]
    %s1034 = sshllo.u32 0, 4
    %s1035 = smul.addr 4, 106
    %s1036 = scalar_lea.vmem %s1, %s1035
    %1037 = vst [vmem:[%s1036] sm:%s1034] %v1033
    %s1038 = scalar_lea.vmem [#allocation0], 856
    %v1039 = vld [vmem:[%s1038] sm:%s398]
    %s1040 = sshllo.u32 0, 4
    %s1041 = smul.addr 4, 107
    %s1042 = scalar_lea.vmem %s1, %s1041
    %1043 = vst [vmem:[%s1042] sm:%s1040] %v1039
    %s1044 = scalar_lea.vmem [#allocation0], 864
    %v1045 = vld [vmem:[%s1044] sm:%s398]
    %s1046 = sshllo.u32 0, 4
    %s1047 = smul.addr 4, 108
    %s1048 = scalar_lea.vmem %s1, %s1047
    %1049 = vst [vmem:[%s1048] sm:%s1046] %v1045
    %s1050 = scalar_lea.vmem [#allocation0], 872
    %v1051 = vld [vmem:[%s1050] sm:%s398]
    %s1052 = sshllo.u32 0, 4
    %s1053 = smul.addr 4, 109
    %s1054 = scalar_lea.vmem %s1, %s1053
    %1055 = vst [vmem:[%s1054] sm:%s1052] %v1051
    %s1056 = scalar_lea.vmem [#allocation0], 880
    %v1057 = vld [vmem:[%s1056] sm:%s398]
    %s1058 = sshllo.u32 0, 4
    %s1059 = smul.addr 4, 110
    %s1060 = scalar_lea.vmem %s1, %s1059
    %1061 = vst [vmem:[%s1060] sm:%s1058] %v1057
    %s1062 = scalar_lea.vmem [#allocation0], 888
    %v1063 = vld [vmem:[%s1062] sm:%s398]
    %s1064 = sshllo.u32 0, 4
    %s1065 = smul.addr 4, 111
    %s1066 = scalar_lea.vmem %s1, %s1065
    %1067 = vst [vmem:[%s1066] sm:%s1064] %v1063
    %s1068 = scalar_lea.vmem [#allocation0], 896
    %v1069 = vld [vmem:[%s1068] sm:%s398]
    %s1070 = sshllo.u32 0, 4
    %s1071 = smul.addr 4, 112
    %s1072 = scalar_lea.vmem %s1, %s1071
    %1073 = vst [vmem:[%s1072] sm:%s1070] %v1069
    %s1074 = scalar_lea.vmem [#allocation0], 904
    %v1075 = vld [vmem:[%s1074] sm:%s398]
    %s1076 = sshllo.u32 0, 4
    %s1077 = smul.addr 4, 113
    %s1078 = scalar_lea.vmem %s1, %s1077
    %1079 = vst [vmem:[%s1078] sm:%s1076] %v1075
    %s1080 = scalar_lea.vmem [#allocation0], 912
    %v1081 = vld [vmem:[%s1080] sm:%s398]
    %s1082 = sshllo.u32 0, 4
    %s1083 = smul.addr 4, 114
    %s1084 = scalar_lea.vmem %s1, %s1083
    %1085 = vst [vmem:[%s1084] sm:%s1082] %v1081
    %s1086 = scalar_lea.vmem [#allocation0], 920
    %v1087 = vld [vmem:[%s1086] sm:%s398]
    %s1088 = sshllo.u32 0, 4
    %s1089 = smul.addr 4, 115
    %s1090 = scalar_lea.vmem %s1, %s1089
    %1091 = vst [vmem:[%s1090] sm:%s1088] %v1087
    %s1092 = scalar_lea.vmem [#allocation0], 928
    %v1093 = vld [vmem:[%s1092] sm:%s398]
    %s1094 = sshllo.u32 0, 4
    %s1095 = smul.addr 4, 116
    %s1096 = scalar_lea.vmem %s1, %s1095
    %1097 = vst [vmem:[%s1096] sm:%s1094] %v1093
    %s1098 = scalar_lea.vmem [#allocation0], 936
    %v1099 = vld [vmem:[%s1098] sm:%s398]
    %s1100 = sshllo.u32 0, 4
    %s1101 = smul.addr 4, 117
    %s1102 = scalar_lea.vmem %s1, %s1101
    %1103 = vst [vmem:[%s1102] sm:%s1100] %v1099
    %s1104 = scalar_lea.vmem [#allocation0], 944
    %v1105 = vld [vmem:[%s1104] sm:%s398]
    %s1106 = sshllo.u32 0, 4
    %s1107 = smul.addr 4, 118
    %s1108 = scalar_lea.vmem %s1, %s1107
    %1109 = vst [vmem:[%s1108] sm:%s1106] %v1105
    %s1110 = scalar_lea.vmem [#allocation0], 952
    %v1111 = vld [vmem:[%s1110] sm:%s398]
    %s1112 = sshllo.u32 0, 4
    %s1113 = smul.addr 4, 119
    %s1114 = scalar_lea.vmem %s1, %s1113
    %1115 = vst [vmem:[%s1114] sm:%s1112] %v1111
    %s1116 = scalar_lea.vmem [#allocation0], 960
    %v1117 = vld [vmem:[%s1116] sm:%s398]
    %s1118 = sshllo.u32 0, 4
    %s1119 = smul.addr 4, 120
    %s1120 = scalar_lea.vmem %s1, %s1119
    %1121 = vst [vmem:[%s1120] sm:%s1118] %v1117
    %s1122 = scalar_lea.vmem [#allocation0], 968
    %v1123 = vld [vmem:[%s1122] sm:%s398]
    %s1124 = sshllo.u32 0, 4
    %s1125 = smul.addr 4, 121
    %s1126 = scalar_lea.vmem %s1, %s1125
    %1127 = vst [vmem:[%s1126] sm:%s1124] %v1123
    %s1128 = scalar_lea.vmem [#allocation0], 976
    %v1129 = vld [vmem:[%s1128] sm:%s398]
    %s1130 = sshllo.u32 0, 4
    %s1131 = smul.addr 4, 122
    %s1132 = scalar_lea.vmem %s1, %s1131
    %1133 = vst [vmem:[%s1132] sm:%s1130] %v1129
    %s1134 = scalar_lea.vmem [#allocation0], 984
    %v1135 = vld [vmem:[%s1134] sm:%s398]
    %s1136 = sshllo.u32 0, 4
    %s1137 = smul.addr 4, 123
    %s1138 = scalar_lea.vmem %s1, %s1137
    %1139 = vst [vmem:[%s1138] sm:%s1136] %v1135
    %s1140 = scalar_lea.vmem [#allocation0], 992
    %v1141 = vld [vmem:[%s1140] sm:%s398]
    %s1142 = sshllo.u32 0, 4
    %s1143 = smul.addr 4, 124
    %s1144 = scalar_lea.vmem %s1, %s1143
    %1145 = vst [vmem:[%s1144] sm:%s1142] %v1141
    %s1146 = scalar_lea.vmem [#allocation0], 1000
    %v1147 = vld [vmem:[%s1146] sm:%s398]
    %s1148 = sshllo.u32 0, 4
    %s1149 = smul.addr 4, 125
    %s1150 = scalar_lea.vmem %s1, %s1149
    %1151 = vst [vmem:[%s1150] sm:%s1148] %v1147
    %s1152 = scalar_lea.vmem [#allocation0], 1008
    %v1153 = vld [vmem:[%s1152] sm:%s398]
    %s1154 = sshllo.u32 0, 4
    %s1155 = smul.addr 4, 126
    %s1156 = scalar_lea.vmem %s1, %s1155
    %1157 = vst [vmem:[%s1156] sm:%s1154] %v1153
    %s1158 = scalar_lea.vmem [#allocation0], 1016
    %v1159 = vld [vmem:[%s1158] sm:%s398]
    %s1160 = sshllo.u32 0, 4
    %s1161 = smul.addr 4, 127
    %s1162 = scalar_lea.vmem %s1, %s1161
    %1163 = vst [vmem:[%s1162] sm:%s1160] %v1159

// kernel: mul.136
$region0: #{mul.136}
  %s0 = inlined_call_operand.hbm [shape: f32[4,32,96], index: 0, kind: input, shape index: {}]
  %s1 = inlined_call_operand.vmem [shape: f32[4,32,3,32], index: 1, kind: output, shape index: {}]
  $region1: #{mul.136} parent=0
    #allocation0 [shape = 'u8[65536]{0}', space=vmem, size = 0x10000, scoped, tag = 'operand span for operand 0']
    #allocation1 [shape = 's32[1]{0}', space=sflag, size = 0x4, scoped, tag = 'scoped memory for mul.136']
    #allocation2 [shape = 'u8[524288]{0}', space=vmem, size = 0x80000, scoped, tag = 'scoped mem for output reshape']
    %2 = vsyncpa [#allocation1], 0
    %s4 = ssub.s32 2048, 2048
    %5 = vsyncadd [#allocation1], %s4
    %s7 = sshll.u32 [#allocation0], 4
    %s8 = int_to_ptr.vmem [resolvable:$true] %s7
    %10 = dma.hbm_to_vmem [thread:$0]  %s0, 2048, %s8, [#allocation1]
    %11 = dma.done [#allocation1], 2048
    %v12 = vld [vmem:[#allocation0] sm:$0xff]
    %vm13 = vcmask 261120
    %14 = vst.msk [vmem:[#allocation2] ss:$8 sm:$0xf] %vm13, %v12
    %15 = vst.msk [vmem:[#allocation2] ss:$8 sm:$0xf0] %vm13, %v12
    %s16 = scalar_lea.vmem [#allocation0], 8
    %v17 = vld [vmem:[%s16] sm:$0xff]
    %vm18 = vcmask 261120
    %s19 = scalar_lea.vmem [#allocation2], 64
    %20 = vst.msk [vmem:[%s19] ss:$8 sm:$0xf] %vm18, %v17
    %s21 = scalar_lea.vmem [#allocation2], 64
    %22 = vst.msk [vmem:[%s21] ss:$8 sm:$0xf0] %vm18, %v17
    %s23 = scalar_lea.vmem [#allocation0], 16
    %v24 = vld [vmem:[%s23] sm:$0xff]
    %vm25 = vcmask 261120
    %s26 = scalar_lea.vmem [#allocation2], 128
    %27 = vst.msk [vmem:[%s26] ss:$8 sm:$0xf] %vm25, %v24
    %s28 = scalar_lea.vmem [#allocation2], 128
    %29 = vst.msk [vmem:[%s28] ss:$8 sm:$0xf0] %vm25, %v24
    %s30 = scalar_lea.vmem [#allocation0], 24
    %v31 = vld [vmem:[%s30] sm:$0xff]
    %vm32 = vcmask 261120
    %s33 = scalar_lea.vmem [#allocation2], 192
    %34 = vst.msk [vmem:[%s33] ss:$8 sm:$0xf] %vm32, %v31
    %s35 = scalar_lea.vmem [#allocation2], 192
    %36 = vst.msk [vmem:[%s35] ss:$8 sm:$0xf0] %vm32, %v31
    %s37 = scalar_lea.vmem [#allocation0], 32
    %v38 = vld [vmem:[%s37] sm:$0xff]
    %vm39 = vcmask 261120
    %s40 = scalar_lea.vmem [#allocation2], 256
    %41 = vst.msk [vmem:[%s40] ss:$8 sm:$0xf] %vm39, %v38
    %s42 = scalar_lea.vmem [#allocation2], 256
    %43 = vst.msk [vmem:[%s42] ss:$8 sm:$0xf0] %vm39, %v38
    %s44 = scalar_lea.vmem [#allocation0], 40
    %v45 = vld [vmem:[%s44] sm:$0xff]
    %vm46 = vcmask 261120
    %s47 = scalar_lea.vmem [#allocation2], 320
    %48 = vst.msk [vmem:[%s47] ss:$8 sm:$0xf] %vm46, %v45
    %s49 = scalar_lea.vmem [#allocation2], 320
    %50 = vst.msk [vmem:[%s49] ss:$8 sm:$0xf0] %vm46, %v45
    %s51 = scalar_lea.vmem [#allocation0], 48
    %v52 = vld [vmem:[%s51] sm:$0xff]
    %vm53 = vcmask 261120
    %s54 = scalar_lea.vmem [#allocation2], 384
    %55 = vst.msk [vmem:[%s54] ss:$8 sm:$0xf] %vm53, %v52
    %s56 = scalar_lea.vmem [#allocation2], 384
    %57 = vst.msk [vmem:[%s56] ss:$8 sm:$0xf0] %vm53, %v52
    %s58 = scalar_lea.vmem [#allocation0], 56
    %v59 = vld [vmem:[%s58] sm:$0xff]
    %vm60 = vcmask 261120
    %s61 = scalar_lea.vmem [#allocation2], 448
    %62 = vst.msk [vmem:[%s61] ss:$8 sm:$0xf] %vm60, %v59
    %s63 = scalar_lea.vmem [#allocation2], 448
    %64 = vst.msk [vmem:[%s63] ss:$8 sm:$0xf0] %vm60, %v59
    %s65 = scalar_lea.vmem [#allocation0], 64
    %v66 = vld [vmem:[%s65] sm:$0xff]
    %vm67 = vcmask 261120
    %s68 = scalar_lea.vmem [#allocation2], 512
    %69 = vst.msk [vmem:[%s68] ss:$8 sm:$0xf] %vm67, %v66
    %s70 = scalar_lea.vmem [#allocation2], 512
    %71 = vst.msk [vmem:[%s70] ss:$8 sm:$0xf0] %vm67, %v66
    %s72 = scalar_lea.vmem [#allocation0], 72
    %v73 = vld [vmem:[%s72] sm:$0xff]
    %vm74 = vcmask 261120
    %s75 = scalar_lea.vmem [#allocation2], 576
    %76 = vst.msk [vmem:[%s75] ss:$8 sm:$0xf] %vm74, %v73
    %s77 = scalar_lea.vmem [#allocation2], 576
    %78 = vst.msk [vmem:[%s77] ss:$8 sm:$0xf0] %vm74, %v73
    %s79 = scalar_lea.vmem [#allocation0], 80
    %v80 = vld [vmem:[%s79] sm:$0xff]
    %vm81 = vcmask 261120
    %s82 = scalar_lea.vmem [#allocation2], 640
    %83 = vst.msk [vmem:[%s82] ss:$8 sm:$0xf] %vm81, %v80
    %s84 = scalar_lea.vmem [#allocation2], 640
    %85 = vst.msk [vmem:[%s84] ss:$8 sm:$0xf0] %vm81, %v80
    %s86 = scalar_lea.vmem [#allocation0], 88
    %v87 = vld [vmem:[%s86] sm:$0xff]
    %vm88 = vcmask 261120
    %s89 = scalar_lea.vmem [#allocation2], 704
    %90 = vst.msk [vmem:[%s89] ss:$8 sm:$0xf] %vm88, %v87
    %s91 = scalar_lea.vmem [#allocation2], 704
    %92 = vst.msk [vmem:[%s91] ss:$8 sm:$0xf0] %vm88, %v87
    %s93 = scalar_lea.vmem [#allocation0], 96
    %v94 = vld [vmem:[%s93] sm:$0xff]
    %vm95 = vcmask 261120
    %s96 = scalar_lea.vmem [#allocation2], 768
    %97 = vst.msk [vmem:[%s96] ss:$8 sm:$0xf] %vm95, %v94
    %s98 = scalar_lea.vmem [#allocation2], 768
    %99 = vst.msk [vmem:[%s98] ss:$8 sm:$0xf0] %vm95, %v94
    %s100 = scalar_lea.vmem [#allocation0], 104
    %v101 = vld [vmem:[%s100] sm:$0xff]
    %vm102 = vcmask 261120
    %s103 = scalar_lea.vmem [#allocation2], 832
    %104 = vst.msk [vmem:[%s103] ss:$8 sm:$0xf] %vm102, %v101
    %s105 = scalar_lea.vmem [#allocation2], 832
    %106 = vst.msk [vmem:[%s105] ss:$8 sm:$0xf0] %vm102, %v101
    %s107 = scalar_lea.vmem [#allocation0], 112
    %v108 = vld [vmem:[%s107] sm:$0xff]
    %vm109 = vcmask 261120
    %s110 = scalar_lea.vmem [#allocation2], 896
    %111 = vst.msk [vmem:[%s110] ss:$8 sm:$0xf] %vm109, %v108
    %s112 = scalar_lea.vmem [#allocation2], 896
    %113 = vst.msk [vmem:[%s112] ss:$8 sm:$0xf0] %vm109, %v108
    %s114 = scalar_lea.vmem [#allocation0], 120
    %v115 = vld [vmem:[%s114] sm:$0xff]
    %vm116 = vcmask 261120
    %s117 = scalar_lea.vmem [#allocation2], 960
    %118 = vst.msk [vmem:[%s117] ss:$8 sm:$0xf] %vm116, %v115
    %s119 = scalar_lea.vmem [#allocation2], 960
    %120 = vst.msk [vmem:[%s119] ss:$8 sm:$0xf0] %vm116, %v115
    %v121 = vld [vmem:[#allocation0] sm:$0xff]
    %122 = vrot.lane.b32.xlu0 %v121, 96
    %v123 = vpop.permute.xlu0 %122
    %vm124 = vcmask 261120
    %s125 = scalar_lea.vmem [#allocation2], 1
    %126 = vst.msk [vmem:[%s125] ss:$8 sm:$0xf] %vm124, %v123
    %s127 = scalar_lea.vmem [#allocation2], 1
    %128 = vst.msk [vmem:[%s127] ss:$8 sm:$0xf0] %vm124, %v123
    %s129 = scalar_lea.vmem [#allocation0], 8
    %v130 = vld [vmem:[%s129] sm:$0xff]
    %131 = vrot.lane.b32.xlu0 %v130, 96
    %v132 = vpop.permute.xlu0 %131
    %vm133 = vcmask 261120
    %s134 = scalar_lea.vmem [#allocation2], 65
    %135 = vst.msk [vmem:[%s134] ss:$8 sm:$0xf] %vm133, %v132
    %s136 = scalar_lea.vmem [#allocation2], 65
    %137 = vst.msk [vmem:[%s136] ss:$8 sm:$0xf0] %vm133, %v132
    %s138 = scalar_lea.vmem [#allocation0], 16
    %v139 = vld [vmem:[%s138] sm:$0xff]
    %140 = vrot.lane.b32.xlu0 %v139, 96
    %v141 = vpop.permute.xlu0 %140
    %vm142 = vcmask 261120
    %s143 = scalar_lea.vmem [#allocation2], 129
    %144 = vst.msk [vmem:[%s143] ss:$8 sm:$0xf] %vm142, %v141
    %s145 = scalar_lea.vmem [#allocation2], 129
    %146 = vst.msk [vmem:[%s145] ss:$8 sm:$0xf0] %vm142, %v141
    %s147 = scalar_lea.vmem [#allocation0], 24
    %v148 = vld [vmem:[%s147] sm:$0xff]
    %149 = vrot.lane.b32.xlu0 %v148, 96
    %v150 = vpop.permute.xlu0 %149
    %vm151 = vcmask 261120
    %s152 = scalar_lea.vmem [#allocation2], 193
    %153 = vst.msk [vmem:[%s152] ss:$8 sm:$0xf] %vm151, %v150
    %s154 = scalar_lea.vmem [#allocation2], 193
    %155 = vst.msk [vmem:[%s154] ss:$8 sm:$0xf0] %vm151, %v150
    %s156 = scalar_lea.vmem [#allocation0], 32
    %v157 = vld [vmem:[%s156] sm:$0xff]
    %158 = vrot.lane.b32.xlu0 %v157, 96
    %v159 = vpop.permute.xlu0 %158
    %vm160 = vcmask 261120
    %s161 = scalar_lea.vmem [#allocation2], 257
    %162 = vst.msk [vmem:[%s161] ss:$8 sm:$0xf] %vm160, %v159
    %s163 = scalar_lea.vmem [#allocation2], 257
    %164 = vst.msk [vmem:[%s163] ss:$8 sm:$0xf0] %vm160, %v159
    %s165 = scalar_lea.vmem [#allocation0], 40
    %v166 = vld [vmem:[%s165] sm:$0xff]
    %167 = vrot.lane.b32.xlu0 %v166, 96
    %v168 = vpop.permute.xlu0 %167
    %vm169 = vcmask 261120
    %s170 = scalar_lea.vmem [#allocation2], 321
    %171 = vst.msk [vmem:[%s170] ss:$8 sm:$0xf] %vm169, %v168
    %s172 = scalar_lea.vmem [#allocation2], 321
    %173 = vst.msk [vmem:[%s172] ss:$8 sm:$0xf0] %vm169, %v168
    %s174 = scalar_lea.vmem [#allocation0], 48
    %v175 = vld [vmem:[%s174] sm:$0xff]
    %176 = vrot.lane.b32.xlu0 %v175, 96
    %v177 = vpop.permute.xlu0 %176
    %vm178 = vcmask 261120
    %s179 = scalar_lea.vmem [#allocation2], 385
    %180 = vst.msk [vmem:[%s179] ss:$8 sm:$0xf] %vm178, %v177
    %s181 = scalar_lea.vmem [#allocation2], 385
    %182 = vst.msk [vmem:[%s181] ss:$8 sm:$0xf0] %vm178, %v177
    %s183 = scalar_lea.vmem [#allocation0], 56
    %v184 = vld [vmem:[%s183] sm:$0xff]
    %185 = vrot.lane.b32.xlu0 %v184, 96
    %v186 = vpop.permute.xlu0 %185
    %vm187 = vcmask 261120
    %s188 = scalar_lea.vmem [#allocation2], 449
    %189 = vst.msk [vmem:[%s188] ss:$8 sm:$0xf] %vm187, %v186
    %s190 = scalar_lea.vmem [#allocation2], 449
    %191 = vst.msk [vmem:[%s190] ss:$8 sm:$0xf0] %vm187, %v186
    %s192 = scalar_lea.vmem [#allocation0], 64
    %v193 = vld [vmem:[%s192] sm:$0xff]
    %194 = vrot.lane.b32.xlu0 %v193, 96
    %v195 = vpop.permute.xlu0 %194
    %vm196 = vcmask 261120
    %s197 = scalar_lea.vmem [#allocation2], 513
    %198 = vst.msk [vmem:[%s197] ss:$8 sm:$0xf] %vm196, %v195
    %s199 = scalar_lea.vmem [#allocation2], 513
    %200 = vst.msk [vmem:[%s199] ss:$8 sm:$0xf0] %vm196, %v195
    %s201 = scalar_lea.vmem [#allocation0], 72
    %v202 = vld [vmem:[%s201] sm:$0xff]
    %203 = vrot.lane.b32.xlu0 %v202, 96
    %v204 = vpop.permute.xlu0 %203
    %vm205 = vcmask 261120
    %s206 = scalar_lea.vmem [#allocation2], 577
    %207 = vst.msk [vmem:[%s206] ss:$8 sm:$0xf] %vm205, %v204
    %s208 = scalar_lea.vmem [#allocation2], 577
    %209 = vst.msk [vmem:[%s208] ss:$8 sm:$0xf0] %vm205, %v204
    %s210 = scalar_lea.vmem [#allocation0], 80
    %v211 = vld [vmem:[%s210] sm:$0xff]
    %212 = vrot.lane.b32.xlu0 %v211, 96
    %v213 = vpop.permute.xlu0 %212
    %vm214 = vcmask 261120
    %s215 = scalar_lea.vmem [#allocation2], 641
    %216 = vst.msk [vmem:[%s215] ss:$8 sm:$0xf] %vm214, %v213
    %s217 = scalar_lea.vmem [#allocation2], 641
    %218 = vst.msk [vmem:[%s217] ss:$8 sm:$0xf0] %vm214, %v213
    %s219 = scalar_lea.vmem [#allocation0], 88
    %v220 = vld [vmem:[%s219] sm:$0xff]
    %221 = vrot.lane.b32.xlu0 %v220, 96
    %v222 = vpop.permute.xlu0 %221
    %vm223 = vcmask 261120
    %s224 = scalar_lea.vmem [#allocation2], 705
    %225 = vst.msk [vmem:[%s224] ss:$8 sm:$0xf] %vm223, %v222
    %s226 = scalar_lea.vmem [#allocation2], 705
    %227 = vst.msk [vmem:[%s226] ss:$8 sm:$0xf0] %vm223, %v222
    %s228 = scalar_lea.vmem [#allocation0], 96
    %v229 = vld [vmem:[%s228] sm:$0xff]
    %230 = vrot.lane.b32.xlu0 %v229, 96
    %v231 = vpop.permute.xlu0 %230
    %vm232 = vcmask 261120
    %s233 = scalar_lea.vmem [#allocation2], 769
    %234 = vst.msk [vmem:[%s233] ss:$8 sm:$0xf] %vm232, %v231
    %s235 = scalar_lea.vmem [#allocation2], 769
    %236 = vst.msk [vmem:[%s235] ss:$8 sm:$0xf0] %vm232, %v231
    %s237 = scalar_lea.vmem [#allocation0], 104
    %v238 = vld [vmem:[%s237] sm:$0xff]
    %239 = vrot.lane.b32.xlu0 %v238, 96
    %v240 = vpop.permute.xlu0 %239
    %vm241 = vcmask 261120
    %s242 = scalar_lea.vmem [#allocation2], 833
    %243 = vst.msk [vmem:[%s242] ss:$8 sm:$0xf] %vm241, %v240
    %s244 = scalar_lea.vmem [#allocation2], 833
    %245 = vst.msk [vmem:[%s244] ss:$8 sm:$0xf0] %vm241, %v240
    %s246 = scalar_lea.vmem [#allocation0], 112
    %v247 = vld [vmem:[%s246] sm:$0xff]
    %248 = vrot.lane.b32.xlu0 %v247, 96
    %v249 = vpop.permute.xlu0 %248
    %vm250 = vcmask 261120
    %s251 = scalar_lea.vmem [#allocation2], 897
    %252 = vst.msk [vmem:[%s251] ss:$8 sm:$0xf] %vm250, %v249
    %s253 = scalar_lea.vmem [#allocation2], 897
    %254 = vst.msk [vmem:[%s253] ss:$8 sm:$0xf0] %vm250, %v249
    %s255 = scalar_lea.vmem [#allocation0], 120
    %v256 = vld [vmem:[%s255] sm:$0xff]
    %257 = vrot.lane.b32.xlu0 %v256, 96
    %v258 = vpop.permute.xlu0 %257
    %vm259 = vcmask 261120
    %s260 = scalar_lea.vmem [#allocation2], 961
    %261 = vst.msk [vmem:[%s260] ss:$8 sm:$0xf] %vm259, %v258
    %s262 = scalar_lea.vmem [#allocation2], 961
    %263 = vst.msk [vmem:[%s262] ss:$8 sm:$0xf0] %vm259, %v258
    %v264 = vld [vmem:[#allocation0] sm:$0xff]
    %265 = vrot.lane.b32.xlu0 %v264, 64
    %v266 = vpop.permute.xlu0 %265
    %vm267 = vcmask 261120
    %s268 = scalar_lea.vmem [#allocation2], 2
    %269 = vst.msk [vmem:[%s268] ss:$8 sm:$0xf] %vm267, %v266
    %s270 = scalar_lea.vmem [#allocation2], 2
    %271 = vst.msk [vmem:[%s270] ss:$8 sm:$0xf0] %vm267, %v266
    %s272 = scalar_lea.vmem [#allocation0], 8
    %v273 = vld [vmem:[%s272] sm:$0xff]
    %274 = vrot.lane.b32.xlu0 %v273, 64
    %v275 = vpop.permute.xlu0 %274
    %vm276 = vcmask 261120
    %s277 = scalar_lea.vmem [#allocation2], 66
    %278 = vst.msk [vmem:[%s277] ss:$8 sm:$0xf] %vm276, %v275
    %s279 = scalar_lea.vmem [#allocation2], 66
    %280 = vst.msk [vmem:[%s279] ss:$8 sm:$0xf0] %vm276, %v275
    %s281 = scalar_lea.vmem [#allocation0], 16
    %v282 = vld [vmem:[%s281] sm:$0xff]
    %283 = vrot.lane.b32.xlu0 %v282, 64
    %v284 = vpop.permute.xlu0 %283
    %vm285 = vcmask 261120
    %s286 = scalar_lea.vmem [#allocation2], 130
    %287 = vst.msk [vmem:[%s286] ss:$8 sm:$0xf] %vm285, %v284
    %s288 = scalar_lea.vmem [#allocation2], 130
    %289 = vst.msk [vmem:[%s288] ss:$8 sm:$0xf0] %vm285, %v284
    %s290 = scalar_lea.vmem [#allocation0], 24
    %v291 = vld [vmem:[%s290] sm:$0xff]
    %292 = vrot.lane.b32.xlu0 %v291, 64
    %v293 = vpop.permute.xlu0 %292
    %vm294 = vcmask 261120
    %s295 = scalar_lea.vmem [#allocation2], 194
    %296 = vst.msk [vmem:[%s295] ss:$8 sm:$0xf] %vm294, %v293
    %s297 = scalar_lea.vmem [#allocation2], 194
    %298 = vst.msk [vmem:[%s297] ss:$8 sm:$0xf0] %vm294, %v293
    %s299 = scalar_lea.vmem [#allocation0], 32
    %v300 = vld [vmem:[%s299] sm:$0xff]
    %301 = vrot.lane.b32.xlu0 %v300, 64
    %v302 = vpop.permute.xlu0 %301
    %vm303 = vcmask 261120
    %s304 = scalar_lea.vmem [#allocation2], 258
    %305 = vst.msk [vmem:[%s304] ss:$8 sm:$0xf] %vm303, %v302
    %s306 = scalar_lea.vmem [#allocation2], 258
    %307 = vst.msk [vmem:[%s306] ss:$8 sm:$0xf0] %vm303, %v302
    %s308 = scalar_lea.vmem [#allocation0], 40
    %v309 = vld [vmem:[%s308] sm:$0xff]
    %310 = vrot.lane.b32.xlu0 %v309, 64
    %v311 = vpop.permute.xlu0 %310
    %vm312 = vcmask 261120
    %s313 = scalar_lea.vmem [#allocation2], 322
    %314 = vst.msk [vmem:[%s313] ss:$8 sm:$0xf] %vm312, %v311
    %s315 = scalar_lea.vmem [#allocation2], 322
    %316 = vst.msk [vmem:[%s315] ss:$8 sm:$0xf0] %vm312, %v311
    %s317 = scalar_lea.vmem [#allocation0], 48
    %v318 = vld [vmem:[%s317] sm:$0xff]
    %319 = vrot.lane.b32.xlu0 %v318, 64
    %v320 = vpop.permute.xlu0 %319
    %vm321 = vcmask 261120
    %s322 = scalar_lea.vmem [#allocation2], 386
    %323 = vst.msk [vmem:[%s322] ss:$8 sm:$0xf] %vm321, %v320
    %s324 = scalar_lea.vmem [#allocation2], 386
    %325 = vst.msk [vmem:[%s324] ss:$8 sm:$0xf0] %vm321, %v320
    %s326 = scalar_lea.vmem [#allocation0], 56
    %v327 = vld [vmem:[%s326] sm:$0xff]
    %328 = vrot.lane.b32.xlu0 %v327, 64
    %v329 = vpop.permute.xlu0 %328
    %vm330 = vcmask 261120
    %s331 = scalar_lea.vmem [#allocation2], 450
    %332 = vst.msk [vmem:[%s331] ss:$8 sm:$0xf] %vm330, %v329
    %s333 = scalar_lea.vmem [#allocation2], 450
    %334 = vst.msk [vmem:[%s333] ss:$8 sm:$0xf0] %vm330, %v329
    %s335 = scalar_lea.vmem [#allocation0], 64
    %v336 = vld [vmem:[%s335] sm:$0xff]
    %337 = vrot.lane.b32.xlu0 %v336, 64
    %v338 = vpop.permute.xlu0 %337
    %vm339 = vcmask 261120
    %s340 = scalar_lea.vmem [#allocation2], 514
    %341 = vst.msk [vmem:[%s340] ss:$8 sm:$0xf] %vm339, %v338
    %s342 = scalar_lea.vmem [#allocation2], 514
    %343 = vst.msk [vmem:[%s342] ss:$8 sm:$0xf0] %vm339, %v338
    %s344 = scalar_lea.vmem [#allocation0], 72
    %v345 = vld [vmem:[%s344] sm:$0xff]
    %346 = vrot.lane.b32.xlu0 %v345, 64
    %v347 = vpop.permute.xlu0 %346
    %vm348 = vcmask 261120
    %s349 = scalar_lea.vmem [#allocation2], 578
    %350 = vst.msk [vmem:[%s349] ss:$8 sm:$0xf] %vm348, %v347
    %s351 = scalar_lea.vmem [#allocation2], 578
    %352 = vst.msk [vmem:[%s351] ss:$8 sm:$0xf0] %vm348, %v347
    %s353 = scalar_lea.vmem [#allocation0], 80
    %v354 = vld [vmem:[%s353] sm:$0xff]
    %355 = vrot.lane.b32.xlu0 %v354, 64
    %v356 = vpop.permute.xlu0 %355
    %vm357 = vcmask 261120
    %s358 = scalar_lea.vmem [#allocation2], 642
    %359 = vst.msk [vmem:[%s358] ss:$8 sm:$0xf] %vm357, %v356
    %s360 = scalar_lea.vmem [#allocation2], 642
    %361 = vst.msk [vmem:[%s360] ss:$8 sm:$0xf0] %vm357, %v356
    %s362 = scalar_lea.vmem [#allocation0], 88
    %v363 = vld [vmem:[%s362] sm:$0xff]
    %364 = vrot.lane.b32.xlu0 %v363, 64
    %v365 = vpop.permute.xlu0 %364
    %vm366 = vcmask 261120
    %s367 = scalar_lea.vmem [#allocation2], 706
    %368 = vst.msk [vmem:[%s367] ss:$8 sm:$0xf] %vm366, %v365
    %s369 = scalar_lea.vmem [#allocation2], 706
    %370 = vst.msk [vmem:[%s369] ss:$8 sm:$0xf0] %vm366, %v365
    %s371 = scalar_lea.vmem [#allocation0], 96
    %v372 = vld [vmem:[%s371] sm:$0xff]
    %373 = vrot.lane.b32.xlu0 %v372, 64
    %v374 = vpop.permute.xlu0 %373
    %vm375 = vcmask 261120
    %s376 = scalar_lea.vmem [#allocation2], 770
    %377 = vst.msk [vmem:[%s376] ss:$8 sm:$0xf] %vm375, %v374
    %s378 = scalar_lea.vmem [#allocation2], 770
    %379 = vst.msk [vmem:[%s378] ss:$8 sm:$0xf0] %vm375, %v374
    %s380 = scalar_lea.vmem [#allocation0], 104
    %v381 = vld [vmem:[%s380] sm:$0xff]
    %382 = vrot.lane.b32.xlu0 %v381, 64
    %v383 = vpop.permute.xlu0 %382
    %vm384 = vcmask 261120
    %s385 = scalar_lea.vmem [#allocation2], 834
    %386 = vst.msk [vmem:[%s385] ss:$8 sm:$0xf] %vm384, %v383
    %s387 = scalar_lea.vmem [#allocation2], 834
    %388 = vst.msk [vmem:[%s387] ss:$8 sm:$0xf0] %vm384, %v383
    %s389 = scalar_lea.vmem [#allocation0], 112
    %v390 = vld [vmem:[%s389] sm:$0xff]
    %391 = vrot.lane.b32.xlu0 %v390, 64
    %v392 = vpop.permute.xlu0 %391
    %vm393 = vcmask 261120
    %s394 = scalar_lea.vmem [#allocation2], 898
    %395 = vst.msk [vmem:[%s394] ss:$8 sm:$0xf] %vm393, %v392
    %s396 = scalar_lea.vmem [#allocation2], 898
    %397 = vst.msk [vmem:[%s396] ss:$8 sm:$0xf0] %vm393, %v392
    %s398 = scalar_lea.vmem [#allocation0], 120
    %v399 = vld [vmem:[%s398] sm:$0xff]
    %400 = vrot.lane.b32.xlu0 %v399, 64
    %v401 = vpop.permute.xlu0 %400
    %vm402 = vcmask 261120
    %s403 = scalar_lea.vmem [#allocation2], 962
    %404 = vst.msk [vmem:[%s403] ss:$8 sm:$0xf] %vm402, %v401
    %s405 = scalar_lea.vmem [#allocation2], 962
    %406 = vst.msk [vmem:[%s405] ss:$8 sm:$0xf0] %vm402, %v401
    %s408 = sshllo.u32 0, 4
    %v410 = vld [vmem:[#allocation2] sm:%s408]
    %s411 = sshllo.u32 0, 4
    %412 = vst [vmem:[%s1] sm:%s411] %v410
    %s413 = scalar_lea.vmem [#allocation2], 8
    %v414 = vld [vmem:[%s413] sm:%s408]
    %s415 = sshllo.u32 0, 4
    %s416 = scalar_lea.vmem %s1, 4
    %417 = vst [vmem:[%s416] sm:%s415] %v414
    %s418 = scalar_lea.vmem [#allocation2], 16
    %v419 = vld [vmem:[%s418] sm:%s408]
    %s420 = sshllo.u32 0, 4
    %s421 = smul.addr 4, 2
    %s422 = scalar_lea.vmem %s1, %s421
    %423 = vst [vmem:[%s422] sm:%s420] %v419
    %s424 = scalar_lea.vmem [#allocation2], 24
    %v425 = vld [vmem:[%s424] sm:%s408]
    %s426 = sshllo.u32 0, 4
    %s427 = smul.addr 4, 3
    %s428 = scalar_lea.vmem %s1, %s427
    %429 = vst [vmem:[%s428] sm:%s426] %v425
    %s430 = scalar_lea.vmem [#allocation2], 32
    %v431 = vld [vmem:[%s430] sm:%s408]
    %s432 = sshllo.u32 0, 4
    %s433 = smul.addr 4, 4
    %s434 = scalar_lea.vmem %s1, %s433
    %435 = vst [vmem:[%s434] sm:%s432] %v431
    %s436 = scalar_lea.vmem [#allocation2], 40
    %v437 = vld [vmem:[%s436] sm:%s408]
    %s438 = sshllo.u32 0, 4
    %s439 = smul.addr 4, 5
    %s440 = scalar_lea.vmem %s1, %s439
    %441 = vst [vmem:[%s440] sm:%s438] %v437
    %s442 = scalar_lea.vmem [#allocation2], 48
    %v443 = vld [vmem:[%s442] sm:%s408]
    %s444 = sshllo.u32 0, 4
    %s445 = smul.addr 4, 6
    %s446 = scalar_lea.vmem %s1, %s445
    %447 = vst [vmem:[%s446] sm:%s444] %v443
    %s448 = scalar_lea.vmem [#allocation2], 56
    %v449 = vld [vmem:[%s448] sm:%s408]
    %s450 = sshllo.u32 0, 4
    %s451 = smul.addr 4, 7
    %s452 = scalar_lea.vmem %s1, %s451
    %453 = vst [vmem:[%s452] sm:%s450] %v449
    %s454 = scalar_lea.vmem [#allocation2], 64
    %v455 = vld [vmem:[%s454] sm:%s408]
    %s456 = sshllo.u32 0, 4
    %s457 = smul.addr 4, 8
    %s458 = scalar_lea.vmem %s1, %s457
    %459 = vst [vmem:[%s458] sm:%s456] %v455
    %s460 = scalar_lea.vmem [#allocation2], 72
    %v461 = vld [vmem:[%s460] sm:%s408]
    %s462 = sshllo.u32 0, 4
    %s463 = smul.addr 4, 9
    %s464 = scalar_lea.vmem %s1, %s463
    %465 = vst [vmem:[%s464] sm:%s462] %v461
    %s466 = scalar_lea.vmem [#allocation2], 80
    %v467 = vld [vmem:[%s466] sm:%s408]
    %s468 = sshllo.u32 0, 4
    %s469 = smul.addr 4, 10
    %s470 = scalar_lea.vmem %s1, %s469
    %471 = vst [vmem:[%s470] sm:%s468] %v467
    %s472 = scalar_lea.vmem [#allocation2], 88
    %v473 = vld [vmem:[%s472] sm:%s408]
    %s474 = sshllo.u32 0, 4
    %s475 = smul.addr 4, 11
    %s476 = scalar_lea.vmem %s1, %s475
    %477 = vst [vmem:[%s476] sm:%s474] %v473
    %s478 = scalar_lea.vmem [#allocation2], 96
    %v479 = vld [vmem:[%s478] sm:%s408]
    %s480 = sshllo.u32 0, 4
    %s481 = smul.addr 4, 12
    %s482 = scalar_lea.vmem %s1, %s481
    %483 = vst [vmem:[%s482] sm:%s480] %v479
    %s484 = scalar_lea.vmem [#allocation2], 104
    %v485 = vld [vmem:[%s484] sm:%s408]
    %s486 = sshllo.u32 0, 4
    %s487 = smul.addr 4, 13
    %s488 = scalar_lea.vmem %s1, %s487
    %489 = vst [vmem:[%s488] sm:%s486] %v485
    %s490 = scalar_lea.vmem [#allocation2], 112
    %v491 = vld [vmem:[%s490] sm:%s408]
    %s492 = sshllo.u32 0, 4
    %s493 = smul.addr 4, 14
    %s494 = scalar_lea.vmem %s1, %s493
    %495 = vst [vmem:[%s494] sm:%s492] %v491
    %s496 = scalar_lea.vmem [#allocation2], 120
    %v497 = vld [vmem:[%s496] sm:%s408]
    %s498 = sshllo.u32 0, 4
    %s499 = smul.addr 4, 15
    %s500 = scalar_lea.vmem %s1, %s499
    %501 = vst [vmem:[%s500] sm:%s498] %v497
    %s502 = scalar_lea.vmem [#allocation2], 128
    %v503 = vld [vmem:[%s502] sm:%s408]
    %s504 = sshllo.u32 0, 4
    %s505 = smul.addr 4, 16
    %s506 = scalar_lea.vmem %s1, %s505
    %507 = vst [vmem:[%s506] sm:%s504] %v503
    %s508 = scalar_lea.vmem [#allocation2], 136
    %v509 = vld [vmem:[%s508] sm:%s408]
    %s510 = sshllo.u32 0, 4
    %s511 = smul.addr 4, 17
    %s512 = scalar_lea.vmem %s1, %s511
    %513 = vst [vmem:[%s512] sm:%s510] %v509
    %s514 = scalar_lea.vmem [#allocation2], 144
    %v515 = vld [vmem:[%s514] sm:%s408]
    %s516 = sshllo.u32 0, 4
    %s517 = smul.addr 4, 18
    %s518 = scalar_lea.vmem %s1, %s517
    %519 = vst [vmem:[%s518] sm:%s516] %v515
    %s520 = scalar_lea.vmem [#allocation2], 152
    %v521 = vld [vmem:[%s520] sm:%s408]
    %s522 = sshllo.u32 0, 4
    %s523 = smul.addr 4, 19
    %s524 = scalar_lea.vmem %s1, %s523
    %525 = vst [vmem:[%s524] sm:%s522] %v521
    %s526 = scalar_lea.vmem [#allocation2], 160
    %v527 = vld [vmem:[%s526] sm:%s408]
    %s528 = sshllo.u32 0, 4
    %s529 = smul.addr 4, 20
    %s530 = scalar_lea.vmem %s1, %s529
    %531 = vst [vmem:[%s530] sm:%s528] %v527
    %s532 = scalar_lea.vmem [#allocation2], 168
    %v533 = vld [vmem:[%s532] sm:%s408]
    %s534 = sshllo.u32 0, 4
    %s535 = smul.addr 4, 21
    %s536 = scalar_lea.vmem %s1, %s535
    %537 = vst [vmem:[%s536] sm:%s534] %v533
    %s538 = scalar_lea.vmem [#allocation2], 176
    %v539 = vld [vmem:[%s538] sm:%s408]
    %s540 = sshllo.u32 0, 4
    %s541 = smul.addr 4, 22
    %s542 = scalar_lea.vmem %s1, %s541
    %543 = vst [vmem:[%s542] sm:%s540] %v539
    %s544 = scalar_lea.vmem [#allocation2], 184
    %v545 = vld [vmem:[%s544] sm:%s408]
    %s546 = sshllo.u32 0, 4
    %s547 = smul.addr 4, 23
    %s548 = scalar_lea.vmem %s1, %s547
    %549 = vst [vmem:[%s548] sm:%s546] %v545
    %s550 = scalar_lea.vmem [#allocation2], 192
    %v551 = vld [vmem:[%s550] sm:%s408]
    %s552 = sshllo.u32 0, 4
    %s553 = smul.addr 4, 24
    %s554 = scalar_lea.vmem %s1, %s553
    %555 = vst [vmem:[%s554] sm:%s552] %v551
    %s556 = scalar_lea.vmem [#allocation2], 200
    %v557 = vld [vmem:[%s556] sm:%s408]
    %s558 = sshllo.u32 0, 4
    %s559 = smul.addr 4, 25
    %s560 = scalar_lea.vmem %s1, %s559
    %561 = vst [vmem:[%s560] sm:%s558] %v557
    %s562 = scalar_lea.vmem [#allocation2], 208
    %v563 = vld [vmem:[%s562] sm:%s408]
    %s564 = sshllo.u32 0, 4
    %s565 = smul.addr 4, 26
    %s566 = scalar_lea.vmem %s1, %s565
    %567 = vst [vmem:[%s566] sm:%s564] %v563
    %s568 = scalar_lea.vmem [#allocation2], 216
    %v569 = vld [vmem:[%s568] sm:%s408]
    %s570 = sshllo.u32 0, 4
    %s571 = smul.addr 4, 27
    %s572 = scalar_lea.vmem %s1, %s571
    %573 = vst [vmem:[%s572] sm:%s570] %v569
    %s574 = scalar_lea.vmem [#allocation2], 224
    %v575 = vld [vmem:[%s574] sm:%s408]
    %s576 = sshllo.u32 0, 4
    %s577 = smul.addr 4, 28
    %s578 = scalar_lea.vmem %s1, %s577
    %579 = vst [vmem:[%s578] sm:%s576] %v575
    %s580 = scalar_lea.vmem [#allocation2], 232
    %v581 = vld [vmem:[%s580] sm:%s408]
    %s582 = sshllo.u32 0, 4
    %s583 = smul.addr 4, 29
    %s584 = scalar_lea.vmem %s1, %s583
    %585 = vst [vmem:[%s584] sm:%s582] %v581
    %s586 = scalar_lea.vmem [#allocation2], 240
    %v587 = vld [vmem:[%s586] sm:%s408]
    %s588 = sshllo.u32 0, 4
    %s589 = smul.addr 4, 30
    %s590 = scalar_lea.vmem %s1, %s589
    %591 = vst [vmem:[%s590] sm:%s588] %v587
    %s592 = scalar_lea.vmem [#allocation2], 248
    %v593 = vld [vmem:[%s592] sm:%s408]
    %s594 = sshllo.u32 0, 4
    %s595 = smul.addr 4, 31
    %s596 = scalar_lea.vmem %s1, %s595
    %597 = vst [vmem:[%s596] sm:%s594] %v593
    %s598 = scalar_lea.vmem [#allocation2], 256
    %v599 = vld [vmem:[%s598] sm:%s408]
    %s600 = sshllo.u32 0, 4
    %s601 = smul.addr 4, 32
    %s602 = scalar_lea.vmem %s1, %s601
    %603 = vst [vmem:[%s602] sm:%s600] %v599
    %s604 = scalar_lea.vmem [#allocation2], 264
    %v605 = vld [vmem:[%s604] sm:%s408]
    %s606 = sshllo.u32 0, 4
    %s607 = smul.addr 4, 33
    %s608 = scalar_lea.vmem %s1, %s607
    %609 = vst [vmem:[%s608] sm:%s606] %v605
    %s610 = scalar_lea.vmem [#allocation2], 272
    %v611 = vld [vmem:[%s610] sm:%s408]
    %s612 = sshllo.u32 0, 4
    %s613 = smul.addr 4, 34
    %s614 = scalar_lea.vmem %s1, %s613
    %615 = vst [vmem:[%s614] sm:%s612] %v611
    %s616 = scalar_lea.vmem [#allocation2], 280
    %v617 = vld [vmem:[%s616] sm:%s408]
    %s618 = sshllo.u32 0, 4
    %s619 = smul.addr 4, 35
    %s620 = scalar_lea.vmem %s1, %s619
    %621 = vst [vmem:[%s620] sm:%s618] %v617
    %s622 = scalar_lea.vmem [#allocation2], 288
    %v623 = vld [vmem:[%s622] sm:%s408]
    %s624 = sshllo.u32 0, 4
    %s625 = smul.addr 4, 36
    %s626 = scalar_lea.vmem %s1, %s625
    %627 = vst [vmem:[%s626] sm:%s624] %v623
    %s628 = scalar_lea.vmem [#allocation2], 296
    %v629 = vld [vmem:[%s628] sm:%s408]
    %s630 = sshllo.u32 0, 4
    %s631 = smul.addr 4, 37
    %s632 = scalar_lea.vmem %s1, %s631
    %633 = vst [vmem:[%s632] sm:%s630] %v629
    %s634 = scalar_lea.vmem [#allocation2], 304
    %v635 = vld [vmem:[%s634] sm:%s408]
    %s636 = sshllo.u32 0, 4
    %s637 = smul.addr 4, 38
    %s638 = scalar_lea.vmem %s1, %s637
    %639 = vst [vmem:[%s638] sm:%s636] %v635
    %s640 = scalar_lea.vmem [#allocation2], 312
    %v641 = vld [vmem:[%s640] sm:%s408]
    %s642 = sshllo.u32 0, 4
    %s643 = smul.addr 4, 39
    %s644 = scalar_lea.vmem %s1, %s643
    %645 = vst [vmem:[%s644] sm:%s642] %v641
    %s646 = scalar_lea.vmem [#allocation2], 320
    %v647 = vld [vmem:[%s646] sm:%s408]
    %s648 = sshllo.u32 0, 4
    %s649 = smul.addr 4, 40
    %s650 = scalar_lea.vmem %s1, %s649
    %651 = vst [vmem:[%s650] sm:%s648] %v647
    %s652 = scalar_lea.vmem [#allocation2], 328
    %v653 = vld [vmem:[%s652] sm:%s408]
    %s654 = sshllo.u32 0, 4
    %s655 = smul.addr 4, 41
    %s656 = scalar_lea.vmem %s1, %s655
    %657 = vst [vmem:[%s656] sm:%s654] %v653
    %s658 = scalar_lea.vmem [#allocation2], 336
    %v659 = vld [vmem:[%s658] sm:%s408]
    %s660 = sshllo.u32 0, 4
    %s661 = smul.addr 4, 42
    %s662 = scalar_lea.vmem %s1, %s661
    %663 = vst [vmem:[%s662] sm:%s660] %v659
    %s664 = scalar_lea.vmem [#allocation2], 344
    %v665 = vld [vmem:[%s664] sm:%s408]
    %s666 = sshllo.u32 0, 4
    %s667 = smul.addr 4, 43
    %s668 = scalar_lea.vmem %s1, %s667
    %669 = vst [vmem:[%s668] sm:%s666] %v665
    %s670 = scalar_lea.vmem [#allocation2], 352
    %v671 = vld [vmem:[%s670] sm:%s408]
    %s672 = sshllo.u32 0, 4
    %s673 = smul.addr 4, 44
    %s674 = scalar_lea.vmem %s1, %s673
    %675 = vst [vmem:[%s674] sm:%s672] %v671
    %s676 = scalar_lea.vmem [#allocation2], 360
    %v677 = vld [vmem:[%s676] sm:%s408]
    %s678 = sshllo.u32 0, 4
    %s679 = smul.addr 4, 45
    %s680 = scalar_lea.vmem %s1, %s679
    %681 = vst [vmem:[%s680] sm:%s678] %v677
    %s682 = scalar_lea.vmem [#allocation2], 368
    %v683 = vld [vmem:[%s682] sm:%s408]
    %s684 = sshllo.u32 0, 4
    %s685 = smul.addr 4, 46
    %s686 = scalar_lea.vmem %s1, %s685
    %687 = vst [vmem:[%s686] sm:%s684] %v683
    %s688 = scalar_lea.vmem [#allocation2], 376
    %v689 = vld [vmem:[%s688] sm:%s408]
    %s690 = sshllo.u32 0, 4
    %s691 = smul.addr 4, 47
    %s692 = scalar_lea.vmem %s1, %s691
    %693 = vst [vmem:[%s692] sm:%s690] %v689
    %s694 = scalar_lea.vmem [#allocation2], 384
    %v695 = vld [vmem:[%s694] sm:%s408]
    %s696 = sshllo.u32 0, 4
    %s697 = smul.addr 4, 48
    %s698 = scalar_lea.vmem %s1, %s697
    %699 = vst [vmem:[%s698] sm:%s696] %v695
    %s700 = scalar_lea.vmem [#allocation2], 392
    %v701 = vld [vmem:[%s700] sm:%s408]
    %s702 = sshllo.u32 0, 4
    %s703 = smul.addr 4, 49
    %s704 = scalar_lea.vmem %s1, %s703
    %705 = vst [vmem:[%s704] sm:%s702] %v701
    %s706 = scalar_lea.vmem [#allocation2], 400
    %v707 = vld [vmem:[%s706] sm:%s408]
    %s708 = sshllo.u32 0, 4
    %s709 = smul.addr 4, 50
    %s710 = scalar_lea.vmem %s1, %s709
    %711 = vst [vmem:[%s710] sm:%s708] %v707
    %s712 = scalar_lea.vmem [#allocation2], 408
    %v713 = vld [vmem:[%s712] sm:%s408]
    %s714 = sshllo.u32 0, 4
    %s715 = smul.addr 4, 51
    %s716 = scalar_lea.vmem %s1, %s715
    %717 = vst [vmem:[%s716] sm:%s714] %v713
    %s718 = scalar_lea.vmem [#allocation2], 416
    %v719 = vld [vmem:[%s718] sm:%s408]
    %s720 = sshllo.u32 0, 4
    %s721 = smul.addr 4, 52
    %s722 = scalar_lea.vmem %s1, %s721
    %723 = vst [vmem:[%s722] sm:%s720] %v719
    %s724 = scalar_lea.vmem [#allocation2], 424
    %v725 = vld [vmem:[%s724] sm:%s408]
    %s726 = sshllo.u32 0, 4
    %s727 = smul.addr 4, 53
    %s728 = scalar_lea.vmem %s1, %s727
    %729 = vst [vmem:[%s728] sm:%s726] %v725
    %s730 = scalar_lea.vmem [#allocation2], 432
    %v731 = vld [vmem:[%s730] sm:%s408]
    %s732 = sshllo.u32 0, 4
    %s733 = smul.addr 4, 54
    %s734 = scalar_lea.vmem %s1, %s733
    %735 = vst [vmem:[%s734] sm:%s732] %v731
    %s736 = scalar_lea.vmem [#allocation2], 440
    %v737 = vld [vmem:[%s736] sm:%s408]
    %s738 = sshllo.u32 0, 4
    %s739 = smul.addr 4, 55
    %s740 = scalar_lea.vmem %s1, %s739
    %741 = vst [vmem:[%s740] sm:%s738] %v737
    %s742 = scalar_lea.vmem [#allocation2], 448
    %v743 = vld [vmem:[%s742] sm:%s408]
    %s744 = sshllo.u32 0, 4
    %s745 = smul.addr 4, 56
    %s746 = scalar_lea.vmem %s1, %s745
    %747 = vst [vmem:[%s746] sm:%s744] %v743
    %s748 = scalar_lea.vmem [#allocation2], 456
    %v749 = vld [vmem:[%s748] sm:%s408]
    %s750 = sshllo.u32 0, 4
    %s751 = smul.addr 4, 57
    %s752 = scalar_lea.vmem %s1, %s751
    %753 = vst [vmem:[%s752] sm:%s750] %v749
    %s754 = scalar_lea.vmem [#allocation2], 464
    %v755 = vld [vmem:[%s754] sm:%s408]
    %s756 = sshllo.u32 0, 4
    %s757 = smul.addr 4, 58
    %s758 = scalar_lea.vmem %s1, %s757
    %759 = vst [vmem:[%s758] sm:%s756] %v755
    %s760 = scalar_lea.vmem [#allocation2], 472
    %v761 = vld [vmem:[%s760] sm:%s408]
    %s762 = sshllo.u32 0, 4
    %s763 = smul.addr 4, 59
    %s764 = scalar_lea.vmem %s1, %s763
    %765 = vst [vmem:[%s764] sm:%s762] %v761
    %s766 = scalar_lea.vmem [#allocation2], 480
    %v767 = vld [vmem:[%s766] sm:%s408]
    %s768 = sshllo.u32 0, 4
    %s769 = smul.addr 4, 60
    %s770 = scalar_lea.vmem %s1, %s769
    %771 = vst [vmem:[%s770] sm:%s768] %v767
    %s772 = scalar_lea.vmem [#allocation2], 488
    %v773 = vld [vmem:[%s772] sm:%s408]
    %s774 = sshllo.u32 0, 4
    %s775 = smul.addr 4, 61
    %s776 = scalar_lea.vmem %s1, %s775
    %777 = vst [vmem:[%s776] sm:%s774] %v773
    %s778 = scalar_lea.vmem [#allocation2], 496
    %v779 = vld [vmem:[%s778] sm:%s408]
    %s780 = sshllo.u32 0, 4
    %s781 = smul.addr 4, 62
    %s782 = scalar_lea.vmem %s1, %s781
    %783 = vst [vmem:[%s782] sm:%s780] %v779
    %s784 = scalar_lea.vmem [#allocation2], 504
    %v785 = vld [vmem:[%s784] sm:%s408]
    %s786 = sshllo.u32 0, 4
    %s787 = smul.addr 4, 63
    %s788 = scalar_lea.vmem %s1, %s787
    %789 = vst [vmem:[%s788] sm:%s786] %v785
    %s790 = scalar_lea.vmem [#allocation2], 512
    %v791 = vld [vmem:[%s790] sm:%s408]
    %s792 = sshllo.u32 0, 4
    %s793 = smul.addr 4, 64
    %s794 = scalar_lea.vmem %s1, %s793
    %795 = vst [vmem:[%s794] sm:%s792] %v791
    %s796 = scalar_lea.vmem [#allocation2], 520
    %v797 = vld [vmem:[%s796] sm:%s408]
    %s798 = sshllo.u32 0, 4
    %s799 = smul.addr 4, 65
    %s800 = scalar_lea.vmem %s1, %s799
    %801 = vst [vmem:[%s800] sm:%s798] %v797
    %s802 = scalar_lea.vmem [#allocation2], 528
    %v803 = vld [vmem:[%s802] sm:%s408]
    %s804 = sshllo.u32 0, 4
    %s805 = smul.addr 4, 66
    %s806 = scalar_lea.vmem %s1, %s805
    %807 = vst [vmem:[%s806] sm:%s804] %v803
    %s808 = scalar_lea.vmem [#allocation2], 536
    %v809 = vld [vmem:[%s808] sm:%s408]
    %s810 = sshllo.u32 0, 4
    %s811 = smul.addr 4, 67
    %s812 = scalar_lea.vmem %s1, %s811
    %813 = vst [vmem:[%s812] sm:%s810] %v809
    %s814 = scalar_lea.vmem [#allocation2], 544
    %v815 = vld [vmem:[%s814] sm:%s408]
    %s816 = sshllo.u32 0, 4
    %s817 = smul.addr 4, 68
    %s818 = scalar_lea.vmem %s1, %s817
    %819 = vst [vmem:[%s818] sm:%s816] %v815
    %s820 = scalar_lea.vmem [#allocation2], 552
    %v821 = vld [vmem:[%s820] sm:%s408]
    %s822 = sshllo.u32 0, 4
    %s823 = smul.addr 4, 69
    %s824 = scalar_lea.vmem %s1, %s823
    %825 = vst [vmem:[%s824] sm:%s822] %v821
    %s826 = scalar_lea.vmem [#allocation2], 560
    %v827 = vld [vmem:[%s826] sm:%s408]
    %s828 = sshllo.u32 0, 4
    %s829 = smul.addr 4, 70
    %s830 = scalar_lea.vmem %s1, %s829
    %831 = vst [vmem:[%s830] sm:%s828] %v827
    %s832 = scalar_lea.vmem [#allocation2], 568
    %v833 = vld [vmem:[%s832] sm:%s408]
    %s834 = sshllo.u32 0, 4
    %s835 = smul.addr 4, 71
    %s836 = scalar_lea.vmem %s1, %s835
    %837 = vst [vmem:[%s836] sm:%s834] %v833
    %s838 = scalar_lea.vmem [#allocation2], 576
    %v839 = vld [vmem:[%s838] sm:%s408]
    %s840 = sshllo.u32 0, 4
    %s841 = smul.addr 4, 72
    %s842 = scalar_lea.vmem %s1, %s841
    %843 = vst [vmem:[%s842] sm:%s840] %v839
    %s844 = scalar_lea.vmem [#allocation2], 584
    %v845 = vld [vmem:[%s844] sm:%s408]
    %s846 = sshllo.u32 0, 4
    %s847 = smul.addr 4, 73
    %s848 = scalar_lea.vmem %s1, %s847
    %849 = vst [vmem:[%s848] sm:%s846] %v845
    %s850 = scalar_lea.vmem [#allocation2], 592
    %v851 = vld [vmem:[%s850] sm:%s408]
    %s852 = sshllo.u32 0, 4
    %s853 = smul.addr 4, 74
    %s854 = scalar_lea.vmem %s1, %s853
    %855 = vst [vmem:[%s854] sm:%s852] %v851
    %s856 = scalar_lea.vmem [#allocation2], 600
    %v857 = vld [vmem:[%s856] sm:%s408]
    %s858 = sshllo.u32 0, 4
    %s859 = smul.addr 4, 75
    %s860 = scalar_lea.vmem %s1, %s859
    %861 = vst [vmem:[%s860] sm:%s858] %v857
    %s862 = scalar_lea.vmem [#allocation2], 608
    %v863 = vld [vmem:[%s862] sm:%s408]
    %s864 = sshllo.u32 0, 4
    %s865 = smul.addr 4, 76
    %s866 = scalar_lea.vmem %s1, %s865
    %867 = vst [vmem:[%s866] sm:%s864] %v863
    %s868 = scalar_lea.vmem [#allocation2], 616
    %v869 = vld [vmem:[%s868] sm:%s408]
    %s870 = sshllo.u32 0, 4
    %s871 = smul.addr 4, 77
    %s872 = scalar_lea.vmem %s1, %s871
    %873 = vst [vmem:[%s872] sm:%s870] %v869
    %s874 = scalar_lea.vmem [#allocation2], 624
    %v875 = vld [vmem:[%s874] sm:%s408]
    %s876 = sshllo.u32 0, 4
    %s877 = smul.addr 4, 78
    %s878 = scalar_lea.vmem %s1, %s877
    %879 = vst [vmem:[%s878] sm:%s876] %v875
    %s880 = scalar_lea.vmem [#allocation2], 632
    %v881 = vld [vmem:[%s880] sm:%s408]
    %s882 = sshllo.u32 0, 4
    %s883 = smul.addr 4, 79
    %s884 = scalar_lea.vmem %s1, %s883
    %885 = vst [vmem:[%s884] sm:%s882] %v881
    %s886 = scalar_lea.vmem [#allocation2], 640
    %v887 = vld [vmem:[%s886] sm:%s408]
    %s888 = sshllo.u32 0, 4
    %s889 = smul.addr 4, 80
    %s890 = scalar_lea.vmem %s1, %s889
    %891 = vst [vmem:[%s890] sm:%s888] %v887
    %s892 = scalar_lea.vmem [#allocation2], 648
    %v893 = vld [vmem:[%s892] sm:%s408]
    %s894 = sshllo.u32 0, 4
    %s895 = smul.addr 4, 81
    %s896 = scalar_lea.vmem %s1, %s895
    %897 = vst [vmem:[%s896] sm:%s894] %v893
    %s898 = scalar_lea.vmem [#allocation2], 656
    %v899 = vld [vmem:[%s898] sm:%s408]
    %s900 = sshllo.u32 0, 4
    %s901 = smul.addr 4, 82
    %s902 = scalar_lea.vmem %s1, %s901
    %903 = vst [vmem:[%s902] sm:%s900] %v899
    %s904 = scalar_lea.vmem [#allocation2], 664
    %v905 = vld [vmem:[%s904] sm:%s408]
    %s906 = sshllo.u32 0, 4
    %s907 = smul.addr 4, 83
    %s908 = scalar_lea.vmem %s1, %s907
    %909 = vst [vmem:[%s908] sm:%s906] %v905
    %s910 = scalar_lea.vmem [#allocation2], 672
    %v911 = vld [vmem:[%s910] sm:%s408]
    %s912 = sshllo.u32 0, 4
    %s913 = smul.addr 4, 84
    %s914 = scalar_lea.vmem %s1, %s913
    %915 = vst [vmem:[%s914] sm:%s912] %v911
    %s916 = scalar_lea.vmem [#allocation2], 680
    %v917 = vld [vmem:[%s916] sm:%s408]
    %s918 = sshllo.u32 0, 4
    %s919 = smul.addr 4, 85
    %s920 = scalar_lea.vmem %s1, %s919
    %921 = vst [vmem:[%s920] sm:%s918] %v917
    %s922 = scalar_lea.vmem [#allocation2], 688
    %v923 = vld [vmem:[%s922] sm:%s408]
    %s924 = sshllo.u32 0, 4
    %s925 = smul.addr 4, 86
    %s926 = scalar_lea.vmem %s1, %s925
    %927 = vst [vmem:[%s926] sm:%s924] %v923
    %s928 = scalar_lea.vmem [#allocation2], 696
    %v929 = vld [vmem:[%s928] sm:%s408]
    %s930 = sshllo.u32 0, 4
    %s931 = smul.addr 4, 87
    %s932 = scalar_lea.vmem %s1, %s931
    %933 = vst [vmem:[%s932] sm:%s930] %v929
    %s934 = scalar_lea.vmem [#allocation2], 704
    %v935 = vld [vmem:[%s934] sm:%s408]
    %s936 = sshllo.u32 0, 4
    %s937 = smul.addr 4, 88
    %s938 = scalar_lea.vmem %s1, %s937
    %939 = vst [vmem:[%s938] sm:%s936] %v935
    %s940 = scalar_lea.vmem [#allocation2], 712
    %v941 = vld [vmem:[%s940] sm:%s408]
    %s942 = sshllo.u32 0, 4
    %s943 = smul.addr 4, 89
    %s944 = scalar_lea.vmem %s1, %s943
    %945 = vst [vmem:[%s944] sm:%s942] %v941
    %s946 = scalar_lea.vmem [#allocation2], 720
    %v947 = vld [vmem:[%s946] sm:%s408]
    %s948 = sshllo.u32 0, 4
    %s949 = smul.addr 4, 90
    %s950 = scalar_lea.vmem %s1, %s949
    %951 = vst [vmem:[%s950] sm:%s948] %v947
    %s952 = scalar_lea.vmem [#allocation2], 728
    %v953 = vld [vmem:[%s952] sm:%s408]
    %s954 = sshllo.u32 0, 4
    %s955 = smul.addr 4, 91
    %s956 = scalar_lea.vmem %s1, %s955
    %957 = vst [vmem:[%s956] sm:%s954] %v953
    %s958 = scalar_lea.vmem [#allocation2], 736
    %v959 = vld [vmem:[%s958] sm:%s408]
    %s960 = sshllo.u32 0, 4
    %s961 = smul.addr 4, 92
    %s962 = scalar_lea.vmem %s1, %s961
    %963 = vst [vmem:[%s962] sm:%s960] %v959
    %s964 = scalar_lea.vmem [#allocation2], 744
    %v965 = vld [vmem:[%s964] sm:%s408]
    %s966 = sshllo.u32 0, 4
    %s967 = smul.addr 4, 93
    %s968 = scalar_lea.vmem %s1, %s967
    %969 = vst [vmem:[%s968] sm:%s966] %v965
    %s970 = scalar_lea.vmem [#allocation2], 752
    %v971 = vld [vmem:[%s970] sm:%s408]
    %s972 = sshllo.u32 0, 4
    %s973 = smul.addr 4, 94
    %s974 = scalar_lea.vmem %s1, %s973
    %975 = vst [vmem:[%s974] sm:%s972] %v971
    %s976 = scalar_lea.vmem [#allocation2], 760
    %v977 = vld [vmem:[%s976] sm:%s408]
    %s978 = sshllo.u32 0, 4
    %s979 = smul.addr 4, 95
    %s980 = scalar_lea.vmem %s1, %s979
    %981 = vst [vmem:[%s980] sm:%s978] %v977
    %s982 = scalar_lea.vmem [#allocation2], 768
    %v983 = vld [vmem:[%s982] sm:%s408]
    %s984 = sshllo.u32 0, 4
    %s985 = smul.addr 4, 96
    %s986 = scalar_lea.vmem %s1, %s985
    %987 = vst [vmem:[%s986] sm:%s984] %v983
    %s988 = scalar_lea.vmem [#allocation2], 776
    %v989 = vld [vmem:[%s988] sm:%s408]
    %s990 = sshllo.u32 0, 4
    %s991 = smul.addr 4, 97
    %s992 = scalar_lea.vmem %s1, %s991
    %993 = vst [vmem:[%s992] sm:%s990] %v989
    %s994 = scalar_lea.vmem [#allocation2], 784
    %v995 = vld [vmem:[%s994] sm:%s408]
    %s996 = sshllo.u32 0, 4
    %s997 = smul.addr 4, 98
    %s998 = scalar_lea.vmem %s1, %s997
    %999 = vst [vmem:[%s998] sm:%s996] %v995
    %s1000 = scalar_lea.vmem [#allocation2], 792
    %v1001 = vld [vmem:[%s1000] sm:%s408]
    %s1002 = sshllo.u32 0, 4
    %s1003 = smul.addr 4, 99
    %s1004 = scalar_lea.vmem %s1, %s1003
    %1005 = vst [vmem:[%s1004] sm:%s1002] %v1001
    %s1006 = scalar_lea.vmem [#allocation2], 800
    %v1007 = vld [vmem:[%s1006] sm:%s408]
    %s1008 = sshllo.u32 0, 4
    %s1009 = smul.addr 4, 100
    %s1010 = scalar_lea.vmem %s1, %s1009
    %1011 = vst [vmem:[%s1010] sm:%s1008] %v1007
    %s1012 = scalar_lea.vmem [#allocation2], 808
    %v1013 = vld [vmem:[%s1012] sm:%s408]
    %s1014 = sshllo.u32 0, 4
    %s1015 = smul.addr 4, 101
    %s1016 = scalar_lea.vmem %s1, %s1015
    %1017 = vst [vmem:[%s1016] sm:%s1014] %v1013
    %s1018 = scalar_lea.vmem [#allocation2], 816
    %v1019 = vld [vmem:[%s1018] sm:%s408]
    %s1020 = sshllo.u32 0, 4
    %s1021 = smul.addr 4, 102
    %s1022 = scalar_lea.vmem %s1, %s1021
    %1023 = vst [vmem:[%s1022] sm:%s1020] %v1019
    %s1024 = scalar_lea.vmem [#allocation2], 824
    %v1025 = vld [vmem:[%s1024] sm:%s408]
    %s1026 = sshllo.u32 0, 4
    %s1027 = smul.addr 4, 103
    %s1028 = scalar_lea.vmem %s1, %s1027
    %1029 = vst [vmem:[%s1028] sm:%s1026] %v1025
    %s1030 = scalar_lea.vmem [#allocation2], 832
    %v1031 = vld [vmem:[%s1030] sm:%s408]
    %s1032 = sshllo.u32 0, 4
    %s1033 = smul.addr 4, 104
    %s1034 = scalar_lea.vmem %s1, %s1033
    %1035 = vst [vmem:[%s1034] sm:%s1032] %v1031
    %s1036 = scalar_lea.vmem [#allocation2], 840
    %v1037 = vld [vmem:[%s1036] sm:%s408]
    %s1038 = sshllo.u32 0, 4
    %s1039 = smul.addr 4, 105
    %s1040 = scalar_lea.vmem %s1, %s1039
    %1041 = vst [vmem:[%s1040] sm:%s1038] %v1037
    %s1042 = scalar_lea.vmem [#allocation2], 848
    %v1043 = vld [vmem:[%s1042] sm:%s408]
    %s1044 = sshllo.u32 0, 4
    %s1045 = smul.addr 4, 106
    %s1046 = scalar_lea.vmem %s1, %s1045
    %1047 = vst [vmem:[%s1046] sm:%s1044] %v1043
    %s1048 = scalar_lea.vmem [#allocation2], 856
    %v1049 = vld [vmem:[%s1048] sm:%s408]
    %s1050 = sshllo.u32 0, 4
    %s1051 = smul.addr 4, 107
    %s1052 = scalar_lea.vmem %s1, %s1051
    %1053 = vst [vmem:[%s1052] sm:%s1050] %v1049
    %s1054 = scalar_lea.vmem [#allocation2], 864
    %v1055 = vld [vmem:[%s1054] sm:%s408]
    %s1056 = sshllo.u32 0, 4
    %s1057 = smul.addr 4, 108
    %s1058 = scalar_lea.vmem %s1, %s1057
    %1059 = vst [vmem:[%s1058] sm:%s1056] %v1055
    %s1060 = scalar_lea.vmem [#allocation2], 872
    %v1061 = vld [vmem:[%s1060] sm:%s408]
    %s1062 = sshllo.u32 0, 4
    %s1063 = smul.addr 4, 109
    %s1064 = scalar_lea.vmem %s1, %s1063
    %1065 = vst [vmem:[%s1064] sm:%s1062] %v1061
    %s1066 = scalar_lea.vmem [#allocation2], 880
    %v1067 = vld [vmem:[%s1066] sm:%s408]
    %s1068 = sshllo.u32 0, 4
    %s1069 = smul.addr 4, 110
    %s1070 = scalar_lea.vmem %s1, %s1069
    %1071 = vst [vmem:[%s1070] sm:%s1068] %v1067
    %s1072 = scalar_lea.vmem [#allocation2], 888
    %v1073 = vld [vmem:[%s1072] sm:%s408]
    %s1074 = sshllo.u32 0, 4
    %s1075 = smul.addr 4, 111
    %s1076 = scalar_lea.vmem %s1, %s1075
    %1077 = vst [vmem:[%s1076] sm:%s1074] %v1073
    %s1078 = scalar_lea.vmem [#allocation2], 896
    %v1079 = vld [vmem:[%s1078] sm:%s408]
    %s1080 = sshllo.u32 0, 4
    %s1081 = smul.addr 4, 112
    %s1082 = scalar_lea.vmem %s1, %s1081
    %1083 = vst [vmem:[%s1082] sm:%s1080] %v1079
    %s1084 = scalar_lea.vmem [#allocation2], 904
    %v1085 = vld [vmem:[%s1084] sm:%s408]
    %s1086 = sshllo.u32 0, 4
    %s1087 = smul.addr 4, 113
    %s1088 = scalar_lea.vmem %s1, %s1087
    %1089 = vst [vmem:[%s1088] sm:%s1086] %v1085
    %s1090 = scalar_lea.vmem [#allocation2], 912
    %v1091 = vld [vmem:[%s1090] sm:%s408]
    %s1092 = sshllo.u32 0, 4
    %s1093 = smul.addr 4, 114
    %s1094 = scalar_lea.vmem %s1, %s1093
    %1095 = vst [vmem:[%s1094] sm:%s1092] %v1091
    %s1096 = scalar_lea.vmem [#allocation2], 920
    %v1097 = vld [vmem:[%s1096] sm:%s408]
    %s1098 = sshllo.u32 0, 4
    %s1099 = smul.addr 4, 115
    %s1100 = scalar_lea.vmem %s1, %s1099
    %1101 = vst [vmem:[%s1100] sm:%s1098] %v1097
    %s1102 = scalar_lea.vmem [#allocation2], 928
    %v1103 = vld [vmem:[%s1102] sm:%s408]
    %s1104 = sshllo.u32 0, 4
    %s1105 = smul.addr 4, 116
    %s1106 = scalar_lea.vmem %s1, %s1105
    %1107 = vst [vmem:[%s1106] sm:%s1104] %v1103
    %s1108 = scalar_lea.vmem [#allocation2], 936
    %v1109 = vld [vmem:[%s1108] sm:%s408]
    %s1110 = sshllo.u32 0, 4
    %s1111 = smul.addr 4, 117
    %s1112 = scalar_lea.vmem %s1, %s1111
    %1113 = vst [vmem:[%s1112] sm:%s1110] %v1109
    %s1114 = scalar_lea.vmem [#allocation2], 944
    %v1115 = vld [vmem:[%s1114] sm:%s408]
    %s1116 = sshllo.u32 0, 4
    %s1117 = smul.addr 4, 118
    %s1118 = scalar_lea.vmem %s1, %s1117
    %1119 = vst [vmem:[%s1118] sm:%s1116] %v1115
    %s1120 = scalar_lea.vmem [#allocation2], 952
    %v1121 = vld [vmem:[%s1120] sm:%s408]
    %s1122 = sshllo.u32 0, 4
    %s1123 = smul.addr 4, 119
    %s1124 = scalar_lea.vmem %s1, %s1123
    %1125 = vst [vmem:[%s1124] sm:%s1122] %v1121
    %s1126 = scalar_lea.vmem [#allocation2], 960
    %v1127 = vld [vmem:[%s1126] sm:%s408]
    %s1128 = sshllo.u32 0, 4
    %s1129 = smul.addr 4, 120
    %s1130 = scalar_lea.vmem %s1, %s1129
    %1131 = vst [vmem:[%s1130] sm:%s1128] %v1127
    %s1132 = scalar_lea.vmem [#allocation2], 968
    %v1133 = vld [vmem:[%s1132] sm:%s408]
    %s1134 = sshllo.u32 0, 4
    %s1135 = smul.addr 4, 121
    %s1136 = scalar_lea.vmem %s1, %s1135
    %1137 = vst [vmem:[%s1136] sm:%s1134] %v1133
    %s1138 = scalar_lea.vmem [#allocation2], 976
    %v1139 = vld [vmem:[%s1138] sm:%s408]
    %s1140 = sshllo.u32 0, 4
    %s1141 = smul.addr 4, 122
    %s1142 = scalar_lea.vmem %s1, %s1141
    %1143 = vst [vmem:[%s1142] sm:%s1140] %v1139
    %s1144 = scalar_lea.vmem [#allocation2], 984
    %v1145 = vld [vmem:[%s1144] sm:%s408]
    %s1146 = sshllo.u32 0, 4
    %s1147 = smul.addr 4, 123
    %s1148 = scalar_lea.vmem %s1, %s1147
    %1149 = vst [vmem:[%s1148] sm:%s1146] %v1145
    %s1150 = scalar_lea.vmem [#allocation2], 992
    %v1151 = vld [vmem:[%s1150] sm:%s408]
    %s1152 = sshllo.u32 0, 4
    %s1153 = smul.addr 4, 124
    %s1154 = scalar_lea.vmem %s1, %s1153
    %1155 = vst [vmem:[%s1154] sm:%s1152] %v1151
    %s1156 = scalar_lea.vmem [#allocation2], 1000
    %v1157 = vld [vmem:[%s1156] sm:%s408]
    %s1158 = sshllo.u32 0, 4
    %s1159 = smul.addr 4, 125
    %s1160 = scalar_lea.vmem %s1, %s1159
    %1161 = vst [vmem:[%s1160] sm:%s1158] %v1157
    %s1162 = scalar_lea.vmem [#allocation2], 1008
    %v1163 = vld [vmem:[%s1162] sm:%s408]
    %s1164 = sshllo.u32 0, 4
    %s1165 = smul.addr 4, 126
    %s1166 = scalar_lea.vmem %s1, %s1165
    %1167 = vst [vmem:[%s1166] sm:%s1164] %v1163
    %s1168 = scalar_lea.vmem [#allocation2], 1016
    %v1169 = vld [vmem:[%s1168] sm:%s408]
    %s1170 = sshllo.u32 0, 4
    %s1171 = smul.addr 4, 127
    %s1172 = scalar_lea.vmem %s1, %s1171
    %1173 = vst [vmem:[%s1172] sm:%s1170] %v1169
    %1174 = vsyncpa [#allocation1], 1

// kernel: mul.129
$region0: #{mul.129}
  %s0 = inlined_call_operand.vmem [shape: f32[4,8,96], index: 0, kind: input, shape index: {}]
  %s1 = inlined_call_operand.vmem [shape: f32[4,8,3,32], index: 1, kind: output, shape index: {}]
  $region1: #{mul.129} parent=0
    #allocation0 [shape = 'u8[131072]{0}', space=vmem, size = 0x20000, scoped, tag = 'scoped mem for output reshape']
    %v2 = vld [vmem:[%s0] sm:$0xff]
    %vm3 = vcmask 261120
    %4 = vst.msk [vmem:[#allocation0] ss:$8 sm:$0xf] %vm3, %v2
    %5 = vst.msk [vmem:[#allocation0] ss:$8 sm:$0xf0] %vm3, %v2
    %s6 = scalar_lea.vmem %s0, 8
    %v7 = vld [vmem:[%s6] sm:$0xff]
    %vm8 = vcmask 261120
    %s9 = scalar_lea.vmem [#allocation0], 64
    %10 = vst.msk [vmem:[%s9] ss:$8 sm:$0xf] %vm8, %v7
    %s11 = scalar_lea.vmem [#allocation0], 64
    %12 = vst.msk [vmem:[%s11] ss:$8 sm:$0xf0] %vm8, %v7
    %s13 = scalar_lea.vmem %s0, 16
    %v14 = vld [vmem:[%s13] sm:$0xff]
    %vm15 = vcmask 261120
    %s16 = scalar_lea.vmem [#allocation0], 128
    %17 = vst.msk [vmem:[%s16] ss:$8 sm:$0xf] %vm15, %v14
    %s18 = scalar_lea.vmem [#allocation0], 128
    %19 = vst.msk [vmem:[%s18] ss:$8 sm:$0xf0] %vm15, %v14
    %s20 = scalar_lea.vmem %s0, 24
    %v21 = vld [vmem:[%s20] sm:$0xff]
    %vm22 = vcmask 261120
    %s23 = scalar_lea.vmem [#allocation0], 192
    %24 = vst.msk [vmem:[%s23] ss:$8 sm:$0xf] %vm22, %v21
    %s25 = scalar_lea.vmem [#allocation0], 192
    %26 = vst.msk [vmem:[%s25] ss:$8 sm:$0xf0] %vm22, %v21
    %v27 = vld [vmem:[%s0] sm:$0xff]
    %28 = vrot.lane.b32.xlu0 %v27, 96
    %v29 = vpop.permute.xlu0 %28
    %vm30 = vcmask 261120
    %s31 = scalar_lea.vmem [#allocation0], 1
    %32 = vst.msk [vmem:[%s31] ss:$8 sm:$0xf] %vm30, %v29
    %s33 = scalar_lea.vmem [#allocation0], 1
    %34 = vst.msk [vmem:[%s33] ss:$8 sm:$0xf0] %vm30, %v29
    %s35 = scalar_lea.vmem %s0, 8
    %v36 = vld [vmem:[%s35] sm:$0xff]
    %37 = vrot.lane.b32.xlu0 %v36, 96
    %v38 = vpop.permute.xlu0 %37
    %vm39 = vcmask 261120
    %s40 = scalar_lea.vmem [#allocation0], 65
    %41 = vst.msk [vmem:[%s40] ss:$8 sm:$0xf] %vm39, %v38
    %s42 = scalar_lea.vmem [#allocation0], 65
    %43 = vst.msk [vmem:[%s42] ss:$8 sm:$0xf0] %vm39, %v38
    %s44 = scalar_lea.vmem %s0, 16
    %v45 = vld [vmem:[%s44] sm:$0xff]
    %46 = vrot.lane.b32.xlu0 %v45, 96
    %v47 = vpop.permute.xlu0 %46
    %vm48 = vcmask 261120
    %s49 = scalar_lea.vmem [#allocation0], 129
    %50 = vst.msk [vmem:[%s49] ss:$8 sm:$0xf] %vm48, %v47
    %s51 = scalar_lea.vmem [#allocation0], 129
    %52 = vst.msk [vmem:[%s51] ss:$8 sm:$0xf0] %vm48, %v47
    %s53 = scalar_lea.vmem %s0, 24
    %v54 = vld [vmem:[%s53] sm:$0xff]
    %55 = vrot.lane.b32.xlu0 %v54, 96
    %v56 = vpop.permute.xlu0 %55
    %vm57 = vcmask 261120
    %s58 = scalar_lea.vmem [#allocation0], 193
    %59 = vst.msk [vmem:[%s58] ss:$8 sm:$0xf] %vm57, %v56
    %s60 = scalar_lea.vmem [#allocation0], 193
    %61 = vst.msk [vmem:[%s60] ss:$8 sm:$0xf0] %vm57, %v56
    %v62 = vld [vmem:[%s0] sm:$0xff]
    %63 = vrot.lane.b32.xlu0 %v62, 64
    %v64 = vpop.permute.xlu0 %63
    %vm65 = vcmask 261120
    %s66 = scalar_lea.vmem [#allocation0], 2
    %67 = vst.msk [vmem:[%s66] ss:$8 sm:$0xf] %vm65, %v64
    %s68 = scalar_lea.vmem [#allocation0], 2
    %69 = vst.msk [vmem:[%s68] ss:$8 sm:$0xf0] %vm65, %v64
    %s70 = scalar_lea.vmem %s0, 8
    %v71 = vld [vmem:[%s70] sm:$0xff]
    %72 = vrot.lane.b32.xlu0 %v71, 64
    %v73 = vpop.permute.xlu0 %72
    %vm74 = vcmask 261120
    %s75 = scalar_lea.vmem [#allocation0], 66
    %76 = vst.msk [vmem:[%s75] ss:$8 sm:$0xf] %vm74, %v73
    %s77 = scalar_lea.vmem [#allocation0], 66
    %78 = vst.msk [vmem:[%s77] ss:$8 sm:$0xf0] %vm74, %v73
    %s79 = scalar_lea.vmem %s0, 16
    %v80 = vld [vmem:[%s79] sm:$0xff]
    %81 = vrot.lane.b32.xlu0 %v80, 64
    %v82 = vpop.permute.xlu0 %81
    %vm83 = vcmask 261120
    %s84 = scalar_lea.vmem [#allocation0], 130
    %85 = vst.msk [vmem:[%s84] ss:$8 sm:$0xf] %vm83, %v82
    %s86 = scalar_lea.vmem [#allocation0], 130
    %87 = vst.msk [vmem:[%s86] ss:$8 sm:$0xf0] %vm83, %v82
    %s88 = scalar_lea.vmem %s0, 24
    %v89 = vld [vmem:[%s88] sm:$0xff]
    %90 = vrot.lane.b32.xlu0 %v89, 64
    %v91 = vpop.permute.xlu0 %90
    %vm92 = vcmask 261120
    %s93 = scalar_lea.vmem [#allocation0], 194
    %94 = vst.msk [vmem:[%s93] ss:$8 sm:$0xf] %vm92, %v91
    %s95 = scalar_lea.vmem [#allocation0], 194
    %96 = vst.msk [vmem:[%s95] ss:$8 sm:$0xf0] %vm92, %v91
    %s98 = sshllo.u32 0, 4
    %v100 = vld [vmem:[#allocation0] sm:%s98]
    %s101 = sshllo.u32 0, 4
    %102 = vst [vmem:[%s1] sm:%s101] %v100
    %s103 = scalar_lea.vmem [#allocation0], 8
    %v104 = vld [vmem:[%s103] sm:%s98]
    %s105 = sshllo.u32 0, 4
    %s106 = scalar_lea.vmem %s1, 4
    %107 = vst [vmem:[%s106] sm:%s105] %v104
    %s108 = scalar_lea.vmem [#allocation0], 16
    %v109 = vld [vmem:[%s108] sm:%s98]
    %s110 = sshllo.u32 0, 4
    %s111 = smul.addr 4, 2
    %s112 = scalar_lea.vmem %s1, %s111
    %113 = vst [vmem:[%s112] sm:%s110] %v109
    %s114 = scalar_lea.vmem [#allocation0], 24
    %v115 = vld [vmem:[%s114] sm:%s98]
    %s116 = sshllo.u32 0, 4
    %s117 = smul.addr 4, 3
    %s118 = scalar_lea.vmem %s1, %s117
    %119 = vst [vmem:[%s118] sm:%s116] %v115
    %s120 = scalar_lea.vmem [#allocation0], 32
    %v121 = vld [vmem:[%s120] sm:%s98]
    %s122 = sshllo.u32 0, 4
    %s123 = smul.addr 4, 4
    %s124 = scalar_lea.vmem %s1, %s123
    %125 = vst [vmem:[%s124] sm:%s122] %v121
    %s126 = scalar_lea.vmem [#allocation0], 40
    %v127 = vld [vmem:[%s126] sm:%s98]
    %s128 = sshllo.u32 0, 4
    %s129 = smul.addr 4, 5
    %s130 = scalar_lea.vmem %s1, %s129
    %131 = vst [vmem:[%s130] sm:%s128] %v127
    %s132 = scalar_lea.vmem [#allocation0], 48
    %v133 = vld [vmem:[%s132] sm:%s98]
    %s134 = sshllo.u32 0, 4
    %s135 = smul.addr 4, 6
    %s136 = scalar_lea.vmem %s1, %s135
    %137 = vst [vmem:[%s136] sm:%s134] %v133
    %s138 = scalar_lea.vmem [#allocation0], 56
    %v139 = vld [vmem:[%s138] sm:%s98]
    %s140 = sshllo.u32 0, 4
    %s141 = smul.addr 4, 7
    %s142 = scalar_lea.vmem %s1, %s141
    %143 = vst [vmem:[%s142] sm:%s140] %v139
    %s144 = scalar_lea.vmem [#allocation0], 64
    %v145 = vld [vmem:[%s144] sm:%s98]
    %s146 = sshllo.u32 0, 4
    %s147 = smul.addr 4, 8
    %s148 = scalar_lea.vmem %s1, %s147
    %149 = vst [vmem:[%s148] sm:%s146] %v145
    %s150 = scalar_lea.vmem [#allocation0], 72
    %v151 = vld [vmem:[%s150] sm:%s98]
    %s152 = sshllo.u32 0, 4
    %s153 = smul.addr 4, 9
    %s154 = scalar_lea.vmem %s1, %s153
    %155 = vst [vmem:[%s154] sm:%s152] %v151
    %s156 = scalar_lea.vmem [#allocation0], 80
    %v157 = vld [vmem:[%s156] sm:%s98]
    %s158 = sshllo.u32 0, 4
    %s159 = smul.addr 4, 10
    %s160 = scalar_lea.vmem %s1, %s159
    %161 = vst [vmem:[%s160] sm:%s158] %v157
    %s162 = scalar_lea.vmem [#allocation0], 88
    %v163 = vld [vmem:[%s162] sm:%s98]
    %s164 = sshllo.u32 0, 4
    %s165 = smul.addr 4, 11
    %s166 = scalar_lea.vmem %s1, %s165
    %167 = vst [vmem:[%s166] sm:%s164] %v163
    %s168 = scalar_lea.vmem [#allocation0], 96
    %v169 = vld [vmem:[%s168] sm:%s98]
    %s170 = sshllo.u32 0, 4
    %s171 = smul.addr 4, 12
    %s172 = scalar_lea.vmem %s1, %s171
    %173 = vst [vmem:[%s172] sm:%s170] %v169
    %s174 = scalar_lea.vmem [#allocation0], 104
    %v175 = vld [vmem:[%s174] sm:%s98]
    %s176 = sshllo.u32 0, 4
    %s177 = smul.addr 4, 13
    %s178 = scalar_lea.vmem %s1, %s177
    %179 = vst [vmem:[%s178] sm:%s176] %v175
    %s180 = scalar_lea.vmem [#allocation0], 112
    %v181 = vld [vmem:[%s180] sm:%s98]
    %s182 = sshllo.u32 0, 4
    %s183 = smul.addr 4, 14
    %s184 = scalar_lea.vmem %s1, %s183
    %185 = vst [vmem:[%s184] sm:%s182] %v181
    %s186 = scalar_lea.vmem [#allocation0], 120
    %v187 = vld [vmem:[%s186] sm:%s98]
    %s188 = sshllo.u32 0, 4
    %s189 = smul.addr 4, 15
    %s190 = scalar_lea.vmem %s1, %s189
    %191 = vst [vmem:[%s190] sm:%s188] %v187
    %s192 = scalar_lea.vmem [#allocation0], 128
    %v193 = vld [vmem:[%s192] sm:%s98]
    %s194 = sshllo.u32 0, 4
    %s195 = smul.addr 4, 16
    %s196 = scalar_lea.vmem %s1, %s195
    %197 = vst [vmem:[%s196] sm:%s194] %v193
    %s198 = scalar_lea.vmem [#allocation0], 136
    %v199 = vld [vmem:[%s198] sm:%s98]
    %s200 = sshllo.u32 0, 4
    %s201 = smul.addr 4, 17
    %s202 = scalar_lea.vmem %s1, %s201
    %203 = vst [vmem:[%s202] sm:%s200] %v199
    %s204 = scalar_lea.vmem [#allocation0], 144
    %v205 = vld [vmem:[%s204] sm:%s98]
    %s206 = sshllo.u32 0, 4
    %s207 = smul.addr 4, 18
    %s208 = scalar_lea.vmem %s1, %s207
    %209 = vst [vmem:[%s208] sm:%s206] %v205
    %s210 = scalar_lea.vmem [#allocation0], 152
    %v211 = vld [vmem:[%s210] sm:%s98]
    %s212 = sshllo.u32 0, 4
    %s213 = smul.addr 4, 19
    %s214 = scalar_lea.vmem %s1, %s213
    %215 = vst [vmem:[%s214] sm:%s212] %v211
    %s216 = scalar_lea.vmem [#allocation0], 160
    %v217 = vld [vmem:[%s216] sm:%s98]
    %s218 = sshllo.u32 0, 4
    %s219 = smul.addr 4, 20
    %s220 = scalar_lea.vmem %s1, %s219
    %221 = vst [vmem:[%s220] sm:%s218] %v217
    %s222 = scalar_lea.vmem [#allocation0], 168
    %v223 = vld [vmem:[%s222] sm:%s98]
    %s224 = sshllo.u32 0, 4
    %s225 = smul.addr 4, 21
    %s226 = scalar_lea.vmem %s1, %s225
    %227 = vst [vmem:[%s226] sm:%s224] %v223
    %s228 = scalar_lea.vmem [#allocation0], 176
    %v229 = vld [vmem:[%s228] sm:%s98]
    %s230 = sshllo.u32 0, 4
    %s231 = smul.addr 4, 22
    %s232 = scalar_lea.vmem %s1, %s231
    %233 = vst [vmem:[%s232] sm:%s230] %v229
    %s234 = scalar_lea.vmem [#allocation0], 184
    %v235 = vld [vmem:[%s234] sm:%s98]
    %s236 = sshllo.u32 0, 4
    %s237 = smul.addr 4, 23
    %s238 = scalar_lea.vmem %s1, %s237
    %239 = vst [vmem:[%s238] sm:%s236] %v235
    %s240 = scalar_lea.vmem [#allocation0], 192
    %v241 = vld [vmem:[%s240] sm:%s98]
    %s242 = sshllo.u32 0, 4
    %s243 = smul.addr 4, 24
    %s244 = scalar_lea.vmem %s1, %s243
    %245 = vst [vmem:[%s244] sm:%s242] %v241
    %s246 = scalar_lea.vmem [#allocation0], 200
    %v247 = vld [vmem:[%s246] sm:%s98]
    %s248 = sshllo.u32 0, 4
    %s249 = smul.addr 4, 25
    %s250 = scalar_lea.vmem %s1, %s249
    %251 = vst [vmem:[%s250] sm:%s248] %v247
    %s252 = scalar_lea.vmem [#allocation0], 208
    %v253 = vld [vmem:[%s252] sm:%s98]
    %s254 = sshllo.u32 0, 4
    %s255 = smul.addr 4, 26
    %s256 = scalar_lea.vmem %s1, %s255
    %257 = vst [vmem:[%s256] sm:%s254] %v253
    %s258 = scalar_lea.vmem [#allocation0], 216
    %v259 = vld [vmem:[%s258] sm:%s98]
    %s260 = sshllo.u32 0, 4
    %s261 = smul.addr 4, 27
    %s262 = scalar_lea.vmem %s1, %s261
    %263 = vst [vmem:[%s262] sm:%s260] %v259
    %s264 = scalar_lea.vmem [#allocation0], 224
    %v265 = vld [vmem:[%s264] sm:%s98]
    %s266 = sshllo.u32 0, 4
    %s267 = smul.addr 4, 28
    %s268 = scalar_lea.vmem %s1, %s267
    %269 = vst [vmem:[%s268] sm:%s266] %v265
    %s270 = scalar_lea.vmem [#allocation0], 232
    %v271 = vld [vmem:[%s270] sm:%s98]
    %s272 = sshllo.u32 0, 4
    %s273 = smul.addr 4, 29
    %s274 = scalar_lea.vmem %s1, %s273
    %275 = vst [vmem:[%s274] sm:%s272] %v271
    %s276 = scalar_lea.vmem [#allocation0], 240
    %v277 = vld [vmem:[%s276] sm:%s98]
    %s278 = sshllo.u32 0, 4
    %s279 = smul.addr 4, 30
    %s280 = scalar_lea.vmem %s1, %s279
    %281 = vst [vmem:[%s280] sm:%s278] %v277
    %s282 = scalar_lea.vmem [#allocation0], 248
    %v283 = vld [vmem:[%s282] sm:%s98]
    %s284 = sshllo.u32 0, 4
    %s285 = smul.addr 4, 31
    %s286 = scalar_lea.vmem %s1, %s285
    %287 = vst [vmem:[%s286] sm:%s284] %v283

// kernel: tile.18
$region0: #{tile.18}
  #allocation0 [shape = 's32[1]{0}', space=sflag, size = 0x4, scoped, tag = 'scoped memory for tile.18']
  %s0 = inlined_call_operand.vmem [shape: f32[8], index: 0, kind: input, shape index: {}]
  %s1 = inlined_call_operand.vmem [shape: f32[4,8], index: 1, kind: output, shape index: {}]
  // Predicated region
  $region2: #{tile.18} parent=0 // pred_check
    _
  $region3: #{tile.18} parent=0 // pred_check_branch
    %3 = sbr.rel (0) target = $region5
  $region4: #{tile.18} parent=0 // pred_region
    _
  $region5: #{tile.18} parent=0 // pred_fallthru
    _
  %v4 = vld [vmem:[%s0] ss:$0 sm:$0xff]
  %5 = vst [vmem:[%s1] sm:$0xf] %v4

// kernel: tile.13
$region0: #{tile.13}
  #allocation0 [shape = 's32[1]{0}', space=sflag, size = 0x4, scoped, tag = 'scoped memory for tile.13']
  %s0 = inlined_call_operand.vmem [shape: f32[16], index: 0, kind: input, shape index: {}]
  %s1 = inlined_call_operand.vmem [shape: f32[4,16], index: 1, kind: output, shape index: {}]
  // Predicated region
  $region2: #{tile.13} parent=0 // pred_check
    _
  $region3: #{tile.13} parent=0 // pred_check_branch
    %3 = sbr.rel (0) target = $region5
  $region4: #{tile.13} parent=0 // pred_region
    _
  $region5: #{tile.13} parent=0 // pred_fallthru
    _
  %v4 = vld [vmem:[%s0] ss:$0 sm:$0xff]
  %5 = vst [vmem:[%s1] sm:$0xf] %v4

// kernel: tile.14
$region0: #{tile.14}
  %s0 = inlined_call_operand.vmem [shape: f32[4,16], index: 0, kind: input, shape index: {}]
  %s1 = inlined_call_operand.vmem [shape: f32[1,64], index: 1, kind: output, shape index: {}]
  $region1: #{tile.14} parent=0
    #allocation0 [shape = 'u8[4096]{0}', space=vmem, size = 0x1000, scoped, tag = 'scoped mem for output reshape']
    #allocation1 [shape = 'u8[4096]{0}', space=vmem, size = 0x1000, scoped, tag = 'scoped mem for input reshape']
    %s3 = sshllo.u32 0, 4
    %v4 = vld [vmem:[%s0] sm:%s3]
    %5 = vst [vmem:[#allocation1] sm:%s3] %v4
    %v6 = vld [vmem:[#allocation1] sm:$0x1]
    %vm7 = vcmask 130048
    %8 = vst.msk [vmem:[#allocation0] sm:$0x1] %vm7, %v6
    %s9 = scalar_lea.vmem [#allocation1], 3
    %v10 = vld [vmem:[%s9] sm:$0x1]
    %11 = vrot.lane.b32.xlu0 %v10, 48
    %v12 = vpop.permute.xlu0 %11
    %vm13 = vcmask 523648
    %14 = vst.msk [vmem:[#allocation0] sm:$0x1] %vm13, %v12
    %s15 = scalar_lea.vmem [#allocation1], 2
    %v16 = vld [vmem:[%s15] sm:$0x1]
    %17 = vrot.lane.b32.xlu0 %v16, 32
    %v18 = vpop.permute.xlu0 %17
    %vm19 = vcmask 392448
    %20 = vst.msk [vmem:[#allocation0] sm:$0x1] %vm19, %v18
    %s21 = scalar_lea.vmem [#allocation1], 1
    %v22 = vld [vmem:[%s21] sm:$0x1]
    %23 = vrot.lane.b32.xlu0 %v22, 16
    %v24 = vpop.permute.xlu0 %23
    %vm25 = vcmask 261248
    %26 = vst.msk [vmem:[#allocation0] sm:$0x1] %vm25, %v24
    %s28 = sshllo.u32 0, 1
    %v30 = vld [vmem:[#allocation0] sm:%s28]
    %s31 = sshllo.u32 0, 1
    %32 = vst [vmem:[%s1] sm:%s31] %v30

// kernel: encoder_forward.1
$region0: #{encoder_forward.1}
  #allocation0 [shape = 'u32[]', space=smem, size = 0x4, offset = 0x4, fixed_abs, tag = 'smem constant byte address 0x4 - core index']
  #allocation1 [shape = 'u32[144,128]{1,0:T(1,128)}', space=vmem, size = 0x12000, scoped, tag = 'internal scratch']
  #allocation2 [shape = 'f32[16,384]{1,0:T(8,128)}', space=vmem, size = 0x6000, scoped, tag = 'scratch operand']
  #allocation3 [shape = 'f32[16,128]{1,0:T(8,128)}', space=vmem, size = 0x2000, scoped, tag = 'scratch operand']
  #allocation4 [shape = 'f32[16,384]{1,0:T(8,128)}', space=vmem, size = 0x6000, scoped, tag = 'scratch operand']
  #allocation5 [shape = 'f32[16,128]{1,0:T(8,128)}', space=vmem, size = 0x2000, scoped, tag = 'scratch operand']
  %s0 = inlined_call_operand.vmem [shape: f32[16,32], index: 0, kind: input, shape index: {}]
  %s1 = inlined_call_operand.vmem [shape: bf16[32,64], index: 1, kind: input, shape index: {}]
  %s2 = inlined_call_operand.vmem [shape: f32[1,64], index: 2, kind: input, shape index: {}]
  %s3 = inlined_call_operand.vmem [shape: bf16[64,384], index: 3, kind: input, shape index: {}]
  %s4 = inlined_call_operand.vmem [shape: f32[1,384], index: 4, kind: input, shape index: {}]
  %s5 = inlined_call_operand.vmem [shape: bf16[3,128,384], index: 5, kind: input, shape index: {}]
  %s6 = inlined_call_operand.vmem [shape: f32[3,1,384], index: 6, kind: input, shape index: {}]
  %s7 = inlined_call_operand.vmem [shape: bf16[128,128], index: 7, kind: input, shape index: {}]
  %s8 = inlined_call_operand.vmem [shape: bf16[2,128,64], index: 8, kind: input, shape index: {}]
  %s9 = inlined_call_operand.vmem [shape: f32[2,1,64], index: 9, kind: input, shape index: {}]
  %s10 = inlined_call_operand.vmem [shape: f32[16,64], index: 10, kind: input, shape index: {}]
  %s11 = inlined_call_operand.vmem [shape: f32[16,256], index: 11, kind: output, shape index: {}]
  %s12 = sld [smem:[#allocation0]]
  $region54: #{encoder_forward.1} parent=0
    _
  %s14 = ssub.s32 1, %s12
  %s15 = scalar_select 0, %s14, %s12
  // Predicated region
  $region2: #{encoder_forward.1} parent=0 // pred_check
    _
  $region3: #{encoder_forward.1} parent=0 // pred_check_branch
    %17 = sbr.rel (0) target = $region5
  $region4: #{encoder_forward.1} parent=0 // pred_region
    _
  $region5: #{encoder_forward.1} parent=0 // pred_fallthru
    _
  // Predicated region
  $region6: #{encoder_forward.1} parent=0 // pred_check
    _
  $region7: #{encoder_forward.1} parent=0 // pred_check_branch
    %19 = sbr.rel (0) target = $region9
  $region8: #{encoder_forward.1} parent=0 // pred_region
    _
  $region9: #{encoder_forward.1} parent=0 // pred_fallthru
    _
  // Predicated region
  $region10: #{encoder_forward.1} parent=0 // pred_check
    _
  $region11: #{encoder_forward.1} parent=0 // pred_check_branch
    %21 = sbr.rel (0) target = $region13
  $region12: #{encoder_forward.1} parent=0 // pred_region
    _
  $region13: #{encoder_forward.1} parent=0 // pred_fallthru
    _
  // Predicated region
  $region14: #{encoder_forward.1} parent=0 // pred_check
    _
  $region15: #{encoder_forward.1} parent=0 // pred_check_branch
    %23 = sbr.rel (0) target = $region17
  $region16: #{encoder_forward.1} parent=0 // pred_region
    _
  $region17: #{encoder_forward.1} parent=0 // pred_fallthru
    _
  // Predicated region
  $region18: #{encoder_forward.1} parent=0 // pred_check
    _
  $region19: #{encoder_forward.1} parent=0 // pred_check_branch
    %25 = sbr.rel (0) target = $region21
  $region20: #{encoder_forward.1} parent=0 // pred_region
    _
  $region21: #{encoder_forward.1} parent=0 // pred_fallthru
    _
  // Predicated region
  $region22: #{encoder_forward.1} parent=0 // pred_check
    _
  $region23: #{encoder_forward.1} parent=0 // pred_check_branch
    %27 = sbr.rel (0) target = $region25
  $region24: #{encoder_forward.1} parent=0 // pred_region
    _
  $region25: #{encoder_forward.1} parent=0 // pred_fallthru
    _
  // Predicated region
  $region26: #{encoder_forward.1} parent=0 // pred_check
    _
  $region27: #{encoder_forward.1} parent=0 // pred_check_branch
    %29 = sbr.rel (0) target = $region29
  $region28: #{encoder_forward.1} parent=0 // pred_region
    _
  $region29: #{encoder_forward.1} parent=0 // pred_fallthru
    _
  // Predicated region
  $region30: #{encoder_forward.1} parent=0 // pred_check
    _
  $region31: #{encoder_forward.1} parent=0 // pred_check_branch
    %31 = sbr.rel (0) target = $region33
  $region32: #{encoder_forward.1} parent=0 // pred_region
    _
  $region33: #{encoder_forward.1} parent=0 // pred_fallthru
    _
  // Predicated region
  $region34: #{encoder_forward.1} parent=0 // pred_check
    _
  $region35: #{encoder_forward.1} parent=0 // pred_check_branch
    %33 = sbr.rel (0) target = $region37
  $region36: #{encoder_forward.1} parent=0 // pred_region
    _
  $region37: #{encoder_forward.1} parent=0 // pred_fallthru
    _
  // Predicated region
  $region38: #{encoder_forward.1} parent=0 // pred_check
    _
  $region39: #{encoder_forward.1} parent=0 // pred_check_branch
    %35 = sbr.rel (0) target = $region41
  $region40: #{encoder_forward.1} parent=0 // pred_region
    _
  $region41: #{encoder_forward.1} parent=0 // pred_fallthru
    _
  // Predicated region
  $region42: #{encoder_forward.1} parent=0 // pred_check
    _
  $region43: #{encoder_forward.1} parent=0 // pred_check_branch
    %37 = sbr.rel (0) target = $region45
  $region44: #{encoder_forward.1} parent=0 // pred_region
    _
  $region45: #{encoder_forward.1} parent=0 // pred_fallthru
    _
  %v39 = vld [vmem:[%s0] sm:$0xff]
  %v40 = vld [vmem:[%s0 + $0x8] sm:$0xff]
  %v41 = vld [vmem:[%s1] sm:$0xf]
  %v42 = vld [vmem:[%s1 + $0x4] sm:$0xf]
  %v43 = vld [vmem:[%s1 + $0x8] sm:$0xf]
  %v44 = vld [vmem:[%s1 + $0xc] sm:$0xf]
  %v45 = vpack.c.bf16 %v40, %v39
  %v46 = vld [vmem:[%s2] sm:$0x1]
  %v48 = vlaneseq
  %v49 = vshrl.u32 %v48, 7
  %v50 = vsub.s32 0, %v49
  %v51 = vrot.slane %v46, %v50
  %v57 = vunpack.c.l.b16 %v41
  %v58 = vunpack.c.l.b16 %v42
  %v59 = vunpack.c.l.b16 %v43
  %v60 = vunpack.c.l.b16 %v44
  %v61 = vpack.c.b16 %v58, %v57
  %v62 = vpack.c.b16 %v60, %v59
  %vm65 = vcmask 261120
  %v67 = vsel %vm65, %v45, 0
  %69 = vmatprep.subr.bf16.mxu0 0
  %70 = vmatpush1.bf16.msra.mxu0 %v61
  %71 = vmatprep.subr.bf16.mxu0 0
  %72 = vmatpush1.bf16.msra.mxu0 %v62
  %73 = vmatprep.subr.bf16.mxu0 0
  %74 = vmatpush1.bf16.msra.mxu0 0
  %75 = vmatprep.subr.bf16.mxu0 0
  %76 = vmatpush1.bf16.msra.mxu0 0
  %77 = vmatprep.subr.bf16.mxu0 0
  %78 = vmatpush1.bf16.msra.mxu0 0
  %79 = vmatprep.subr.bf16.mxu0 0
  %80 = vmatpush1.bf16.msra.mxu0 0
  %81 = vmatprep.subr.bf16.mxu0 0
  %82 = vmatpush1.bf16.msra.mxu0 0
  %83 = vmatprep.subr.bf16.mxu0 0
  %84 = vmatpush1.bf16.msra.mxu0 0
  %85 = vmatprep.subr.bf16.mxu0 0
  %86 = vmatpush1.bf16.msra.mxu0 0
  %87 = vmatprep.subr.bf16.mxu0 0
  %88 = vmatpush1.bf16.msra.mxu0 0
  %89 = vmatprep.subr.bf16.mxu0 0
  %90 = vmatpush1.bf16.msra.mxu0 0
  %91 = vmatprep.subr.bf16.mxu0 0
  %92 = vmatpush1.bf16.msra.mxu0 0
  %93 = vmatprep.subr.bf16.mxu0 0
  %94 = vmatpush1.bf16.msra.mxu0 0
  %95 = vmatprep.subr.bf16.mxu0 0
  %96 = vmatpush1.bf16.msra.mxu0 0
  %97 = vmatprep.subr.bf16.mxu0 0
  %98 = vmatpush1.bf16.msra.mxu0 0
  %99 = vmatprep.subr.bf16.mxu0 0
  %100 = vmatpush1.bf16.msra.mxu0 0
  %101 = vmatprep.mubr.bf16.mxu0 0
  %102 = vmatmul.mubr.bf16.gmra.mrb[0].mxu0 %v67
  %v103 = vpop.f32.mrb[0].mxu0
  %v104 = vadd.f32 %v51, %v103
  %v105 = vpop.f32.mrb[0].mxu0
  %v106 = vpop.f32.mrb[0].mxu0
  %v107 = vadd.f32 %v51, %v106
  %v108 = vpop.f32.mrb[0].mxu0
  %109 = vdwg.mxu0
  %v110 = vmax.f32 %v104, 0.0
  %v111 = vmax.f32 %v107, 0.0
  %v112 = vld [vmem:[%s3] sm:$0xff]
  %v113 = vld [vmem:[%s3 + $0x8] sm:$0xf]
  %v114 = vld [vmem:[%s3 + $0xc] sm:$0xff]
  %v115 = vld [vmem:[%s3 + $0x14] sm:$0xf]
  %v116 = vld [vmem:[%s3 + $0x18] sm:$0xff]
  %v117 = vld [vmem:[%s3 + $0x20] sm:$0xf]
  %v118 = vld [vmem:[%s3 + $0x24] sm:$0xff]
  %v119 = vld [vmem:[%s3 + $0x2c] sm:$0xf]
  %v120 = vld [vmem:[%s3 + $0x30] sm:$0xff]
  %v121 = vld [vmem:[%s3 + $0x38] sm:$0xf]
  %v122 = vld [vmem:[%s3 + $0x3c] sm:$0xff]
  %v123 = vld [vmem:[%s3 + $0x44] sm:$0xf]
  %v124 = vld [vmem:[%s3 + $0x48] sm:$0xff]
  %v125 = vld [vmem:[%s3 + $0x50] sm:$0xf]
  %v126 = vld [vmem:[%s3 + $0x54] sm:$0xff]
  %v127 = vld [vmem:[%s3 + $0x5c] sm:$0xf]
  %v128 = vpack.c.bf16 %v111, %v110
  %v129 = vld [vmem:[%s4] sm:$0x7]
  %v131 = vlaneseq
  %v132 = vshrl.u32 %v131, 7
  %v133 = vsub.s32 0, %v132
  %v134 = vrot.slane %v129, %v133
  %v135 = vlaneseq
  %v136 = vshrl.u32 %v135, 7
  %v137 = vsub.s32 1, %v136
  %v138 = vrot.slane %v129, %v137
  %v139 = vlaneseq
  %v140 = vshrl.u32 %v139, 7
  %v141 = vsub.s32 2, %v140
  %v142 = vrot.slane %v129, %v141
  %v162 = vunpack.c.l.b16 %v112
  %v163 = vunpack.c.h.b16 %v112
  %v164 = vunpack.c.l.b16 %v113
  %v165 = vunpack.c.l.b16 %v114
  %v166 = vunpack.c.h.b16 %v114
  %v167 = vunpack.c.l.b16 %v115
  %v168 = vunpack.c.l.b16 %v116
  %v169 = vunpack.c.h.b16 %v116
  %v170 = vunpack.c.l.b16 %v117
  %v171 = vunpack.c.l.b16 %v118
  %v172 = vunpack.c.h.b16 %v118
  %v173 = vunpack.c.l.b16 %v119
  %v174 = vunpack.c.l.b16 %v120
  %v175 = vunpack.c.h.b16 %v120
  %v176 = vunpack.c.l.b16 %v121
  %v177 = vunpack.c.l.b16 %v122
  %v178 = vunpack.c.h.b16 %v122
  %v179 = vunpack.c.l.b16 %v123
  %v180 = vunpack.c.l.b16 %v124
  %v181 = vunpack.c.h.b16 %v124
  %v182 = vunpack.c.l.b16 %v125
  %v183 = vunpack.c.l.b16 %v126
  %v184 = vunpack.c.h.b16 %v126
  %v185 = vunpack.c.l.b16 %v127
  %v186 = vpack.c.b16 %v165, %v162
  %v187 = vpack.c.b16 %v166, %v163
  %v188 = vpack.c.b16 %v167, %v164
  %v189 = vpack.c.b16 %v171, %v168
  %v190 = vpack.c.b16 %v172, %v169
  %v191 = vpack.c.b16 %v173, %v170
  %v192 = vpack.c.b16 %v177, %v174
  %v193 = vpack.c.b16 %v178, %v175
  %v194 = vpack.c.b16 %v179, %v176
  %v195 = vpack.c.b16 %v183, %v180
  %v196 = vpack.c.b16 %v184, %v181
  %v197 = vpack.c.b16 %v185, %v182
  %vm210 = vcmask 523264
  %v212 = vsel %vm210, %v128, 0
  %214 = vmatprep.subr.bf16.mxu0 %v187
  %215 = vmatpush1.bf16.msra.mxu0 %v186
  %216 = vmatprep.subr.bf16.mxu0 %v190
  %217 = vmatpush1.bf16.msra.mxu0 %v189
  %218 = vmatprep.subr.bf16.mxu0 %v193
  %219 = vmatpush1.bf16.msra.mxu0 %v192
  %220 = vmatprep.subr.bf16.mxu0 %v196
  %221 = vmatpush1.bf16.msra.mxu0 %v195
  %222 = vmatprep.subr.bf16.mxu0 0
  %223 = vmatpush1.bf16.msra.mxu0 0
  %224 = vmatprep.subr.bf16.mxu0 0
  %225 = vmatpush1.bf16.msra.mxu0 0
  %226 = vmatprep.subr.bf16.mxu0 0
  %227 = vmatpush1.bf16.msra.mxu0 0
  %228 = vmatprep.subr.bf16.mxu0 0
  %229 = vmatpush1.bf16.msra.mxu0 0
  %230 = vmatprep.subr.bf16.mxu0 0
  %231 = vmatpush1.bf16.msra.mxu0 0
  %232 = vmatprep.subr.bf16.mxu0 0
  %233 = vmatpush1.bf16.msra.mxu0 0
  %234 = vmatprep.subr.bf16.mxu0 0
  %235 = vmatpush1.bf16.msra.mxu0 0
  %236 = vmatprep.subr.bf16.mxu0 0
  %237 = vmatpush1.bf16.msra.mxu0 0
  %238 = vmatprep.subr.bf16.mxu0 0
  %239 = vmatpush1.bf16.msra.mxu0 0
  %240 = vmatprep.subr.bf16.mxu0 0
  %241 = vmatpush1.bf16.msra.mxu0 0
  %242 = vmatprep.subr.bf16.mxu0 0
  %243 = vmatpush1.bf16.msra.mxu0 0
  %244 = vmatprep.subr.bf16.mxu0 0
  %245 = vmatpush1.bf16.msra.mxu0 0
  %246 = vmatprep.mubr.bf16.mxu0 0
  %247 = vmatmul.mubr.bf16.gmra.mrb[0].mxu0 %v212
  %v248 = vpop.f32.mrb[0].mxu0
  %v249 = vadd.f32 %v134, %v248
  %v250 = vpop.f32.mrb[0].mxu0
  %v251 = vadd.f32 %v138, %v250
  %v252 = vpop.f32.mrb[0].mxu0
  %v253 = vadd.f32 %v134, %v252
  %v254 = vpop.f32.mrb[0].mxu0
  %v255 = vadd.f32 %v138, %v254
  %256 = vdwg.mxu0
  %257 = vmatprep.subr.bf16.mxu0 0
  %258 = vmatpush1.bf16.msra.mxu0 %v188
  %259 = vmatprep.subr.bf16.mxu0 0
  %260 = vmatpush1.bf16.msra.mxu0 %v191
  %261 = vmatprep.subr.bf16.mxu0 0
  %262 = vmatpush1.bf16.msra.mxu0 %v194
  %263 = vmatprep.subr.bf16.mxu0 0
  %264 = vmatpush1.bf16.msra.mxu0 %v197
  %265 = vmatprep.subr.bf16.mxu0 0
  %266 = vmatpush1.bf16.msra.mxu0 0
  %267 = vmatprep.subr.bf16.mxu0 0
  %268 = vmatpush1.bf16.msra.mxu0 0
  %269 = vmatprep.subr.bf16.mxu0 0
  %270 = vmatpush1.bf16.msra.mxu0 0
  %271 = vmatprep.subr.bf16.mxu0 0
  %272 = vmatpush1.bf16.msra.mxu0 0
  %273 = vmatprep.subr.bf16.mxu0 0
  %274 = vmatpush1.bf16.msra.mxu0 0
  %275 = vmatprep.subr.bf16.mxu0 0
  %276 = vmatpush1.bf16.msra.mxu0 0
  %277 = vmatprep.subr.bf16.mxu0 0
  %278 = vmatpush1.bf16.msra.mxu0 0
  %279 = vmatprep.subr.bf16.mxu0 0
  %280 = vmatpush1.bf16.msra.mxu0 0
  %281 = vmatprep.subr.bf16.mxu0 0
  %282 = vmatpush1.bf16.msra.mxu0 0
  %283 = vmatprep.subr.bf16.mxu0 0
  %284 = vmatpush1.bf16.msra.mxu0 0
  %285 = vmatprep.subr.bf16.mxu0 0
  %286 = vmatpush1.bf16.msra.mxu0 0
  %287 = vmatprep.subr.bf16.mxu0 0
  %288 = vmatpush1.bf16.msra.mxu0 0
  %289 = vmatprep.mubr.bf16.mxu0 0
  %290 = vmatmul.mubr.bf16.gmra.mrb[0].mxu0 %v212
  %v291 = vpop.f32.mrb[0].mxu0
  %v292 = vadd.f32 %v142, %v291
  %v293 = vpop.f32.mrb[0].mxu0
  %v294 = vpop.f32.mrb[0].mxu0
  %v295 = vadd.f32 %v142, %v294
  %v296 = vpop.f32.mrb[0].mxu0
  %297 = vdwg.mxu0
  %298 = vst [vmem:[#allocation2] sm:$0xff] %v249
  %299 = vst [vmem:[#allocation2 + $0x8] sm:$0xff] %v251
  %300 = vst [vmem:[#allocation2 + $0x10] sm:$0xff] %v292
  %301 = vst [vmem:[#allocation2 + $0x18] sm:$0xff] %v253
  %302 = vst [vmem:[#allocation2 + $0x20] sm:$0xff] %v255
  %303 = vst [vmem:[#allocation2 + $0x28] sm:$0xff] %v295
  %v304 = vld [vmem:[%s5] sm:$0xff]
  %v305 = vld [vmem:[%s5 + $0x8] sm:$0xf]
  %v306 = vld [vmem:[%s5 + $0xc] sm:$0xff]
  %v307 = vld [vmem:[%s5 + $0x14] sm:$0xf]
  %v308 = vld [vmem:[%s5 + $0x18] sm:$0xff]
  %v309 = vld [vmem:[%s5 + $0x20] sm:$0xf]
  %v310 = vld [vmem:[%s5 + $0x24] sm:$0xff]
  %v311 = vld [vmem:[%s5 + $0x2c] sm:$0xf]
  %v312 = vld [vmem:[%s5 + $0x30] sm:$0xff]
  %v313 = vld [vmem:[%s5 + $0x38] sm:$0xf]
  %v314 = vld [vmem:[%s5 + $0x3c] sm:$0xff]
  %v315 = vld [vmem:[%s5 + $0x44] sm:$0xf]
  %v316 = vld [vmem:[%s5 + $0x48] sm:$0xff]
  %v317 = vld [vmem:[%s5 + $0x50] sm:$0xf]
  %v318 = vld [vmem:[%s5 + $0x54] sm:$0xff]
  %v319 = vld [vmem:[%s5 + $0x5c] sm:$0xf]
  %v320 = vld [vmem:[%s5 + $0x60] sm:$0xff]
  %v321 = vld [vmem:[%s5 + $0x68] sm:$0xf]
  %v322 = vld [vmem:[%s5 + $0x6c] sm:$0xff]
  %v323 = vld [vmem:[%s5 + $0x74] sm:$0xf]
  %v324 = vld [vmem:[%s5 + $0x78] sm:$0xff]
  %v325 = vld [vmem:[%s5 + $0x80] sm:$0xf]
  %v326 = vld [vmem:[%s5 + $0x84] sm:$0xff]
  %v327 = vld [vmem:[%s5 + $0x8c] sm:$0xf]
  %v328 = vld [vmem:[%s5 + $0x90] sm:$0xff]
  %v329 = vld [vmem:[%s5 + $0x98] sm:$0xf]
  %v330 = vld [vmem:[%s5 + $0x9c] sm:$0xff]
  %v331 = vld [vmem:[%s5 + $0xa4] sm:$0xf]
  %v332 = vld [vmem:[%s5 + $0xa8] sm:$0xff]
  %v333 = vld [vmem:[%s5 + $0xb0] sm:$0xf]
  %v334 = vld [vmem:[%s5 + $0xb4] sm:$0xff]
  %v335 = vld [vmem:[%s5 + $0xbc] sm:$0xf]
  %v336 = vld [vmem:[%s6] sm:$0x7]
  %v338 = vlaneseq
  %v339 = vshrl.u32 %v338, 7
  %v340 = vsub.s32 0, %v339
  %v341 = vrot.slane %v336, %v340
  %v342 = vlaneseq
  %v343 = vshrl.u32 %v342, 7
  %v344 = vsub.s32 1, %v343
  %v345 = vrot.slane %v336, %v344
  %v346 = vlaneseq
  %v347 = vshrl.u32 %v346, 7
  %v348 = vsub.s32 2, %v347
  %v349 = vrot.slane %v336, %v348
  %v385 = vunpack.c.l.b16 %v304
  %v386 = vunpack.c.h.b16 %v304
  %v387 = vunpack.c.l.b16 %v305
  %v388 = vunpack.c.l.b16 %v306
  %v389 = vunpack.c.h.b16 %v306
  %v390 = vunpack.c.l.b16 %v307
  %v391 = vunpack.c.l.b16 %v308
  %v392 = vunpack.c.h.b16 %v308
  %v393 = vunpack.c.l.b16 %v309
  %v394 = vunpack.c.l.b16 %v310
  %v395 = vunpack.c.h.b16 %v310
  %v396 = vunpack.c.l.b16 %v311
  %v397 = vunpack.c.l.b16 %v312
  %v398 = vunpack.c.h.b16 %v312
  %v399 = vunpack.c.l.b16 %v313
  %v400 = vunpack.c.l.b16 %v314
  %v401 = vunpack.c.h.b16 %v314
  %v402 = vunpack.c.l.b16 %v315
  %v403 = vunpack.c.l.b16 %v316
  %v404 = vunpack.c.h.b16 %v316
  %v405 = vunpack.c.l.b16 %v317
  %v406 = vunpack.c.l.b16 %v318
  %v407 = vunpack.c.h.b16 %v318
  %v408 = vunpack.c.l.b16 %v319
  %v409 = vunpack.c.l.b16 %v320
  %v410 = vunpack.c.h.b16 %v320
  %v411 = vunpack.c.l.b16 %v321
  %v412 = vunpack.c.l.b16 %v322
  %v413 = vunpack.c.h.b16 %v322
  %v414 = vunpack.c.l.b16 %v323
  %v415 = vunpack.c.l.b16 %v324
  %v416 = vunpack.c.h.b16 %v324
  %v417 = vunpack.c.l.b16 %v325
  %v418 = vunpack.c.l.b16 %v326
  %v419 = vunpack.c.h.b16 %v326
  %v420 = vunpack.c.l.b16 %v327
  %v421 = vunpack.c.l.b16 %v328
  %v422 = vunpack.c.h.b16 %v328
  %v423 = vunpack.c.l.b16 %v329
  %v424 = vunpack.c.l.b16 %v330
  %v425 = vunpack.c.h.b16 %v330
  %v426 = vunpack.c.l.b16 %v331
  %v427 = vunpack.c.l.b16 %v332
  %v428 = vunpack.c.h.b16 %v332
  %v429 = vunpack.c.l.b16 %v333
  %v430 = vunpack.c.l.b16 %v334
  %v431 = vunpack.c.h.b16 %v334
  %v432 = vunpack.c.l.b16 %v335
  %v433 = vpack.c.b16 %v388, %v385
  %v434 = vpack.c.b16 %v389, %v386
  %v435 = vpack.c.b16 %v390, %v387
  %v436 = vpack.c.b16 %v394, %v391
  %v437 = vpack.c.b16 %v395, %v392
  %v438 = vpack.c.b16 %v396, %v393
  %v439 = vpack.c.b16 %v400, %v397
  %v440 = vpack.c.b16 %v401, %v398
  %v441 = vpack.c.b16 %v402, %v399
  %v442 = vpack.c.b16 %v406, %v403
  %v443 = vpack.c.b16 %v407, %v404
  %v444 = vpack.c.b16 %v408, %v405
  %v445 = vpack.c.b16 %v412, %v409
  %v446 = vpack.c.b16 %v413, %v410
  %v447 = vpack.c.b16 %v414, %v411
  %v448 = vpack.c.b16 %v418, %v415
  %v449 = vpack.c.b16 %v419, %v416
  %v450 = vpack.c.b16 %v420, %v417
  %v451 = vpack.c.b16 %v424, %v421
  %v452 = vpack.c.b16 %v425, %v422
  %v453 = vpack.c.b16 %v426, %v423
  %v454 = vpack.c.b16 %v430, %v427
  %v455 = vpack.c.b16 %v431, %v428
  %v456 = vpack.c.b16 %v432, %v429
  %481 = vmatprep.subr.bf16.mxu0 %v434
  %482 = vmatpush1.bf16.msra.mxu0 %v433
  %483 = vmatprep.subr.bf16.mxu0 %v437
  %484 = vmatpush1.bf16.msra.mxu0 %v436
  %485 = vmatprep.subr.bf16.mxu0 %v440
  %486 = vmatpush1.bf16.msra.mxu0 %v439
  %487 = vmatprep.subr.bf16.mxu0 %v443
  %488 = vmatpush1.bf16.msra.mxu0 %v442
  %489 = vmatprep.subr.bf16.mxu0 %v446
  %490 = vmatpush1.bf16.msra.mxu0 %v445
  %491 = vmatprep.subr.bf16.mxu0 %v449
  %492 = vmatpush1.bf16.msra.mxu0 %v448
  %493 = vmatprep.subr.bf16.mxu0 %v452
  %494 = vmatpush1.bf16.msra.mxu0 %v451
  %495 = vmatprep.subr.bf16.mxu0 %v455
  %496 = vmatpush1.bf16.msra.mxu0 %v454
  %497 = vmatprep.subr.bf16.mxu0 0
  %498 = vmatpush1.bf16.msra.mxu0 0
  %499 = vmatprep.subr.bf16.mxu0 0
  %500 = vmatpush1.bf16.msra.mxu0 0
  %501 = vmatprep.subr.bf16.mxu0 0
  %502 = vmatpush1.bf16.msra.mxu0 0
  %503 = vmatprep.subr.bf16.mxu0 0
  %504 = vmatpush1.bf16.msra.mxu0 0
  %505 = vmatprep.subr.bf16.mxu0 0
  %506 = vmatpush1.bf16.msra.mxu0 0
  %507 = vmatprep.subr.bf16.mxu0 0
  %508 = vmatpush1.bf16.msra.mxu0 0
  %509 = vmatprep.subr.bf16.mxu0 0
  %510 = vmatpush1.bf16.msra.mxu0 0
  %511 = vmatprep.subr.bf16.mxu0 0
  %512 = vmatpush1.bf16.msra.mxu0 0
  %513 = vmatprep.mubr.bf16.mxu0 0
  %514 = vmatmul.mubr.bf16.gmra.mrb[0].mxu0 0
  %v515 = vpop.f32.mrb[0].mxu0
  %v516 = vadd.f32 %v341, %v515
  %v517 = vpop.f32.mrb[0].mxu0
  %v518 = vadd.f32 %v345, %v517
  %v519 = vpop.f32.mrb[0].mxu0
  %v520 = vpop.f32.mrb[0].mxu0
  %521 = vdwg.mxu0
  %522 = vmatprep.subr.bf16.mxu0 0
  %523 = vmatpush1.bf16.msra.mxu0 %v435
  %524 = vmatprep.subr.bf16.mxu0 0
  %525 = vmatpush1.bf16.msra.mxu0 %v438
  %526 = vmatprep.subr.bf16.mxu0 0
  %527 = vmatpush1.bf16.msra.mxu0 %v441
  %528 = vmatprep.subr.bf16.mxu0 0
  %529 = vmatpush1.bf16.msra.mxu0 %v444
  %530 = vmatprep.subr.bf16.mxu0 0
  %531 = vmatpush1.bf16.msra.mxu0 %v447
  %532 = vmatprep.subr.bf16.mxu0 0
  %533 = vmatpush1.bf16.msra.mxu0 %v450
  %534 = vmatprep.subr.bf16.mxu0 0
  %535 = vmatpush1.bf16.msra.mxu0 %v453
  %536 = vmatprep.subr.bf16.mxu0 0
  %537 = vmatpush1.bf16.msra.mxu0 %v456
  %538 = vmatprep.subr.bf16.mxu0 0
  %539 = vmatpush1.bf16.msra.mxu0 0
  %540 = vmatprep.subr.bf16.mxu0 0
  %541 = vmatpush1.bf16.msra.mxu0 0
  %542 = vmatprep.subr.bf16.mxu0 0
  %543 = vmatpush1.bf16.msra.mxu0 0
  %544 = vmatprep.subr.bf16.mxu0 0
  %545 = vmatpush1.bf16.msra.mxu0 0
  %546 = vmatprep.subr.bf16.mxu0 0
  %547 = vmatpush1.bf16.msra.mxu0 0
  %548 = vmatprep.subr.bf16.mxu0 0
  %549 = vmatpush1.bf16.msra.mxu0 0
  %550 = vmatprep.subr.bf16.mxu0 0
  %551 = vmatpush1.bf16.msra.mxu0 0
  %552 = vmatprep.subr.bf16.mxu0 0
  %553 = vmatpush1.bf16.msra.mxu0 0
  %554 = vmatprep.mubr.bf16.mxu0 0
  %555 = vmatmul.mubr.bf16.gmra.mrb[0].mxu0 0
  %v556 = vpop.f32.mrb[0].mxu0
  %v557 = vadd.f32 %v349, %v556
  %v558 = vpop.f32.mrb[0].mxu0
  %v559 = vpop.f32.mrb[0].mxu0
  %v560 = vpop.f32.mrb[0].mxu0
  %561 = vdwg.mxu0
  %v562 = vld [vmem:[#allocation2] sm:$0x3]
  %v563 = vld [vmem:[#allocation2 + $0x8] sm:$0x3]
  %v564 = vld [vmem:[#allocation2 + $0x10] sm:$0x3]
  %v565 = vadd.f32 %v562, %v516
  %v566 = vxor.u32 %v565, 2147483648
  %v567 = vmul.f32 %v566, 1.442695
  %v568 = vpow.pop %v567
  %v569 = vadd.f32 %v568, 1.0
  %v570 = vrcp.pop %v569
  %v571 = vmul.f32 1.0, %v570
  %v572 = vadd.f32 %v563, %v518
  %v573 = vxor.u32 %v572, 2147483648
  %v574 = vmul.f32 %v573, 1.442695
  %v575 = vpow.pop %v574
  %v576 = vadd.f32 %v575, 1.0
  %v577 = vrcp.pop %v576
  %v578 = vmul.f32 1.0, %v577
  %v579 = vmul.f32 %v571, %v557
  %v580 = vadd.f32 %v564, %v579
  %v581 = vtanh.pop %v580
  %v582 = vsub.f32 1.0, %v578
  %v583 = vmul.f32 %v582, %v581
  %v584 = vmul.f32 %v578, 0.0
  %v585 = vadd.f32 %v583, %v584
  %586 = vst [vmem:[#allocation3] sm:$0x3] %v585
  %v587 = vld [vmem:[%s5] sm:$0xff]
  %v588 = vld [vmem:[%s5 + $0x8] sm:$0xf]
  %v589 = vld [vmem:[%s5 + $0xc] sm:$0xff]
  %v590 = vld [vmem:[%s5 + $0x14] sm:$0xf]
  %v591 = vld [vmem:[%s5 + $0x18] sm:$0xff]
  %v592 = vld [vmem:[%s5 + $0x20] sm:$0xf]
  %v593 = vld [vmem:[%s5 + $0x24] sm:$0xff]
  %v594 = vld [vmem:[%s5 + $0x2c] sm:$0xf]
  %v595 = vld [vmem:[%s5 + $0x30] sm:$0xff]
  %v596 = vld [vmem:[%s5 + $0x38] sm:$0xf]
  %v597 = vld [vmem:[%s5 + $0x3c] sm:$0xff]
  %v598 = vld [vmem:[%s5 + $0x44] sm:$0xf]
  %v599 = vld [vmem:[%s5 + $0x48] sm:$0xff]
  %v600 = vld [vmem:[%s5 + $0x50] sm:$0xf]
  %v601 = vld [vmem:[%s5 + $0x54] sm:$0xff]
  %v602 = vld [vmem:[%s5 + $0x5c] sm:$0xf]
  %v603 = vld [vmem:[%s5 + $0x60] sm:$0xff]
  %v604 = vld [vmem:[%s5 + $0x68] sm:$0xf]
  %v605 = vld [vmem:[%s5 + $0x6c] sm:$0xff]
  %v606 = vld [vmem:[%s5 + $0x74] sm:$0xf]
  %v607 = vld [vmem:[%s5 + $0x78] sm:$0xff]
  %v608 = vld [vmem:[%s5 + $0x80] sm:$0xf]
  %v609 = vld [vmem:[%s5 + $0x84] sm:$0xff]
  %v610 = vld [vmem:[%s5 + $0x8c] sm:$0xf]
  %v611 = vld [vmem:[%s5 + $0x90] sm:$0xff]
  %v612 = vld [vmem:[%s5 + $0x98] sm:$0xf]
  %v613 = vld [vmem:[%s5 + $0x9c] sm:$0xff]
  %v614 = vld [vmem:[%s5 + $0xa4] sm:$0xf]
  %v615 = vld [vmem:[%s5 + $0xa8] sm:$0xff]
  %v616 = vld [vmem:[%s5 + $0xb0] sm:$0xf]
  %v617 = vld [vmem:[%s5 + $0xb4] sm:$0xff]
  %v618 = vld [vmem:[%s5 + $0xbc] sm:$0xf]
  %v619 = vpack.c.bf16 %v585, %v585
  %v620 = vld [vmem:[%s6] sm:$0x7]
  %v622 = vlaneseq
  %v623 = vshrl.u32 %v622, 7
  %v624 = vsub.s32 0, %v623
  %v625 = vrot.slane %v620, %v624
  %v626 = vlaneseq
  %v627 = vshrl.u32 %v626, 7
  %v628 = vsub.s32 1, %v627
  %v629 = vrot.slane %v620, %v628
  %v630 = vlaneseq
  %v631 = vshrl.u32 %v630, 7
  %v632 = vsub.s32 2, %v631
  %v633 = vrot.slane %v620, %v632
  %v669 = vunpack.c.l.b16 %v587
  %v670 = vunpack.c.h.b16 %v587
  %v671 = vunpack.c.l.b16 %v588
  %v672 = vunpack.c.l.b16 %v589
  %v673 = vunpack.c.h.b16 %v589
  %v674 = vunpack.c.l.b16 %v590
  %v675 = vunpack.c.l.b16 %v591
  %v676 = vunpack.c.h.b16 %v591
  %v677 = vunpack.c.l.b16 %v592
  %v678 = vunpack.c.l.b16 %v593
  %v679 = vunpack.c.h.b16 %v593
  %v680 = vunpack.c.l.b16 %v594
  %v681 = vunpack.c.l.b16 %v595
  %v682 = vunpack.c.h.b16 %v595
  %v683 = vunpack.c.l.b16 %v596
  %v684 = vunpack.c.l.b16 %v597
  %v685 = vunpack.c.h.b16 %v597
  %v686 = vunpack.c.l.b16 %v598
  %v687 = vunpack.c.l.b16 %v599
  %v688 = vunpack.c.h.b16 %v599
  %v689 = vunpack.c.l.b16 %v600
  %v690 = vunpack.c.l.b16 %v601
  %v691 = vunpack.c.h.b16 %v601
  %v692 = vunpack.c.l.b16 %v602
  %v693 = vunpack.c.l.b16 %v603
  %v694 = vunpack.c.h.b16 %v603
  %v695 = vunpack.c.l.b16 %v604
  %v696 = vunpack.c.l.b16 %v605
  %v697 = vunpack.c.h.b16 %v605
  %v698 = vunpack.c.l.b16 %v606
  %v699 = vunpack.c.l.b16 %v607
  %v700 = vunpack.c.h.b16 %v607
  %v701 = vunpack.c.l.b16 %v608
  %v702 = vunpack.c.l.b16 %v609
  %v703 = vunpack.c.h.b16 %v609
  %v704 = vunpack.c.l.b16 %v610
  %v705 = vunpack.c.l.b16 %v611
  %v706 = vunpack.c.h.b16 %v611
  %v707 = vunpack.c.l.b16 %v612
  %v708 = vunpack.c.l.b16 %v613
  %v709 = vunpack.c.h.b16 %v613
  %v710 = vunpack.c.l.b16 %v614
  %v711 = vunpack.c.l.b16 %v615
  %v712 = vunpack.c.h.b16 %v615
  %v713 = vunpack.c.l.b16 %v616
  %v714 = vunpack.c.l.b16 %v617
  %v715 = vunpack.c.h.b16 %v617
  %v716 = vunpack.c.l.b16 %v618
  %v717 = vpack.c.b16 %v672, %v669
  %v718 = vpack.c.b16 %v673, %v670
  %v719 = vpack.c.b16 %v674, %v671
  %v720 = vpack.c.b16 %v678, %v675
  %v721 = vpack.c.b16 %v679, %v676
  %v722 = vpack.c.b16 %v680, %v677
  %v723 = vpack.c.b16 %v684, %v681
  %v724 = vpack.c.b16 %v685, %v682
  %v725 = vpack.c.b16 %v686, %v683
  %v726 = vpack.c.b16 %v690, %v687
  %v727 = vpack.c.b16 %v691, %v688
  %v728 = vpack.c.b16 %v692, %v689
  %v729 = vpack.c.b16 %v696, %v693
  %v730 = vpack.c.b16 %v697, %v694
  %v731 = vpack.c.b16 %v698, %v695
  %v732 = vpack.c.b16 %v702, %v699
  %v733 = vpack.c.b16 %v703, %v700
  %v734 = vpack.c.b16 %v704, %v701
  %v735 = vpack.c.b16 %v708, %v705
  %v736 = vpack.c.b16 %v709, %v706
  %v737 = vpack.c.b16 %v710, %v707
  %v738 = vpack.c.b16 %v714, %v711
  %v739 = vpack.c.b16 %v715, %v712
  %v740 = vpack.c.b16 %v716, %v713
  %765 = vmatprep.subr.bf16.mxu0 %v718
  %766 = vmatpush1.bf16.msra.mxu0 %v717
  %767 = vmatprep.subr.bf16.mxu0 %v721
  %768 = vmatpush1.bf16.msra.mxu0 %v720
  %769 = vmatprep.subr.bf16.mxu0 %v724
  %770 = vmatpush1.bf16.msra.mxu0 %v723
  %771 = vmatprep.subr.bf16.mxu0 %v727
  %772 = vmatpush1.bf16.msra.mxu0 %v726
  %773 = vmatprep.subr.bf16.mxu0 %v730
  %774 = vmatpush1.bf16.msra.mxu0 %v729
  %775 = vmatprep.subr.bf16.mxu0 %v733
  %776 = vmatpush1.bf16.msra.mxu0 %v732
  %777 = vmatprep.subr.bf16.mxu0 %v736
  %778 = vmatpush1.bf16.msra.mxu0 %v735
  %779 = vmatprep.subr.bf16.mxu0 %v739
  %780 = vmatpush1.bf16.msra.mxu0 %v738
  %781 = vmatprep.subr.bf16.mxu0 0
  %782 = vmatpush1.bf16.msra.mxu0 0
  %783 = vmatprep.subr.bf16.mxu0 0
  %784 = vmatpush1.bf16.msra.mxu0 0
  %785 = vmatprep.subr.bf16.mxu0 0
  %786 = vmatpush1.bf16.msra.mxu0 0
  %787 = vmatprep.subr.bf16.mxu0 0
  %788 = vmatpush1.bf16.msra.mxu0 0
  %789 = vmatprep.subr.bf16.mxu0 0
  %790 = vmatpush1.bf16.msra.mxu0 0
  %791 = vmatprep.subr.bf16.mxu0 0
  %792 = vmatpush1.bf16.msra.mxu0 0
  %793 = vmatprep.subr.bf16.mxu0 0
  %794 = vmatpush1.bf16.msra.mxu0 0
  %795 = vmatprep.subr.bf16.mxu0 0
  %796 = vmatpush1.bf16.msra.mxu0 0
  %797 = vmatprep.mubr.bf16.mxu0 0
  %798 = vmatmul.mubr.bf16.gmra.mrb[0].mxu0 %v619
  %v799 = vpop.f32.mrb[0].mxu0
  %v800 = vadd.f32 %v625, %v799
  %v801 = vpop.f32.mrb[0].mxu0
  %v802 = vadd.f32 %v629, %v801
  %v803 = vpop.f32.mrb[0].mxu0
  %v804 = vpop.f32.mrb[0].mxu0
  %805 = vdwg.mxu0
  %806 = vmatprep.subr.bf16.mxu0 0
  %807 = vmatpush1.bf16.msra.mxu0 %v719
  %808 = vmatprep.subr.bf16.mxu0 0
  %809 = vmatpush1.bf16.msra.mxu0 %v722
  %810 = vmatprep.subr.bf16.mxu0 0
  %811 = vmatpush1.bf16.msra.mxu0 %v725
  %812 = vmatprep.subr.bf16.mxu0 0
  %813 = vmatpush1.bf16.msra.mxu0 %v728
  %814 = vmatprep.subr.bf16.mxu0 0
  %815 = vmatpush1.bf16.msra.mxu0 %v731
  %816 = vmatprep.subr.bf16.mxu0 0
  %817 = vmatpush1.bf16.msra.mxu0 %v734
  %818 = vmatprep.subr.bf16.mxu0 0
  %819 = vmatpush1.bf16.msra.mxu0 %v737
  %820 = vmatprep.subr.bf16.mxu0 0
  %821 = vmatpush1.bf16.msra.mxu0 %v740
  %822 = vmatprep.subr.bf16.mxu0 0
  %823 = vmatpush1.bf16.msra.mxu0 0
  %824 = vmatprep.subr.bf16.mxu0 0
  %825 = vmatpush1.bf16.msra.mxu0 0
  %826 = vmatprep.subr.bf16.mxu0 0
  %827 = vmatpush1.bf16.msra.mxu0 0
  %828 = vmatprep.subr.bf16.mxu0 0
  %829 = vmatpush1.bf16.msra.mxu0 0
  %830 = vmatprep.subr.bf16.mxu0 0
  %831 = vmatpush1.bf16.msra.mxu0 0
  %832 = vmatprep.subr.bf16.mxu0 0
  %833 = vmatpush1.bf16.msra.mxu0 0
  %834 = vmatprep.subr.bf16.mxu0 0
  %835 = vmatpush1.bf16.msra.mxu0 0
  %836 = vmatprep.subr.bf16.mxu0 0
  %837 = vmatpush1.bf16.msra.mxu0 0
  %838 = vmatprep.mubr.bf16.mxu0 0
  %839 = vmatmul.mubr.bf16.gmra.mrb[0].mxu0 %v619
  %v840 = vpop.f32.mrb[0].mxu0
  %v841 = vadd.f32 %v633, %v840
  %v842 = vpop.f32.mrb[0].mxu0
  %v843 = vpop.f32.mrb[0].mxu0
  %v844 = vpop.f32.mrb[0].mxu0
  %845 = vdwg.mxu0
  %v846 = vld [vmem:[#allocation2] sm:$0xc]
  %v847 = vld [vmem:[#allocation2 + $0x8] sm:$0xc]
  %v848 = vld [vmem:[#allocation2 + $0x10] sm:$0xc]
  %v850 = vrot.slane %v800, 6
  %v852 = vadd.f32 %v846, %v850
  %v853 = vxor.u32 %v852, 2147483648
  %v854 = vmul.f32 %v853, 1.442695
  %v855 = vpow.pop %v854
  %v856 = vadd.f32 %v855, 1.0
  %v857 = vrcp.pop %v856
  %v858 = vmul.f32 1.0, %v857
  %v860 = vrot.slane %v802, 6
  %v862 = vadd.f32 %v847, %v860
  %v863 = vxor.u32 %v862, 2147483648
  %v864 = vmul.f32 %v863, 1.442695
  %v865 = vpow.pop %v864
  %v866 = vadd.f32 %v865, 1.0
  %v867 = vrcp.pop %v866
  %v868 = vmul.f32 1.0, %v867
  %v870 = vrot.slane %v841, 6
  %v872 = vmul.f32 %v858, %v870
  %v873 = vadd.f32 %v848, %v872
  %v874 = vtanh.pop %v873
  %v875 = vsub.f32 1.0, %v868
  %v876 = vmul.f32 %v875, %v874
  %v878 = vrot.slane %v585, 6
  %v880 = vmul.f32 %v868, %v878
  %v881 = vadd.f32 %v876, %v880
  %882 = vst [vmem:[#allocation3] sm:$0xc] %v881
  %v883 = vld [vmem:[%s5] sm:$0xff]
  %v884 = vld [vmem:[%s5 + $0x8] sm:$0xf]
  %v885 = vld [vmem:[%s5 + $0xc] sm:$0xff]
  %v886 = vld [vmem:[%s5 + $0x14] sm:$0xf]
  %v887 = vld [vmem:[%s5 + $0x18] sm:$0xff]
  %v888 = vld [vmem:[%s5 + $0x20] sm:$0xf]
  %v889 = vld [vmem:[%s5 + $0x24] sm:$0xff]
  %v890 = vld [vmem:[%s5 + $0x2c] sm:$0xf]
  %v891 = vld [vmem:[%s5 + $0x30] sm:$0xff]
  %v892 = vld [vmem:[%s5 + $0x38] sm:$0xf]
  %v893 = vld [vmem:[%s5 + $0x3c] sm:$0xff]
  %v894 = vld [vmem:[%s5 + $0x44] sm:$0xf]
  %v895 = vld [vmem:[%s5 + $0x48] sm:$0xff]
  %v896 = vld [vmem:[%s5 + $0x50] sm:$0xf]
  %v897 = vld [vmem:[%s5 + $0x54] sm:$0xff]
  %v898 = vld [vmem:[%s5 + $0x5c] sm:$0xf]
  %v899 = vld [vmem:[%s5 + $0x60] sm:$0xff]
  %v900 = vld [vmem:[%s5 + $0x68] sm:$0xf]
  %v901 = vld [vmem:[%s5 + $0x6c] sm:$0xff]
  %v902 = vld [vmem:[%s5 + $0x74] sm:$0xf]
  %v903 = vld [vmem:[%s5 + $0x78] sm:$0xff]
  %v904 = vld [vmem:[%s5 + $0x80] sm:$0xf]
  %v905 = vld [vmem:[%s5 + $0x84] sm:$0xff]
  %v906 = vld [vmem:[%s5 + $0x8c] sm:$0xf]
  %v907 = vld [vmem:[%s5 + $0x90] sm:$0xff]
  %v908 = vld [vmem:[%s5 + $0x98] sm:$0xf]
  %v909 = vld [vmem:[%s5 + $0x9c] sm:$0xff]
  %v910 = vld [vmem:[%s5 + $0xa4] sm:$0xf]
  %v911 = vld [vmem:[%s5 + $0xa8] sm:$0xff]
  %v912 = vld [vmem:[%s5 + $0xb0] sm:$0xf]
  %v913 = vld [vmem:[%s5 + $0xb4] sm:$0xff]
  %v914 = vld [vmem:[%s5 + $0xbc] sm:$0xf]
  %v915 = vpack.c.bf16 %v881, %v881
  %v916 = vld [vmem:[%s6] sm:$0x7]
  %v918 = vlaneseq
  %v919 = vshrl.u32 %v918, 7
  %v920 = vsub.s32 0, %v919
  %v921 = vrot.slane %v916, %v920
  %v922 = vlaneseq
  %v923 = vshrl.u32 %v922, 7
  %v924 = vsub.s32 1, %v923
  %v925 = vrot.slane %v916, %v924
  %v926 = vlaneseq
  %v927 = vshrl.u32 %v926, 7
  %v928 = vsub.s32 2, %v927
  %v929 = vrot.slane %v916, %v928
  %v934 = vrot.slane %v915, 1
  %v968 = vunpack.c.l.b16 %v883
  %v969 = vunpack.c.h.b16 %v883
  %v970 = vunpack.c.l.b16 %v884
  %v971 = vunpack.c.l.b16 %v885
  %v972 = vunpack.c.h.b16 %v885
  %v973 = vunpack.c.l.b16 %v886
  %v974 = vunpack.c.l.b16 %v887
  %v975 = vunpack.c.h.b16 %v887
  %v976 = vunpack.c.l.b16 %v888
  %v977 = vunpack.c.l.b16 %v889
  %v978 = vunpack.c.h.b16 %v889
  %v979 = vunpack.c.l.b16 %v890
  %v980 = vunpack.c.l.b16 %v891
  %v981 = vunpack.c.h.b16 %v891
  %v982 = vunpack.c.l.b16 %v892
  %v983 = vunpack.c.l.b16 %v893
  %v984 = vunpack.c.h.b16 %v893
  %v985 = vunpack.c.l.b16 %v894
  %v986 = vunpack.c.l.b16 %v895
  %v987 = vunpack.c.h.b16 %v895
  %v988 = vunpack.c.l.b16 %v896
  %v989 = vunpack.c.l.b16 %v897
  %v990 = vunpack.c.h.b16 %v897
  %v991 = vunpack.c.l.b16 %v898
  %v992 = vunpack.c.l.b16 %v899
  %v993 = vunpack.c.h.b16 %v899
  %v994 = vunpack.c.l.b16 %v900
  %v995 = vunpack.c.l.b16 %v901
  %v996 = vunpack.c.h.b16 %v901
  %v997 = vunpack.c.l.b16 %v902
  %v998 = vunpack.c.l.b16 %v903
  %v999 = vunpack.c.h.b16 %v903
  %v1000 = vunpack.c.l.b16 %v904
  %v1001 = vunpack.c.l.b16 %v905
  %v1002 = vunpack.c.h.b16 %v905
  %v1003 = vunpack.c.l.b16 %v906
  %v1004 = vunpack.c.l.b16 %v907
  %v1005 = vunpack.c.h.b16 %v907
  %v1006 = vunpack.c.l.b16 %v908
  %v1007 = vunpack.c.l.b16 %v909
  %v1008 = vunpack.c.h.b16 %v909
  %v1009 = vunpack.c.l.b16 %v910
  %v1010 = vunpack.c.l.b16 %v911
  %v1011 = vunpack.c.h.b16 %v911
  %v1012 = vunpack.c.l.b16 %v912
  %v1013 = vunpack.c.l.b16 %v913
  %v1014 = vunpack.c.h.b16 %v913
  %v1015 = vunpack.c.l.b16 %v914
  %v1016 = vpack.c.b16 %v971, %v968
  %v1017 = vpack.c.b16 %v972, %v969
  %v1018 = vpack.c.b16 %v973, %v970
  %v1019 = vpack.c.b16 %v977, %v974
  %v1020 = vpack.c.b16 %v978, %v975
  %v1021 = vpack.c.b16 %v979, %v976
  %v1022 = vpack.c.b16 %v983, %v980
  %v1023 = vpack.c.b16 %v984, %v981
  %v1024 = vpack.c.b16 %v985, %v982
  %v1025 = vpack.c.b16 %v989, %v986
  %v1026 = vpack.c.b16 %v990, %v987
  %v1027 = vpack.c.b16 %v991, %v988
  %v1028 = vpack.c.b16 %v995, %v992
  %v1029 = vpack.c.b16 %v996, %v993
  %v1030 = vpack.c.b16 %v997, %v994
  %v1031 = vpack.c.b16 %v1001, %v998
  %v1032 = vpack.c.b16 %v1002, %v999
  %v1033 = vpack.c.b16 %v1003, %v1000
  %v1034 = vpack.c.b16 %v1007, %v1004
  %v1035 = vpack.c.b16 %v1008, %v1005
  %v1036 = vpack.c.b16 %v1009, %v1006
  %v1037 = vpack.c.b16 %v1013, %v1010
  %v1038 = vpack.c.b16 %v1014, %v1011
  %v1039 = vpack.c.b16 %v1015, %v1012
  %1064 = vmatprep.subr.bf16.mxu0 %v1017
  %1065 = vmatpush1.bf16.msra.mxu0 %v1016
  %1066 = vmatprep.subr.bf16.mxu0 %v1020
  %1067 = vmatpush1.bf16.msra.mxu0 %v1019
  %1068 = vmatprep.subr.bf16.mxu0 %v1023
  %1069 = vmatpush1.bf16.msra.mxu0 %v1022
  %1070 = vmatprep.subr.bf16.mxu0 %v1026
  %1071 = vmatpush1.bf16.msra.mxu0 %v1025
  %1072 = vmatprep.subr.bf16.mxu0 %v1029
  %1073 = vmatpush1.bf16.msra.mxu0 %v1028
  %1074 = vmatprep.subr.bf16.mxu0 %v1032
  %1075 = vmatpush1.bf16.msra.mxu0 %v1031
  %1076 = vmatprep.subr.bf16.mxu0 %v1035
  %1077 = vmatpush1.bf16.msra.mxu0 %v1034
  %1078 = vmatprep.subr.bf16.mxu0 %v1038
  %1079 = vmatpush1.bf16.msra.mxu0 %v1037
  %1080 = vmatprep.subr.bf16.mxu0 0
  %1081 = vmatpush1.bf16.msra.mxu0 0
  %1082 = vmatprep.subr.bf16.mxu0 0
  %1083 = vmatpush1.bf16.msra.mxu0 0
  %1084 = vmatprep.subr.bf16.mxu0 0
  %1085 = vmatpush1.bf16.msra.mxu0 0
  %1086 = vmatprep.subr.bf16.mxu0 0
  %1087 = vmatpush1.bf16.msra.mxu0 0
  %1088 = vmatprep.subr.bf16.mxu0 0
  %1089 = vmatpush1.bf16.msra.mxu0 0
  %1090 = vmatprep.subr.bf16.mxu0 0
  %1091 = vmatpush1.bf16.msra.mxu0 0
  %1092 = vmatprep.subr.bf16.mxu0 0
  %1093 = vmatpush1.bf16.msra.mxu0 0
  %1094 = vmatprep.subr.bf16.mxu0 0
  %1095 = vmatpush1.bf16.msra.mxu0 0
  %1096 = vmatprep.mubr.bf16.mxu0 0
  %1097 = vmatmul.mubr.bf16.gmra.mrb[0].mxu0 %v934
  %v1098 = vpop.f32.mrb[0].mxu0
  %v1099 = vadd.f32 %v921, %v1098
  %v1100 = vpop.f32.mrb[0].mxu0
  %v1101 = vadd.f32 %v925, %v1100
  %v1102 = vpop.f32.mrb[0].mxu0
  %v1103 = vpop.f32.mrb[0].mxu0
  %1104 = vdwg.mxu0
  %1105 = vmatprep.subr.bf16.mxu0 0
  %1106 = vmatpush1.bf16.msra.mxu0 %v1018
  %1107 = vmatprep.subr.bf16.mxu0 0
  %1108 = vmatpush1.bf16.msra.mxu0 %v1021
  %1109 = vmatprep.subr.bf16.mxu0 0
  %1110 = vmatpush1.bf16.msra.mxu0 %v1024
  %1111 = vmatprep.subr.bf16.mxu0 0
  %1112 = vmatpush1.bf16.msra.mxu0 %v1027
  %1113 = vmatprep.subr.bf16.mxu0 0
  %1114 = vmatpush1.bf16.msra.mxu0 %v1030
  %1115 = vmatprep.subr.bf16.mxu0 0
  %1116 = vmatpush1.bf16.msra.mxu0 %v1033
  %1117 = vmatprep.subr.bf16.mxu0 0
  %1118 = vmatpush1.bf16.msra.mxu0 %v1036
  %1119 = vmatprep.subr.bf16.mxu0 0
  %1120 = vmatpush1.bf16.msra.mxu0 %v1039
  %1121 = vmatprep.subr.bf16.mxu0 0
  %1122 = vmatpush1.bf16.msra.mxu0 0
  %1123 = vmatprep.subr.bf16.mxu0 0
  %1124 = vmatpush1.bf16.msra.mxu0 0
  %1125 = vmatprep.subr.bf16.mxu0 0
  %1126 = vmatpush1.bf16.msra.mxu0 0
  %1127 = vmatprep.subr.bf16.mxu0 0
  %1128 = vmatpush1.bf16.msra.mxu0 0
  %1129 = vmatprep.subr.bf16.mxu0 0
  %1130 = vmatpush1.bf16.msra.mxu0 0
  %1131 = vmatprep.subr.bf16.mxu0 0
  %1132 = vmatpush1.bf16.msra.mxu0 0
  %1133 = vmatprep.subr.bf16.mxu0 0
  %1134 = vmatpush1.bf16.msra.mxu0 0
  %1135 = vmatprep.subr.bf16.mxu0 0
  %1136 = vmatpush1.bf16.msra.mxu0 0
  %1137 = vmatprep.mubr.bf16.mxu0 0
  %1138 = vmatmul.mubr.bf16.gmra.mrb[0].mxu0 %v934
  %v1139 = vpop.f32.mrb[0].mxu0
  %v1140 = vadd.f32 %v929, %v1139
  %v1141 = vpop.f32.mrb[0].mxu0
  %v1142 = vpop.f32.mrb[0].mxu0
  %v1143 = vpop.f32.mrb[0].mxu0
  %1144 = vdwg.mxu0
  %v1145 = vld [vmem:[#allocation2] sm:$0x30]
  %v1146 = vld [vmem:[#allocation2 + $0x8] sm:$0x30]
  %v1147 = vld [vmem:[#allocation2 + $0x10] sm:$0x30]
  %v1149 = vrot.slane %v1099, 4
  %v1151 = vadd.f32 %v1145, %v1149
  %v1152 = vxor.u32 %v1151, 2147483648
  %v1153 = vmul.f32 %v1152, 1.442695
  %v1154 = vpow.pop %v1153
  %v1155 = vadd.f32 %v1154, 1.0
  %v1156 = vrcp.pop %v1155
  %v1157 = vmul.f32 1.0, %v1156
  %v1159 = vrot.slane %v1101, 4
  %v1161 = vadd.f32 %v1146, %v1159
  %v1162 = vxor.u32 %v1161, 2147483648
  %v1163 = vmul.f32 %v1162, 1.442695
  %v1164 = vpow.pop %v1163
  %v1165 = vadd.f32 %v1164, 1.0
  %v1166 = vrcp.pop %v1165
  %v1167 = vmul.f32 1.0, %v1166
  %v1169 = vrot.slane %v1140, 4
  %v1171 = vmul.f32 %v1157, %v1169
  %v1172 = vadd.f32 %v1147, %v1171
  %v1173 = vtanh.pop %v1172
  %v1174 = vsub.f32 1.0, %v1167
  %v1175 = vmul.f32 %v1174, %v1173
  %v1177 = vrot.slane %v881, 6
  %v1179 = vmul.f32 %v1167, %v1177
  %v1180 = vadd.f32 %v1175, %v1179
  %1181 = vst [vmem:[#allocation3] sm:$0x30] %v1180
  %v1182 = vld [vmem:[%s5] sm:$0xff]
  %v1183 = vld [vmem:[%s5 + $0x8] sm:$0xf]
  %v1184 = vld [vmem:[%s5 + $0xc] sm:$0xff]
  %v1185 = vld [vmem:[%s5 + $0x14] sm:$0xf]
  %v1186 = vld [vmem:[%s5 + $0x18] sm:$0xff]
  %v1187 = vld [vmem:[%s5 + $0x20] sm:$0xf]
  %v1188 = vld [vmem:[%s5 + $0x24] sm:$0xff]
  %v1189 = vld [vmem:[%s5 + $0x2c] sm:$0xf]
  %v1190 = vld [vmem:[%s5 + $0x30] sm:$0xff]
  %v1191 = vld [vmem:[%s5 + $0x38] sm:$0xf]
  %v1192 = vld [vmem:[%s5 + $0x3c] sm:$0xff]
  %v1193 = vld [vmem:[%s5 + $0x44] sm:$0xf]
  %v1194 = vld [vmem:[%s5 + $0x48] sm:$0xff]
  %v1195 = vld [vmem:[%s5 + $0x50] sm:$0xf]
  %v1196 = vld [vmem:[%s5 + $0x54] sm:$0xff]
  %v1197 = vld [vmem:[%s5 + $0x5c] sm:$0xf]
  %v1198 = vld [vmem:[%s5 + $0x60] sm:$0xff]
  %v1199 = vld [vmem:[%s5 + $0x68] sm:$0xf]
  %v1200 = vld [vmem:[%s5 + $0x6c] sm:$0xff]
  %v1201 = vld [vmem:[%s5 + $0x74] sm:$0xf]
  %v1202 = vld [vmem:[%s5 + $0x78] sm:$0xff]
  %v1203 = vld [vmem:[%s5 + $0x80] sm:$0xf]
  %v1204 = vld [vmem:[%s5 + $0x84] sm:$0xff]
  %v1205 = vld [vmem:[%s5 + $0x8c] sm:$0xf]
  %v1206 = vld [vmem:[%s5 + $0x90] sm:$0xff]
  %v1207 = vld [vmem:[%s5 + $0x98] sm:$0xf]
  %v1208 = vld [vmem:[%s5 + $0x9c] sm:$0xff]
  %v1209 = vld [vmem:[%s5 + $0xa4] sm:$0xf]
  %v1210 = vld [vmem:[%s5 + $0xa8] sm:$0xff]
  %v1211 = vld [vmem:[%s5 + $0xb0] sm:$0xf]
  %v1212 = vld [vmem:[%s5 + $0xb4] sm:$0xff]
  %v1213 = vld [vmem:[%s5 + $0xbc] sm:$0xf]
  %v1214 = vpack.c.bf16 %v1180, %v1180
  %v1215 = vld [vmem:[%s6] sm:$0x7]
  %v1217 = vlaneseq
  %v1218 = vshrl.u32 %v1217, 7
  %v1219 = vsub.s32 0, %v1218
  %v1220 = vrot.slane %v1215, %v1219
  %v1221 = vlaneseq
  %v1222 = vshrl.u32 %v1221, 7
  %v1223 = vsub.s32 1, %v1222
  %v1224 = vrot.slane %v1215, %v1223
  %v1225 = vlaneseq
  %v1226 = vshrl.u32 %v1225, 7
  %v1227 = vsub.s32 2, %v1226
  %v1228 = vrot.slane %v1215, %v1227
  %v1233 = vrot.slane %v1214, 2
  %v1267 = vunpack.c.l.b16 %v1182
  %v1268 = vunpack.c.h.b16 %v1182
  %v1269 = vunpack.c.l.b16 %v1183
  %v1270 = vunpack.c.l.b16 %v1184
  %v1271 = vunpack.c.h.b16 %v1184
  %v1272 = vunpack.c.l.b16 %v1185
  %v1273 = vunpack.c.l.b16 %v1186
  %v1274 = vunpack.c.h.b16 %v1186
  %v1275 = vunpack.c.l.b16 %v1187
  %v1276 = vunpack.c.l.b16 %v1188
  %v1277 = vunpack.c.h.b16 %v1188
  %v1278 = vunpack.c.l.b16 %v1189
  %v1279 = vunpack.c.l.b16 %v1190
  %v1280 = vunpack.c.h.b16 %v1190
  %v1281 = vunpack.c.l.b16 %v1191
  %v1282 = vunpack.c.l.b16 %v1192
  %v1283 = vunpack.c.h.b16 %v1192
  %v1284 = vunpack.c.l.b16 %v1193
  %v1285 = vunpack.c.l.b16 %v1194
  %v1286 = vunpack.c.h.b16 %v1194
  %v1287 = vunpack.c.l.b16 %v1195
  %v1288 = vunpack.c.l.b16 %v1196
  %v1289 = vunpack.c.h.b16 %v1196
  %v1290 = vunpack.c.l.b16 %v1197
  %v1291 = vunpack.c.l.b16 %v1198
  %v1292 = vunpack.c.h.b16 %v1198
  %v1293 = vunpack.c.l.b16 %v1199
  %v1294 = vunpack.c.l.b16 %v1200
  %v1295 = vunpack.c.h.b16 %v1200
  %v1296 = vunpack.c.l.b16 %v1201
  %v1297 = vunpack.c.l.b16 %v1202
  %v1298 = vunpack.c.h.b16 %v1202
  %v1299 = vunpack.c.l.b16 %v1203
  %v1300 = vunpack.c.l.b16 %v1204
  %v1301 = vunpack.c.h.b16 %v1204
  %v1302 = vunpack.c.l.b16 %v1205
  %v1303 = vunpack.c.l.b16 %v1206
  %v1304 = vunpack.c.h.b16 %v1206
  %v1305 = vunpack.c.l.b16 %v1207
  %v1306 = vunpack.c.l.b16 %v1208
  %v1307 = vunpack.c.h.b16 %v1208
  %v1308 = vunpack.c.l.b16 %v1209
  %v1309 = vunpack.c.l.b16 %v1210
  %v1310 = vunpack.c.h.b16 %v1210
  %v1311 = vunpack.c.l.b16 %v1211
  %v1312 = vunpack.c.l.b16 %v1212
  %v1313 = vunpack.c.h.b16 %v1212
  %v1314 = vunpack.c.l.b16 %v1213
  %v1315 = vpack.c.b16 %v1270, %v1267
  %v1316 = vpack.c.b16 %v1271, %v1268
  %v1317 = vpack.c.b16 %v1272, %v1269
  %v1318 = vpack.c.b16 %v1276, %v1273
  %v1319 = vpack.c.b16 %v1277, %v1274
  %v1320 = vpack.c.b16 %v1278, %v1275
  %v1321 = vpack.c.b16 %v1282, %v1279
  %v1322 = vpack.c.b16 %v1283, %v1280
  %v1323 = vpack.c.b16 %v1284, %v1281
  %v1324 = vpack.c.b16 %v1288, %v1285
  %v1325 = vpack.c.b16 %v1289, %v1286
  %v1326 = vpack.c.b16 %v1290, %v1287
  %v1327 = vpack.c.b16 %v1294, %v1291
  %v1328 = vpack.c.b16 %v1295, %v1292
  %v1329 = vpack.c.b16 %v1296, %v1293
  %v1330 = vpack.c.b16 %v1300, %v1297
  %v1331 = vpack.c.b16 %v1301, %v1298
  %v1332 = vpack.c.b16 %v1302, %v1299
  %v1333 = vpack.c.b16 %v1306, %v1303
  %v1334 = vpack.c.b16 %v1307, %v1304
  %v1335 = vpack.c.b16 %v1308, %v1305
  %v1336 = vpack.c.b16 %v1312, %v1309
  %v1337 = vpack.c.b16 %v1313, %v1310
  %v1338 = vpack.c.b16 %v1314, %v1311
  %1363 = vmatprep.subr.bf16.mxu0 %v1316
  %1364 = vmatpush1.bf16.msra.mxu0 %v1315
  %1365 = vmatprep.subr.bf16.mxu0 %v1319
  %1366 = vmatpush1.bf16.msra.mxu0 %v1318
  %1367 = vmatprep.subr.bf16.mxu0 %v1322
  %1368 = vmatpush1.bf16.msra.mxu0 %v1321
  %1369 = vmatprep.subr.bf16.mxu0 %v1325
  %1370 = vmatpush1.bf16.msra.mxu0 %v1324
  %1371 = vmatprep.subr.bf16.mxu0 %v1328
  %1372 = vmatpush1.bf16.msra.mxu0 %v1327
  %1373 = vmatprep.subr.bf16.mxu0 %v1331
  %1374 = vmatpush1.bf16.msra.mxu0 %v1330
  %1375 = vmatprep.subr.bf16.mxu0 %v1334
  %1376 = vmatpush1.bf16.msra.mxu0 %v1333
  %1377 = vmatprep.subr.bf16.mxu0 %v1337
  %1378 = vmatpush1.bf16.msra.mxu0 %v1336
  %1379 = vmatprep.subr.bf16.mxu0 0
  %1380 = vmatpush1.bf16.msra.mxu0 0
  %1381 = vmatprep.subr.bf16.mxu0 0
  %1382 = vmatpush1.bf16.msra.mxu0 0
  %1383 = vmatprep.subr.bf16.mxu0 0
  %1384 = vmatpush1.bf16.msra.mxu0 0
  %1385 = vmatprep.subr.bf16.mxu0 0
  %1386 = vmatpush1.bf16.msra.mxu0 0
  %1387 = vmatprep.subr.bf16.mxu0 0
  %1388 = vmatpush1.bf16.msra.mxu0 0
  %1389 = vmatprep.subr.bf16.mxu0 0
  %1390 = vmatpush1.bf16.msra.mxu0 0
  %1391 = vmatprep.subr.bf16.mxu0 0
  %1392 = vmatpush1.bf16.msra.mxu0 0
  %1393 = vmatprep.subr.bf16.mxu0 0
  %1394 = vmatpush1.bf16.msra.mxu0 0
  %1395 = vmatprep.mubr.bf16.mxu0 0
  %1396 = vmatmul.mubr.bf16.gmra.mrb[0].mxu0 %v1233
  %v1397 = vpop.f32.mrb[0].mxu0
  %v1398 = vadd.f32 %v1220, %v1397
  %v1399 = vpop.f32.mrb[0].mxu0
  %v1400 = vadd.f32 %v1224, %v1399
  %v1401 = vpop.f32.mrb[0].mxu0
  %v1402 = vpop.f32.mrb[0].mxu0
  %1403 = vdwg.mxu0
  %1404 = vmatprep.subr.bf16.mxu0 0
  %1405 = vmatpush1.bf16.msra.mxu0 %v1317
  %1406 = vmatprep.subr.bf16.mxu0 0
  %1407 = vmatpush1.bf16.msra.mxu0 %v1320
  %1408 = vmatprep.subr.bf16.mxu0 0
  %1409 = vmatpush1.bf16.msra.mxu0 %v1323
  %1410 = vmatprep.subr.bf16.mxu0 0
  %1411 = vmatpush1.bf16.msra.mxu0 %v1326
  %1412 = vmatprep.subr.bf16.mxu0 0
  %1413 = vmatpush1.bf16.msra.mxu0 %v1329
  %1414 = vmatprep.subr.bf16.mxu0 0
  %1415 = vmatpush1.bf16.msra.mxu0 %v1332
  %1416 = vmatprep.subr.bf16.mxu0 0
  %1417 = vmatpush1.bf16.msra.mxu0 %v1335
  %1418 = vmatprep.subr.bf16.mxu0 0
  %1419 = vmatpush1.bf16.msra.mxu0 %v1338
  %1420 = vmatprep.subr.bf16.mxu0 0
  %1421 = vmatpush1.bf16.msra.mxu0 0
  %1422 = vmatprep.subr.bf16.mxu0 0
  %1423 = vmatpush1.bf16.msra.mxu0 0
  %1424 = vmatprep.subr.bf16.mxu0 0
  %1425 = vmatpush1.bf16.msra.mxu0 0
  %1426 = vmatprep.subr.bf16.mxu0 0
  %1427 = vmatpush1.bf16.msra.mxu0 0
  %1428 = vmatprep.subr.bf16.mxu0 0
  %1429 = vmatpush1.bf16.msra.mxu0 0
  %1430 = vmatprep.subr.bf16.mxu0 0
  %1431 = vmatpush1.bf16.msra.mxu0 0
  %1432 = vmatprep.subr.bf16.mxu0 0
  %1433 = vmatpush1.bf16.msra.mxu0 0
  %1434 = vmatprep.subr.bf16.mxu0 0
  %1435 = vmatpush1.bf16.msra.mxu0 0
  %1436 = vmatprep.mubr.bf16.mxu0 0
  %1437 = vmatmul.mubr.bf16.gmra.mrb[0].mxu0 %v1233
  %v1438 = vpop.f32.mrb[0].mxu0
  %v1439 = vadd.f32 %v1228, %v1438
  %v1440 = vpop.f32.mrb[0].mxu0
  %v1441 = vpop.f32.mrb[0].mxu0
  %v1442 = vpop.f32.mrb[0].mxu0
  %1443 = vdwg.mxu0
  %v1444 = vld [vmem:[#allocation2] sm:$0xc0]
  %v1445 = vld [vmem:[#allocation2 + $0x8] sm:$0xc0]
  %v1446 = vld [vmem:[#allocation2 + $0x10] sm:$0xc0]
  %v1448 = vrot.slane %v1398, 2
  %v1450 = vadd.f32 %v1444, %v1448
  %v1451 = vxor.u32 %v1450, 2147483648
  %v1452 = vmul.f32 %v1451, 1.442695
  %v1453 = vpow.pop %v1452
  %v1454 = vadd.f32 %v1453, 1.0
  %v1455 = vrcp.pop %v1454
  %v1456 = vmul.f32 1.0, %v1455
  %v1458 = vrot.slane %v1400, 2
  %v1460 = vadd.f32 %v1445, %v1458
  %v1461 = vxor.u32 %v1460, 2147483648
  %v1462 = vmul.f32 %v1461, 1.442695
  %v1463 = vpow.pop %v1462
  %v1464 = vadd.f32 %v1463, 1.0
  %v1465 = vrcp.pop %v1464
  %v1466 = vmul.f32 1.0, %v1465
  %v1468 = vrot.slane %v1439, 2
  %v1470 = vmul.f32 %v1456, %v1468
  %v1471 = vadd.f32 %v1446, %v1470
  %v1472 = vtanh.pop %v1471
  %v1473 = vsub.f32 1.0, %v1466
  %v1474 = vmul.f32 %v1473, %v1472
  %v1476 = vrot.slane %v1180, 6
  %v1478 = vmul.f32 %v1466, %v1476
  %v1479 = vadd.f32 %v1474, %v1478
  %1480 = vst [vmem:[#allocation3] sm:$0xc0] %v1479
  %v1481 = vld [vmem:[%s5] sm:$0xff]
  %v1482 = vld [vmem:[%s5 + $0x8] sm:$0xf]
  %v1483 = vld [vmem:[%s5 + $0xc] sm:$0xff]
  %v1484 = vld [vmem:[%s5 + $0x14] sm:$0xf]
  %v1485 = vld [vmem:[%s5 + $0x18] sm:$0xff]
  %v1486 = vld [vmem:[%s5 + $0x20] sm:$0xf]
  %v1487 = vld [vmem:[%s5 + $0x24] sm:$0xff]
  %v1488 = vld [vmem:[%s5 + $0x2c] sm:$0xf]
  %v1489 = vld [vmem:[%s5 + $0x30] sm:$0xff]
  %v1490 = vld [vmem:[%s5 + $0x38] sm:$0xf]
  %v1491 = vld [vmem:[%s5 + $0x3c] sm:$0xff]
  %v1492 = vld [vmem:[%s5 + $0x44] sm:$0xf]
  %v1493 = vld [vmem:[%s5 + $0x48] sm:$0xff]
  %v1494 = vld [vmem:[%s5 + $0x50] sm:$0xf]
  %v1495 = vld [vmem:[%s5 + $0x54] sm:$0xff]
  %v1496 = vld [vmem:[%s5 + $0x5c] sm:$0xf]
  %v1497 = vld [vmem:[%s5 + $0x60] sm:$0xff]
  %v1498 = vld [vmem:[%s5 + $0x68] sm:$0xf]
  %v1499 = vld [vmem:[%s5 + $0x6c] sm:$0xff]
  %v1500 = vld [vmem:[%s5 + $0x74] sm:$0xf]
  %v1501 = vld [vmem:[%s5 + $0x78] sm:$0xff]
  %v1502 = vld [vmem:[%s5 + $0x80] sm:$0xf]
  %v1503 = vld [vmem:[%s5 + $0x84] sm:$0xff]
  %v1504 = vld [vmem:[%s5 + $0x8c] sm:$0xf]
  %v1505 = vld [vmem:[%s5 + $0x90] sm:$0xff]
  %v1506 = vld [vmem:[%s5 + $0x98] sm:$0xf]
  %v1507 = vld [vmem:[%s5 + $0x9c] sm:$0xff]
  %v1508 = vld [vmem:[%s5 + $0xa4] sm:$0xf]
  %v1509 = vld [vmem:[%s5 + $0xa8] sm:$0xff]
  %v1510 = vld [vmem:[%s5 + $0xb0] sm:$0xf]
  %v1511 = vld [vmem:[%s5 + $0xb4] sm:$0xff]
  %v1512 = vld [vmem:[%s5 + $0xbc] sm:$0xf]
  %v1513 = vpack.c.bf16 %v1479, %v1479
  %v1514 = vld [vmem:[%s6] sm:$0x7]
  %v1516 = vlaneseq
  %v1517 = vshrl.u32 %v1516, 7
  %v1518 = vsub.s32 0, %v1517
  %v1519 = vrot.slane %v1514, %v1518
  %v1520 = vlaneseq
  %v1521 = vshrl.u32 %v1520, 7
  %v1522 = vsub.s32 1, %v1521
  %v1523 = vrot.slane %v1514, %v1522
  %v1524 = vlaneseq
  %v1525 = vshrl.u32 %v1524, 7
  %v1526 = vsub.s32 2, %v1525
  %v1527 = vrot.slane %v1514, %v1526
  %v1532 = vrot.slane %v1513, 3
  %v1566 = vunpack.c.l.b16 %v1481
  %v1567 = vunpack.c.h.b16 %v1481
  %v1568 = vunpack.c.l.b16 %v1482
  %v1569 = vunpack.c.l.b16 %v1483
  %v1570 = vunpack.c.h.b16 %v1483
  %v1571 = vunpack.c.l.b16 %v1484
  %v1572 = vunpack.c.l.b16 %v1485
  %v1573 = vunpack.c.h.b16 %v1485
  %v1574 = vunpack.c.l.b16 %v1486
  %v1575 = vunpack.c.l.b16 %v1487
  %v1576 = vunpack.c.h.b16 %v1487
  %v1577 = vunpack.c.l.b16 %v1488
  %v1578 = vunpack.c.l.b16 %v1489
  %v1579 = vunpack.c.h.b16 %v1489
  %v1580 = vunpack.c.l.b16 %v1490
  %v1581 = vunpack.c.l.b16 %v1491
  %v1582 = vunpack.c.h.b16 %v1491
  %v1583 = vunpack.c.l.b16 %v1492
  %v1584 = vunpack.c.l.b16 %v1493
  %v1585 = vunpack.c.h.b16 %v1493
  %v1586 = vunpack.c.l.b16 %v1494
  %v1587 = vunpack.c.l.b16 %v1495
  %v1588 = vunpack.c.h.b16 %v1495
  %v1589 = vunpack.c.l.b16 %v1496
  %v1590 = vunpack.c.l.b16 %v1497
  %v1591 = vunpack.c.h.b16 %v1497
  %v1592 = vunpack.c.l.b16 %v1498
  %v1593 = vunpack.c.l.b16 %v1499
  %v1594 = vunpack.c.h.b16 %v1499
  %v1595 = vunpack.c.l.b16 %v1500
  %v1596 = vunpack.c.l.b16 %v1501
  %v1597 = vunpack.c.h.b16 %v1501
  %v1598 = vunpack.c.l.b16 %v1502
  %v1599 = vunpack.c.l.b16 %v1503
  %v1600 = vunpack.c.h.b16 %v1503
  %v1601 = vunpack.c.l.b16 %v1504
  %v1602 = vunpack.c.l.b16 %v1505
  %v1603 = vunpack.c.h.b16 %v1505
  %v1604 = vunpack.c.l.b16 %v1506
  %v1605 = vunpack.c.l.b16 %v1507
  %v1606 = vunpack.c.h.b16 %v1507
  %v1607 = vunpack.c.l.b16 %v1508
  %v1608 = vunpack.c.l.b16 %v1509
  %v1609 = vunpack.c.h.b16 %v1509
  %v1610 = vunpack.c.l.b16 %v1510
  %v1611 = vunpack.c.l.b16 %v1511
  %v1612 = vunpack.c.h.b16 %v1511
  %v1613 = vunpack.c.l.b16 %v1512
  %v1614 = vpack.c.b16 %v1569, %v1566
  %v1615 = vpack.c.b16 %v1570, %v1567
  %v1616 = vpack.c.b16 %v1571, %v1568
  %v1617 = vpack.c.b16 %v1575, %v1572
  %v1618 = vpack.c.b16 %v1576, %v1573
  %v1619 = vpack.c.b16 %v1577, %v1574
  %v1620 = vpack.c.b16 %v1581, %v1578
  %v1621 = vpack.c.b16 %v1582, %v1579
  %v1622 = vpack.c.b16 %v1583, %v1580
  %v1623 = vpack.c.b16 %v1587, %v1584
  %v1624 = vpack.c.b16 %v1588, %v1585
  %v1625 = vpack.c.b16 %v1589, %v1586
  %v1626 = vpack.c.b16 %v1593, %v1590
  %v1627 = vpack.c.b16 %v1594, %v1591
  %v1628 = vpack.c.b16 %v1595, %v1592
  %v1629 = vpack.c.b16 %v1599, %v1596
  %v1630 = vpack.c.b16 %v1600, %v1597
  %v1631 = vpack.c.b16 %v1601, %v1598
  %v1632 = vpack.c.b16 %v1605, %v1602
  %v1633 = vpack.c.b16 %v1606, %v1603
  %v1634 = vpack.c.b16 %v1607, %v1604
  %v1635 = vpack.c.b16 %v1611, %v1608
  %v1636 = vpack.c.b16 %v1612, %v1609
  %v1637 = vpack.c.b16 %v1613, %v1610
  %1662 = vmatprep.subr.bf16.mxu0 %v1615
  %1663 = vmatpush1.bf16.msra.mxu0 %v1614
  %1664 = vmatprep.subr.bf16.mxu0 %v1618
  %1665 = vmatpush1.bf16.msra.mxu0 %v1617
  %1666 = vmatprep.subr.bf16.mxu0 %v1621
  %1667 = vmatpush1.bf16.msra.mxu0 %v1620
  %1668 = vmatprep.subr.bf16.mxu0 %v1624
  %1669 = vmatpush1.bf16.msra.mxu0 %v1623
  %1670 = vmatprep.subr.bf16.mxu0 %v1627
  %1671 = vmatpush1.bf16.msra.mxu0 %v1626
  %1672 = vmatprep.subr.bf16.mxu0 %v1630
  %1673 = vmatpush1.bf16.msra.mxu0 %v1629
  %1674 = vmatprep.subr.bf16.mxu0 %v1633
  %1675 = vmatpush1.bf16.msra.mxu0 %v1632
  %1676 = vmatprep.subr.bf16.mxu0 %v1636
  %1677 = vmatpush1.bf16.msra.mxu0 %v1635
  %1678 = vmatprep.subr.bf16.mxu0 0
  %1679 = vmatpush1.bf16.msra.mxu0 0
  %1680 = vmatprep.subr.bf16.mxu0 0
  %1681 = vmatpush1.bf16.msra.mxu0 0
  %1682 = vmatprep.subr.bf16.mxu0 0
  %1683 = vmatpush1.bf16.msra.mxu0 0
  %1684 = vmatprep.subr.bf16.mxu0 0
  %1685 = vmatpush1.bf16.msra.mxu0 0
  %1686 = vmatprep.subr.bf16.mxu0 0
  %1687 = vmatpush1.bf16.msra.mxu0 0
  %1688 = vmatprep.subr.bf16.mxu0 0
  %1689 = vmatpush1.bf16.msra.mxu0 0
  %1690 = vmatprep.subr.bf16.mxu0 0
  %1691 = vmatpush1.bf16.msra.mxu0 0
  %1692 = vmatprep.subr.bf16.mxu0 0
  %1693 = vmatpush1.bf16.msra.mxu0 0
  %1694 = vmatprep.mubr.bf16.mxu0 0
  %1695 = vmatmul.mubr.bf16.gmra.mrb[0].mxu0 %v1532
  %v1696 = vpop.f32.mrb[0].mxu0
  %v1697 = vadd.f32 %v1519, %v1696
  %v1698 = vpop.f32.mrb[0].mxu0
  %v1699 = vadd.f32 %v1523, %v1698
  %v1700 = vpop.f32.mrb[0].mxu0
  %v1701 = vpop.f32.mrb[0].mxu0
  %1702 = vdwg.mxu0
  %1703 = vmatprep.subr.bf16.mxu0 0
  %1704 = vmatpush1.bf16.msra.mxu0 %v1616
  %1705 = vmatprep.subr.bf16.mxu0 0
  %1706 = vmatpush1.bf16.msra.mxu0 %v1619
  %1707 = vmatprep.subr.bf16.mxu0 0
  %1708 = vmatpush1.bf16.msra.mxu0 %v1622
  %1709 = vmatprep.subr.bf16.mxu0 0
  %1710 = vmatpush1.bf16.msra.mxu0 %v1625
  %1711 = vmatprep.subr.bf16.mxu0 0
  %1712 = vmatpush1.bf16.msra.mxu0 %v1628
  %1713 = vmatprep.subr.bf16.mxu0 0
  %1714 = vmatpush1.bf16.msra.mxu0 %v1631
  %1715 = vmatprep.subr.bf16.mxu0 0
  %1716 = vmatpush1.bf16.msra.mxu0 %v1634
  %1717 = vmatprep.subr.bf16.mxu0 0
  %1718 = vmatpush1.bf16.msra.mxu0 %v1637
  %1719 = vmatprep.subr.bf16.mxu0 0
  %1720 = vmatpush1.bf16.msra.mxu0 0
  %1721 = vmatprep.subr.bf16.mxu0 0
  %1722 = vmatpush1.bf16.msra.mxu0 0
  %1723 = vmatprep.subr.bf16.mxu0 0
  %1724 = vmatpush1.bf16.msra.mxu0 0
  %1725 = vmatprep.subr.bf16.mxu0 0
  %1726 = vmatpush1.bf16.msra.mxu0 0
  %1727 = vmatprep.subr.bf16.mxu0 0
  %1728 = vmatpush1.bf16.msra.mxu0 0
  %1729 = vmatprep.subr.bf16.mxu0 0
  %1730 = vmatpush1.bf16.msra.mxu0 0
  %1731 = vmatprep.subr.bf16.mxu0 0
  %1732 = vmatpush1.bf16.msra.mxu0 0
  %1733 = vmatprep.subr.bf16.mxu0 0
  %1734 = vmatpush1.bf16.msra.mxu0 0
  %1735 = vmatprep.mubr.bf16.mxu0 0
  %1736 = vmatmul.mubr.bf16.gmra.mrb[0].mxu0 %v1532
  %v1737 = vpop.f32.mrb[0].mxu0
  %v1738 = vadd.f32 %v1527, %v1737
  %v1739 = vpop.f32.mrb[0].mxu0
  %v1740 = vpop.f32.mrb[0].mxu0
  %v1741 = vpop.f32.mrb[0].mxu0
  %1742 = vdwg.mxu0
  %v1743 = vld [vmem:[#allocation2 + $0x18] sm:$0x3]
  %v1744 = vld [vmem:[#allocation2 + $0x20] sm:$0x3]
  %v1745 = vld [vmem:[#allocation2 + $0x28] sm:$0x3]
  %v1746 = vadd.f32 %v1743, %v1697
  %v1747 = vxor.u32 %v1746, 2147483648
  %v1748 = vmul.f32 %v1747, 1.442695
  %v1749 = vpow.pop %v1748
  %v1750 = vadd.f32 %v1749, 1.0
  %v1751 = vrcp.pop %v1750
  %v1752 = vmul.f32 1.0, %v1751
  %v1753 = vadd.f32 %v1744, %v1699
  %v1754 = vxor.u32 %v1753, 2147483648
  %v1755 = vmul.f32 %v1754, 1.442695
  %v1756 = vpow.pop %v1755
  %v1757 = vadd.f32 %v1756, 1.0
  %v1758 = vrcp.pop %v1757
  %v1759 = vmul.f32 1.0, %v1758
  %v1760 = vmul.f32 %v1752, %v1738
  %v1761 = vadd.f32 %v1745, %v1760
  %v1762 = vtanh.pop %v1761
  %v1763 = vsub.f32 1.0, %v1759
  %v1764 = vmul.f32 %v1763, %v1762
  %v1766 = vrot.slane %v1479, 6
  %v1768 = vmul.f32 %v1759, %v1766
  %v1769 = vadd.f32 %v1764, %v1768
  %1770 = vst [vmem:[#allocation3 + $0x8] sm:$0x3] %v1769
  %v1771 = vld [vmem:[%s5] sm:$0xff]
  %v1772 = vld [vmem:[%s5 + $0x8] sm:$0xf]
  %v1773 = vld [vmem:[%s5 + $0xc] sm:$0xff]
  %v1774 = vld [vmem:[%s5 + $0x14] sm:$0xf]
  %v1775 = vld [vmem:[%s5 + $0x18] sm:$0xff]
  %v1776 = vld [vmem:[%s5 + $0x20] sm:$0xf]
  %v1777 = vld [vmem:[%s5 + $0x24] sm:$0xff]
  %v1778 = vld [vmem:[%s5 + $0x2c] sm:$0xf]
  %v1779 = vld [vmem:[%s5 + $0x30] sm:$0xff]
  %v1780 = vld [vmem:[%s5 + $0x38] sm:$0xf]
  %v1781 = vld [vmem:[%s5 + $0x3c] sm:$0xff]
  %v1782 = vld [vmem:[%s5 + $0x44] sm:$0xf]
  %v1783 = vld [vmem:[%s5 + $0x48] sm:$0xff]
  %v1784 = vld [vmem:[%s5 + $0x50] sm:$0xf]
  %v1785 = vld [vmem:[%s5 + $0x54] sm:$0xff]
  %v1786 = vld [vmem:[%s5 + $0x5c] sm:$0xf]
  %v1787 = vld [vmem:[%s5 + $0x60] sm:$0xff]
  %v1788 = vld [vmem:[%s5 + $0x68] sm:$0xf]
  %v1789 = vld [vmem:[%s5 + $0x6c] sm:$0xff]
  %v1790 = vld [vmem:[%s5 + $0x74] sm:$0xf]
  %v1791 = vld [vmem:[%s5 + $0x78] sm:$0xff]
  %v1792 = vld [vmem:[%s5 + $0x80] sm:$0xf]
  %v1793 = vld [vmem:[%s5 + $0x84] sm:$0xff]
  %v1794 = vld [vmem:[%s5 + $0x8c] sm:$0xf]
  %v1795 = vld [vmem:[%s5 + $0x90] sm:$0xff]
  %v1796 = vld [vmem:[%s5 + $0x98] sm:$0xf]
  %v1797 = vld [vmem:[%s5 + $0x9c] sm:$0xff]
  %v1798 = vld [vmem:[%s5 + $0xa4] sm:$0xf]
  %v1799 = vld [vmem:[%s5 + $0xa8] sm:$0xff]
  %v1800 = vld [vmem:[%s5 + $0xb0] sm:$0xf]
  %v1801 = vld [vmem:[%s5 + $0xb4] sm:$0xff]
  %v1802 = vld [vmem:[%s5 + $0xbc] sm:$0xf]
  %v1803 = vpack.c.bf16 %v1769, %v1769
  %v1804 = vld [vmem:[%s6] sm:$0x7]
  %v1806 = vlaneseq
  %v1807 = vshrl.u32 %v1806, 7
  %v1808 = vsub.s32 0, %v1807
  %v1809 = vrot.slane %v1804, %v1808
  %v1810 = vlaneseq
  %v1811 = vshrl.u32 %v1810, 7
  %v1812 = vsub.s32 1, %v1811
  %v1813 = vrot.slane %v1804, %v1812
  %v1814 = vlaneseq
  %v1815 = vshrl.u32 %v1814, 7
  %v1816 = vsub.s32 2, %v1815
  %v1817 = vrot.slane %v1804, %v1816
  %v1853 = vunpack.c.l.b16 %v1771
  %v1854 = vunpack.c.h.b16 %v1771
  %v1855 = vunpack.c.l.b16 %v1772
  %v1856 = vunpack.c.l.b16 %v1773
  %v1857 = vunpack.c.h.b16 %v1773
  %v1858 = vunpack.c.l.b16 %v1774
  %v1859 = vunpack.c.l.b16 %v1775
  %v1860 = vunpack.c.h.b16 %v1775
  %v1861 = vunpack.c.l.b16 %v1776
  %v1862 = vunpack.c.l.b16 %v1777
  %v1863 = vunpack.c.h.b16 %v1777
  %v1864 = vunpack.c.l.b16 %v1778
  %v1865 = vunpack.c.l.b16 %v1779
  %v1866 = vunpack.c.h.b16 %v1779
  %v1867 = vunpack.c.l.b16 %v1780
  %v1868 = vunpack.c.l.b16 %v1781
  %v1869 = vunpack.c.h.b16 %v1781
  %v1870 = vunpack.c.l.b16 %v1782
  %v1871 = vunpack.c.l.b16 %v1783
  %v1872 = vunpack.c.h.b16 %v1783
  %v1873 = vunpack.c.l.b16 %v1784
  %v1874 = vunpack.c.l.b16 %v1785
  %v1875 = vunpack.c.h.b16 %v1785
  %v1876 = vunpack.c.l.b16 %v1786
  %v1877 = vunpack.c.l.b16 %v1787
  %v1878 = vunpack.c.h.b16 %v1787
  %v1879 = vunpack.c.l.b16 %v1788
  %v1880 = vunpack.c.l.b16 %v1789
  %v1881 = vunpack.c.h.b16 %v1789
  %v1882 = vunpack.c.l.b16 %v1790
  %v1883 = vunpack.c.l.b16 %v1791
  %v1884 = vunpack.c.h.b16 %v1791
  %v1885 = vunpack.c.l.b16 %v1792
  %v1886 = vunpack.c.l.b16 %v1793
  %v1887 = vunpack.c.h.b16 %v1793
  %v1888 = vunpack.c.l.b16 %v1794
  %v1889 = vunpack.c.l.b16 %v1795
  %v1890 = vunpack.c.h.b16 %v1795
  %v1891 = vunpack.c.l.b16 %v1796
  %v1892 = vunpack.c.l.b16 %v1797
  %v1893 = vunpack.c.h.b16 %v1797
  %v1894 = vunpack.c.l.b16 %v1798
  %v1895 = vunpack.c.l.b16 %v1799
  %v1896 = vunpack.c.h.b16 %v1799
  %v1897 = vunpack.c.l.b16 %v1800
  %v1898 = vunpack.c.l.b16 %v1801
  %v1899 = vunpack.c.h.b16 %v1801
  %v1900 = vunpack.c.l.b16 %v1802
  %v1901 = vpack.c.b16 %v1856, %v1853
  %v1902 = vpack.c.b16 %v1857, %v1854
  %v1903 = vpack.c.b16 %v1858, %v1855
  %v1904 = vpack.c.b16 %v1862, %v1859
  %v1905 = vpack.c.b16 %v1863, %v1860
  %v1906 = vpack.c.b16 %v1864, %v1861
  %v1907 = vpack.c.b16 %v1868, %v1865
  %v1908 = vpack.c.b16 %v1869, %v1866
  %v1909 = vpack.c.b16 %v1870, %v1867
  %v1910 = vpack.c.b16 %v1874, %v1871
  %v1911 = vpack.c.b16 %v1875, %v1872
  %v1912 = vpack.c.b16 %v1876, %v1873
  %v1913 = vpack.c.b16 %v1880, %v1877
  %v1914 = vpack.c.b16 %v1881, %v1878
  %v1915 = vpack.c.b16 %v1882, %v1879
  %v1916 = vpack.c.b16 %v1886, %v1883
  %v1917 = vpack.c.b16 %v1887, %v1884
  %v1918 = vpack.c.b16 %v1888, %v1885
  %v1919 = vpack.c.b16 %v1892, %v1889
  %v1920 = vpack.c.b16 %v1893, %v1890
  %v1921 = vpack.c.b16 %v1894, %v1891
  %v1922 = vpack.c.b16 %v1898, %v1895
  %v1923 = vpack.c.b16 %v1899, %v1896
  %v1924 = vpack.c.b16 %v1900, %v1897
  %1949 = vmatprep.subr.bf16.mxu0 %v1902
  %1950 = vmatpush1.bf16.msra.mxu0 %v1901
  %1951 = vmatprep.subr.bf16.mxu0 %v1905
  %1952 = vmatpush1.bf16.msra.mxu0 %v1904
  %1953 = vmatprep.subr.bf16.mxu0 %v1908
  %1954 = vmatpush1.bf16.msra.mxu0 %v1907
  %1955 = vmatprep.subr.bf16.mxu0 %v1911
  %1956 = vmatpush1.bf16.msra.mxu0 %v1910
  %1957 = vmatprep.subr.bf16.mxu0 %v1914
  %1958 = vmatpush1.bf16.msra.mxu0 %v1913
  %1959 = vmatprep.subr.bf16.mxu0 %v1917
  %1960 = vmatpush1.bf16.msra.mxu0 %v1916
  %1961 = vmatprep.subr.bf16.mxu0 %v1920
  %1962 = vmatpush1.bf16.msra.mxu0 %v1919
  %1963 = vmatprep.subr.bf16.mxu0 %v1923
  %1964 = vmatpush1.bf16.msra.mxu0 %v1922
  %1965 = vmatprep.subr.bf16.mxu0 0
  %1966 = vmatpush1.bf16.msra.mxu0 0
  %1967 = vmatprep.subr.bf16.mxu0 0
  %1968 = vmatpush1.bf16.msra.mxu0 0
  %1969 = vmatprep.subr.bf16.mxu0 0
  %1970 = vmatpush1.bf16.msra.mxu0 0
  %1971 = vmatprep.subr.bf16.mxu0 0
  %1972 = vmatpush1.bf16.msra.mxu0 0
  %1973 = vmatprep.subr.bf16.mxu0 0
  %1974 = vmatpush1.bf16.msra.mxu0 0
  %1975 = vmatprep.subr.bf16.mxu0 0
  %1976 = vmatpush1.bf16.msra.mxu0 0
  %1977 = vmatprep.subr.bf16.mxu0 0
  %1978 = vmatpush1.bf16.msra.mxu0 0
  %1979 = vmatprep.subr.bf16.mxu0 0
  %1980 = vmatpush1.bf16.msra.mxu0 0
  %1981 = vmatprep.mubr.bf16.mxu0 0
  %1982 = vmatmul.mubr.bf16.gmra.mrb[0].mxu0 %v1803
  %v1983 = vpop.f32.mrb[0].mxu0
  %v1984 = vadd.f32 %v1809, %v1983
  %v1985 = vpop.f32.mrb[0].mxu0
  %v1986 = vadd.f32 %v1813, %v1985
  %v1987 = vpop.f32.mrb[0].mxu0
  %v1988 = vpop.f32.mrb[0].mxu0
  %1989 = vdwg.mxu0
  %1990 = vmatprep.subr.bf16.mxu0 0
  %1991 = vmatpush1.bf16.msra.mxu0 %v1903
  %1992 = vmatprep.subr.bf16.mxu0 0
  %1993 = vmatpush1.bf16.msra.mxu0 %v1906
  %1994 = vmatprep.subr.bf16.mxu0 0
  %1995 = vmatpush1.bf16.msra.mxu0 %v1909
  %1996 = vmatprep.subr.bf16.mxu0 0
  %1997 = vmatpush1.bf16.msra.mxu0 %v1912
  %1998 = vmatprep.subr.bf16.mxu0 0
  %1999 = vmatpush1.bf16.msra.mxu0 %v1915
  %2000 = vmatprep.subr.bf16.mxu0 0
  %2001 = vmatpush1.bf16.msra.mxu0 %v1918
  %2002 = vmatprep.subr.bf16.mxu0 0
  %2003 = vmatpush1.bf16.msra.mxu0 %v1921
  %2004 = vmatprep.subr.bf16.mxu0 0
  %2005 = vmatpush1.bf16.msra.mxu0 %v1924
  %2006 = vmatprep.subr.bf16.mxu0 0
  %2007 = vmatpush1.bf16.msra.mxu0 0
  %2008 = vmatprep.subr.bf16.mxu0 0
  %2009 = vmatpush1.bf16.msra.mxu0 0
  %2010 = vmatprep.subr.bf16.mxu0 0
  %2011 = vmatpush1.bf16.msra.mxu0 0
  %2012 = vmatprep.subr.bf16.mxu0 0
  %2013 = vmatpush1.bf16.msra.mxu0 0
  %2014 = vmatprep.subr.bf16.mxu0 0
  %2015 = vmatpush1.bf16.msra.mxu0 0
  %2016 = vmatprep.subr.bf16.mxu0 0
  %2017 = vmatpush1.bf16.msra.mxu0 0
  %2018 = vmatprep.subr.bf16.mxu0 0
  %2019 = vmatpush1.bf16.msra.mxu0 0
  %2020 = vmatprep.subr.bf16.mxu0 0
  %2021 = vmatpush1.bf16.msra.mxu0 0
  %2022 = vmatprep.mubr.bf16.mxu0 0
  %2023 = vmatmul.mubr.bf16.gmra.mrb[0].mxu0 %v1803
  %v2024 = vpop.f32.mrb[0].mxu0
  %v2025 = vadd.f32 %v1817, %v2024
  %v2026 = vpop.f32.mrb[0].mxu0
  %v2027 = vpop.f32.mrb[0].mxu0
  %v2028 = vpop.f32.mrb[0].mxu0
  %2029 = vdwg.mxu0
  %v2030 = vld [vmem:[#allocation2 + $0x18] sm:$0xc]
  %v2031 = vld [vmem:[#allocation2 + $0x20] sm:$0xc]
  %v2032 = vld [vmem:[#allocation2 + $0x28] sm:$0xc]
  %v2034 = vrot.slane %v1984, 6
  %v2036 = vadd.f32 %v2030, %v2034
  %v2037 = vxor.u32 %v2036, 2147483648
  %v2038 = vmul.f32 %v2037, 1.442695
  %v2039 = vpow.pop %v2038
  %v2040 = vadd.f32 %v2039, 1.0
  %v2041 = vrcp.pop %v2040
  %v2042 = vmul.f32 1.0, %v2041
  %v2044 = vrot.slane %v1986, 6
  %v2046 = vadd.f32 %v2031, %v2044
  %v2047 = vxor.u32 %v2046, 2147483648
  %v2048 = vmul.f32 %v2047, 1.442695
  %v2049 = vpow.pop %v2048
  %v2050 = vadd.f32 %v2049, 1.0
  %v2051 = vrcp.pop %v2050
  %v2052 = vmul.f32 1.0, %v2051
  %v2054 = vrot.slane %v2025, 6
  %v2056 = vmul.f32 %v2042, %v2054
  %v2057 = vadd.f32 %v2032, %v2056
  %v2058 = vtanh.pop %v2057
  %v2059 = vsub.f32 1.0, %v2052
  %v2060 = vmul.f32 %v2059, %v2058
  %v2062 = vrot.slane %v1769, 6
  %v2064 = vmul.f32 %v2052, %v2062
  %v2065 = vadd.f32 %v2060, %v2064
  %2066 = vst [vmem:[#allocation3 + $0x8] sm:$0xc] %v2065
  %v2067 = vld [vmem:[%s5] sm:$0xff]
  %v2068 = vld [vmem:[%s5 + $0x8] sm:$0xf]
  %v2069 = vld [vmem:[%s5 + $0xc] sm:$0xff]
  %v2070 = vld [vmem:[%s5 + $0x14] sm:$0xf]
  %v2071 = vld [vmem:[%s5 + $0x18] sm:$0xff]
  %v2072 = vld [vmem:[%s5 + $0x20] sm:$0xf]
  %v2073 = vld [vmem:[%s5 + $0x24] sm:$0xff]
  %v2074 = vld [vmem:[%s5 + $0x2c] sm:$0xf]
  %v2075 = vld [vmem:[%s5 + $0x30] sm:$0xff]
  %v2076 = vld [vmem:[%s5 + $0x38] sm:$0xf]
  %v2077 = vld [vmem:[%s5 + $0x3c] sm:$0xff]
  %v2078 = vld [vmem:[%s5 + $0x44] sm:$0xf]
  %v2079 = vld [vmem:[%s5 + $0x48] sm:$0xff]
  %v2080 = vld [vmem:[%s5 + $0x50] sm:$0xf]
  %v2081 = vld [vmem:[%s5 + $0x54] sm:$0xff]
  %v2082 = vld [vmem:[%s5 + $0x5c] sm:$0xf]
  %v2083 = vld [vmem:[%s5 + $0x60] sm:$0xff]
  %v2084 = vld [vmem:[%s5 + $0x68] sm:$0xf]
  %v2085 = vld [vmem:[%s5 + $0x6c] sm:$0xff]
  %v2086 = vld [vmem:[%s5 + $0x74] sm:$0xf]
  %v2087 = vld [vmem:[%s5 + $0x78] sm:$0xff]
  %v2088 = vld [vmem:[%s5 + $0x80] sm:$0xf]
  %v2089 = vld [vmem:[%s5 + $0x84] sm:$0xff]
  %v2090 = vld [vmem:[%s5 + $0x8c] sm:$0xf]
  %v2091 = vld [vmem:[%s5 + $0x90] sm:$0xff]
  %v2092 = vld [vmem:[%s5 + $0x98] sm:$0xf]
  %v2093 = vld [vmem:[%s5 + $0x9c] sm:$0xff]
  %v2094 = vld [vmem:[%s5 + $0xa4] sm:$0xf]
  %v2095 = vld [vmem:[%s5 + $0xa8] sm:$0xff]
  %v2096 = vld [vmem:[%s5 + $0xb0] sm:$0xf]
  %v2097 = vld [vmem:[%s5 + $0xb4] sm:$0xff]
  %v2098 = vld [vmem:[%s5 + $0xbc] sm:$0xf]
  %v2099 = vpack.c.bf16 %v2065, %v2065
  %v2100 = vld [vmem:[%s6] sm:$0x7]
  %v2102 = vlaneseq
  %v2103 = vshrl.u32 %v2102, 7
  %v2104 = vsub.s32 0, %v2103
  %v2105 = vrot.slane %v2100, %v2104
  %v2106 = vlaneseq
  %v2107 = vshrl.u32 %v2106, 7
  %v2108 = vsub.s32 1, %v2107
  %v2109 = vrot.slane %v2100, %v2108
  %v2110 = vlaneseq
  %v2111 = vshrl.u32 %v2110, 7
  %v2112 = vsub.s32 2, %v2111
  %v2113 = vrot.slane %v2100, %v2112
  %v2118 = vrot.slane %v2099, 1
  %v2152 = vunpack.c.l.b16 %v2067
  %v2153 = vunpack.c.h.b16 %v2067
  %v2154 = vunpack.c.l.b16 %v2068
  %v2155 = vunpack.c.l.b16 %v2069
  %v2156 = vunpack.c.h.b16 %v2069
  %v2157 = vunpack.c.l.b16 %v2070
  %v2158 = vunpack.c.l.b16 %v2071
  %v2159 = vunpack.c.h.b16 %v2071
  %v2160 = vunpack.c.l.b16 %v2072
  %v2161 = vunpack.c.l.b16 %v2073
  %v2162 = vunpack.c.h.b16 %v2073
  %v2163 = vunpack.c.l.b16 %v2074
  %v2164 = vunpack.c.l.b16 %v2075
  %v2165 = vunpack.c.h.b16 %v2075
  %v2166 = vunpack.c.l.b16 %v2076
  %v2167 = vunpack.c.l.b16 %v2077
  %v2168 = vunpack.c.h.b16 %v2077
  %v2169 = vunpack.c.l.b16 %v2078
  %v2170 = vunpack.c.l.b16 %v2079
  %v2171 = vunpack.c.h.b16 %v2079
  %v2172 = vunpack.c.l.b16 %v2080
  %v2173 = vunpack.c.l.b16 %v2081
  %v2174 = vunpack.c.h.b16 %v2081
  %v2175 = vunpack.c.l.b16 %v2082
  %v2176 = vunpack.c.l.b16 %v2083
  %v2177 = vunpack.c.h.b16 %v2083
  %v2178 = vunpack.c.l.b16 %v2084
  %v2179 = vunpack.c.l.b16 %v2085
  %v2180 = vunpack.c.h.b16 %v2085
  %v2181 = vunpack.c.l.b16 %v2086
  %v2182 = vunpack.c.l.b16 %v2087
  %v2183 = vunpack.c.h.b16 %v2087
  %v2184 = vunpack.c.l.b16 %v2088
  %v2185 = vunpack.c.l.b16 %v2089
  %v2186 = vunpack.c.h.b16 %v2089
  %v2187 = vunpack.c.l.b16 %v2090
  %v2188 = vunpack.c.l.b16 %v2091
  %v2189 = vunpack.c.h.b16 %v2091
  %v2190 = vunpack.c.l.b16 %v2092
  %v2191 = vunpack.c.l.b16 %v2093
  %v2192 = vunpack.c.h.b16 %v2093
  %v2193 = vunpack.c.l.b16 %v2094
  %v2194 = vunpack.c.l.b16 %v2095
  %v2195 = vunpack.c.h.b16 %v2095
  %v2196 = vunpack.c.l.b16 %v2096
  %v2197 = vunpack.c.l.b16 %v2097
  %v2198 = vunpack.c.h.b16 %v2097
  %v2199 = vunpack.c.l.b16 %v2098
  %v2200 = vpack.c.b16 %v2155, %v2152
  %v2201 = vpack.c.b16 %v2156, %v2153
  %v2202 = vpack.c.b16 %v2157, %v2154
  %v2203 = vpack.c.b16 %v2161, %v2158
  %v2204 = vpack.c.b16 %v2162, %v2159
  %v2205 = vpack.c.b16 %v2163, %v2160
  %v2206 = vpack.c.b16 %v2167, %v2164
  %v2207 = vpack.c.b16 %v2168, %v2165
  %v2208 = vpack.c.b16 %v2169, %v2166
  %v2209 = vpack.c.b16 %v2173, %v2170
  %v2210 = vpack.c.b16 %v2174, %v2171
  %v2211 = vpack.c.b16 %v2175, %v2172
  %v2212 = vpack.c.b16 %v2179, %v2176
  %v2213 = vpack.c.b16 %v2180, %v2177
  %v2214 = vpack.c.b16 %v2181, %v2178
  %v2215 = vpack.c.b16 %v2185, %v2182
  %v2216 = vpack.c.b16 %v2186, %v2183
  %v2217 = vpack.c.b16 %v2187, %v2184
  %v2218 = vpack.c.b16 %v2191, %v2188
  %v2219 = vpack.c.b16 %v2192, %v2189
  %v2220 = vpack.c.b16 %v2193, %v2190
  %v2221 = vpack.c.b16 %v2197, %v2194
  %v2222 = vpack.c.b16 %v2198, %v2195
  %v2223 = vpack.c.b16 %v2199, %v2196
  %2248 = vmatprep.subr.bf16.mxu0 %v2201
  %2249 = vmatpush1.bf16.msra.mxu0 %v2200
  %2250 = vmatprep.subr.bf16.mxu0 %v2204
  %2251 = vmatpush1.bf16.msra.mxu0 %v2203
  %2252 = vmatprep.subr.bf16.mxu0 %v2207
  %2253 = vmatpush1.bf16.msra.mxu0 %v2206
  %2254 = vmatprep.subr.bf16.mxu0 %v2210
  %2255 = vmatpush1.bf16.msra.mxu0 %v2209
  %2256 = vmatprep.subr.bf16.mxu0 %v2213
  %2257 = vmatpush1.bf16.msra.mxu0 %v2212
  %2258 = vmatprep.subr.bf16.mxu0 %v2216
  %2259 = vmatpush1.bf16.msra.mxu0 %v2215
  %2260 = vmatprep.subr.bf16.mxu0 %v2219
  %2261 = vmatpush1.bf16.msra.mxu0 %v2218
  %2262 = vmatprep.subr.bf16.mxu0 %v2222
  %2263 = vmatpush1.bf16.msra.mxu0 %v2221
  %2264 = vmatprep.subr.bf16.mxu0 0
  %2265 = vmatpush1.bf16.msra.mxu0 0
  %2266 = vmatprep.subr.bf16.mxu0 0
  %2267 = vmatpush1.bf16.msra.mxu0 0
  %2268 = vmatprep.subr.bf16.mxu0 0
  %2269 = vmatpush1.bf16.msra.mxu0 0
  %2270 = vmatprep.subr.bf16.mxu0 0
  %2271 = vmatpush1.bf16.msra.mxu0 0
  %2272 = vmatprep.subr.bf16.mxu0 0
  %2273 = vmatpush1.bf16.msra.mxu0 0
  %2274 = vmatprep.subr.bf16.mxu0 0
  %2275 = vmatpush1.bf16.msra.mxu0 0
  %2276 = vmatprep.subr.bf16.mxu0 0
  %2277 = vmatpush1.bf16.msra.mxu0 0
  %2278 = vmatprep.subr.bf16.mxu0 0
  %2279 = vmatpush1.bf16.msra.mxu0 0
  %2280 = vmatprep.mubr.bf16.mxu0 0
  %2281 = vmatmul.mubr.bf16.gmra.mrb[0].mxu0 %v2118
  %v2282 = vpop.f32.mrb[0].mxu0
  %v2283 = vadd.f32 %v2105, %v2282
  %v2284 = vpop.f32.mrb[0].mxu0
  %v2285 = vadd.f32 %v2109, %v2284
  %v2286 = vpop.f32.mrb[0].mxu0
  %v2287 = vpop.f32.mrb[0].mxu0
  %2288 = vdwg.mxu0
  %2289 = vmatprep.subr.bf16.mxu0 0
  %2290 = vmatpush1.bf16.msra.mxu0 %v2202
  %2291 = vmatprep.subr.bf16.mxu0 0
  %2292 = vmatpush1.bf16.msra.mxu0 %v2205
  %2293 = vmatprep.subr.bf16.mxu0 0
  %2294 = vmatpush1.bf16.msra.mxu0 %v2208
  %2295 = vmatprep.subr.bf16.mxu0 0
  %2296 = vmatpush1.bf16.msra.mxu0 %v2211
  %2297 = vmatprep.subr.bf16.mxu0 0
  %2298 = vmatpush1.bf16.msra.mxu0 %v2214
  %2299 = vmatprep.subr.bf16.mxu0 0
  %2300 = vmatpush1.bf16.msra.mxu0 %v2217
  %2301 = vmatprep.subr.bf16.mxu0 0
  %2302 = vmatpush1.bf16.msra.mxu0 %v2220
  %2303 = vmatprep.subr.bf16.mxu0 0
  %2304 = vmatpush1.bf16.msra.mxu0 %v2223
  %2305 = vmatprep.subr.bf16.mxu0 0
  %2306 = vmatpush1.bf16.msra.mxu0 0
  %2307 = vmatprep.subr.bf16.mxu0 0
  %2308 = vmatpush1.bf16.msra.mxu0 0
  %2309 = vmatprep.subr.bf16.mxu0 0
  %2310 = vmatpush1.bf16.msra.mxu0 0
  %2311 = vmatprep.subr.bf16.mxu0 0
  %2312 = vmatpush1.bf16.msra.mxu0 0
  %2313 = vmatprep.subr.bf16.mxu0 0
  %2314 = vmatpush1.bf16.msra.mxu0 0
  %2315 = vmatprep.subr.bf16.mxu0 0
  %2316 = vmatpush1.bf16.msra.mxu0 0
  %2317 = vmatprep.subr.bf16.mxu0 0
  %2318 = vmatpush1.bf16.msra.mxu0 0
  %2319 = vmatprep.subr.bf16.mxu0 0
  %2320 = vmatpush1.bf16.msra.mxu0 0
  %2321 = vmatprep.mubr.bf16.mxu0 0
  %2322 = vmatmul.mubr.bf16.gmra.mrb[0].mxu0 %v2118
  %v2323 = vpop.f32.mrb[0].mxu0
  %v2324 = vadd.f32 %v2113, %v2323
  %v2325 = vpop.f32.mrb[0].mxu0
  %v2326 = vpop.f32.mrb[0].mxu0
  %v2327 = vpop.f32.mrb[0].mxu0
  %2328 = vdwg.mxu0
  %v2329 = vld [vmem:[#allocation2 + $0x18] sm:$0x30]
  %v2330 = vld [vmem:[#allocation2 + $0x20] sm:$0x30]
  %v2331 = vld [vmem:[#allocation2 + $0x28] sm:$0x30]
  %v2333 = vrot.slane %v2283, 4
  %v2335 = vadd.f32 %v2329, %v2333
  %v2336 = vxor.u32 %v2335, 2147483648
  %v2337 = vmul.f32 %v2336, 1.442695
  %v2338 = vpow.pop %v2337
  %v2339 = vadd.f32 %v2338, 1.0
  %v2340 = vrcp.pop %v2339
  %v2341 = vmul.f32 1.0, %v2340
  %v2343 = vrot.slane %v2285, 4
  %v2345 = vadd.f32 %v2330, %v2343
  %v2346 = vxor.u32 %v2345, 2147483648
  %v2347 = vmul.f32 %v2346, 1.442695
  %v2348 = vpow.pop %v2347
  %v2349 = vadd.f32 %v2348, 1.0
  %v2350 = vrcp.pop %v2349
  %v2351 = vmul.f32 1.0, %v2350
  %v2353 = vrot.slane %v2324, 4
  %v2355 = vmul.f32 %v2341, %v2353
  %v2356 = vadd.f32 %v2331, %v2355
  %v2357 = vtanh.pop %v2356
  %v2358 = vsub.f32 1.0, %v2351
  %v2359 = vmul.f32 %v2358, %v2357
  %v2361 = vrot.slane %v2065, 6
  %v2363 = vmul.f32 %v2351, %v2361
  %v2364 = vadd.f32 %v2359, %v2363
  %2365 = vst [vmem:[#allocation3 + $0x8] sm:$0x30] %v2364
  %v2366 = vld [vmem:[%s5] sm:$0xff]
  %v2367 = vld [vmem:[%s5 + $0x8] sm:$0xf]
  %v2368 = vld [vmem:[%s5 + $0xc] sm:$0xff]
  %v2369 = vld [vmem:[%s5 + $0x14] sm:$0xf]
  %v2370 = vld [vmem:[%s5 + $0x18] sm:$0xff]
  %v2371 = vld [vmem:[%s5 + $0x20] sm:$0xf]
  %v2372 = vld [vmem:[%s5 + $0x24] sm:$0xff]
  %v2373 = vld [vmem:[%s5 + $0x2c] sm:$0xf]
  %v2374 = vld [vmem:[%s5 + $0x30] sm:$0xff]
  %v2375 = vld [vmem:[%s5 + $0x38] sm:$0xf]
  %v2376 = vld [vmem:[%s5 + $0x3c] sm:$0xff]
  %v2377 = vld [vmem:[%s5 + $0x44] sm:$0xf]
  %v2378 = vld [vmem:[%s5 + $0x48] sm:$0xff]
  %v2379 = vld [vmem:[%s5 + $0x50] sm:$0xf]
  %v2380 = vld [vmem:[%s5 + $0x54] sm:$0xff]
  %v2381 = vld [vmem:[%s5 + $0x5c] sm:$0xf]
  %v2382 = vld [vmem:[%s5 + $0x60] sm:$0xff]
  %v2383 = vld [vmem:[%s5 + $0x68] sm:$0xf]
  %v2384 = vld [vmem:[%s5 + $0x6c] sm:$0xff]
  %v2385 = vld [vmem:[%s5 + $0x74] sm:$0xf]
  %v2386 = vld [vmem:[%s5 + $0x78] sm:$0xff]
  %v2387 = vld [vmem:[%s5 + $0x80] sm:$0xf]
  %v2388 = vld [vmem:[%s5 + $0x84] sm:$0xff]
  %v2389 = vld [vmem:[%s5 + $0x8c] sm:$0xf]
  %v2390 = vld [vmem:[%s5 + $0x90] sm:$0xff]
  %v2391 = vld [vmem:[%s5 + $0x98] sm:$0xf]
  %v2392 = vld [vmem:[%s5 + $0x9c] sm:$0xff]
  %v2393 = vld [vmem:[%s5 + $0xa4] sm:$0xf]
  %v2394 = vld [vmem:[%s5 + $0xa8] sm:$0xff]
  %v2395 = vld [vmem:[%s5 + $0xb0] sm:$0xf]
  %v2396 = vld [vmem:[%s5 + $0xb4] sm:$0xff]
  %v2397 = vld [vmem:[%s5 + $0xbc] sm:$0xf]
  %v2398 = vpack.c.bf16 %v2364, %v2364
  %v2399 = vld [vmem:[%s6] sm:$0x7]
  %v2401 = vlaneseq
  %v2402 = vshrl.u32 %v2401, 7
  %v2403 = vsub.s32 0, %v2402
  %v2404 = vrot.slane %v2399, %v2403
  %v2405 = vlaneseq
  %v2406 = vshrl.u32 %v2405, 7
  %v2407 = vsub.s32 1, %v2406
  %v2408 = vrot.slane %v2399, %v2407
  %v2409 = vlaneseq
  %v2410 = vshrl.u32 %v2409, 7
  %v2411 = vsub.s32 2, %v2410
  %v2412 = vrot.slane %v2399, %v2411
  %v2417 = vrot.slane %v2398, 2
  %v2451 = vunpack.c.l.b16 %v2366
  %v2452 = vunpack.c.h.b16 %v2366
  %v2453 = vunpack.c.l.b16 %v2367
  %v2454 = vunpack.c.l.b16 %v2368
  %v2455 = vunpack.c.h.b16 %v2368
  %v2456 = vunpack.c.l.b16 %v2369
  %v2457 = vunpack.c.l.b16 %v2370
  %v2458 = vunpack.c.h.b16 %v2370
  %v2459 = vunpack.c.l.b16 %v2371
  %v2460 = vunpack.c.l.b16 %v2372
  %v2461 = vunpack.c.h.b16 %v2372
  %v2462 = vunpack.c.l.b16 %v2373
  %v2463 = vunpack.c.l.b16 %v2374
  %v2464 = vunpack.c.h.b16 %v2374
  %v2465 = vunpack.c.l.b16 %v2375
  %v2466 = vunpack.c.l.b16 %v2376
  %v2467 = vunpack.c.h.b16 %v2376
  %v2468 = vunpack.c.l.b16 %v2377
  %v2469 = vunpack.c.l.b16 %v2378
  %v2470 = vunpack.c.h.b16 %v2378
  %v2471 = vunpack.c.l.b16 %v2379
  %v2472 = vunpack.c.l.b16 %v2380
  %v2473 = vunpack.c.h.b16 %v2380
  %v2474 = vunpack.c.l.b16 %v2381
  %v2475 = vunpack.c.l.b16 %v2382
  %v2476 = vunpack.c.h.b16 %v2382
  %v2477 = vunpack.c.l.b16 %v2383
  %v2478 = vunpack.c.l.b16 %v2384
  %v2479 = vunpack.c.h.b16 %v2384
  %v2480 = vunpack.c.l.b16 %v2385
  %v2481 = vunpack.c.l.b16 %v2386
  %v2482 = vunpack.c.h.b16 %v2386
  %v2483 = vunpack.c.l.b16 %v2387
  %v2484 = vunpack.c.l.b16 %v2388
  %v2485 = vunpack.c.h.b16 %v2388
  %v2486 = vunpack.c.l.b16 %v2389
  %v2487 = vunpack.c.l.b16 %v2390
  %v2488 = vunpack.c.h.b16 %v2390
  %v2489 = vunpack.c.l.b16 %v2391
  %v2490 = vunpack.c.l.b16 %v2392
  %v2491 = vunpack.c.h.b16 %v2392
  %v2492 = vunpack.c.l.b16 %v2393
  %v2493 = vunpack.c.l.b16 %v2394
  %v2494 = vunpack.c.h.b16 %v2394
  %v2495 = vunpack.c.l.b16 %v2395
  %v2496 = vunpack.c.l.b16 %v2396
  %v2497 = vunpack.c.h.b16 %v2396
  %v2498 = vunpack.c.l.b16 %v2397
  %v2499 = vpack.c.b16 %v2454, %v2451
  %v2500 = vpack.c.b16 %v2455, %v2452
  %v2501 = vpack.c.b16 %v2456, %v2453
  %v2502 = vpack.c.b16 %v2460, %v2457
  %v2503 = vpack.c.b16 %v2461, %v2458
  %v2504 = vpack.c.b16 %v2462, %v2459
  %v2505 = vpack.c.b16 %v2466, %v2463
  %v2506 = vpack.c.b16 %v2467, %v2464
  %v2507 = vpack.c.b16 %v2468, %v2465
  %v2508 = vpack.c.b16 %v2472, %v2469
  %v2509 = vpack.c.b16 %v2473, %v2470
  %v2510 = vpack.c.b16 %v2474, %v2471
  %v2511 = vpack.c.b16 %v2478, %v2475
  %v2512 = vpack.c.b16 %v2479, %v2476
  %v2513 = vpack.c.b16 %v2480, %v2477
  %v2514 = vpack.c.b16 %v2484, %v2481
  %v2515 = vpack.c.b16 %v2485, %v2482
  %v2516 = vpack.c.b16 %v2486, %v2483
  %v2517 = vpack.c.b16 %v2490, %v2487
  %v2518 = vpack.c.b16 %v2491, %v2488
  %v2519 = vpack.c.b16 %v2492, %v2489
  %v2520 = vpack.c.b16 %v2496, %v2493
  %v2521 = vpack.c.b16 %v2497, %v2494
  %v2522 = vpack.c.b16 %v2498, %v2495
  %2547 = vmatprep.subr.bf16.mxu0 %v2500
  %2548 = vmatpush1.bf16.msra.mxu0 %v2499
  %2549 = vmatprep.subr.bf16.mxu0 %v2503
  %2550 = vmatpush1.bf16.msra.mxu0 %v2502
  %2551 = vmatprep.subr.bf16.mxu0 %v2506
  %2552 = vmatpush1.bf16.msra.mxu0 %v2505
  %2553 = vmatprep.subr.bf16.mxu0 %v2509
  %2554 = vmatpush1.bf16.msra.mxu0 %v2508
  %2555 = vmatprep.subr.bf16.mxu0 %v2512
  %2556 = vmatpush1.bf16.msra.mxu0 %v2511
  %2557 = vmatprep.subr.bf16.mxu0 %v2515
  %2558 = vmatpush1.bf16.msra.mxu0 %v2514
  %2559 = vmatprep.subr.bf16.mxu0 %v2518
  %2560 = vmatpush1.bf16.msra.mxu0 %v2517
  %2561 = vmatprep.subr.bf16.mxu0 %v2521
  %2562 = vmatpush1.bf16.msra.mxu0 %v2520
  %2563 = vmatprep.subr.bf16.mxu0 0
  %2564 = vmatpush1.bf16.msra.mxu0 0
  %2565 = vmatprep.subr.bf16.mxu0 0
  %2566 = vmatpush1.bf16.msra.mxu0 0
  %2567 = vmatprep.subr.bf16.mxu0 0
  %2568 = vmatpush1.bf16.msra.mxu0 0
  %2569 = vmatprep.subr.bf16.mxu0 0
  %2570 = vmatpush1.bf16.msra.mxu0 0
  %2571 = vmatprep.subr.bf16.mxu0 0
  %2572 = vmatpush1.bf16.msra.mxu0 0
  %2573 = vmatprep.subr.bf16.mxu0 0
  %2574 = vmatpush1.bf16.msra.mxu0 0
  %2575 = vmatprep.subr.bf16.mxu0 0
  %2576 = vmatpush1.bf16.msra.mxu0 0
  %2577 = vmatprep.subr.bf16.mxu0 0
  %2578 = vmatpush1.bf16.msra.mxu0 0
  %2579 = vmatprep.mubr.bf16.mxu0 0
  %2580 = vmatmul.mubr.bf16.gmra.mrb[0].mxu0 %v2417
  %v2581 = vpop.f32.mrb[0].mxu0
  %v2582 = vadd.f32 %v2404, %v2581
  %v2583 = vpop.f32.mrb[0].mxu0
  %v2584 = vadd.f32 %v2408, %v2583
  %v2585 = vpop.f32.mrb[0].mxu0
  %v2586 = vpop.f32.mrb[0].mxu0
  %2587 = vdwg.mxu0
  %2588 = vmatprep.subr.bf16.mxu0 0
  %2589 = vmatpush1.bf16.msra.mxu0 %v2501
  %2590 = vmatprep.subr.bf16.mxu0 0
  %2591 = vmatpush1.bf16.msra.mxu0 %v2504
  %2592 = vmatprep.subr.bf16.mxu0 0
  %2593 = vmatpush1.bf16.msra.mxu0 %v2507
  %2594 = vmatprep.subr.bf16.mxu0 0
  %2595 = vmatpush1.bf16.msra.mxu0 %v2510
  %2596 = vmatprep.subr.bf16.mxu0 0
  %2597 = vmatpush1.bf16.msra.mxu0 %v2513
  %2598 = vmatprep.subr.bf16.mxu0 0
  %2599 = vmatpush1.bf16.msra.mxu0 %v2516
  %2600 = vmatprep.subr.bf16.mxu0 0
  %2601 = vmatpush1.bf16.msra.mxu0 %v2519
  %2602 = vmatprep.subr.bf16.mxu0 0
  %2603 = vmatpush1.bf16.msra.mxu0 %v2522
  %2604 = vmatprep.subr.bf16.mxu0 0
  %2605 = vmatpush1.bf16.msra.mxu0 0
  %2606 = vmatprep.subr.bf16.mxu0 0
  %2607 = vmatpush1.bf16.msra.mxu0 0
  %2608 = vmatprep.subr.bf16.mxu0 0
  %2609 = vmatpush1.bf16.msra.mxu0 0
  %2610 = vmatprep.subr.bf16.mxu0 0
  %2611 = vmatpush1.bf16.msra.mxu0 0
  %2612 = vmatprep.subr.bf16.mxu0 0
  %2613 = vmatpush1.bf16.msra.mxu0 0
  %2614 = vmatprep.subr.bf16.mxu0 0
  %2615 = vmatpush1.bf16.msra.mxu0 0
  %2616 = vmatprep.subr.bf16.mxu0 0
  %2617 = vmatpush1.bf16.msra.mxu0 0
  %2618 = vmatprep.subr.bf16.mxu0 0
  %2619 = vmatpush1.bf16.msra.mxu0 0
  %2620 = vmatprep.mubr.bf16.mxu0 0
  %2621 = vmatmul.mubr.bf16.gmra.mrb[0].mxu0 %v2417
  %v2622 = vpop.f32.mrb[0].mxu0
  %v2623 = vadd.f32 %v2412, %v2622
  %v2624 = vpop.f32.mrb[0].mxu0
  %v2625 = vpop.f32.mrb[0].mxu0
  %v2626 = vpop.f32.mrb[0].mxu0
  %2627 = vdwg.mxu0
  %v2628 = vld [vmem:[#allocation2 + $0x18] sm:$0xc0]
  %v2629 = vld [vmem:[#allocation2 + $0x20] sm:$0xc0]
  %v2630 = vld [vmem:[#allocation2 + $0x28] sm:$0xc0]
  %v2632 = vrot.slane %v2582, 2
  %v2634 = vadd.f32 %v2628, %v2632
  %v2635 = vxor.u32 %v2634, 2147483648
  %v2636 = vmul.f32 %v2635, 1.442695
  %v2637 = vpow.pop %v2636
  %v2638 = vadd.f32 %v2637, 1.0
  %v2639 = vrcp.pop %v2638
  %v2640 = vmul.f32 1.0, %v2639
  %v2642 = vrot.slane %v2584, 2
  %v2644 = vadd.f32 %v2629, %v2642
  %v2645 = vxor.u32 %v2644, 2147483648
  %v2646 = vmul.f32 %v2645, 1.442695
  %v2647 = vpow.pop %v2646
  %v2648 = vadd.f32 %v2647, 1.0
  %v2649 = vrcp.pop %v2648
  %v2650 = vmul.f32 1.0, %v2649
  %v2652 = vrot.slane %v2623, 2
  %v2654 = vmul.f32 %v2640, %v2652
  %v2655 = vadd.f32 %v2630, %v2654
  %v2656 = vtanh.pop %v2655
  %v2657 = vsub.f32 1.0, %v2650
  %v2658 = vmul.f32 %v2657, %v2656
  %v2660 = vrot.slane %v2364, 6
  %v2662 = vmul.f32 %v2650, %v2660
  %v2663 = vadd.f32 %v2658, %v2662
  %2664 = vst [vmem:[#allocation3 + $0x8] sm:$0xc0] %v2663
  %v2665 = vld [vmem:[#allocation3] sm:$0xff]
  %v2666 = vld [vmem:[#allocation3 + $0x8] sm:$0xff]
  %s2667 = scalar_lea.vmem %s5, 192
  %v2668 = vld [vmem:[%s2667] sm:$0xff]
  %v2669 = vld [vmem:[%s2667 + $0x8] sm:$0xf]
  %v2670 = vld [vmem:[%s2667 + $0xc] sm:$0xff]
  %v2671 = vld [vmem:[%s2667 + $0x14] sm:$0xf]
  %v2672 = vld [vmem:[%s2667 + $0x18] sm:$0xff]
  %v2673 = vld [vmem:[%s2667 + $0x20] sm:$0xf]
  %v2674 = vld [vmem:[%s2667 + $0x24] sm:$0xff]
  %v2675 = vld [vmem:[%s2667 + $0x2c] sm:$0xf]
  %v2676 = vld [vmem:[%s2667 + $0x30] sm:$0xff]
  %v2677 = vld [vmem:[%s2667 + $0x38] sm:$0xf]
  %v2678 = vld [vmem:[%s2667 + $0x3c] sm:$0xff]
  %v2679 = vld [vmem:[%s2667 + $0x44] sm:$0xf]
  %v2680 = vld [vmem:[%s2667 + $0x48] sm:$0xff]
  %v2681 = vld [vmem:[%s2667 + $0x50] sm:$0xf]
  %v2682 = vld [vmem:[%s2667 + $0x54] sm:$0xff]
  %v2683 = vld [vmem:[%s2667 + $0x5c] sm:$0xf]
  %v2684 = vld [vmem:[%s2667 + $0x60] sm:$0xff]
  %v2685 = vld [vmem:[%s2667 + $0x68] sm:$0xf]
  %v2686 = vld [vmem:[%s2667 + $0x6c] sm:$0xff]
  %v2687 = vld [vmem:[%s2667 + $0x74] sm:$0xf]
  %v2688 = vld [vmem:[%s2667 + $0x78] sm:$0xff]
  %v2689 = vld [vmem:[%s2667 + $0x80] sm:$0xf]
  %v2690 = vld [vmem:[%s2667 + $0x84] sm:$0xff]
  %v2691 = vld [vmem:[%s2667 + $0x8c] sm:$0xf]
  %v2692 = vld [vmem:[%s2667 + $0x90] sm:$0xff]
  %v2693 = vld [vmem:[%s2667 + $0x98] sm:$0xf]
  %v2694 = vld [vmem:[%s2667 + $0x9c] sm:$0xff]
  %v2695 = vld [vmem:[%s2667 + $0xa4] sm:$0xf]
  %v2696 = vld [vmem:[%s2667 + $0xa8] sm:$0xff]
  %v2697 = vld [vmem:[%s2667 + $0xb0] sm:$0xf]
  %v2698 = vld [vmem:[%s2667 + $0xb4] sm:$0xff]
  %v2699 = vld [vmem:[%s2667 + $0xbc] sm:$0xf]
  %v2700 = vpack.c.bf16 %v2666, %v2665
  %s2701 = scalar_lea.vmem %s6, 3
  %v2702 = vld [vmem:[%s2701] sm:$0x7]
  %v2704 = vlaneseq
  %v2705 = vshrl.u32 %v2704, 7
  %v2706 = vsub.s32 0, %v2705
  %v2707 = vrot.slane %v2702, %v2706
  %v2708 = vlaneseq
  %v2709 = vshrl.u32 %v2708, 7
  %v2710 = vsub.s32 1, %v2709
  %v2711 = vrot.slane %v2702, %v2710
  %v2712 = vlaneseq
  %v2713 = vshrl.u32 %v2712, 7
  %v2714 = vsub.s32 2, %v2713
  %v2715 = vrot.slane %v2702, %v2714
  %v2751 = vunpack.c.l.b16 %v2668
  %v2752 = vunpack.c.h.b16 %v2668
  %v2753 = vunpack.c.l.b16 %v2669
  %v2754 = vunpack.c.l.b16 %v2670
  %v2755 = vunpack.c.h.b16 %v2670
  %v2756 = vunpack.c.l.b16 %v2671
  %v2757 = vunpack.c.l.b16 %v2672
  %v2758 = vunpack.c.h.b16 %v2672
  %v2759 = vunpack.c.l.b16 %v2673
  %v2760 = vunpack.c.l.b16 %v2674
  %v2761 = vunpack.c.h.b16 %v2674
  %v2762 = vunpack.c.l.b16 %v2675
  %v2763 = vunpack.c.l.b16 %v2676
  %v2764 = vunpack.c.h.b16 %v2676
  %v2765 = vunpack.c.l.b16 %v2677
  %v2766 = vunpack.c.l.b16 %v2678
  %v2767 = vunpack.c.h.b16 %v2678
  %v2768 = vunpack.c.l.b16 %v2679
  %v2769 = vunpack.c.l.b16 %v2680
  %v2770 = vunpack.c.h.b16 %v2680
  %v2771 = vunpack.c.l.b16 %v2681
  %v2772 = vunpack.c.l.b16 %v2682
  %v2773 = vunpack.c.h.b16 %v2682
  %v2774 = vunpack.c.l.b16 %v2683
  %v2775 = vunpack.c.l.b16 %v2684
  %v2776 = vunpack.c.h.b16 %v2684
  %v2777 = vunpack.c.l.b16 %v2685
  %v2778 = vunpack.c.l.b16 %v2686
  %v2779 = vunpack.c.h.b16 %v2686
  %v2780 = vunpack.c.l.b16 %v2687
  %v2781 = vunpack.c.l.b16 %v2688
  %v2782 = vunpack.c.h.b16 %v2688
  %v2783 = vunpack.c.l.b16 %v2689
  %v2784 = vunpack.c.l.b16 %v2690
  %v2785 = vunpack.c.h.b16 %v2690
  %v2786 = vunpack.c.l.b16 %v2691
  %v2787 = vunpack.c.l.b16 %v2692
  %v2788 = vunpack.c.h.b16 %v2692
  %v2789 = vunpack.c.l.b16 %v2693
  %v2790 = vunpack.c.l.b16 %v2694
  %v2791 = vunpack.c.h.b16 %v2694
  %v2792 = vunpack.c.l.b16 %v2695
  %v2793 = vunpack.c.l.b16 %v2696
  %v2794 = vunpack.c.h.b16 %v2696
  %v2795 = vunpack.c.l.b16 %v2697
  %v2796 = vunpack.c.l.b16 %v2698
  %v2797 = vunpack.c.h.b16 %v2698
  %v2798 = vunpack.c.l.b16 %v2699
  %v2799 = vpack.c.b16 %v2754, %v2751
  %v2800 = vpack.c.b16 %v2755, %v2752
  %v2801 = vpack.c.b16 %v2756, %v2753
  %v2802 = vpack.c.b16 %v2760, %v2757
  %v2803 = vpack.c.b16 %v2761, %v2758
  %v2804 = vpack.c.b16 %v2762, %v2759
  %v2805 = vpack.c.b16 %v2766, %v2763
  %v2806 = vpack.c.b16 %v2767, %v2764
  %v2807 = vpack.c.b16 %v2768, %v2765
  %v2808 = vpack.c.b16 %v2772, %v2769
  %v2809 = vpack.c.b16 %v2773, %v2770
  %v2810 = vpack.c.b16 %v2774, %v2771
  %v2811 = vpack.c.b16 %v2778, %v2775
  %v2812 = vpack.c.b16 %v2779, %v2776
  %v2813 = vpack.c.b16 %v2780, %v2777
  %v2814 = vpack.c.b16 %v2784, %v2781
  %v2815 = vpack.c.b16 %v2785, %v2782
  %v2816 = vpack.c.b16 %v2786, %v2783
  %v2817 = vpack.c.b16 %v2790, %v2787
  %v2818 = vpack.c.b16 %v2791, %v2788
  %v2819 = vpack.c.b16 %v2792, %v2789
  %v2820 = vpack.c.b16 %v2796, %v2793
  %v2821 = vpack.c.b16 %v2797, %v2794
  %v2822 = vpack.c.b16 %v2798, %v2795
  %2847 = vmatprep.subr.bf16.mxu0 %v2800
  %2848 = vmatpush1.bf16.msra.mxu0 %v2799
  %2849 = vmatprep.subr.bf16.mxu0 %v2803
  %2850 = vmatpush1.bf16.msra.mxu0 %v2802
  %2851 = vmatprep.subr.bf16.mxu0 %v2806
  %2852 = vmatpush1.bf16.msra.mxu0 %v2805
  %2853 = vmatprep.subr.bf16.mxu0 %v2809
  %2854 = vmatpush1.bf16.msra.mxu0 %v2808
  %2855 = vmatprep.subr.bf16.mxu0 %v2812
  %2856 = vmatpush1.bf16.msra.mxu0 %v2811
  %2857 = vmatprep.subr.bf16.mxu0 %v2815
  %2858 = vmatpush1.bf16.msra.mxu0 %v2814
  %2859 = vmatprep.subr.bf16.mxu0 %v2818
  %2860 = vmatpush1.bf16.msra.mxu0 %v2817
  %2861 = vmatprep.subr.bf16.mxu0 %v2821
  %2862 = vmatpush1.bf16.msra.mxu0 %v2820
  %2863 = vmatprep.subr.bf16.mxu0 0
  %2864 = vmatpush1.bf16.msra.mxu0 0
  %2865 = vmatprep.subr.bf16.mxu0 0
  %2866 = vmatpush1.bf16.msra.mxu0 0
  %2867 = vmatprep.subr.bf16.mxu0 0
  %2868 = vmatpush1.bf16.msra.mxu0 0
  %2869 = vmatprep.subr.bf16.mxu0 0
  %2870 = vmatpush1.bf16.msra.mxu0 0
  %2871 = vmatprep.subr.bf16.mxu0 0
  %2872 = vmatpush1.bf16.msra.mxu0 0
  %2873 = vmatprep.subr.bf16.mxu0 0
  %2874 = vmatpush1.bf16.msra.mxu0 0
  %2875 = vmatprep.subr.bf16.mxu0 0
  %2876 = vmatpush1.bf16.msra.mxu0 0
  %2877 = vmatprep.subr.bf16.mxu0 0
  %2878 = vmatpush1.bf16.msra.mxu0 0
  %2879 = vmatprep.mubr.bf16.mxu0 0
  %2880 = vmatmul.mubr.bf16.gmra.mrb[0].mxu0 %v2700
  %v2881 = vpop.f32.mrb[0].mxu0
  %v2882 = vadd.f32 %v2707, %v2881
  %v2883 = vpop.f32.mrb[0].mxu0
  %v2884 = vadd.f32 %v2711, %v2883
  %v2885 = vpop.f32.mrb[0].mxu0
  %v2886 = vadd.f32 %v2707, %v2885
  %v2887 = vpop.f32.mrb[0].mxu0
  %v2888 = vadd.f32 %v2711, %v2887
  %2889 = vdwg.mxu0
  %2890 = vmatprep.subr.bf16.mxu0 0
  %2891 = vmatpush1.bf16.msra.mxu0 %v2801
  %2892 = vmatprep.subr.bf16.mxu0 0
  %2893 = vmatpush1.bf16.msra.mxu0 %v2804
  %2894 = vmatprep.subr.bf16.mxu0 0
  %2895 = vmatpush1.bf16.msra.mxu0 %v2807
  %2896 = vmatprep.subr.bf16.mxu0 0
  %2897 = vmatpush1.bf16.msra.mxu0 %v2810
  %2898 = vmatprep.subr.bf16.mxu0 0
  %2899 = vmatpush1.bf16.msra.mxu0 %v2813
  %2900 = vmatprep.subr.bf16.mxu0 0
  %2901 = vmatpush1.bf16.msra.mxu0 %v2816
  %2902 = vmatprep.subr.bf16.mxu0 0
  %2903 = vmatpush1.bf16.msra.mxu0 %v2819
  %2904 = vmatprep.subr.bf16.mxu0 0
  %2905 = vmatpush1.bf16.msra.mxu0 %v2822
  %2906 = vmatprep.subr.bf16.mxu0 0
  %2907 = vmatpush1.bf16.msra.mxu0 0
  %2908 = vmatprep.subr.bf16.mxu0 0
  %2909 = vmatpush1.bf16.msra.mxu0 0
  %2910 = vmatprep.subr.bf16.mxu0 0
  %2911 = vmatpush1.bf16.msra.mxu0 0
  %2912 = vmatprep.subr.bf16.mxu0 0
  %2913 = vmatpush1.bf16.msra.mxu0 0
  %2914 = vmatprep.subr.bf16.mxu0 0
  %2915 = vmatpush1.bf16.msra.mxu0 0
  %2916 = vmatprep.subr.bf16.mxu0 0
  %2917 = vmatpush1.bf16.msra.mxu0 0
  %2918 = vmatprep.subr.bf16.mxu0 0
  %2919 = vmatpush1.bf16.msra.mxu0 0
  %2920 = vmatprep.subr.bf16.mxu0 0
  %2921 = vmatpush1.bf16.msra.mxu0 0
  %2922 = vmatprep.mubr.bf16.mxu0 0
  %2923 = vmatmul.mubr.bf16.gmra.mrb[0].mxu0 %v2700
  %v2924 = vpop.f32.mrb[0].mxu0
  %v2925 = vadd.f32 %v2715, %v2924
  %v2926 = vpop.f32.mrb[0].mxu0
  %v2927 = vpop.f32.mrb[0].mxu0
  %v2928 = vadd.f32 %v2715, %v2927
  %v2929 = vpop.f32.mrb[0].mxu0
  %2930 = vdwg.mxu0
  %2931 = vst [vmem:[#allocation4] sm:$0xff] %v2882
  %2932 = vst [vmem:[#allocation4 + $0x8] sm:$0xff] %v2884
  %2933 = vst [vmem:[#allocation4 + $0x10] sm:$0xff] %v2925
  %2934 = vst [vmem:[#allocation4 + $0x18] sm:$0xff] %v2886
  %2935 = vst [vmem:[#allocation4 + $0x20] sm:$0xff] %v2888
  %2936 = vst [vmem:[#allocation4 + $0x28] sm:$0xff] %v2928
  %s2937 = scalar_lea.vmem %s5, 384
  %v2938 = vld [vmem:[%s2937] sm:$0xff]
  %v2939 = vld [vmem:[%s2937 + $0x8] sm:$0xf]
  %v2940 = vld [vmem:[%s2937 + $0xc] sm:$0xff]
  %v2941 = vld [vmem:[%s2937 + $0x14] sm:$0xf]
  %v2942 = vld [vmem:[%s2937 + $0x18] sm:$0xff]
  %v2943 = vld [vmem:[%s2937 + $0x20] sm:$0xf]
  %v2944 = vld [vmem:[%s2937 + $0x24] sm:$0xff]
  %v2945 = vld [vmem:[%s2937 + $0x2c] sm:$0xf]
  %v2946 = vld [vmem:[%s2937 + $0x30] sm:$0xff]
  %v2947 = vld [vmem:[%s2937 + $0x38] sm:$0xf]
  %v2948 = vld [vmem:[%s2937 + $0x3c] sm:$0xff]
  %v2949 = vld [vmem:[%s2937 + $0x44] sm:$0xf]
  %v2950 = vld [vmem:[%s2937 + $0x48] sm:$0xff]
  %v2951 = vld [vmem:[%s2937 + $0x50] sm:$0xf]
  %v2952 = vld [vmem:[%s2937 + $0x54] sm:$0xff]
  %v2953 = vld [vmem:[%s2937 + $0x5c] sm:$0xf]
  %v2954 = vld [vmem:[%s2937 + $0x60] sm:$0xff]
  %v2955 = vld [vmem:[%s2937 + $0x68] sm:$0xf]
  %v2956 = vld [vmem:[%s2937 + $0x6c] sm:$0xff]
  %v2957 = vld [vmem:[%s2937 + $0x74] sm:$0xf]
  %v2958 = vld [vmem:[%s2937 + $0x78] sm:$0xff]
  %v2959 = vld [vmem:[%s2937 + $0x80] sm:$0xf]
  %v2960 = vld [vmem:[%s2937 + $0x84] sm:$0xff]
  %v2961 = vld [vmem:[%s2937 + $0x8c] sm:$0xf]
  %v2962 = vld [vmem:[%s2937 + $0x90] sm:$0xff]
  %v2963 = vld [vmem:[%s2937 + $0x98] sm:$0xf]
  %v2964 = vld [vmem:[%s2937 + $0x9c] sm:$0xff]
  %v2965 = vld [vmem:[%s2937 + $0xa4] sm:$0xf]
  %v2966 = vld [vmem:[%s2937 + $0xa8] sm:$0xff]
  %v2967 = vld [vmem:[%s2937 + $0xb0] sm:$0xf]
  %v2968 = vld [vmem:[%s2937 + $0xb4] sm:$0xff]
  %v2969 = vld [vmem:[%s2937 + $0xbc] sm:$0xf]
  %s2970 = scalar_lea.vmem %s6, 6
  %v2971 = vld [vmem:[%s2970] sm:$0x7]
  %v2973 = vlaneseq
  %v2974 = vshrl.u32 %v2973, 7
  %v2975 = vsub.s32 0, %v2974
  %v2976 = vrot.slane %v2971, %v2975
  %v2977 = vlaneseq
  %v2978 = vshrl.u32 %v2977, 7
  %v2979 = vsub.s32 1, %v2978
  %v2980 = vrot.slane %v2971, %v2979
  %v2981 = vlaneseq
  %v2982 = vshrl.u32 %v2981, 7
  %v2983 = vsub.s32 2, %v2982
  %v2984 = vrot.slane %v2971, %v2983
  %v3020 = vunpack.c.l.b16 %v2938
  %v3021 = vunpack.c.h.b16 %v2938
  %v3022 = vunpack.c.l.b16 %v2939
  %v3023 = vunpack.c.l.b16 %v2940
  %v3024 = vunpack.c.h.b16 %v2940
  %v3025 = vunpack.c.l.b16 %v2941
  %v3026 = vunpack.c.l.b16 %v2942
  %v3027 = vunpack.c.h.b16 %v2942
  %v3028 = vunpack.c.l.b16 %v2943
  %v3029 = vunpack.c.l.b16 %v2944
  %v3030 = vunpack.c.h.b16 %v2944
  %v3031 = vunpack.c.l.b16 %v2945
  %v3032 = vunpack.c.l.b16 %v2946
  %v3033 = vunpack.c.h.b16 %v2946
  %v3034 = vunpack.c.l.b16 %v2947
  %v3035 = vunpack.c.l.b16 %v2948
  %v3036 = vunpack.c.h.b16 %v2948
  %v3037 = vunpack.c.l.b16 %v2949
  %v3038 = vunpack.c.l.b16 %v2950
  %v3039 = vunpack.c.h.b16 %v2950
  %v3040 = vunpack.c.l.b16 %v2951
  %v3041 = vunpack.c.l.b16 %v2952
  %v3042 = vunpack.c.h.b16 %v2952
  %v3043 = vunpack.c.l.b16 %v2953
  %v3044 = vunpack.c.l.b16 %v2954
  %v3045 = vunpack.c.h.b16 %v2954
  %v3046 = vunpack.c.l.b16 %v2955
  %v3047 = vunpack.c.l.b16 %v2956
  %v3048 = vunpack.c.h.b16 %v2956
  %v3049 = vunpack.c.l.b16 %v2957
  %v3050 = vunpack.c.l.b16 %v2958
  %v3051 = vunpack.c.h.b16 %v2958
  %v3052 = vunpack.c.l.b16 %v2959
  %v3053 = vunpack.c.l.b16 %v2960
  %v3054 = vunpack.c.h.b16 %v2960
  %v3055 = vunpack.c.l.b16 %v2961
  %v3056 = vunpack.c.l.b16 %v2962
  %v3057 = vunpack.c.h.b16 %v2962
  %v3058 = vunpack.c.l.b16 %v2963
  %v3059 = vunpack.c.l.b16 %v2964
  %v3060 = vunpack.c.h.b16 %v2964
  %v3061 = vunpack.c.l.b16 %v2965
  %v3062 = vunpack.c.l.b16 %v2966
  %v3063 = vunpack.c.h.b16 %v2966
  %v3064 = vunpack.c.l.b16 %v2967
  %v3065 = vunpack.c.l.b16 %v2968
  %v3066 = vunpack.c.h.b16 %v2968
  %v3067 = vunpack.c.l.b16 %v2969
  %v3068 = vpack.c.b16 %v3023, %v3020
  %v3069 = vpack.c.b16 %v3024, %v3021
  %v3070 = vpack.c.b16 %v3025, %v3022
  %v3071 = vpack.c.b16 %v3029, %v3026
  %v3072 = vpack.c.b16 %v3030, %v3027
  %v3073 = vpack.c.b16 %v3031, %v3028
  %v3074 = vpack.c.b16 %v3035, %v3032
  %v3075 = vpack.c.b16 %v3036, %v3033
  %v3076 = vpack.c.b16 %v3037, %v3034
  %v3077 = vpack.c.b16 %v3041, %v3038
  %v3078 = vpack.c.b16 %v3042, %v3039
  %v3079 = vpack.c.b16 %v3043, %v3040
  %v3080 = vpack.c.b16 %v3047, %v3044
  %v3081 = vpack.c.b16 %v3048, %v3045
  %v3082 = vpack.c.b16 %v3049, %v3046
  %v3083 = vpack.c.b16 %v3053, %v3050
  %v3084 = vpack.c.b16 %v3054, %v3051
  %v3085 = vpack.c.b16 %v3055, %v3052
  %v3086 = vpack.c.b16 %v3059, %v3056
  %v3087 = vpack.c.b16 %v3060, %v3057
  %v3088 = vpack.c.b16 %v3061, %v3058
  %v3089 = vpack.c.b16 %v3065, %v3062
  %v3090 = vpack.c.b16 %v3066, %v3063
  %v3091 = vpack.c.b16 %v3067, %v3064
  %3116 = vmatprep.subr.bf16.mxu0 %v3069
  %3117 = vmatpush1.bf16.msra.mxu0 %v3068
  %3118 = vmatprep.subr.bf16.mxu0 %v3072
  %3119 = vmatpush1.bf16.msra.mxu0 %v3071
  %3120 = vmatprep.subr.bf16.mxu0 %v3075
  %3121 = vmatpush1.bf16.msra.mxu0 %v3074
  %3122 = vmatprep.subr.bf16.mxu0 %v3078
  %3123 = vmatpush1.bf16.msra.mxu0 %v3077
  %3124 = vmatprep.subr.bf16.mxu0 %v3081
  %3125 = vmatpush1.bf16.msra.mxu0 %v3080
  %3126 = vmatprep.subr.bf16.mxu0 %v3084
  %3127 = vmatpush1.bf16.msra.mxu0 %v3083
  %3128 = vmatprep.subr.bf16.mxu0 %v3087
  %3129 = vmatpush1.bf16.msra.mxu0 %v3086
  %3130 = vmatprep.subr.bf16.mxu0 %v3090
  %3131 = vmatpush1.bf16.msra.mxu0 %v3089
  %3132 = vmatprep.subr.bf16.mxu0 0
  %3133 = vmatpush1.bf16.msra.mxu0 0
  %3134 = vmatprep.subr.bf16.mxu0 0
  %3135 = vmatpush1.bf16.msra.mxu0 0
  %3136 = vmatprep.subr.bf16.mxu0 0
  %3137 = vmatpush1.bf16.msra.mxu0 0
  %3138 = vmatprep.subr.bf16.mxu0 0
  %3139 = vmatpush1.bf16.msra.mxu0 0
  %3140 = vmatprep.subr.bf16.mxu0 0
  %3141 = vmatpush1.bf16.msra.mxu0 0
  %3142 = vmatprep.subr.bf16.mxu0 0
  %3143 = vmatpush1.bf16.msra.mxu0 0
  %3144 = vmatprep.subr.bf16.mxu0 0
  %3145 = vmatpush1.bf16.msra.mxu0 0
  %3146 = vmatprep.subr.bf16.mxu0 0
  %3147 = vmatpush1.bf16.msra.mxu0 0
  %3148 = vmatprep.mubr.bf16.mxu0 0
  %3149 = vmatmul.mubr.bf16.gmra.mrb[0].mxu0 0
  %v3150 = vpop.f32.mrb[0].mxu0
  %v3151 = vadd.f32 %v2976, %v3150
  %v3152 = vpop.f32.mrb[0].mxu0
  %v3153 = vadd.f32 %v2980, %v3152
  %v3154 = vpop.f32.mrb[0].mxu0
  %v3155 = vpop.f32.mrb[0].mxu0
  %3156 = vdwg.mxu0
  %3157 = vmatprep.subr.bf16.mxu0 0
  %3158 = vmatpush1.bf16.msra.mxu0 %v3070
  %3159 = vmatprep.subr.bf16.mxu0 0
  %3160 = vmatpush1.bf16.msra.mxu0 %v3073
  %3161 = vmatprep.subr.bf16.mxu0 0
  %3162 = vmatpush1.bf16.msra.mxu0 %v3076
  %3163 = vmatprep.subr.bf16.mxu0 0
  %3164 = vmatpush1.bf16.msra.mxu0 %v3079
  %3165 = vmatprep.subr.bf16.mxu0 0
  %3166 = vmatpush1.bf16.msra.mxu0 %v3082
  %3167 = vmatprep.subr.bf16.mxu0 0
  %3168 = vmatpush1.bf16.msra.mxu0 %v3085
  %3169 = vmatprep.subr.bf16.mxu0 0
  %3170 = vmatpush1.bf16.msra.mxu0 %v3088
  %3171 = vmatprep.subr.bf16.mxu0 0
  %3172 = vmatpush1.bf16.msra.mxu0 %v3091
  %3173 = vmatprep.subr.bf16.mxu0 0
  %3174 = vmatpush1.bf16.msra.mxu0 0
  %3175 = vmatprep.subr.bf16.mxu0 0
  %3176 = vmatpush1.bf16.msra.mxu0 0
  %3177 = vmatprep.subr.bf16.mxu0 0
  %3178 = vmatpush1.bf16.msra.mxu0 0
  %3179 = vmatprep.subr.bf16.mxu0 0
  %3180 = vmatpush1.bf16.msra.mxu0 0
  %3181 = vmatprep.subr.bf16.mxu0 0
  %3182 = vmatpush1.bf16.msra.mxu0 0
  %3183 = vmatprep.subr.bf16.mxu0 0
  %3184 = vmatpush1.bf16.msra.mxu0 0
  %3185 = vmatprep.subr.bf16.mxu0 0
  %3186 = vmatpush1.bf16.msra.mxu0 0
  %3187 = vmatprep.subr.bf16.mxu0 0
  %3188 = vmatpush1.bf16.msra.mxu0 0
  %3189 = vmatprep.mubr.bf16.mxu0 0
  %3190 = vmatmul.mubr.bf16.gmra.mrb[0].mxu0 0
  %v3191 = vpop.f32.mrb[0].mxu0
  %v3192 = vadd.f32 %v2984, %v3191
  %v3193 = vpop.f32.mrb[0].mxu0
  %v3194 = vpop.f32.mrb[0].mxu0
  %v3195 = vpop.f32.mrb[0].mxu0
  %3196 = vdwg.mxu0
  %v3197 = vld [vmem:[#allocation4] sm:$0x3]
  %v3198 = vld [vmem:[#allocation4 + $0x8] sm:$0x3]
  %v3199 = vld [vmem:[#allocation4 + $0x10] sm:$0x3]
  %v3200 = vadd.f32 %v3197, %v3151
  %v3201 = vxor.u32 %v3200, 2147483648
  %v3202 = vmul.f32 %v3201, 1.442695
  %v3203 = vpow.pop %v3202
  %v3204 = vadd.f32 %v3203, 1.0
  %v3205 = vrcp.pop %v3204
  %v3206 = vmul.f32 1.0, %v3205
  %v3207 = vadd.f32 %v3198, %v3153
  %v3208 = vxor.u32 %v3207, 2147483648
  %v3209 = vmul.f32 %v3208, 1.442695
  %v3210 = vpow.pop %v3209
  %v3211 = vadd.f32 %v3210, 1.0
  %v3212 = vrcp.pop %v3211
  %v3213 = vmul.f32 1.0, %v3212
  %v3214 = vmul.f32 %v3206, %v3192
  %v3215 = vadd.f32 %v3199, %v3214
  %v3216 = vtanh.pop %v3215
  %v3217 = vsub.f32 1.0, %v3213
  %v3218 = vmul.f32 %v3217, %v3216
  %v3219 = vmul.f32 %v3213, 0.0
  %v3220 = vadd.f32 %v3218, %v3219
  %3221 = vst [vmem:[#allocation5] sm:$0x3] %v3220
  %v3222 = vld [vmem:[%s2937] sm:$0xff]
  %v3223 = vld [vmem:[%s2937 + $0x8] sm:$0xf]
  %v3224 = vld [vmem:[%s2937 + $0xc] sm:$0xff]
  %v3225 = vld [vmem:[%s2937 + $0x14] sm:$0xf]
  %v3226 = vld [vmem:[%s2937 + $0x18] sm:$0xff]
  %v3227 = vld [vmem:[%s2937 + $0x20] sm:$0xf]
  %v3228 = vld [vmem:[%s2937 + $0x24] sm:$0xff]
  %v3229 = vld [vmem:[%s2937 + $0x2c] sm:$0xf]
  %v3230 = vld [vmem:[%s2937 + $0x30] sm:$0xff]
  %v3231 = vld [vmem:[%s2937 + $0x38] sm:$0xf]
  %v3232 = vld [vmem:[%s2937 + $0x3c] sm:$0xff]
  %v3233 = vld [vmem:[%s2937 + $0x44] sm:$0xf]
  %v3234 = vld [vmem:[%s2937 + $0x48] sm:$0xff]
  %v3235 = vld [vmem:[%s2937 + $0x50] sm:$0xf]
  %v3236 = vld [vmem:[%s2937 + $0x54] sm:$0xff]
  %v3237 = vld [vmem:[%s2937 + $0x5c] sm:$0xf]
  %v3238 = vld [vmem:[%s2937 + $0x60] sm:$0xff]
  %v3239 = vld [vmem:[%s2937 + $0x68] sm:$0xf]
  %v3240 = vld [vmem:[%s2937 + $0x6c] sm:$0xff]
  %v3241 = vld [vmem:[%s2937 + $0x74] sm:$0xf]
  %v3242 = vld [vmem:[%s2937 + $0x78] sm:$0xff]
  %v3243 = vld [vmem:[%s2937 + $0x80] sm:$0xf]
  %v3244 = vld [vmem:[%s2937 + $0x84] sm:$0xff]
  %v3245 = vld [vmem:[%s2937 + $0x8c] sm:$0xf]
  %v3246 = vld [vmem:[%s2937 + $0x90] sm:$0xff]
  %v3247 = vld [vmem:[%s2937 + $0x98] sm:$0xf]
  %v3248 = vld [vmem:[%s2937 + $0x9c] sm:$0xff]
  %v3249 = vld [vmem:[%s2937 + $0xa4] sm:$0xf]
  %v3250 = vld [vmem:[%s2937 + $0xa8] sm:$0xff]
  %v3251 = vld [vmem:[%s2937 + $0xb0] sm:$0xf]
  %v3252 = vld [vmem:[%s2937 + $0xb4] sm:$0xff]
  %v3253 = vld [vmem:[%s2937 + $0xbc] sm:$0xf]
  %v3254 = vpack.c.bf16 %v3220, %v3220
  %v3255 = vld [vmem:[%s2970] sm:$0x7]
  %v3257 = vlaneseq
  %v3258 = vshrl.u32 %v3257, 7
  %v3259 = vsub.s32 0, %v3258
  %v3260 = vrot.slane %v3255, %v3259
  %v3261 = vlaneseq
  %v3262 = vshrl.u32 %v3261, 7
  %v3263 = vsub.s32 1, %v3262
  %v3264 = vrot.slane %v3255, %v3263
  %v3265 = vlaneseq
  %v3266 = vshrl.u32 %v3265, 7
  %v3267 = vsub.s32 2, %v3266
  %v3268 = vrot.slane %v3255, %v3267
  %v3304 = vunpack.c.l.b16 %v3222
  %v3305 = vunpack.c.h.b16 %v3222
  %v3306 = vunpack.c.l.b16 %v3223
  %v3307 = vunpack.c.l.b16 %v3224
  %v3308 = vunpack.c.h.b16 %v3224
  %v3309 = vunpack.c.l.b16 %v3225
  %v3310 = vunpack.c.l.b16 %v3226
  %v3311 = vunpack.c.h.b16 %v3226
  %v3312 = vunpack.c.l.b16 %v3227
  %v3313 = vunpack.c.l.b16 %v3228
  %v3314 = vunpack.c.h.b16 %v3228
  %v3315 = vunpack.c.l.b16 %v3229
  %v3316 = vunpack.c.l.b16 %v3230
  %v3317 = vunpack.c.h.b16 %v3230
  %v3318 = vunpack.c.l.b16 %v3231
  %v3319 = vunpack.c.l.b16 %v3232
  %v3320 = vunpack.c.h.b16 %v3232
  %v3321 = vunpack.c.l.b16 %v3233
  %v3322 = vunpack.c.l.b16 %v3234
  %v3323 = vunpack.c.h.b16 %v3234
  %v3324 = vunpack.c.l.b16 %v3235
  %v3325 = vunpack.c.l.b16 %v3236
  %v3326 = vunpack.c.h.b16 %v3236
  %v3327 = vunpack.c.l.b16 %v3237
  %v3328 = vunpack.c.l.b16 %v3238
  %v3329 = vunpack.c.h.b16 %v3238
  %v3330 = vunpack.c.l.b16 %v3239
  %v3331 = vunpack.c.l.b16 %v3240
  %v3332 = vunpack.c.h.b16 %v3240
  %v3333 = vunpack.c.l.b16 %v3241
  %v3334 = vunpack.c.l.b16 %v3242
  %v3335 = vunpack.c.h.b16 %v3242
  %v3336 = vunpack.c.l.b16 %v3243
  %v3337 = vunpack.c.l.b16 %v3244
  %v3338 = vunpack.c.h.b16 %v3244
  %v3339 = vunpack.c.l.b16 %v3245
  %v3340 = vunpack.c.l.b16 %v3246
  %v3341 = vunpack.c.h.b16 %v3246
  %v3342 = vunpack.c.l.b16 %v3247
  %v3343 = vunpack.c.l.b16 %v3248
  %v3344 = vunpack.c.h.b16 %v3248
  %v3345 = vunpack.c.l.b16 %v3249
  %v3346 = vunpack.c.l.b16 %v3250
  %v3347 = vunpack.c.h.b16 %v3250
  %v3348 = vunpack.c.l.b16 %v3251
  %v3349 = vunpack.c.l.b16 %v3252
  %v3350 = vunpack.c.h.b16 %v3252
  %v3351 = vunpack.c.l.b16 %v3253
  %v3352 = vpack.c.b16 %v3307, %v3304
  %v3353 = vpack.c.b16 %v3308, %v3305
  %v3354 = vpack.c.b16 %v3309, %v3306
  %v3355 = vpack.c.b16 %v3313, %v3310
  %v3356 = vpack.c.b16 %v3314, %v3311
  %v3357 = vpack.c.b16 %v3315, %v3312
  %v3358 = vpack.c.b16 %v3319, %v3316
  %v3359 = vpack.c.b16 %v3320, %v3317
  %v3360 = vpack.c.b16 %v3321, %v3318
  %v3361 = vpack.c.b16 %v3325, %v3322
  %v3362 = vpack.c.b16 %v3326, %v3323
  %v3363 = vpack.c.b16 %v3327, %v3324
  %v3364 = vpack.c.b16 %v3331, %v3328
  %v3365 = vpack.c.b16 %v3332, %v3329
  %v3366 = vpack.c.b16 %v3333, %v3330
  %v3367 = vpack.c.b16 %v3337, %v3334
  %v3368 = vpack.c.b16 %v3338, %v3335
  %v3369 = vpack.c.b16 %v3339, %v3336
  %v3370 = vpack.c.b16 %v3343, %v3340
  %v3371 = vpack.c.b16 %v3344, %v3341
  %v3372 = vpack.c.b16 %v3345, %v3342
  %v3373 = vpack.c.b16 %v3349, %v3346
  %v3374 = vpack.c.b16 %v3350, %v3347
  %v3375 = vpack.c.b16 %v3351, %v3348
  %3400 = vmatprep.subr.bf16.mxu0 %v3353
  %3401 = vmatpush1.bf16.msra.mxu0 %v3352
  %3402 = vmatprep.subr.bf16.mxu0 %v3356
  %3403 = vmatpush1.bf16.msra.mxu0 %v3355
  %3404 = vmatprep.subr.bf16.mxu0 %v3359
  %3405 = vmatpush1.bf16.msra.mxu0 %v3358
  %3406 = vmatprep.subr.bf16.mxu0 %v3362
  %3407 = vmatpush1.bf16.msra.mxu0 %v3361
  %3408 = vmatprep.subr.bf16.mxu0 %v3365
  %3409 = vmatpush1.bf16.msra.mxu0 %v3364
  %3410 = vmatprep.subr.bf16.mxu0 %v3368
  %3411 = vmatpush1.bf16.msra.mxu0 %v3367
  %3412 = vmatprep.subr.bf16.mxu0 %v3371
  %3413 = vmatpush1.bf16.msra.mxu0 %v3370
  %3414 = vmatprep.subr.bf16.mxu0 %v3374
  %3415 = vmatpush1.bf16.msra.mxu0 %v3373
  %3416 = vmatprep.subr.bf16.mxu0 0
  %3417 = vmatpush1.bf16.msra.mxu0 0
  %3418 = vmatprep.subr.bf16.mxu0 0
  %3419 = vmatpush1.bf16.msra.mxu0 0
  %3420 = vmatprep.subr.bf16.mxu0 0
  %3421 = vmatpush1.bf16.msra.mxu0 0
  %3422 = vmatprep.subr.bf16.mxu0 0
  %3423 = vmatpush1.bf16.msra.mxu0 0
  %3424 = vmatprep.subr.bf16.mxu0 0
  %3425 = vmatpush1.bf16.msra.mxu0 0
  %3426 = vmatprep.subr.bf16.mxu0 0
  %3427 = vmatpush1.bf16.msra.mxu0 0
  %3428 = vmatprep.subr.bf16.mxu0 0
  %3429 = vmatpush1.bf16.msra.mxu0 0
  %3430 = vmatprep.subr.bf16.mxu0 0
  %3431 = vmatpush1.bf16.msra.mxu0 0
  %3432 = vmatprep.mubr.bf16.mxu0 0
  %3433 = vmatmul.mubr.bf16.gmra.mrb[0].mxu0 %v3254
  %v3434 = vpop.f32.mrb[0].mxu0
  %v3435 = vadd.f32 %v3260, %v3434
  %v3436 = vpop.f32.mrb[0].mxu0
  %v3437 = vadd.f32 %v3264, %v3436
  %v3438 = vpop.f32.mrb[0].mxu0
  %v3439 = vpop.f32.mrb[0].mxu0
  %3440 = vdwg.mxu0
  %3441 = vmatprep.subr.bf16.mxu0 0
  %3442 = vmatpush1.bf16.msra.mxu0 %v3354
  %3443 = vmatprep.subr.bf16.mxu0 0
  %3444 = vmatpush1.bf16.msra.mxu0 %v3357
  %3445 = vmatprep.subr.bf16.mxu0 0
  %3446 = vmatpush1.bf16.msra.mxu0 %v3360
  %3447 = vmatprep.subr.bf16.mxu0 0
  %3448 = vmatpush1.bf16.msra.mxu0 %v3363
  %3449 = vmatprep.subr.bf16.mxu0 0
  %3450 = vmatpush1.bf16.msra.mxu0 %v3366
  %3451 = vmatprep.subr.bf16.mxu0 0
  %3452 = vmatpush1.bf16.msra.mxu0 %v3369
  %3453 = vmatprep.subr.bf16.mxu0 0
  %3454 = vmatpush1.bf16.msra.mxu0 %v3372
  %3455 = vmatprep.subr.bf16.mxu0 0
  %3456 = vmatpush1.bf16.msra.mxu0 %v3375
  %3457 = vmatprep.subr.bf16.mxu0 0
  %3458 = vmatpush1.bf16.msra.mxu0 0
  %3459 = vmatprep.subr.bf16.mxu0 0
  %3460 = vmatpush1.bf16.msra.mxu0 0
  %3461 = vmatprep.subr.bf16.mxu0 0
  %3462 = vmatpush1.bf16.msra.mxu0 0
  %3463 = vmatprep.subr.bf16.mxu0 0
  %3464 = vmatpush1.bf16.msra.mxu0 0
  %3465 = vmatprep.subr.bf16.mxu0 0
  %3466 = vmatpush1.bf16.msra.mxu0 0
  %3467 = vmatprep.subr.bf16.mxu0 0
  %3468 = vmatpush1.bf16.msra.mxu0 0
  %3469 = vmatprep.subr.bf16.mxu0 0
  %3470 = vmatpush1.bf16.msra.mxu0 0
  %3471 = vmatprep.subr.bf16.mxu0 0
  %3472 = vmatpush1.bf16.msra.mxu0 0
  %3473 = vmatprep.mubr.bf16.mxu0 0
  %3474 = vmatmul.mubr.bf16.gmra.mrb[0].mxu0 %v3254
  %v3475 = vpop.f32.mrb[0].mxu0
  %v3476 = vadd.f32 %v3268, %v3475
  %v3477 = vpop.f32.mrb[0].mxu0
  %v3478 = vpop.f32.mrb[0].mxu0
  %v3479 = vpop.f32.mrb[0].mxu0
  %3480 = vdwg.mxu0
  %v3481 = vld [vmem:[#allocation4] sm:$0xc]
  %v3482 = vld [vmem:[#allocation4 + $0x8] sm:$0xc]
  %v3483 = vld [vmem:[#allocation4 + $0x10] sm:$0xc]
  %v3485 = vrot.slane %v3435, 6
  %v3487 = vadd.f32 %v3481, %v3485
  %v3488 = vxor.u32 %v3487, 2147483648
  %v3489 = vmul.f32 %v3488, 1.442695
  %v3490 = vpow.pop %v3489
  %v3491 = vadd.f32 %v3490, 1.0
  %v3492 = vrcp.pop %v3491
  %v3493 = vmul.f32 1.0, %v3492
  %v3495 = vrot.slane %v3437, 6
  %v3497 = vadd.f32 %v3482, %v3495
  %v3498 = vxor.u32 %v3497, 2147483648
  %v3499 = vmul.f32 %v3498, 1.442695
  %v3500 = vpow.pop %v3499
  %v3501 = vadd.f32 %v3500, 1.0
  %v3502 = vrcp.pop %v3501
  %v3503 = vmul.f32 1.0, %v3502
  %v3505 = vrot.slane %v3476, 6
  %v3507 = vmul.f32 %v3493, %v3505
  %v3508 = vadd.f32 %v3483, %v3507
  %v3509 = vtanh.pop %v3508
  %v3510 = vsub.f32 1.0, %v3503
  %v3511 = vmul.f32 %v3510, %v3509
  %v3513 = vrot.slane %v3220, 6
  %v3515 = vmul.f32 %v3503, %v3513
  %v3516 = vadd.f32 %v3511, %v3515
  %3517 = vst [vmem:[#allocation5] sm:$0xc] %v3516
  %v3518 = vld [vmem:[%s2937] sm:$0xff]
  %v3519 = vld [vmem:[%s2937 + $0x8] sm:$0xf]
  %v3520 = vld [vmem:[%s2937 + $0xc] sm:$0xff]
  %v3521 = vld [vmem:[%s2937 + $0x14] sm:$0xf]
  %v3522 = vld [vmem:[%s2937 + $0x18] sm:$0xff]
  %v3523 = vld [vmem:[%s2937 + $0x20] sm:$0xf]
  %v3524 = vld [vmem:[%s2937 + $0x24] sm:$0xff]
  %v3525 = vld [vmem:[%s2937 + $0x2c] sm:$0xf]
  %v3526 = vld [vmem:[%s2937 + $0x30] sm:$0xff]
  %v3527 = vld [vmem:[%s2937 + $0x38] sm:$0xf]
  %v3528 = vld [vmem:[%s2937 + $0x3c] sm:$0xff]
  %v3529 = vld [vmem:[%s2937 + $0x44] sm:$0xf]
  %v3530 = vld [vmem:[%s2937 + $0x48] sm:$0xff]
  %v3531 = vld [vmem:[%s2937 + $0x50] sm:$0xf]
  %v3532 = vld [vmem:[%s2937 + $0x54] sm:$0xff]
  %v3533 = vld [vmem:[%s2937 + $0x5c] sm:$0xf]
  %v3534 = vld [vmem:[%s2937 + $0x60] sm:$0xff]
  %v3535 = vld [vmem:[%s2937 + $0x68] sm:$0xf]
  %v3536 = vld [vmem:[%s2937 + $0x6c] sm:$0xff]
  %v3537 = vld [vmem:[%s2937 + $0x74] sm:$0xf]
  %v3538 = vld [vmem:[%s2937 + $0x78] sm:$0xff]
  %v3539 = vld [vmem:[%s2937 + $0x80] sm:$0xf]
  %v3540 = vld [vmem:[%s2937 + $0x84] sm:$0xff]
  %v3541 = vld [vmem:[%s2937 + $0x8c] sm:$0xf]
  %v3542 = vld [vmem:[%s2937 + $0x90] sm:$0xff]
  %v3543 = vld [vmem:[%s2937 + $0x98] sm:$0xf]
  %v3544 = vld [vmem:[%s2937 + $0x9c] sm:$0xff]
  %v3545 = vld [vmem:[%s2937 + $0xa4] sm:$0xf]
  %v3546 = vld [vmem:[%s2937 + $0xa8] sm:$0xff]
  %v3547 = vld [vmem:[%s2937 + $0xb0] sm:$0xf]
  %v3548 = vld [vmem:[%s2937 + $0xb4] sm:$0xff]
  %v3549 = vld [vmem:[%s2937 + $0xbc] sm:$0xf]
  %v3550 = vpack.c.bf16 %v3516, %v3516
  %v3551 = vld [vmem:[%s2970] sm:$0x7]
  %v3553 = vlaneseq
  %v3554 = vshrl.u32 %v3553, 7
  %v3555 = vsub.s32 0, %v3554
  %v3556 = vrot.slane %v3551, %v3555
  %v3557 = vlaneseq
  %v3558 = vshrl.u32 %v3557, 7
  %v3559 = vsub.s32 1, %v3558
  %v3560 = vrot.slane %v3551, %v3559
  %v3561 = vlaneseq
  %v3562 = vshrl.u32 %v3561, 7
  %v3563 = vsub.s32 2, %v3562
  %v3564 = vrot.slane %v3551, %v3563
  %v3569 = vrot.slane %v3550, 1
  %v3603 = vunpack.c.l.b16 %v3518
  %v3604 = vunpack.c.h.b16 %v3518
  %v3605 = vunpack.c.l.b16 %v3519
  %v3606 = vunpack.c.l.b16 %v3520
  %v3607 = vunpack.c.h.b16 %v3520
  %v3608 = vunpack.c.l.b16 %v3521
  %v3609 = vunpack.c.l.b16 %v3522
  %v3610 = vunpack.c.h.b16 %v3522
  %v3611 = vunpack.c.l.b16 %v3523
  %v3612 = vunpack.c.l.b16 %v3524
  %v3613 = vunpack.c.h.b16 %v3524
  %v3614 = vunpack.c.l.b16 %v3525
  %v3615 = vunpack.c.l.b16 %v3526
  %v3616 = vunpack.c.h.b16 %v3526
  %v3617 = vunpack.c.l.b16 %v3527
  %v3618 = vunpack.c.l.b16 %v3528
  %v3619 = vunpack.c.h.b16 %v3528
  %v3620 = vunpack.c.l.b16 %v3529
  %v3621 = vunpack.c.l.b16 %v3530
  %v3622 = vunpack.c.h.b16 %v3530
  %v3623 = vunpack.c.l.b16 %v3531
  %v3624 = vunpack.c.l.b16 %v3532
  %v3625 = vunpack.c.h.b16 %v3532
  %v3626 = vunpack.c.l.b16 %v3533
  %v3627 = vunpack.c.l.b16 %v3534
  %v3628 = vunpack.c.h.b16 %v3534
  %v3629 = vunpack.c.l.b16 %v3535
  %v3630 = vunpack.c.l.b16 %v3536
  %v3631 = vunpack.c.h.b16 %v3536
  %v3632 = vunpack.c.l.b16 %v3537
  %v3633 = vunpack.c.l.b16 %v3538
  %v3634 = vunpack.c.h.b16 %v3538
  %v3635 = vunpack.c.l.b16 %v3539
  %v3636 = vunpack.c.l.b16 %v3540
  %v3637 = vunpack.c.h.b16 %v3540
  %v3638 = vunpack.c.l.b16 %v3541
  %v3639 = vunpack.c.l.b16 %v3542
  %v3640 = vunpack.c.h.b16 %v3542
  %v3641 = vunpack.c.l.b16 %v3543
  %v3642 = vunpack.c.l.b16 %v3544
  %v3643 = vunpack.c.h.b16 %v3544
  %v3644 = vunpack.c.l.b16 %v3545
  %v3645 = vunpack.c.l.b16 %v3546
  %v3646 = vunpack.c.h.b16 %v3546
  %v3647 = vunpack.c.l.b16 %v3547
  %v3648 = vunpack.c.l.b16 %v3548
  %v3649 = vunpack.c.h.b16 %v3548
  %v3650 = vunpack.c.l.b16 %v3549
  %v3651 = vpack.c.b16 %v3606, %v3603
  %v3652 = vpack.c.b16 %v3607, %v3604
  %v3653 = vpack.c.b16 %v3608, %v3605
  %v3654 = vpack.c.b16 %v3612, %v3609
  %v3655 = vpack.c.b16 %v3613, %v3610
  %v3656 = vpack.c.b16 %v3614, %v3611
  %v3657 = vpack.c.b16 %v3618, %v3615
  %v3658 = vpack.c.b16 %v3619, %v3616
  %v3659 = vpack.c.b16 %v3620, %v3617
  %v3660 = vpack.c.b16 %v3624, %v3621
  %v3661 = vpack.c.b16 %v3625, %v3622
  %v3662 = vpack.c.b16 %v3626, %v3623
  %v3663 = vpack.c.b16 %v3630, %v3627
  %v3664 = vpack.c.b16 %v3631, %v3628
  %v3665 = vpack.c.b16 %v3632, %v3629
  %v3666 = vpack.c.b16 %v3636, %v3633
  %v3667 = vpack.c.b16 %v3637, %v3634
  %v3668 = vpack.c.b16 %v3638, %v3635
  %v3669 = vpack.c.b16 %v3642, %v3639
  %v3670 = vpack.c.b16 %v3643, %v3640
  %v3671 = vpack.c.b16 %v3644, %v3641
  %v3672 = vpack.c.b16 %v3648, %v3645
  %v3673 = vpack.c.b16 %v3649, %v3646
  %v3674 = vpack.c.b16 %v3650, %v3647
  %3699 = vmatprep.subr.bf16.mxu0 %v3652
  %3700 = vmatpush1.bf16.msra.mxu0 %v3651
  %3701 = vmatprep.subr.bf16.mxu0 %v3655
  %3702 = vmatpush1.bf16.msra.mxu0 %v3654
  %3703 = vmatprep.subr.bf16.mxu0 %v3658
  %3704 = vmatpush1.bf16.msra.mxu0 %v3657
  %3705 = vmatprep.subr.bf16.mxu0 %v3661
  %3706 = vmatpush1.bf16.msra.mxu0 %v3660
  %3707 = vmatprep.subr.bf16.mxu0 %v3664
  %3708 = vmatpush1.bf16.msra.mxu0 %v3663
  %3709 = vmatprep.subr.bf16.mxu0 %v3667
  %3710 = vmatpush1.bf16.msra.mxu0 %v3666
  %3711 = vmatprep.subr.bf16.mxu0 %v3670
  %3712 = vmatpush1.bf16.msra.mxu0 %v3669
  %3713 = vmatprep.subr.bf16.mxu0 %v3673
  %3714 = vmatpush1.bf16.msra.mxu0 %v3672
  %3715 = vmatprep.subr.bf16.mxu0 0
  %3716 = vmatpush1.bf16.msra.mxu0 0
  %3717 = vmatprep.subr.bf16.mxu0 0
  %3718 = vmatpush1.bf16.msra.mxu0 0
  %3719 = vmatprep.subr.bf16.mxu0 0
  %3720 = vmatpush1.bf16.msra.mxu0 0
  %3721 = vmatprep.subr.bf16.mxu0 0
  %3722 = vmatpush1.bf16.msra.mxu0 0
  %3723 = vmatprep.subr.bf16.mxu0 0
  %3724 = vmatpush1.bf16.msra.mxu0 0
  %3725 = vmatprep.subr.bf16.mxu0 0
  %3726 = vmatpush1.bf16.msra.mxu0 0
  %3727 = vmatprep.subr.bf16.mxu0 0
  %3728 = vmatpush1.bf16.msra.mxu0 0
  %3729 = vmatprep.subr.bf16.mxu0 0
  %3730 = vmatpush1.bf16.msra.mxu0 0
  %3731 = vmatprep.mubr.bf16.mxu0 0
  %3732 = vmatmul.mubr.bf16.gmra.mrb[0].mxu0 %v3569
  %v3733 = vpop.f32.mrb[0].mxu0
  %v3734 = vadd.f32 %v3556, %v3733
  %v3735 = vpop.f32.mrb[0].mxu0
  %v3736 = vadd.f32 %v3560, %v3735
  %v3737 = vpop.f32.mrb[0].mxu0
  %v3738 = vpop.f32.mrb[0].mxu0
  %3739 = vdwg.mxu0
  %3740 = vmatprep.subr.bf16.mxu0 0
  %3741 = vmatpush1.bf16.msra.mxu0 %v3653
  %3742 = vmatprep.subr.bf16.mxu0 0
  %3743 = vmatpush1.bf16.msra.mxu0 %v3656
  %3744 = vmatprep.subr.bf16.mxu0 0
  %3745 = vmatpush1.bf16.msra.mxu0 %v3659
  %3746 = vmatprep.subr.bf16.mxu0 0
  %3747 = vmatpush1.bf16.msra.mxu0 %v3662
  %3748 = vmatprep.subr.bf16.mxu0 0
  %3749 = vmatpush1.bf16.msra.mxu0 %v3665
  %3750 = vmatprep.subr.bf16.mxu0 0
  %3751 = vmatpush1.bf16.msra.mxu0 %v3668
  %3752 = vmatprep.subr.bf16.mxu0 0
  %3753 = vmatpush1.bf16.msra.mxu0 %v3671
  %3754 = vmatprep.subr.bf16.mxu0 0
  %3755 = vmatpush1.bf16.msra.mxu0 %v3674
  %3756 = vmatprep.subr.bf16.mxu0 0
  %3757 = vmatpush1.bf16.msra.mxu0 0
  %3758 = vmatprep.subr.bf16.mxu0 0
  %3759 = vmatpush1.bf16.msra.mxu0 0
  %3760 = vmatprep.subr.bf16.mxu0 0
  %3761 = vmatpush1.bf16.msra.mxu0 0
  %3762 = vmatprep.subr.bf16.mxu0 0
  %3763 = vmatpush1.bf16.msra.mxu0 0
  %3764 = vmatprep.subr.bf16.mxu0 0
  %3765 = vmatpush1.bf16.msra.mxu0 0
  %3766 = vmatprep.subr.bf16.mxu0 0
  %3767 = vmatpush1.bf16.msra.mxu0 0
  %3768 = vmatprep.subr.bf16.mxu0 0
  %3769 = vmatpush1.bf16.msra.mxu0 0
  %3770 = vmatprep.subr.bf16.mxu0 0
  %3771 = vmatpush1.bf16.msra.mxu0 0
  %3772 = vmatprep.mubr.bf16.mxu0 0
  %3773 = vmatmul.mubr.bf16.gmra.mrb[0].mxu0 %v3569
  %v3774 = vpop.f32.mrb[0].mxu0
  %v3775 = vadd.f32 %v3564, %v3774
  %v3776 = vpop.f32.mrb[0].mxu0
  %v3777 = vpop.f32.mrb[0].mxu0
  %v3778 = vpop.f32.mrb[0].mxu0
  %3779 = vdwg.mxu0
  %v3780 = vld [vmem:[#allocation4] sm:$0x30]
  %v3781 = vld [vmem:[#allocation4 + $0x8] sm:$0x30]
  %v3782 = vld [vmem:[#allocation4 + $0x10] sm:$0x30]
  %v3784 = vrot.slane %v3734, 4
  %v3786 = vadd.f32 %v3780, %v3784
  %v3787 = vxor.u32 %v3786, 2147483648
  %v3788 = vmul.f32 %v3787, 1.442695
  %v3789 = vpow.pop %v3788
  %v3790 = vadd.f32 %v3789, 1.0
  %v3791 = vrcp.pop %v3790
  %v3792 = vmul.f32 1.0, %v3791
  %v3794 = vrot.slane %v3736, 4
  %v3796 = vadd.f32 %v3781, %v3794
  %v3797 = vxor.u32 %v3796, 2147483648
  %v3798 = vmul.f32 %v3797, 1.442695
  %v3799 = vpow.pop %v3798
  %v3800 = vadd.f32 %v3799, 1.0
  %v3801 = vrcp.pop %v3800
  %v3802 = vmul.f32 1.0, %v3801
  %v3804 = vrot.slane %v3775, 4
  %v3806 = vmul.f32 %v3792, %v3804
  %v3807 = vadd.f32 %v3782, %v3806
  %v3808 = vtanh.pop %v3807
  %v3809 = vsub.f32 1.0, %v3802
  %v3810 = vmul.f32 %v3809, %v3808
  %v3812 = vrot.slane %v3516, 6
  %v3814 = vmul.f32 %v3802, %v3812
  %v3815 = vadd.f32 %v3810, %v3814
  %3816 = vst [vmem:[#allocation5] sm:$0x30] %v3815
  %v3817 = vld [vmem:[%s2937] sm:$0xff]
  %v3818 = vld [vmem:[%s2937 + $0x8] sm:$0xf]
  %v3819 = vld [vmem:[%s2937 + $0xc] sm:$0xff]
  %v3820 = vld [vmem:[%s2937 + $0x14] sm:$0xf]
  %v3821 = vld [vmem:[%s2937 + $0x18] sm:$0xff]
  %v3822 = vld [vmem:[%s2937 + $0x20] sm:$0xf]
  %v3823 = vld [vmem:[%s2937 + $0x24] sm:$0xff]
  %v3824 = vld [vmem:[%s2937 + $0x2c] sm:$0xf]
  %v3825 = vld [vmem:[%s2937 + $0x30] sm:$0xff]
  %v3826 = vld [vmem:[%s2937 + $0x38] sm:$0xf]
  %v3827 = vld [vmem:[%s2937 + $0x3c] sm:$0xff]
  %v3828 = vld [vmem:[%s2937 + $0x44] sm:$0xf]
  %v3829 = vld [vmem:[%s2937 + $0x48] sm:$0xff]
  %v3830 = vld [vmem:[%s2937 + $0x50] sm:$0xf]
  %v3831 = vld [vmem:[%s2937 + $0x54] sm:$0xff]
  %v3832 = vld [vmem:[%s2937 + $0x5c] sm:$0xf]
  %v3833 = vld [vmem:[%s2937 + $0x60] sm:$0xff]
  %v3834 = vld [vmem:[%s2937 + $0x68] sm:$0xf]
  %v3835 = vld [vmem:[%s2937 + $0x6c] sm:$0xff]
  %v3836 = vld [vmem:[%s2937 + $0x74] sm:$0xf]
  %v3837 = vld [vmem:[%s2937 + $0x78] sm:$0xff]
  %v3838 = vld [vmem:[%s2937 + $0x80] sm:$0xf]
  %v3839 = vld [vmem:[%s2937 + $0x84] sm:$0xff]
  %v3840 = vld [vmem:[%s2937 + $0x8c] sm:$0xf]
  %v3841 = vld [vmem:[%s2937 + $0x90] sm:$0xff]
  %v3842 = vld [vmem:[%s2937 + $0x98] sm:$0xf]
  %v3843 = vld [vmem:[%s2937 + $0x9c] sm:$0xff]
  %v3844 = vld [vmem:[%s2937 + $0xa4] sm:$0xf]
  %v3845 = vld [vmem:[%s2937 + $0xa8] sm:$0xff]
  %v3846 = vld [vmem:[%s2937 + $0xb0] sm:$0xf]
  %v3847 = vld [vmem:[%s2937 + $0xb4] sm:$0xff]
  %v3848 = vld [vmem:[%s2937 + $0xbc] sm:$0xf]
  %v3849 = vpack.c.bf16 %v3815, %v3815
  %v3850 = vld [vmem:[%s2970] sm:$0x7]
  %v3852 = vlaneseq
  %v3853 = vshrl.u32 %v3852, 7
  %v3854 = vsub.s32 0, %v3853
  %v3855 = vrot.slane %v3850, %v3854
  %v3856 = vlaneseq
  %v3857 = vshrl.u32 %v3856, 7
  %v3858 = vsub.s32 1, %v3857
  %v3859 = vrot.slane %v3850, %v3858
  %v3860 = vlaneseq
  %v3861 = vshrl.u32 %v3860, 7
  %v3862 = vsub.s32 2, %v3861
  %v3863 = vrot.slane %v3850, %v3862
  %v3868 = vrot.slane %v3849, 2
  %v3902 = vunpack.c.l.b16 %v3817
  %v3903 = vunpack.c.h.b16 %v3817
  %v3904 = vunpack.c.l.b16 %v3818
  %v3905 = vunpack.c.l.b16 %v3819
  %v3906 = vunpack.c.h.b16 %v3819
  %v3907 = vunpack.c.l.b16 %v3820
  %v3908 = vunpack.c.l.b16 %v3821
  %v3909 = vunpack.c.h.b16 %v3821
  %v3910 = vunpack.c.l.b16 %v3822
  %v3911 = vunpack.c.l.b16 %v3823
  %v3912 = vunpack.c.h.b16 %v3823
  %v3913 = vunpack.c.l.b16 %v3824
  %v3914 = vunpack.c.l.b16 %v3825
  %v3915 = vunpack.c.h.b16 %v3825
  %v3916 = vunpack.c.l.b16 %v3826
  %v3917 = vunpack.c.l.b16 %v3827
  %v3918 = vunpack.c.h.b16 %v3827
  %v3919 = vunpack.c.l.b16 %v3828
  %v3920 = vunpack.c.l.b16 %v3829
  %v3921 = vunpack.c.h.b16 %v3829
  %v3922 = vunpack.c.l.b16 %v3830
  %v3923 = vunpack.c.l.b16 %v3831
  %v3924 = vunpack.c.h.b16 %v3831
  %v3925 = vunpack.c.l.b16 %v3832
  %v3926 = vunpack.c.l.b16 %v3833
  %v3927 = vunpack.c.h.b16 %v3833
  %v3928 = vunpack.c.l.b16 %v3834
  %v3929 = vunpack.c.l.b16 %v3835
  %v3930 = vunpack.c.h.b16 %v3835
  %v3931 = vunpack.c.l.b16 %v3836
  %v3932 = vunpack.c.l.b16 %v3837
  %v3933 = vunpack.c.h.b16 %v3837
  %v3934 = vunpack.c.l.b16 %v3838
  %v3935 = vunpack.c.l.b16 %v3839
  %v3936 = vunpack.c.h.b16 %v3839
  %v3937 = vunpack.c.l.b16 %v3840
  %v3938 = vunpack.c.l.b16 %v3841
  %v3939 = vunpack.c.h.b16 %v3841
  %v3940 = vunpack.c.l.b16 %v3842
  %v3941 = vunpack.c.l.b16 %v3843
  %v3942 = vunpack.c.h.b16 %v3843
  %v3943 = vunpack.c.l.b16 %v3844
  %v3944 = vunpack.c.l.b16 %v3845
  %v3945 = vunpack.c.h.b16 %v3845
  %v3946 = vunpack.c.l.b16 %v3846
  %v3947 = vunpack.c.l.b16 %v3847
  %v3948 = vunpack.c.h.b16 %v3847
  %v3949 = vunpack.c.l.b16 %v3848
  %v3950 = vpack.c.b16 %v3905, %v3902
  %v3951 = vpack.c.b16 %v3906, %v3903
  %v3952 = vpack.c.b16 %v3907, %v3904
  %v3953 = vpack.c.b16 %v3911, %v3908
  %v3954 = vpack.c.b16 %v3912, %v3909
  %v3955 = vpack.c.b16 %v3913, %v3910
  %v3956 = vpack.c.b16 %v3917, %v3914
  %v3957 = vpack.c.b16 %v3918, %v3915
  %v3958 = vpack.c.b16 %v3919, %v3916
  %v3959 = vpack.c.b16 %v3923, %v3920
  %v3960 = vpack.c.b16 %v3924, %v3921
  %v3961 = vpack.c.b16 %v3925, %v3922
  %v3962 = vpack.c.b16 %v3929, %v3926
  %v3963 = vpack.c.b16 %v3930, %v3927
  %v3964 = vpack.c.b16 %v3931, %v3928
  %v3965 = vpack.c.b16 %v3935, %v3932
  %v3966 = vpack.c.b16 %v3936, %v3933
  %v3967 = vpack.c.b16 %v3937, %v3934
  %v3968 = vpack.c.b16 %v3941, %v3938
  %v3969 = vpack.c.b16 %v3942, %v3939
  %v3970 = vpack.c.b16 %v3943, %v3940
  %v3971 = vpack.c.b16 %v3947, %v3944
  %v3972 = vpack.c.b16 %v3948, %v3945
  %v3973 = vpack.c.b16 %v3949, %v3946
  %3998 = vmatprep.subr.bf16.mxu0 %v3951
  %3999 = vmatpush1.bf16.msra.mxu0 %v3950
  %4000 = vmatprep.subr.bf16.mxu0 %v3954
  %4001 = vmatpush1.bf16.msra.mxu0 %v3953
  %4002 = vmatprep.subr.bf16.mxu0 %v3957
  %4003 = vmatpush1.bf16.msra.mxu0 %v3956
  %4004 = vmatprep.subr.bf16.mxu0 %v3960
  %4005 = vmatpush1.bf16.msra.mxu0 %v3959
  %4006 = vmatprep.subr.bf16.mxu0 %v3963
  %4007 = vmatpush1.bf16.msra.mxu0 %v3962
  %4008 = vmatprep.subr.bf16.mxu0 %v3966
  %4009 = vmatpush1.bf16.msra.mxu0 %v3965
  %4010 = vmatprep.subr.bf16.mxu0 %v3969
  %4011 = vmatpush1.bf16.msra.mxu0 %v3968
  %4012 = vmatprep.subr.bf16.mxu0 %v3972
  %4013 = vmatpush1.bf16.msra.mxu0 %v3971
  %4014 = vmatprep.subr.bf16.mxu0 0
  %4015 = vmatpush1.bf16.msra.mxu0 0
  %4016 = vmatprep.subr.bf16.mxu0 0
  %4017 = vmatpush1.bf16.msra.mxu0 0
  %4018 = vmatprep.subr.bf16.mxu0 0
  %4019 = vmatpush1.bf16.msra.mxu0 0
  %4020 = vmatprep.subr.bf16.mxu0 0
  %4021 = vmatpush1.bf16.msra.mxu0 0
  %4022 = vmatprep.subr.bf16.mxu0 0
  %4023 = vmatpush1.bf16.msra.mxu0 0
  %4024 = vmatprep.subr.bf16.mxu0 0
  %4025 = vmatpush1.bf16.msra.mxu0 0
  %4026 = vmatprep.subr.bf16.mxu0 0
  %4027 = vmatpush1.bf16.msra.mxu0 0
  %4028 = vmatprep.subr.bf16.mxu0 0
  %4029 = vmatpush1.bf16.msra.mxu0 0
  %4030 = vmatprep.mubr.bf16.mxu0 0
  %4031 = vmatmul.mubr.bf16.gmra.mrb[0].mxu0 %v3868
  %v4032 = vpop.f32.mrb[0].mxu0
  %v4033 = vadd.f32 %v3855, %v4032
  %v4034 = vpop.f32.mrb[0].mxu0
  %v4035 = vadd.f32 %v3859, %v4034
  %v4036 = vpop.f32.mrb[0].mxu0
  %v4037 = vpop.f32.mrb[0].mxu0
  %4038 = vdwg.mxu0
  %4039 = vmatprep.subr.bf16.mxu0 0
  %4040 = vmatpush1.bf16.msra.mxu0 %v3952
  %4041 = vmatprep.subr.bf16.mxu0 0
  %4042 = vmatpush1.bf16.msra.mxu0 %v3955
  %4043 = vmatprep.subr.bf16.mxu0 0
  %4044 = vmatpush1.bf16.msra.mxu0 %v3958
  %4045 = vmatprep.subr.bf16.mxu0 0
  %4046 = vmatpush1.bf16.msra.mxu0 %v3961
  %4047 = vmatprep.subr.bf16.mxu0 0
  %4048 = vmatpush1.bf16.msra.mxu0 %v3964
  %4049 = vmatprep.subr.bf16.mxu0 0
  %4050 = vmatpush1.bf16.msra.mxu0 %v3967
  %4051 = vmatprep.subr.bf16.mxu0 0
  %4052 = vmatpush1.bf16.msra.mxu0 %v3970
  %4053 = vmatprep.subr.bf16.mxu0 0
  %4054 = vmatpush1.bf16.msra.mxu0 %v3973
  %4055 = vmatprep.subr.bf16.mxu0 0
  %4056 = vmatpush1.bf16.msra.mxu0 0
  %4057 = vmatprep.subr.bf16.mxu0 0
  %4058 = vmatpush1.bf16.msra.mxu0 0
  %4059 = vmatprep.subr.bf16.mxu0 0
  %4060 = vmatpush1.bf16.msra.mxu0 0
  %4061 = vmatprep.subr.bf16.mxu0 0
  %4062 = vmatpush1.bf16.msra.mxu0 0
  %4063 = vmatprep.subr.bf16.mxu0 0
  %4064 = vmatpush1.bf16.msra.mxu0 0
  %4065 = vmatprep.subr.bf16.mxu0 0
  %4066 = vmatpush1.bf16.msra.mxu0 0
  %4067 = vmatprep.subr.bf16.mxu0 0
  %4068 = vmatpush1.bf16.msra.mxu0 0
  %4069 = vmatprep.subr.bf16.mxu0 0
  %4070 = vmatpush1.bf16.msra.mxu0 0
  %4071 = vmatprep.mubr.bf16.mxu0 0
  %4072 = vmatmul.mubr.bf16.gmra.mrb[0].mxu0 %v3868
  %v4073 = vpop.f32.mrb[0].mxu0
  %v4074 = vadd.f32 %v3863, %v4073
  %v4075 = vpop.f32.mrb[0].mxu0
  %v4076 = vpop.f32.mrb[0].mxu0
  %v4077 = vpop.f32.mrb[0].mxu0
  %4078 = vdwg.mxu0
  %v4079 = vld [vmem:[#allocation4] sm:$0xc0]
  %v4080 = vld [vmem:[#allocation4 + $0x8] sm:$0xc0]
  %v4081 = vld [vmem:[#allocation4 + $0x10] sm:$0xc0]
  %v4083 = vrot.slane %v4033, 2
  %v4085 = vadd.f32 %v4079, %v4083
  %v4086 = vxor.u32 %v4085, 2147483648
  %v4087 = vmul.f32 %v4086, 1.442695
  %v4088 = vpow.pop %v4087
  %v4089 = vadd.f32 %v4088, 1.0
  %v4090 = vrcp.pop %v4089
  %v4091 = vmul.f32 1.0, %v4090
  %v4093 = vrot.slane %v4035, 2
  %v4095 = vadd.f32 %v4080, %v4093
  %v4096 = vxor.u32 %v4095, 2147483648
  %v4097 = vmul.f32 %v4096, 1.442695
  %v4098 = vpow.pop %v4097
  %v4099 = vadd.f32 %v4098, 1.0
  %v4100 = vrcp.pop %v4099
  %v4101 = vmul.f32 1.0, %v4100
  %v4103 = vrot.slane %v4074, 2
  %v4105 = vmul.f32 %v4091, %v4103
  %v4106 = vadd.f32 %v4081, %v4105
  %v4107 = vtanh.pop %v4106
  %v4108 = vsub.f32 1.0, %v4101
  %v4109 = vmul.f32 %v4108, %v4107
  %v4111 = vrot.slane %v3815, 6
  %v4113 = vmul.f32 %v4101, %v4111
  %v4114 = vadd.f32 %v4109, %v4113
  %4115 = vst [vmem:[#allocation5] sm:$0xc0] %v4114
  %v4116 = vld [vmem:[%s2937] sm:$0xff]
  %v4117 = vld [vmem:[%s2937 + $0x8] sm:$0xf]
  %v4118 = vld [vmem:[%s2937 + $0xc] sm:$0xff]
  %v4119 = vld [vmem:[%s2937 + $0x14] sm:$0xf]
  %v4120 = vld [vmem:[%s2937 + $0x18] sm:$0xff]
  %v4121 = vld [vmem:[%s2937 + $0x20] sm:$0xf]
  %v4122 = vld [vmem:[%s2937 + $0x24] sm:$0xff]
  %v4123 = vld [vmem:[%s2937 + $0x2c] sm:$0xf]
  %v4124 = vld [vmem:[%s2937 + $0x30] sm:$0xff]
  %v4125 = vld [vmem:[%s2937 + $0x38] sm:$0xf]
  %v4126 = vld [vmem:[%s2937 + $0x3c] sm:$0xff]
  %v4127 = vld [vmem:[%s2937 + $0x44] sm:$0xf]
  %v4128 = vld [vmem:[%s2937 + $0x48] sm:$0xff]
  %v4129 = vld [vmem:[%s2937 + $0x50] sm:$0xf]
  %v4130 = vld [vmem:[%s2937 + $0x54] sm:$0xff]
  %v4131 = vld [vmem:[%s2937 + $0x5c] sm:$0xf]
  %v4132 = vld [vmem:[%s2937 + $0x60] sm:$0xff]
  %v4133 = vld [vmem:[%s2937 + $0x68] sm:$0xf]
  %v4134 = vld [vmem:[%s2937 + $0x6c] sm:$0xff]
  %v4135 = vld [vmem:[%s2937 + $0x74] sm:$0xf]
  %v4136 = vld [vmem:[%s2937 + $0x78] sm:$0xff]
  %v4137 = vld [vmem:[%s2937 + $0x80] sm:$0xf]
  %v4138 = vld [vmem:[%s2937 + $0x84] sm:$0xff]
  %v4139 = vld [vmem:[%s2937 + $0x8c] sm:$0xf]
  %v4140 = vld [vmem:[%s2937 + $0x90] sm:$0xff]
  %v4141 = vld [vmem:[%s2937 + $0x98] sm:$0xf]
  %v4142 = vld [vmem:[%s2937 + $0x9c] sm:$0xff]
  %v4143 = vld [vmem:[%s2937 + $0xa4] sm:$0xf]
  %v4144 = vld [vmem:[%s2937 + $0xa8] sm:$0xff]
  %v4145 = vld [vmem:[%s2937 + $0xb0] sm:$0xf]
  %v4146 = vld [vmem:[%s2937 + $0xb4] sm:$0xff]
  %v4147 = vld [vmem:[%s2937 + $0xbc] sm:$0xf]
  %v4148 = vpack.c.bf16 %v4114, %v4114
  %v4149 = vld [vmem:[%s2970] sm:$0x7]
  %v4151 = vlaneseq
  %v4152 = vshrl.u32 %v4151, 7
  %v4153 = vsub.s32 0, %v4152
  %v4154 = vrot.slane %v4149, %v4153
  %v4155 = vlaneseq
  %v4156 = vshrl.u32 %v4155, 7
  %v4157 = vsub.s32 1, %v4156
  %v4158 = vrot.slane %v4149, %v4157
  %v4159 = vlaneseq
  %v4160 = vshrl.u32 %v4159, 7
  %v4161 = vsub.s32 2, %v4160
  %v4162 = vrot.slane %v4149, %v4161
  %v4167 = vrot.slane %v4148, 3
  %v4201 = vunpack.c.l.b16 %v4116
  %v4202 = vunpack.c.h.b16 %v4116
  %v4203 = vunpack.c.l.b16 %v4117
  %v4204 = vunpack.c.l.b16 %v4118
  %v4205 = vunpack.c.h.b16 %v4118
  %v4206 = vunpack.c.l.b16 %v4119
  %v4207 = vunpack.c.l.b16 %v4120
  %v4208 = vunpack.c.h.b16 %v4120
  %v4209 = vunpack.c.l.b16 %v4121
  %v4210 = vunpack.c.l.b16 %v4122
  %v4211 = vunpack.c.h.b16 %v4122
  %v4212 = vunpack.c.l.b16 %v4123
  %v4213 = vunpack.c.l.b16 %v4124
  %v4214 = vunpack.c.h.b16 %v4124
  %v4215 = vunpack.c.l.b16 %v4125
  %v4216 = vunpack.c.l.b16 %v4126
  %v4217 = vunpack.c.h.b16 %v4126
  %v4218 = vunpack.c.l.b16 %v4127
  %v4219 = vunpack.c.l.b16 %v4128
  %v4220 = vunpack.c.h.b16 %v4128
  %v4221 = vunpack.c.l.b16 %v4129
  %v4222 = vunpack.c.l.b16 %v4130
  %v4223 = vunpack.c.h.b16 %v4130
  %v4224 = vunpack.c.l.b16 %v4131
  %v4225 = vunpack.c.l.b16 %v4132
  %v4226 = vunpack.c.h.b16 %v4132
  %v4227 = vunpack.c.l.b16 %v4133
  %v4228 = vunpack.c.l.b16 %v4134
  %v4229 = vunpack.c.h.b16 %v4134
  %v4230 = vunpack.c.l.b16 %v4135
  %v4231 = vunpack.c.l.b16 %v4136
  %v4232 = vunpack.c.h.b16 %v4136
  %v4233 = vunpack.c.l.b16 %v4137
  %v4234 = vunpack.c.l.b16 %v4138
  %v4235 = vunpack.c.h.b16 %v4138
  %v4236 = vunpack.c.l.b16 %v4139
  %v4237 = vunpack.c.l.b16 %v4140
  %v4238 = vunpack.c.h.b16 %v4140
  %v4239 = vunpack.c.l.b16 %v4141
  %v4240 = vunpack.c.l.b16 %v4142
  %v4241 = vunpack.c.h.b16 %v4142
  %v4242 = vunpack.c.l.b16 %v4143
  %v4243 = vunpack.c.l.b16 %v4144
  %v4244 = vunpack.c.h.b16 %v4144
  %v4245 = vunpack.c.l.b16 %v4145
  %v4246 = vunpack.c.l.b16 %v4146
  %v4247 = vunpack.c.h.b16 %v4146
  %v4248 = vunpack.c.l.b16 %v4147
  %v4249 = vpack.c.b16 %v4204, %v4201
  %v4250 = vpack.c.b16 %v4205, %v4202
  %v4251 = vpack.c.b16 %v4206, %v4203
  %v4252 = vpack.c.b16 %v4210, %v4207
  %v4253 = vpack.c.b16 %v4211, %v4208
  %v4254 = vpack.c.b16 %v4212, %v4209
  %v4255 = vpack.c.b16 %v4216, %v4213
  %v4256 = vpack.c.b16 %v4217, %v4214
  %v4257 = vpack.c.b16 %v4218, %v4215
  %v4258 = vpack.c.b16 %v4222, %v4219
  %v4259 = vpack.c.b16 %v4223, %v4220
  %v4260 = vpack.c.b16 %v4224, %v4221
  %v4261 = vpack.c.b16 %v4228, %v4225
  %v4262 = vpack.c.b16 %v4229, %v4226
  %v4263 = vpack.c.b16 %v4230, %v4227
  %v4264 = vpack.c.b16 %v4234, %v4231
  %v4265 = vpack.c.b16 %v4235, %v4232
  %v4266 = vpack.c.b16 %v4236, %v4233
  %v4267 = vpack.c.b16 %v4240, %v4237
  %v4268 = vpack.c.b16 %v4241, %v4238
  %v4269 = vpack.c.b16 %v4242, %v4239
  %v4270 = vpack.c.b16 %v4246, %v4243
  %v4271 = vpack.c.b16 %v4247, %v4244
  %v4272 = vpack.c.b16 %v4248, %v4245
  %4297 = vmatprep.subr.bf16.mxu0 %v4250
  %4298 = vmatpush1.bf16.msra.mxu0 %v4249
  %4299 = vmatprep.subr.bf16.mxu0 %v4253
  %4300 = vmatpush1.bf16.msra.mxu0 %v4252
  %4301 = vmatprep.subr.bf16.mxu0 %v4256
  %4302 = vmatpush1.bf16.msra.mxu0 %v4255
  %4303 = vmatprep.subr.bf16.mxu0 %v4259
  %4304 = vmatpush1.bf16.msra.mxu0 %v4258
  %4305 = vmatprep.subr.bf16.mxu0 %v4262
  %4306 = vmatpush1.bf16.msra.mxu0 %v4261
  %4307 = vmatprep.subr.bf16.mxu0 %v4265
  %4308 = vmatpush1.bf16.msra.mxu0 %v4264
  %4309 = vmatprep.subr.bf16.mxu0 %v4268
  %4310 = vmatpush1.bf16.msra.mxu0 %v4267
  %4311 = vmatprep.subr.bf16.mxu0 %v4271
  %4312 = vmatpush1.bf16.msra.mxu0 %v4270
  %4313 = vmatprep.subr.bf16.mxu0 0
  %4314 = vmatpush1.bf16.msra.mxu0 0
  %4315 = vmatprep.subr.bf16.mxu0 0
  %4316 = vmatpush1.bf16.msra.mxu0 0
  %4317 = vmatprep.subr.bf16.mxu0 0
  %4318 = vmatpush1.bf16.msra.mxu0 0
  %4319 = vmatprep.subr.bf16.mxu0 0
  %4320 = vmatpush1.bf16.msra.mxu0 0
  %4321 = vmatprep.subr.bf16.mxu0 0
  %4322 = vmatpush1.bf16.msra.mxu0 0
  %4323 = vmatprep.subr.bf16.mxu0 0
  %4324 = vmatpush1.bf16.msra.mxu0 0
  %4325 = vmatprep.subr.bf16.mxu0 0
  %4326 = vmatpush1.bf16.msra.mxu0 0
  %4327 = vmatprep.subr.bf16.mxu0 0
  %4328 = vmatpush1.bf16.msra.mxu0 0
  %4329 = vmatprep.mubr.bf16.mxu0 0
  %4330 = vmatmul.mubr.bf16.gmra.mrb[0].mxu0 %v4167
  %v4331 = vpop.f32.mrb[0].mxu0
  %v4332 = vadd.f32 %v4154, %v4331
  %v4333 = vpop.f32.mrb[0].mxu0
  %v4334 = vadd.f32 %v4158, %v4333
  %v4335 = vpop.f32.mrb[0].mxu0
  %v4336 = vpop.f32.mrb[0].mxu0
  %4337 = vdwg.mxu0
  %4338 = vmatprep.subr.bf16.mxu0 0
  %4339 = vmatpush1.bf16.msra.mxu0 %v4251
  %4340 = vmatprep.subr.bf16.mxu0 0
  %4341 = vmatpush1.bf16.msra.mxu0 %v4254
  %4342 = vmatprep.subr.bf16.mxu0 0
  %4343 = vmatpush1.bf16.msra.mxu0 %v4257
  %4344 = vmatprep.subr.bf16.mxu0 0
  %4345 = vmatpush1.bf16.msra.mxu0 %v4260
  %4346 = vmatprep.subr.bf16.mxu0 0
  %4347 = vmatpush1.bf16.msra.mxu0 %v4263
  %4348 = vmatprep.subr.bf16.mxu0 0
  %4349 = vmatpush1.bf16.msra.mxu0 %v4266
  %4350 = vmatprep.subr.bf16.mxu0 0
  %4351 = vmatpush1.bf16.msra.mxu0 %v4269
  %4352 = vmatprep.subr.bf16.mxu0 0
  %4353 = vmatpush1.bf16.msra.mxu0 %v4272
  %4354 = vmatprep.subr.bf16.mxu0 0
  %4355 = vmatpush1.bf16.msra.mxu0 0
  %4356 = vmatprep.subr.bf16.mxu0 0
  %4357 = vmatpush1.bf16.msra.mxu0 0
  %4358 = vmatprep.subr.bf16.mxu0 0
  %4359 = vmatpush1.bf16.msra.mxu0 0
  %4360 = vmatprep.subr.bf16.mxu0 0
  %4361 = vmatpush1.bf16.msra.mxu0 0
  %4362 = vmatprep.subr.bf16.mxu0 0
  %4363 = vmatpush1.bf16.msra.mxu0 0
  %4364 = vmatprep.subr.bf16.mxu0 0
  %4365 = vmatpush1.bf16.msra.mxu0 0
  %4366 = vmatprep.subr.bf16.mxu0 0
  %4367 = vmatpush1.bf16.msra.mxu0 0
  %4368 = vmatprep.subr.bf16.mxu0 0
  %4369 = vmatpush1.bf16.msra.mxu0 0
  %4370 = vmatprep.mubr.bf16.mxu0 0
  %4371 = vmatmul.mubr.bf16.gmra.mrb[0].mxu0 %v4167
  %v4372 = vpop.f32.mrb[0].mxu0
  %v4373 = vadd.f32 %v4162, %v4372
  %v4374 = vpop.f32.mrb[0].mxu0
  %v4375 = vpop.f32.mrb[0].mxu0
  %v4376 = vpop.f32.mrb[0].mxu0
  %4377 = vdwg.mxu0
  %v4378 = vld [vmem:[#allocation4 + $0x18] sm:$0x3]
  %v4379 = vld [vmem:[#allocation4 + $0x20] sm:$0x3]
  %v4380 = vld [vmem:[#allocation4 + $0x28] sm:$0x3]
  %v4381 = vadd.f32 %v4378, %v4332
  %v4382 = vxor.u32 %v4381, 2147483648
  %v4383 = vmul.f32 %v4382, 1.442695
  %v4384 = vpow.pop %v4383
  %v4385 = vadd.f32 %v4384, 1.0
  %v4386 = vrcp.pop %v4385
  %v4387 = vmul.f32 1.0, %v4386
  %v4388 = vadd.f32 %v4379, %v4334
  %v4389 = vxor.u32 %v4388, 2147483648
  %v4390 = vmul.f32 %v4389, 1.442695
  %v4391 = vpow.pop %v4390
  %v4392 = vadd.f32 %v4391, 1.0
  %v4393 = vrcp.pop %v4392
  %v4394 = vmul.f32 1.0, %v4393
  %v4395 = vmul.f32 %v4387, %v4373
  %v4396 = vadd.f32 %v4380, %v4395
  %v4397 = vtanh.pop %v4396
  %v4398 = vsub.f32 1.0, %v4394
  %v4399 = vmul.f32 %v4398, %v4397
  %v4401 = vrot.slane %v4114, 6
  %v4403 = vmul.f32 %v4394, %v4401
  %v4404 = vadd.f32 %v4399, %v4403
  %4405 = vst [vmem:[#allocation5 + $0x8] sm:$0x3] %v4404
  %v4406 = vld [vmem:[%s2937] sm:$0xff]
  %v4407 = vld [vmem:[%s2937 + $0x8] sm:$0xf]
  %v4408 = vld [vmem:[%s2937 + $0xc] sm:$0xff]
  %v4409 = vld [vmem:[%s2937 + $0x14] sm:$0xf]
  %v4410 = vld [vmem:[%s2937 + $0x18] sm:$0xff]
  %v4411 = vld [vmem:[%s2937 + $0x20] sm:$0xf]
  %v4412 = vld [vmem:[%s2937 + $0x24] sm:$0xff]
  %v4413 = vld [vmem:[%s2937 + $0x2c] sm:$0xf]
  %v4414 = vld [vmem:[%s2937 + $0x30] sm:$0xff]
  %v4415 = vld [vmem:[%s2937 + $0x38] sm:$0xf]
  %v4416 = vld [vmem:[%s2937 + $0x3c] sm:$0xff]
  %v4417 = vld [vmem:[%s2937 + $0x44] sm:$0xf]
  %v4418 = vld [vmem:[%s2937 + $0x48] sm:$0xff]
  %v4419 = vld [vmem:[%s2937 + $0x50] sm:$0xf]
  %v4420 = vld [vmem:[%s2937 + $0x54] sm:$0xff]
  %v4421 = vld [vmem:[%s2937 + $0x5c] sm:$0xf]
  %v4422 = vld [vmem:[%s2937 + $0x60] sm:$0xff]
  %v4423 = vld [vmem:[%s2937 + $0x68] sm:$0xf]
  %v4424 = vld [vmem:[%s2937 + $0x6c] sm:$0xff]
  %v4425 = vld [vmem:[%s2937 + $0x74] sm:$0xf]
  %v4426 = vld [vmem:[%s2937 + $0x78] sm:$0xff]
  %v4427 = vld [vmem:[%s2937 + $0x80] sm:$0xf]
  %v4428 = vld [vmem:[%s2937 + $0x84] sm:$0xff]
  %v4429 = vld [vmem:[%s2937 + $0x8c] sm:$0xf]
  %v4430 = vld [vmem:[%s2937 + $0x90] sm:$0xff]
  %v4431 = vld [vmem:[%s2937 + $0x98] sm:$0xf]
  %v4432 = vld [vmem:[%s2937 + $0x9c] sm:$0xff]
  %v4433 = vld [vmem:[%s2937 + $0xa4] sm:$0xf]
  %v4434 = vld [vmem:[%s2937 + $0xa8] sm:$0xff]
  %v4435 = vld [vmem:[%s2937 + $0xb0] sm:$0xf]
  %v4436 = vld [vmem:[%s2937 + $0xb4] sm:$0xff]
  %v4437 = vld [vmem:[%s2937 + $0xbc] sm:$0xf]
  %v4438 = vpack.c.bf16 %v4404, %v4404
  %v4439 = vld [vmem:[%s2970] sm:$0x7]
  %v4441 = vlaneseq
  %v4442 = vshrl.u32 %v4441, 7
  %v4443 = vsub.s32 0, %v4442
  %v4444 = vrot.slane %v4439, %v4443
  %v4445 = vlaneseq
  %v4446 = vshrl.u32 %v4445, 7
  %v4447 = vsub.s32 1, %v4446
  %v4448 = vrot.slane %v4439, %v4447
  %v4449 = vlaneseq
  %v4450 = vshrl.u32 %v4449, 7
  %v4451 = vsub.s32 2, %v4450
  %v4452 = vrot.slane %v4439, %v4451
  %v4488 = vunpack.c.l.b16 %v4406
  %v4489 = vunpack.c.h.b16 %v4406
  %v4490 = vunpack.c.l.b16 %v4407
  %v4491 = vunpack.c.l.b16 %v4408
  %v4492 = vunpack.c.h.b16 %v4408
  %v4493 = vunpack.c.l.b16 %v4409
  %v4494 = vunpack.c.l.b16 %v4410
  %v4495 = vunpack.c.h.b16 %v4410
  %v4496 = vunpack.c.l.b16 %v4411
  %v4497 = vunpack.c.l.b16 %v4412
  %v4498 = vunpack.c.h.b16 %v4412
  %v4499 = vunpack.c.l.b16 %v4413
  %v4500 = vunpack.c.l.b16 %v4414
  %v4501 = vunpack.c.h.b16 %v4414
  %v4502 = vunpack.c.l.b16 %v4415
  %v4503 = vunpack.c.l.b16 %v4416
  %v4504 = vunpack.c.h.b16 %v4416
  %v4505 = vunpack.c.l.b16 %v4417
  %v4506 = vunpack.c.l.b16 %v4418
  %v4507 = vunpack.c.h.b16 %v4418
  %v4508 = vunpack.c.l.b16 %v4419
  %v4509 = vunpack.c.l.b16 %v4420
  %v4510 = vunpack.c.h.b16 %v4420
  %v4511 = vunpack.c.l.b16 %v4421
  %v4512 = vunpack.c.l.b16 %v4422
  %v4513 = vunpack.c.h.b16 %v4422
  %v4514 = vunpack.c.l.b16 %v4423
  %v4515 = vunpack.c.l.b16 %v4424
  %v4516 = vunpack.c.h.b16 %v4424
  %v4517 = vunpack.c.l.b16 %v4425
  %v4518 = vunpack.c.l.b16 %v4426
  %v4519 = vunpack.c.h.b16 %v4426
  %v4520 = vunpack.c.l.b16 %v4427
  %v4521 = vunpack.c.l.b16 %v4428
  %v4522 = vunpack.c.h.b16 %v4428
  %v4523 = vunpack.c.l.b16 %v4429
  %v4524 = vunpack.c.l.b16 %v4430
  %v4525 = vunpack.c.h.b16 %v4430
  %v4526 = vunpack.c.l.b16 %v4431
  %v4527 = vunpack.c.l.b16 %v4432
  %v4528 = vunpack.c.h.b16 %v4432
  %v4529 = vunpack.c.l.b16 %v4433
  %v4530 = vunpack.c.l.b16 %v4434
  %v4531 = vunpack.c.h.b16 %v4434
  %v4532 = vunpack.c.l.b16 %v4435
  %v4533 = vunpack.c.l.b16 %v4436
  %v4534 = vunpack.c.h.b16 %v4436
  %v4535 = vunpack.c.l.b16 %v4437
  %v4536 = vpack.c.b16 %v4491, %v4488
  %v4537 = vpack.c.b16 %v4492, %v4489
  %v4538 = vpack.c.b16 %v4493, %v4490
  %v4539 = vpack.c.b16 %v4497, %v4494
  %v4540 = vpack.c.b16 %v4498, %v4495
  %v4541 = vpack.c.b16 %v4499, %v4496
  %v4542 = vpack.c.b16 %v4503, %v4500
  %v4543 = vpack.c.b16 %v4504, %v4501
  %v4544 = vpack.c.b16 %v4505, %v4502
  %v4545 = vpack.c.b16 %v4509, %v4506
  %v4546 = vpack.c.b16 %v4510, %v4507
  %v4547 = vpack.c.b16 %v4511, %v4508
  %v4548 = vpack.c.b16 %v4515, %v4512
  %v4549 = vpack.c.b16 %v4516, %v4513
  %v4550 = vpack.c.b16 %v4517, %v4514
  %v4551 = vpack.c.b16 %v4521, %v4518
  %v4552 = vpack.c.b16 %v4522, %v4519
  %v4553 = vpack.c.b16 %v4523, %v4520
  %v4554 = vpack.c.b16 %v4527, %v4524
  %v4555 = vpack.c.b16 %v4528, %v4525
  %v4556 = vpack.c.b16 %v4529, %v4526
  %v4557 = vpack.c.b16 %v4533, %v4530
  %v4558 = vpack.c.b16 %v4534, %v4531
  %v4559 = vpack.c.b16 %v4535, %v4532
  %4584 = vmatprep.subr.bf16.mxu0 %v4537
  %4585 = vmatpush1.bf16.msra.mxu0 %v4536
  %4586 = vmatprep.subr.bf16.mxu0 %v4540
  %4587 = vmatpush1.bf16.msra.mxu0 %v4539
  %4588 = vmatprep.subr.bf16.mxu0 %v4543
  %4589 = vmatpush1.bf16.msra.mxu0 %v4542
  %4590 = vmatprep.subr.bf16.mxu0 %v4546
  %4591 = vmatpush1.bf16.msra.mxu0 %v4545
  %4592 = vmatprep.subr.bf16.mxu0 %v4549
  %4593 = vmatpush1.bf16.msra.mxu0 %v4548
  %4594 = vmatprep.subr.bf16.mxu0 %v4552
  %4595 = vmatpush1.bf16.msra.mxu0 %v4551
  %4596 = vmatprep.subr.bf16.mxu0 %v4555
  %4597 = vmatpush1.bf16.msra.mxu0 %v4554
  %4598 = vmatprep.subr.bf16.mxu0 %v4558
  %4599 = vmatpush1.bf16.msra.mxu0 %v4557
  %4600 = vmatprep.subr.bf16.mxu0 0
  %4601 = vmatpush1.bf16.msra.mxu0 0
  %4602 = vmatprep.subr.bf16.mxu0 0
  %4603 = vmatpush1.bf16.msra.mxu0 0
  %4604 = vmatprep.subr.bf16.mxu0 0
  %4605 = vmatpush1.bf16.msra.mxu0 0
  %4606 = vmatprep.subr.bf16.mxu0 0
  %4607 = vmatpush1.bf16.msra.mxu0 0
  %4608 = vmatprep.subr.bf16.mxu0 0
  %4609 = vmatpush1.bf16.msra.mxu0 0
  %4610 = vmatprep.subr.bf16.mxu0 0
  %4611 = vmatpush1.bf16.msra.mxu0 0
  %4612 = vmatprep.subr.bf16.mxu0 0
  %4613 = vmatpush1.bf16.msra.mxu0 0
  %4614 = vmatprep.subr.bf16.mxu0 0
  %4615 = vmatpush1.bf16.msra.mxu0 0
  %4616 = vmatprep.mubr.bf16.mxu0 0
  %4617 = vmatmul.mubr.bf16.gmra.mrb[0].mxu0 %v4438
  %v4618 = vpop.f32.mrb[0].mxu0
  %v4619 = vadd.f32 %v4444, %v4618
  %v4620 = vpop.f32.mrb[0].mxu0
  %v4621 = vadd.f32 %v4448, %v4620
  %v4622 = vpop.f32.mrb[0].mxu0
  %v4623 = vpop.f32.mrb[0].mxu0
  %4624 = vdwg.mxu0
  %4625 = vmatprep.subr.bf16.mxu0 0
  %4626 = vmatpush1.bf16.msra.mxu0 %v4538
  %4627 = vmatprep.subr.bf16.mxu0 0
  %4628 = vmatpush1.bf16.msra.mxu0 %v4541
  %4629 = vmatprep.subr.bf16.mxu0 0
  %4630 = vmatpush1.bf16.msra.mxu0 %v4544
  %4631 = vmatprep.subr.bf16.mxu0 0
  %4632 = vmatpush1.bf16.msra.mxu0 %v4547
  %4633 = vmatprep.subr.bf16.mxu0 0
  %4634 = vmatpush1.bf16.msra.mxu0 %v4550
  %4635 = vmatprep.subr.bf16.mxu0 0
  %4636 = vmatpush1.bf16.msra.mxu0 %v4553
  %4637 = vmatprep.subr.bf16.mxu0 0
  %4638 = vmatpush1.bf16.msra.mxu0 %v4556
  %4639 = vmatprep.subr.bf16.mxu0 0
  %4640 = vmatpush1.bf16.msra.mxu0 %v4559
  %4641 = vmatprep.subr.bf16.mxu0 0
  %4642 = vmatpush1.bf16.msra.mxu0 0
  %4643 = vmatprep.subr.bf16.mxu0 0
  %4644 = vmatpush1.bf16.msra.mxu0 0
  %4645 = vmatprep.subr.bf16.mxu0 0
  %4646 = vmatpush1.bf16.msra.mxu0 0
  %4647 = vmatprep.subr.bf16.mxu0 0
  %4648 = vmatpush1.bf16.msra.mxu0 0
  %4649 = vmatprep.subr.bf16.mxu0 0
  %4650 = vmatpush1.bf16.msra.mxu0 0
  %4651 = vmatprep.subr.bf16.mxu0 0
  %4652 = vmatpush1.bf16.msra.mxu0 0
  %4653 = vmatprep.subr.bf16.mxu0 0
  %4654 = vmatpush1.bf16.msra.mxu0 0
  %4655 = vmatprep.subr.bf16.mxu0 0
  %4656 = vmatpush1.bf16.msra.mxu0 0
  %4657 = vmatprep.mubr.bf16.mxu0 0
  %4658 = vmatmul.mubr.bf16.gmra.mrb[0].mxu0 %v4438
  %v4659 = vpop.f32.mrb[0].mxu0
  %v4660 = vadd.f32 %v4452, %v4659
  %v4661 = vpop.f32.mrb[0].mxu0
  %v4662 = vpop.f32.mrb[0].mxu0
  %v4663 = vpop.f32.mrb[0].mxu0
  %4664 = vdwg.mxu0
  %v4665 = vld [vmem:[#allocation4 + $0x18] sm:$0xc]
  %v4666 = vld [vmem:[#allocation4 + $0x20] sm:$0xc]
  %v4667 = vld [vmem:[#allocation4 + $0x28] sm:$0xc]
  %v4669 = vrot.slane %v4619, 6
  %v4671 = vadd.f32 %v4665, %v4669
  %v4672 = vxor.u32 %v4671, 2147483648
  %v4673 = vmul.f32 %v4672, 1.442695
  %v4674 = vpow.pop %v4673
  %v4675 = vadd.f32 %v4674, 1.0
  %v4676 = vrcp.pop %v4675
  %v4677 = vmul.f32 1.0, %v4676
  %v4679 = vrot.slane %v4621, 6
  %v4681 = vadd.f32 %v4666, %v4679
  %v4682 = vxor.u32 %v4681, 2147483648
  %v4683 = vmul.f32 %v4682, 1.442695
  %v4684 = vpow.pop %v4683
  %v4685 = vadd.f32 %v4684, 1.0
  %v4686 = vrcp.pop %v4685
  %v4687 = vmul.f32 1.0, %v4686
  %v4689 = vrot.slane %v4660, 6
  %v4691 = vmul.f32 %v4677, %v4689
  %v4692 = vadd.f32 %v4667, %v4691
  %v4693 = vtanh.pop %v4692
  %v4694 = vsub.f32 1.0, %v4687
  %v4695 = vmul.f32 %v4694, %v4693
  %v4697 = vrot.slane %v4404, 6
  %v4699 = vmul.f32 %v4687, %v4697
  %v4700 = vadd.f32 %v4695, %v4699
  %4701 = vst [vmem:[#allocation5 + $0x8] sm:$0xc] %v4700
  %v4702 = vld [vmem:[%s2937] sm:$0xff]
  %v4703 = vld [vmem:[%s2937 + $0x8] sm:$0xf]
  %v4704 = vld [vmem:[%s2937 + $0xc] sm:$0xff]
  %v4705 = vld [vmem:[%s2937 + $0x14] sm:$0xf]
  %v4706 = vld [vmem:[%s2937 + $0x18] sm:$0xff]
  %v4707 = vld [vmem:[%s2937 + $0x20] sm:$0xf]
  %v4708 = vld [vmem:[%s2937 + $0x24] sm:$0xff]
  %v4709 = vld [vmem:[%s2937 + $0x2c] sm:$0xf]
  %v4710 = vld [vmem:[%s2937 + $0x30] sm:$0xff]
  %v4711 = vld [vmem:[%s2937 + $0x38] sm:$0xf]
  %v4712 = vld [vmem:[%s2937 + $0x3c] sm:$0xff]
  %v4713 = vld [vmem:[%s2937 + $0x44] sm:$0xf]
  %v4714 = vld [vmem:[%s2937 + $0x48] sm:$0xff]
  %v4715 = vld [vmem:[%s2937 + $0x50] sm:$0xf]
  %v4716 = vld [vmem:[%s2937 + $0x54] sm:$0xff]
  %v4717 = vld [vmem:[%s2937 + $0x5c] sm:$0xf]
  %v4718 = vld [vmem:[%s2937 + $0x60] sm:$0xff]
  %v4719 = vld [vmem:[%s2937 + $0x68] sm:$0xf]
  %v4720 = vld [vmem:[%s2937 + $0x6c] sm:$0xff]
  %v4721 = vld [vmem:[%s2937 + $0x74] sm:$0xf]
  %v4722 = vld [vmem:[%s2937 + $0x78] sm:$0xff]
  %v4723 = vld [vmem:[%s2937 + $0x80] sm:$0xf]
  %v4724 = vld [vmem:[%s2937 + $0x84] sm:$0xff]
  %v4725 = vld [vmem:[%s2937 + $0x8c] sm:$0xf]
  %v4726 = vld [vmem:[%s2937 + $0x90] sm:$0xff]
  %v4727 = vld [vmem:[%s2937 + $0x98] sm:$0xf]
  %v4728 = vld [vmem:[%s2937 + $0x9c] sm:$0xff]
  %v4729 = vld [vmem:[%s2937 + $0xa4] sm:$0xf]
  %v4730 = vld [vmem:[%s2937 + $0xa8] sm:$0xff]
  %v4731 = vld [vmem:[%s2937 + $0xb0] sm:$0xf]
  %v4732 = vld [vmem:[%s2937 + $0xb4] sm:$0xff]
  %v4733 = vld [vmem:[%s2937 + $0xbc] sm:$0xf]
  %v4734 = vpack.c.bf16 %v4700, %v4700
  %v4735 = vld [vmem:[%s2970] sm:$0x7]
  %v4737 = vlaneseq
  %v4738 = vshrl.u32 %v4737, 7
  %v4739 = vsub.s32 0, %v4738
  %v4740 = vrot.slane %v4735, %v4739
  %v4741 = vlaneseq
  %v4742 = vshrl.u32 %v4741, 7
  %v4743 = vsub.s32 1, %v4742
  %v4744 = vrot.slane %v4735, %v4743
  %v4745 = vlaneseq
  %v4746 = vshrl.u32 %v4745, 7
  %v4747 = vsub.s32 2, %v4746
  %v4748 = vrot.slane %v4735, %v4747
  %v4753 = vrot.slane %v4734, 1
  %v4787 = vunpack.c.l.b16 %v4702
  %v4788 = vunpack.c.h.b16 %v4702
  %v4789 = vunpack.c.l.b16 %v4703
  %v4790 = vunpack.c.l.b16 %v4704
  %v4791 = vunpack.c.h.b16 %v4704
  %v4792 = vunpack.c.l.b16 %v4705
  %v4793 = vunpack.c.l.b16 %v4706
  %v4794 = vunpack.c.h.b16 %v4706
  %v4795 = vunpack.c.l.b16 %v4707
  %v4796 = vunpack.c.l.b16 %v4708
  %v4797 = vunpack.c.h.b16 %v4708
  %v4798 = vunpack.c.l.b16 %v4709
  %v4799 = vunpack.c.l.b16 %v4710
  %v4800 = vunpack.c.h.b16 %v4710
  %v4801 = vunpack.c.l.b16 %v4711
  %v4802 = vunpack.c.l.b16 %v4712
  %v4803 = vunpack.c.h.b16 %v4712
  %v4804 = vunpack.c.l.b16 %v4713
  %v4805 = vunpack.c.l.b16 %v4714
  %v4806 = vunpack.c.h.b16 %v4714
  %v4807 = vunpack.c.l.b16 %v4715
  %v4808 = vunpack.c.l.b16 %v4716
  %v4809 = vunpack.c.h.b16 %v4716
  %v4810 = vunpack.c.l.b16 %v4717
  %v4811 = vunpack.c.l.b16 %v4718
  %v4812 = vunpack.c.h.b16 %v4718
  %v4813 = vunpack.c.l.b16 %v4719
  %v4814 = vunpack.c.l.b16 %v4720
  %v4815 = vunpack.c.h.b16 %v4720
  %v4816 = vunpack.c.l.b16 %v4721
  %v4817 = vunpack.c.l.b16 %v4722
  %v4818 = vunpack.c.h.b16 %v4722
  %v4819 = vunpack.c.l.b16 %v4723
  %v4820 = vunpack.c.l.b16 %v4724
  %v4821 = vunpack.c.h.b16 %v4724
  %v4822 = vunpack.c.l.b16 %v4725
  %v4823 = vunpack.c.l.b16 %v4726
  %v4824 = vunpack.c.h.b16 %v4726
  %v4825 = vunpack.c.l.b16 %v4727
  %v4826 = vunpack.c.l.b16 %v4728
  %v4827 = vunpack.c.h.b16 %v4728
  %v4828 = vunpack.c.l.b16 %v4729
  %v4829 = vunpack.c.l.b16 %v4730
  %v4830 = vunpack.c.h.b16 %v4730
  %v4831 = vunpack.c.l.b16 %v4731
  %v4832 = vunpack.c.l.b16 %v4732
  %v4833 = vunpack.c.h.b16 %v4732
  %v4834 = vunpack.c.l.b16 %v4733
  %v4835 = vpack.c.b16 %v4790, %v4787
  %v4836 = vpack.c.b16 %v4791, %v4788
  %v4837 = vpack.c.b16 %v4792, %v4789
  %v4838 = vpack.c.b16 %v4796, %v4793
  %v4839 = vpack.c.b16 %v4797, %v4794
  %v4840 = vpack.c.b16 %v4798, %v4795
  %v4841 = vpack.c.b16 %v4802, %v4799
  %v4842 = vpack.c.b16 %v4803, %v4800
  %v4843 = vpack.c.b16 %v4804, %v4801
  %v4844 = vpack.c.b16 %v4808, %v4805
  %v4845 = vpack.c.b16 %v4809, %v4806
  %v4846 = vpack.c.b16 %v4810, %v4807
  %v4847 = vpack.c.b16 %v4814, %v4811
  %v4848 = vpack.c.b16 %v4815, %v4812
  %v4849 = vpack.c.b16 %v4816, %v4813
  %v4850 = vpack.c.b16 %v4820, %v4817
  %v4851 = vpack.c.b16 %v4821, %v4818
  %v4852 = vpack.c.b16 %v4822, %v4819
  %v4853 = vpack.c.b16 %v4826, %v4823
  %v4854 = vpack.c.b16 %v4827, %v4824
  %v4855 = vpack.c.b16 %v4828, %v4825
  %v4856 = vpack.c.b16 %v4832, %v4829
  %v4857 = vpack.c.b16 %v4833, %v4830
  %v4858 = vpack.c.b16 %v4834, %v4831
  %4883 = vmatprep.subr.bf16.mxu0 %v4836
  %4884 = vmatpush1.bf16.msra.mxu0 %v4835
  %4885 = vmatprep.subr.bf16.mxu0 %v4839
  %4886 = vmatpush1.bf16.msra.mxu0 %v4838
  %4887 = vmatprep.subr.bf16.mxu0 %v4842
  %4888 = vmatpush1.bf16.msra.mxu0 %v4841
  %4889 = vmatprep.subr.bf16.mxu0 %v4845
  %4890 = vmatpush1.bf16.msra.mxu0 %v4844
  %4891 = vmatprep.subr.bf16.mxu0 %v4848
  %4892 = vmatpush1.bf16.msra.mxu0 %v4847
  %4893 = vmatprep.subr.bf16.mxu0 %v4851
  %4894 = vmatpush1.bf16.msra.mxu0 %v4850
  %4895 = vmatprep.subr.bf16.mxu0 %v4854
  %4896 = vmatpush1.bf16.msra.mxu0 %v4853
  %4897 = vmatprep.subr.bf16.mxu0 %v4857
  %4898 = vmatpush1.bf16.msra.mxu0 %v4856
  %4899 = vmatprep.subr.bf16.mxu0 0
  %4900 = vmatpush1.bf16.msra.mxu0 0
  %4901 = vmatprep.subr.bf16.mxu0 0
  %4902 = vmatpush1.bf16.msra.mxu0 0
  %4903 = vmatprep.subr.bf16.mxu0 0
  %4904 = vmatpush1.bf16.msra.mxu0 0
  %4905 = vmatprep.subr.bf16.mxu0 0
  %4906 = vmatpush1.bf16.msra.mxu0 0
  %4907 = vmatprep.subr.bf16.mxu0 0
  %4908 = vmatpush1.bf16.msra.mxu0 0
  %4909 = vmatprep.subr.bf16.mxu0 0
  %4910 = vmatpush1.bf16.msra.mxu0 0
  %4911 = vmatprep.subr.bf16.mxu0 0
  %4912 = vmatpush1.bf16.msra.mxu0 0
  %4913 = vmatprep.subr.bf16.mxu0 0
  %4914 = vmatpush1.bf16.msra.mxu0 0
  %4915 = vmatprep.mubr.bf16.mxu0 0
  %4916 = vmatmul.mubr.bf16.gmra.mrb[0].mxu0 %v4753
  %v4917 = vpop.f32.mrb[0].mxu0
  %v4918 = vadd.f32 %v4740, %v4917
  %v4919 = vpop.f32.mrb[0].mxu0
  %v4920 = vadd.f32 %v4744, %v4919
  %v4921 = vpop.f32.mrb[0].mxu0
  %v4922 = vpop.f32.mrb[0].mxu0
  %4923 = vdwg.mxu0
  %4924 = vmatprep.subr.bf16.mxu0 0
  %4925 = vmatpush1.bf16.msra.mxu0 %v4837
  %4926 = vmatprep.subr.bf16.mxu0 0
  %4927 = vmatpush1.bf16.msra.mxu0 %v4840
  %4928 = vmatprep.subr.bf16.mxu0 0
  %4929 = vmatpush1.bf16.msra.mxu0 %v4843
  %4930 = vmatprep.subr.bf16.mxu0 0
  %4931 = vmatpush1.bf16.msra.mxu0 %v4846
  %4932 = vmatprep.subr.bf16.mxu0 0
  %4933 = vmatpush1.bf16.msra.mxu0 %v4849
  %4934 = vmatprep.subr.bf16.mxu0 0
  %4935 = vmatpush1.bf16.msra.mxu0 %v4852
  %4936 = vmatprep.subr.bf16.mxu0 0
  %4937 = vmatpush1.bf16.msra.mxu0 %v4855
  %4938 = vmatprep.subr.bf16.mxu0 0
  %4939 = vmatpush1.bf16.msra.mxu0 %v4858
  %4940 = vmatprep.subr.bf16.mxu0 0
  %4941 = vmatpush1.bf16.msra.mxu0 0
  %4942 = vmatprep.subr.bf16.mxu0 0
  %4943 = vmatpush1.bf16.msra.mxu0 0
  %4944 = vmatprep.subr.bf16.mxu0 0
  %4945 = vmatpush1.bf16.msra.mxu0 0
  %4946 = vmatprep.subr.bf16.mxu0 0
  %4947 = vmatpush1.bf16.msra.mxu0 0
  %4948 = vmatprep.subr.bf16.mxu0 0
  %4949 = vmatpush1.bf16.msra.mxu0 0
  %4950 = vmatprep.subr.bf16.mxu0 0
  %4951 = vmatpush1.bf16.msra.mxu0 0
  %4952 = vmatprep.subr.bf16.mxu0 0
  %4953 = vmatpush1.bf16.msra.mxu0 0
  %4954 = vmatprep.subr.bf16.mxu0 0
  %4955 = vmatpush1.bf16.msra.mxu0 0
  %4956 = vmatprep.mubr.bf16.mxu0 0
  %4957 = vmatmul.mubr.bf16.gmra.mrb[0].mxu0 %v4753
  %v4958 = vpop.f32.mrb[0].mxu0
  %v4959 = vadd.f32 %v4748, %v4958
  %v4960 = vpop.f32.mrb[0].mxu0
  %v4961 = vpop.f32.mrb[0].mxu0
  %v4962 = vpop.f32.mrb[0].mxu0
  %4963 = vdwg.mxu0
  %v4964 = vld [vmem:[#allocation4 + $0x18] sm:$0x30]
  %v4965 = vld [vmem:[#allocation4 + $0x20] sm:$0x30]
  %v4966 = vld [vmem:[#allocation4 + $0x28] sm:$0x30]
  %v4968 = vrot.slane %v4918, 4
  %v4970 = vadd.f32 %v4964, %v4968
  %v4971 = vxor.u32 %v4970, 2147483648
  %v4972 = vmul.f32 %v4971, 1.442695
  %v4973 = vpow.pop %v4972
  %v4974 = vadd.f32 %v4973, 1.0
  %v4975 = vrcp.pop %v4974
  %v4976 = vmul.f32 1.0, %v4975
  %v4978 = vrot.slane %v4920, 4
  %v4980 = vadd.f32 %v4965, %v4978
  %v4981 = vxor.u32 %v4980, 2147483648
  %v4982 = vmul.f32 %v4981, 1.442695
  %v4983 = vpow.pop %v4982
  %v4984 = vadd.f32 %v4983, 1.0
  %v4985 = vrcp.pop %v4984
  %v4986 = vmul.f32 1.0, %v4985
  %v4988 = vrot.slane %v4959, 4
  %v4990 = vmul.f32 %v4976, %v4988
  %v4991 = vadd.f32 %v4966, %v4990
  %v4992 = vtanh.pop %v4991
  %v4993 = vsub.f32 1.0, %v4986
  %v4994 = vmul.f32 %v4993, %v4992
  %v4996 = vrot.slane %v4700, 6
  %v4998 = vmul.f32 %v4986, %v4996
  %v4999 = vadd.f32 %v4994, %v4998
  %5000 = vst [vmem:[#allocation5 + $0x8] sm:$0x30] %v4999
  %v5001 = vld [vmem:[%s2937] sm:$0xff]
  %v5002 = vld [vmem:[%s2937 + $0x8] sm:$0xf]
  %v5003 = vld [vmem:[%s2937 + $0xc] sm:$0xff]
  %v5004 = vld [vmem:[%s2937 + $0x14] sm:$0xf]
  %v5005 = vld [vmem:[%s2937 + $0x18] sm:$0xff]
  %v5006 = vld [vmem:[%s2937 + $0x20] sm:$0xf]
  %v5007 = vld [vmem:[%s2937 + $0x24] sm:$0xff]
  %v5008 = vld [vmem:[%s2937 + $0x2c] sm:$0xf]
  %v5009 = vld [vmem:[%s2937 + $0x30] sm:$0xff]
  %v5010 = vld [vmem:[%s2937 + $0x38] sm:$0xf]
  %v5011 = vld [vmem:[%s2937 + $0x3c] sm:$0xff]
  %v5012 = vld [vmem:[%s2937 + $0x44] sm:$0xf]
  %v5013 = vld [vmem:[%s2937 + $0x48] sm:$0xff]
  %v5014 = vld [vmem:[%s2937 + $0x50] sm:$0xf]
  %v5015 = vld [vmem:[%s2937 + $0x54] sm:$0xff]
  %v5016 = vld [vmem:[%s2937 + $0x5c] sm:$0xf]
  %v5017 = vld [vmem:[%s2937 + $0x60] sm:$0xff]
  %v5018 = vld [vmem:[%s2937 + $0x68] sm:$0xf]
  %v5019 = vld [vmem:[%s2937 + $0x6c] sm:$0xff]
  %v5020 = vld [vmem:[%s2937 + $0x74] sm:$0xf]
  %v5021 = vld [vmem:[%s2937 + $0x78] sm:$0xff]
  %v5022 = vld [vmem:[%s2937 + $0x80] sm:$0xf]
  %v5023 = vld [vmem:[%s2937 + $0x84] sm:$0xff]
  %v5024 = vld [vmem:[%s2937 + $0x8c] sm:$0xf]
  %v5025 = vld [vmem:[%s2937 + $0x90] sm:$0xff]
  %v5026 = vld [vmem:[%s2937 + $0x98] sm:$0xf]
  %v5027 = vld [vmem:[%s2937 + $0x9c] sm:$0xff]
  %v5028 = vld [vmem:[%s2937 + $0xa4] sm:$0xf]
  %v5029 = vld [vmem:[%s2937 + $0xa8] sm:$0xff]
  %v5030 = vld [vmem:[%s2937 + $0xb0] sm:$0xf]
  %v5031 = vld [vmem:[%s2937 + $0xb4] sm:$0xff]
  %v5032 = vld [vmem:[%s2937 + $0xbc] sm:$0xf]
  %v5033 = vpack.c.bf16 %v4999, %v4999
  %v5034 = vld [vmem:[%s2970] sm:$0x7]
  %v5036 = vlaneseq
  %v5037 = vshrl.u32 %v5036, 7
  %v5038 = vsub.s32 0, %v5037
  %v5039 = vrot.slane %v5034, %v5038
  %v5040 = vlaneseq
  %v5041 = vshrl.u32 %v5040, 7
  %v5042 = vsub.s32 1, %v5041
  %v5043 = vrot.slane %v5034, %v5042
  %v5044 = vlaneseq
  %v5045 = vshrl.u32 %v5044, 7
  %v5046 = vsub.s32 2, %v5045
  %v5047 = vrot.slane %v5034, %v5046
  %v5052 = vrot.slane %v5033, 2
  %v5086 = vunpack.c.l.b16 %v5001
  %v5087 = vunpack.c.h.b16 %v5001
  %v5088 = vunpack.c.l.b16 %v5002
  %v5089 = vunpack.c.l.b16 %v5003
  %v5090 = vunpack.c.h.b16 %v5003
  %v5091 = vunpack.c.l.b16 %v5004
  %v5092 = vunpack.c.l.b16 %v5005
  %v5093 = vunpack.c.h.b16 %v5005
  %v5094 = vunpack.c.l.b16 %v5006
  %v5095 = vunpack.c.l.b16 %v5007
  %v5096 = vunpack.c.h.b16 %v5007
  %v5097 = vunpack.c.l.b16 %v5008
  %v5098 = vunpack.c.l.b16 %v5009
  %v5099 = vunpack.c.h.b16 %v5009
  %v5100 = vunpack.c.l.b16 %v5010
  %v5101 = vunpack.c.l.b16 %v5011
  %v5102 = vunpack.c.h.b16 %v5011
  %v5103 = vunpack.c.l.b16 %v5012
  %v5104 = vunpack.c.l.b16 %v5013
  %v5105 = vunpack.c.h.b16 %v5013
  %v5106 = vunpack.c.l.b16 %v5014
  %v5107 = vunpack.c.l.b16 %v5015
  %v5108 = vunpack.c.h.b16 %v5015
  %v5109 = vunpack.c.l.b16 %v5016
  %v5110 = vunpack.c.l.b16 %v5017
  %v5111 = vunpack.c.h.b16 %v5017
  %v5112 = vunpack.c.l.b16 %v5018
  %v5113 = vunpack.c.l.b16 %v5019
  %v5114 = vunpack.c.h.b16 %v5019
  %v5115 = vunpack.c.l.b16 %v5020
  %v5116 = vunpack.c.l.b16 %v5021
  %v5117 = vunpack.c.h.b16 %v5021
  %v5118 = vunpack.c.l.b16 %v5022
  %v5119 = vunpack.c.l.b16 %v5023
  %v5120 = vunpack.c.h.b16 %v5023
  %v5121 = vunpack.c.l.b16 %v5024
  %v5122 = vunpack.c.l.b16 %v5025
  %v5123 = vunpack.c.h.b16 %v5025
  %v5124 = vunpack.c.l.b16 %v5026
  %v5125 = vunpack.c.l.b16 %v5027
  %v5126 = vunpack.c.h.b16 %v5027
  %v5127 = vunpack.c.l.b16 %v5028
  %v5128 = vunpack.c.l.b16 %v5029
  %v5129 = vunpack.c.h.b16 %v5029
  %v5130 = vunpack.c.l.b16 %v5030
  %v5131 = vunpack.c.l.b16 %v5031
  %v5132 = vunpack.c.h.b16 %v5031
  %v5133 = vunpack.c.l.b16 %v5032
  %v5134 = vpack.c.b16 %v5089, %v5086
  %v5135 = vpack.c.b16 %v5090, %v5087
  %v5136 = vpack.c.b16 %v5091, %v5088
  %v5137 = vpack.c.b16 %v5095, %v5092
  %v5138 = vpack.c.b16 %v5096, %v5093
  %v5139 = vpack.c.b16 %v5097, %v5094
  %v5140 = vpack.c.b16 %v5101, %v5098
  %v5141 = vpack.c.b16 %v5102, %v5099
  %v5142 = vpack.c.b16 %v5103, %v5100
  %v5143 = vpack.c.b16 %v5107, %v5104
  %v5144 = vpack.c.b16 %v5108, %v5105
  %v5145 = vpack.c.b16 %v5109, %v5106
  %v5146 = vpack.c.b16 %v5113, %v5110
  %v5147 = vpack.c.b16 %v5114, %v5111
  %v5148 = vpack.c.b16 %v5115, %v5112
  %v5149 = vpack.c.b16 %v5119, %v5116
  %v5150 = vpack.c.b16 %v5120, %v5117
  %v5151 = vpack.c.b16 %v5121, %v5118
  %v5152 = vpack.c.b16 %v5125, %v5122
  %v5153 = vpack.c.b16 %v5126, %v5123
  %v5154 = vpack.c.b16 %v5127, %v5124
  %v5155 = vpack.c.b16 %v5131, %v5128
  %v5156 = vpack.c.b16 %v5132, %v5129
  %v5157 = vpack.c.b16 %v5133, %v5130
  %5182 = vmatprep.subr.bf16.mxu0 %v5135
  %5183 = vmatpush1.bf16.msra.mxu0 %v5134
  %5184 = vmatprep.subr.bf16.mxu0 %v5138
  %5185 = vmatpush1.bf16.msra.mxu0 %v5137
  %5186 = vmatprep.subr.bf16.mxu0 %v5141
  %5187 = vmatpush1.bf16.msra.mxu0 %v5140
  %5188 = vmatprep.subr.bf16.mxu0 %v5144
  %5189 = vmatpush1.bf16.msra.mxu0 %v5143
  %5190 = vmatprep.subr.bf16.mxu0 %v5147
  %5191 = vmatpush1.bf16.msra.mxu0 %v5146
  %5192 = vmatprep.subr.bf16.mxu0 %v5150
  %5193 = vmatpush1.bf16.msra.mxu0 %v5149
  %5194 = vmatprep.subr.bf16.mxu0 %v5153
  %5195 = vmatpush1.bf16.msra.mxu0 %v5152
  %5196 = vmatprep.subr.bf16.mxu0 %v5156
  %5197 = vmatpush1.bf16.msra.mxu0 %v5155
  %5198 = vmatprep.subr.bf16.mxu0 0
  %5199 = vmatpush1.bf16.msra.mxu0 0
  %5200 = vmatprep.subr.bf16.mxu0 0
  %5201 = vmatpush1.bf16.msra.mxu0 0
  %5202 = vmatprep.subr.bf16.mxu0 0
  %5203 = vmatpush1.bf16.msra.mxu0 0
  %5204 = vmatprep.subr.bf16.mxu0 0
  %5205 = vmatpush1.bf16.msra.mxu0 0
  %5206 = vmatprep.subr.bf16.mxu0 0
  %5207 = vmatpush1.bf16.msra.mxu0 0
  %5208 = vmatprep.subr.bf16.mxu0 0
  %5209 = vmatpush1.bf16.msra.mxu0 0
  %5210 = vmatprep.subr.bf16.mxu0 0
  %5211 = vmatpush1.bf16.msra.mxu0 0
  %5212 = vmatprep.subr.bf16.mxu0 0
  %5213 = vmatpush1.bf16.msra.mxu0 0
  %5214 = vmatprep.mubr.bf16.mxu0 0
  %5215 = vmatmul.mubr.bf16.gmra.mrb[0].mxu0 %v5052
  %v5216 = vpop.f32.mrb[0].mxu0
  %v5217 = vadd.f32 %v5039, %v5216
  %v5218 = vpop.f32.mrb[0].mxu0
  %v5219 = vadd.f32 %v5043, %v5218
  %v5220 = vpop.f32.mrb[0].mxu0
  %v5221 = vpop.f32.mrb[0].mxu0
  %5222 = vdwg.mxu0
  %5223 = vmatprep.subr.bf16.mxu0 0
  %5224 = vmatpush1.bf16.msra.mxu0 %v5136
  %5225 = vmatprep.subr.bf16.mxu0 0
  %5226 = vmatpush1.bf16.msra.mxu0 %v5139
  %5227 = vmatprep.subr.bf16.mxu0 0
  %5228 = vmatpush1.bf16.msra.mxu0 %v5142
  %5229 = vmatprep.subr.bf16.mxu0 0
  %5230 = vmatpush1.bf16.msra.mxu0 %v5145
  %5231 = vmatprep.subr.bf16.mxu0 0
  %5232 = vmatpush1.bf16.msra.mxu0 %v5148
  %5233 = vmatprep.subr.bf16.mxu0 0
  %5234 = vmatpush1.bf16.msra.mxu0 %v5151
  %5235 = vmatprep.subr.bf16.mxu0 0
  %5236 = vmatpush1.bf16.msra.mxu0 %v5154
  %5237 = vmatprep.subr.bf16.mxu0 0
  %5238 = vmatpush1.bf16.msra.mxu0 %v5157
  %5239 = vmatprep.subr.bf16.mxu0 0
  %5240 = vmatpush1.bf16.msra.mxu0 0
  %5241 = vmatprep.subr.bf16.mxu0 0
  %5242 = vmatpush1.bf16.msra.mxu0 0
  %5243 = vmatprep.subr.bf16.mxu0 0
  %5244 = vmatpush1.bf16.msra.mxu0 0
  %5245 = vmatprep.subr.bf16.mxu0 0
  %5246 = vmatpush1.bf16.msra.mxu0 0
  %5247 = vmatprep.subr.bf16.mxu0 0
  %5248 = vmatpush1.bf16.msra.mxu0 0
  %5249 = vmatprep.subr.bf16.mxu0 0
  %5250 = vmatpush1.bf16.msra.mxu0 0
  %5251 = vmatprep.subr.bf16.mxu0 0
  %5252 = vmatpush1.bf16.msra.mxu0 0
  %5253 = vmatprep.subr.bf16.mxu0 0
  %5254 = vmatpush1.bf16.msra.mxu0 0
  %5255 = vmatprep.mubr.bf16.mxu0 0
  %5256 = vmatmul.mubr.bf16.gmra.mrb[0].mxu0 %v5052
  %v5257 = vpop.f32.mrb[0].mxu0
  %v5258 = vadd.f32 %v5047, %v5257
  %v5259 = vpop.f32.mrb[0].mxu0
  %v5260 = vpop.f32.mrb[0].mxu0
  %v5261 = vpop.f32.mrb[0].mxu0
  %5262 = vdwg.mxu0
  %v5263 = vld [vmem:[#allocation4 + $0x18] sm:$0xc0]
  %v5264 = vld [vmem:[#allocation4 + $0x20] sm:$0xc0]
  %v5265 = vld [vmem:[#allocation4 + $0x28] sm:$0xc0]
  %v5267 = vrot.slane %v5217, 2
  %v5269 = vadd.f32 %v5263, %v5267
  %v5270 = vxor.u32 %v5269, 2147483648
  %v5271 = vmul.f32 %v5270, 1.442695
  %v5272 = vpow.pop %v5271
  %v5273 = vadd.f32 %v5272, 1.0
  %v5274 = vrcp.pop %v5273
  %v5275 = vmul.f32 1.0, %v5274
  %v5277 = vrot.slane %v5219, 2
  %v5279 = vadd.f32 %v5264, %v5277
  %v5280 = vxor.u32 %v5279, 2147483648
  %v5281 = vmul.f32 %v5280, 1.442695
  %v5282 = vpow.pop %v5281
  %v5283 = vadd.f32 %v5282, 1.0
  %v5284 = vrcp.pop %v5283
  %v5285 = vmul.f32 1.0, %v5284
  %v5287 = vrot.slane %v5258, 2
  %v5289 = vmul.f32 %v5275, %v5287
  %v5290 = vadd.f32 %v5265, %v5289
  %v5291 = vtanh.pop %v5290
  %v5292 = vsub.f32 1.0, %v5285
  %v5293 = vmul.f32 %v5292, %v5291
  %v5295 = vrot.slane %v4999, 6
  %v5297 = vmul.f32 %v5285, %v5295
  %v5298 = vadd.f32 %v5293, %v5297
  %5299 = vst [vmem:[#allocation5 + $0x8] sm:$0xc0] %v5298
  %v5300 = vld [vmem:[#allocation5] sm:$0xff]
  %v5301 = vld [vmem:[#allocation5 + $0x8] sm:$0xff]
  %v5302 = vld [vmem:[%s7] sm:$0xf]
  %v5303 = vld [vmem:[%s7 + $0x4] sm:$0xf]
  %v5304 = vld [vmem:[%s7 + $0x8] sm:$0xf]
  %v5305 = vld [vmem:[%s7 + $0xc] sm:$0xf]
  %v5306 = vld [vmem:[%s7 + $0x10] sm:$0xf]
  %v5307 = vld [vmem:[%s7 + $0x14] sm:$0xf]
  %v5308 = vld [vmem:[%s7 + $0x18] sm:$0xf]
  %v5309 = vld [vmem:[%s7 + $0x1c] sm:$0xf]
  %v5310 = vld [vmem:[%s7 + $0x20] sm:$0xf]
  %v5311 = vld [vmem:[%s7 + $0x24] sm:$0xf]
  %v5312 = vld [vmem:[%s7 + $0x28] sm:$0xf]
  %v5313 = vld [vmem:[%s7 + $0x2c] sm:$0xf]
  %v5314 = vld [vmem:[%s7 + $0x30] sm:$0xf]
  %v5315 = vld [vmem:[%s7 + $0x34] sm:$0xf]
  %v5316 = vld [vmem:[%s7 + $0x38] sm:$0xf]
  %v5317 = vld [vmem:[%s7 + $0x3c] sm:$0xf]
  %v5318 = vpack.c.bf16 %v5301, %v5300
  %v5335 = vunpack.c.l.b16 %v5302
  %v5336 = vunpack.c.l.b16 %v5303
  %v5337 = vunpack.c.l.b16 %v5304
  %v5338 = vunpack.c.l.b16 %v5305
  %v5339 = vunpack.c.l.b16 %v5306
  %v5340 = vunpack.c.l.b16 %v5307
  %v5341 = vunpack.c.l.b16 %v5308
  %v5342 = vunpack.c.l.b16 %v5309
  %v5343 = vunpack.c.l.b16 %v5310
  %v5344 = vunpack.c.l.b16 %v5311
  %v5345 = vunpack.c.l.b16 %v5312
  %v5346 = vunpack.c.l.b16 %v5313
  %v5347 = vunpack.c.l.b16 %v5314
  %v5348 = vunpack.c.l.b16 %v5315
  %v5349 = vunpack.c.l.b16 %v5316
  %v5350 = vunpack.c.l.b16 %v5317
  %v5351 = vpack.c.b16 %v5336, %v5335
  %v5352 = vpack.c.b16 %v5338, %v5337
  %v5353 = vpack.c.b16 %v5340, %v5339
  %v5354 = vpack.c.b16 %v5342, %v5341
  %v5355 = vpack.c.b16 %v5344, %v5343
  %v5356 = vpack.c.b16 %v5346, %v5345
  %v5357 = vpack.c.b16 %v5348, %v5347
  %v5358 = vpack.c.b16 %v5350, %v5349
  %5367 = vmatprep.subr.bf16.mxu0 0
  %5368 = vmatpush1.bf16.msra.mxu0 %v5351
  %5369 = vmatprep.subr.bf16.mxu0 0
  %5370 = vmatpush1.bf16.msra.mxu0 %v5352
  %5371 = vmatprep.subr.bf16.mxu0 0
  %5372 = vmatpush1.bf16.msra.mxu0 %v5353
  %5373 = vmatprep.subr.bf16.mxu0 0
  %5374 = vmatpush1.bf16.msra.mxu0 %v5354
  %5375 = vmatprep.subr.bf16.mxu0 0
  %5376 = vmatpush1.bf16.msra.mxu0 %v5355
  %5377 = vmatprep.subr.bf16.mxu0 0
  %5378 = vmatpush1.bf16.msra.mxu0 %v5356
  %5379 = vmatprep.subr.bf16.mxu0 0
  %5380 = vmatpush1.bf16.msra.mxu0 %v5357
  %5381 = vmatprep.subr.bf16.mxu0 0
  %5382 = vmatpush1.bf16.msra.mxu0 %v5358
  %5383 = vmatprep.subr.bf16.mxu0 0
  %5384 = vmatpush1.bf16.msra.mxu0 0
  %5385 = vmatprep.subr.bf16.mxu0 0
  %5386 = vmatpush1.bf16.msra.mxu0 0
  %5387 = vmatprep.subr.bf16.mxu0 0
  %5388 = vmatpush1.bf16.msra.mxu0 0
  %5389 = vmatprep.subr.bf16.mxu0 0
  %5390 = vmatpush1.bf16.msra.mxu0 0
  %5391 = vmatprep.subr.bf16.mxu0 0
  %5392 = vmatpush1.bf16.msra.mxu0 0
  %5393 = vmatprep.subr.bf16.mxu0 0
  %5394 = vmatpush1.bf16.msra.mxu0 0
  %5395 = vmatprep.subr.bf16.mxu0 0
  %5396 = vmatpush1.bf16.msra.mxu0 0
  %5397 = vmatprep.subr.bf16.mxu0 0
  %5398 = vmatpush1.bf16.msra.mxu0 0
  %5399 = vmatprep.mubr.bf16.mxu0 0
  %5400 = vmatmul.mubr.bf16.gmra.mrb[0].mxu0 %v5318
  %v5401 = vpop.f32.mrb[0].mxu0
  %v5402 = vadd.f32 0.0, %v5401
  %v5403 = vpop.f32.mrb[0].mxu0
  %v5404 = vpop.f32.mrb[0].mxu0
  %v5405 = vadd.f32 0.0, %v5404
  %v5406 = vpop.f32.mrb[0].mxu0
  %5407 = vdwg.mxu0
  %v5408 = vsub.f32 %v5300, %v5402
  %v5409 = vsub.f32 %v5301, %v5405
  %v5410 = vmul.f32 %v5408, %v5408
  %v5411 = vmul.f32 %v5409, %v5409
  %v5412 = vpack.c.bf16 %v5411, %v5410
  %5413 = vmatprep.subr.bf16.mxu0 0
  %5414 = vmatpush1.bf16.msra.mxu0 %v5351
  %5415 = vmatprep.subr.bf16.mxu0 0
  %5416 = vmatpush1.bf16.msra.mxu0 %v5352
  %5417 = vmatprep.subr.bf16.mxu0 0
  %5418 = vmatpush1.bf16.msra.mxu0 %v5353
  %5419 = vmatprep.subr.bf16.mxu0 0
  %5420 = vmatpush1.bf16.msra.mxu0 %v5354
  %5421 = vmatprep.subr.bf16.mxu0 0
  %5422 = vmatpush1.bf16.msra.mxu0 %v5355
  %5423 = vmatprep.subr.bf16.mxu0 0
  %5424 = vmatpush1.bf16.msra.mxu0 %v5356
  %5425 = vmatprep.subr.bf16.mxu0 0
  %5426 = vmatpush1.bf16.msra.mxu0 %v5357
  %5427 = vmatprep.subr.bf16.mxu0 0
  %5428 = vmatpush1.bf16.msra.mxu0 %v5358
  %5429 = vmatprep.subr.bf16.mxu0 0
  %5430 = vmatpush1.bf16.msra.mxu0 0
  %5431 = vmatprep.subr.bf16.mxu0 0
  %5432 = vmatpush1.bf16.msra.mxu0 0
  %5433 = vmatprep.subr.bf16.mxu0 0
  %5434 = vmatpush1.bf16.msra.mxu0 0
  %5435 = vmatprep.subr.bf16.mxu0 0
  %5436 = vmatpush1.bf16.msra.mxu0 0
  %5437 = vmatprep.subr.bf16.mxu0 0
  %5438 = vmatpush1.bf16.msra.mxu0 0
  %5439 = vmatprep.subr.bf16.mxu0 0
  %5440 = vmatpush1.bf16.msra.mxu0 0
  %5441 = vmatprep.subr.bf16.mxu0 0
  %5442 = vmatpush1.bf16.msra.mxu0 0
  %5443 = vmatprep.subr.bf16.mxu0 0
  %5444 = vmatpush1.bf16.msra.mxu0 0
  %5445 = vmatprep.mubr.bf16.mxu0 0
  %5446 = vmatmul.mubr.bf16.gmra.mrb[0].mxu0 %v5412
  %v5447 = vpop.f32.mrb[0].mxu0
  %v5448 = vadd.f32 1e-05, %v5447
  %v5449 = vpop.f32.mrb[0].mxu0
  %v5450 = vpop.f32.mrb[0].mxu0
  %v5451 = vadd.f32 1e-05, %v5450
  %v5452 = vpop.f32.mrb[0].mxu0
  %5453 = vdwg.mxu0
  %v5454 = vrsqrt.pop %v5448
  %v5455 = vrsqrt.pop %v5451
  %v5456 = vmul.f32 %v5408, %v5454
  %v5457 = vmul.f32 %v5409, %v5455
  %v5458 = vld [vmem:[%s8] sm:$0xf]
  %v5459 = vld [vmem:[%s8 + $0x4] sm:$0xf]
  %v5460 = vld [vmem:[%s8 + $0x8] sm:$0xf]
  %v5461 = vld [vmem:[%s8 + $0xc] sm:$0xf]
  %v5462 = vld [vmem:[%s8 + $0x10] sm:$0xf]
  %v5463 = vld [vmem:[%s8 + $0x14] sm:$0xf]
  %v5464 = vld [vmem:[%s8 + $0x18] sm:$0xf]
  %v5465 = vld [vmem:[%s8 + $0x1c] sm:$0xf]
  %v5466 = vld [vmem:[%s8 + $0x20] sm:$0xf]
  %v5467 = vld [vmem:[%s8 + $0x24] sm:$0xf]
  %v5468 = vld [vmem:[%s8 + $0x28] sm:$0xf]
  %v5469 = vld [vmem:[%s8 + $0x2c] sm:$0xf]
  %v5470 = vld [vmem:[%s8 + $0x30] sm:$0xf]
  %v5471 = vld [vmem:[%s8 + $0x34] sm:$0xf]
  %v5472 = vld [vmem:[%s8 + $0x38] sm:$0xf]
  %v5473 = vld [vmem:[%s8 + $0x3c] sm:$0xf]
  %v5474 = vpack.c.bf16 %v5457, %v5456
  %v5475 = vld [vmem:[%s9] sm:$0x1]
  %v5477 = vlaneseq
  %v5478 = vshrl.u32 %v5477, 7
  %v5479 = vsub.s32 0, %v5478
  %v5480 = vrot.slane %v5475, %v5479
  %v5498 = vunpack.c.l.b16 %v5458
  %v5499 = vunpack.c.l.b16 %v5459
  %v5500 = vunpack.c.l.b16 %v5460
  %v5501 = vunpack.c.l.b16 %v5461
  %v5502 = vunpack.c.l.b16 %v5462
  %v5503 = vunpack.c.l.b16 %v5463
  %v5504 = vunpack.c.l.b16 %v5464
  %v5505 = vunpack.c.l.b16 %v5465
  %v5506 = vunpack.c.l.b16 %v5466
  %v5507 = vunpack.c.l.b16 %v5467
  %v5508 = vunpack.c.l.b16 %v5468
  %v5509 = vunpack.c.l.b16 %v5469
  %v5510 = vunpack.c.l.b16 %v5470
  %v5511 = vunpack.c.l.b16 %v5471
  %v5512 = vunpack.c.l.b16 %v5472
  %v5513 = vunpack.c.l.b16 %v5473
  %v5514 = vpack.c.b16 %v5499, %v5498
  %v5515 = vpack.c.b16 %v5501, %v5500
  %v5516 = vpack.c.b16 %v5503, %v5502
  %v5517 = vpack.c.b16 %v5505, %v5504
  %v5518 = vpack.c.b16 %v5507, %v5506
  %v5519 = vpack.c.b16 %v5509, %v5508
  %v5520 = vpack.c.b16 %v5511, %v5510
  %v5521 = vpack.c.b16 %v5513, %v5512
  %5530 = vmatprep.subr.bf16.mxu0 0
  %5531 = vmatpush1.bf16.msra.mxu0 %v5514
  %5532 = vmatprep.subr.bf16.mxu0 0
  %5533 = vmatpush1.bf16.msra.mxu0 %v5515
  %5534 = vmatprep.subr.bf16.mxu0 0
  %5535 = vmatpush1.bf16.msra.mxu0 %v5516
  %5536 = vmatprep.subr.bf16.mxu0 0
  %5537 = vmatpush1.bf16.msra.mxu0 %v5517
  %5538 = vmatprep.subr.bf16.mxu0 0
  %5539 = vmatpush1.bf16.msra.mxu0 %v5518
  %5540 = vmatprep.subr.bf16.mxu0 0
  %5541 = vmatpush1.bf16.msra.mxu0 %v5519
  %5542 = vmatprep.subr.bf16.mxu0 0
  %5543 = vmatpush1.bf16.msra.mxu0 %v5520
  %5544 = vmatprep.subr.bf16.mxu0 0
  %5545 = vmatpush1.bf16.msra.mxu0 %v5521
  %5546 = vmatprep.subr.bf16.mxu0 0
  %5547 = vmatpush1.bf16.msra.mxu0 0
  %5548 = vmatprep.subr.bf16.mxu0 0
  %5549 = vmatpush1.bf16.msra.mxu0 0
  %5550 = vmatprep.subr.bf16.mxu0 0
  %5551 = vmatpush1.bf16.msra.mxu0 0
  %5552 = vmatprep.subr.bf16.mxu0 0
  %5553 = vmatpush1.bf16.msra.mxu0 0
  %5554 = vmatprep.subr.bf16.mxu0 0
  %5555 = vmatpush1.bf16.msra.mxu0 0
  %5556 = vmatprep.subr.bf16.mxu0 0
  %5557 = vmatpush1.bf16.msra.mxu0 0
  %5558 = vmatprep.subr.bf16.mxu0 0
  %5559 = vmatpush1.bf16.msra.mxu0 0
  %5560 = vmatprep.subr.bf16.mxu0 0
  %5561 = vmatpush1.bf16.msra.mxu0 0
  %5562 = vmatprep.mubr.bf16.mxu0 0
  %5563 = vmatmul.mubr.bf16.gmra.mrb[0].mxu0 %v5474
  %v5564 = vpop.f32.mrb[0].mxu0
  %v5565 = vadd.f32 %v5480, %v5564
  %v5566 = vpop.f32.mrb[0].mxu0
  %v5567 = vpop.f32.mrb[0].mxu0
  %v5568 = vadd.f32 %v5480, %v5567
  %v5569 = vpop.f32.mrb[0].mxu0
  %5570 = vdwg.mxu0
  %s5571 = scalar_lea.vmem %s8, 64
  %v5572 = vld [vmem:[%s5571] sm:$0xf]
  %v5573 = vld [vmem:[%s5571 + $0x4] sm:$0xf]
  %v5574 = vld [vmem:[%s5571 + $0x8] sm:$0xf]
  %v5575 = vld [vmem:[%s5571 + $0xc] sm:$0xf]
  %v5576 = vld [vmem:[%s5571 + $0x10] sm:$0xf]
  %v5577 = vld [vmem:[%s5571 + $0x14] sm:$0xf]
  %v5578 = vld [vmem:[%s5571 + $0x18] sm:$0xf]
  %v5579 = vld [vmem:[%s5571 + $0x1c] sm:$0xf]
  %v5580 = vld [vmem:[%s5571 + $0x20] sm:$0xf]
  %v5581 = vld [vmem:[%s5571 + $0x24] sm:$0xf]
  %v5582 = vld [vmem:[%s5571 + $0x28] sm:$0xf]
  %v5583 = vld [vmem:[%s5571 + $0x2c] sm:$0xf]
  %v5584 = vld [vmem:[%s5571 + $0x30] sm:$0xf]
  %v5585 = vld [vmem:[%s5571 + $0x34] sm:$0xf]
  %v5586 = vld [vmem:[%s5571 + $0x38] sm:$0xf]
  %v5587 = vld [vmem:[%s5571 + $0x3c] sm:$0xf]
  %s5588 = scalar_lea.vmem %s9, 1
  %v5589 = vld [vmem:[%s5588] sm:$0x1]
  %v5591 = vlaneseq
  %v5592 = vshrl.u32 %v5591, 7
  %v5593 = vsub.s32 0, %v5592
  %v5594 = vrot.slane %v5589, %v5593
  %v5612 = vunpack.c.l.b16 %v5572
  %v5613 = vunpack.c.l.b16 %v5573
  %v5614 = vunpack.c.l.b16 %v5574
  %v5615 = vunpack.c.l.b16 %v5575
  %v5616 = vunpack.c.l.b16 %v5576
  %v5617 = vunpack.c.l.b16 %v5577
  %v5618 = vunpack.c.l.b16 %v5578
  %v5619 = vunpack.c.l.b16 %v5579
  %v5620 = vunpack.c.l.b16 %v5580
  %v5621 = vunpack.c.l.b16 %v5581
  %v5622 = vunpack.c.l.b16 %v5582
  %v5623 = vunpack.c.l.b16 %v5583
  %v5624 = vunpack.c.l.b16 %v5584
  %v5625 = vunpack.c.l.b16 %v5585
  %v5626 = vunpack.c.l.b16 %v5586
  %v5627 = vunpack.c.l.b16 %v5587
  %v5628 = vpack.c.b16 %v5613, %v5612
  %v5629 = vpack.c.b16 %v5615, %v5614
  %v5630 = vpack.c.b16 %v5617, %v5616
  %v5631 = vpack.c.b16 %v5619, %v5618
  %v5632 = vpack.c.b16 %v5621, %v5620
  %v5633 = vpack.c.b16 %v5623, %v5622
  %v5634 = vpack.c.b16 %v5625, %v5624
  %v5635 = vpack.c.b16 %v5627, %v5626
  %5644 = vmatprep.subr.bf16.mxu0 0
  %5645 = vmatpush1.bf16.msra.mxu0 %v5628
  %5646 = vmatprep.subr.bf16.mxu0 0
  %5647 = vmatpush1.bf16.msra.mxu0 %v5629
  %5648 = vmatprep.subr.bf16.mxu0 0
  %5649 = vmatpush1.bf16.msra.mxu0 %v5630
  %5650 = vmatprep.subr.bf16.mxu0 0
  %5651 = vmatpush1.bf16.msra.mxu0 %v5631
  %5652 = vmatprep.subr.bf16.mxu0 0
  %5653 = vmatpush1.bf16.msra.mxu0 %v5632
  %5654 = vmatprep.subr.bf16.mxu0 0
  %5655 = vmatpush1.bf16.msra.mxu0 %v5633
  %5656 = vmatprep.subr.bf16.mxu0 0
  %5657 = vmatpush1.bf16.msra.mxu0 %v5634
  %5658 = vmatprep.subr.bf16.mxu0 0
  %5659 = vmatpush1.bf16.msra.mxu0 %v5635
  %5660 = vmatprep.subr.bf16.mxu0 0
  %5661 = vmatpush1.bf16.msra.mxu0 0
  %5662 = vmatprep.subr.bf16.mxu0 0
  %5663 = vmatpush1.bf16.msra.mxu0 0
  %5664 = vmatprep.subr.bf16.mxu0 0
  %5665 = vmatpush1.bf16.msra.mxu0 0
  %5666 = vmatprep.subr.bf16.mxu0 0
  %5667 = vmatpush1.bf16.msra.mxu0 0
  %5668 = vmatprep.subr.bf16.mxu0 0
  %5669 = vmatpush1.bf16.msra.mxu0 0
  %5670 = vmatprep.subr.bf16.mxu0 0
  %5671 = vmatpush1.bf16.msra.mxu0 0
  %5672 = vmatprep.subr.bf16.mxu0 0
  %5673 = vmatpush1.bf16.msra.mxu0 0
  %5674 = vmatprep.subr.bf16.mxu0 0
  %5675 = vmatpush1.bf16.msra.mxu0 0
  %5676 = vmatprep.mubr.bf16.mxu0 0
  %5677 = vmatmul.mubr.bf16.gmra.mrb[0].mxu0 %v5474
  %v5678 = vpop.f32.mrb[0].mxu0
  %v5679 = vadd.f32 %v5594, %v5678
  %v5680 = vpop.f32.mrb[0].mxu0
  %v5681 = vpop.f32.mrb[0].mxu0
  %v5682 = vadd.f32 %v5594, %v5681
  %v5683 = vpop.f32.mrb[0].mxu0
  %5684 = vdwg.mxu0
  %v5685 = vmul.f32 %v5679, 0.5
  %v5686 = vmul.f32 %v5682, 0.5
  %v5687 = vmul.f32 %v5685, 1.442695
  %v5688 = vpow.pop %v5687
  %v5689 = vmul.f32 %v5686, 1.442695
  %v5690 = vpow.pop %v5689
  %v5691 = vld [vmem:[%s10] sm:$0xff]
  %v5692 = vld [vmem:[%s10 + $0x8] sm:$0xff]
  %v5693 = vmul.f32 %v5688, %v5691
  %v5694 = vmul.f32 %v5690, %v5692
  %v5695 = vadd.f32 %v5565, %v5693
  %v5696 = vadd.f32 %v5568, %v5694
  %5699 = vrot.lane.b32.xlu0 %v5565, 64
  %v5700 = vpop.permute.xlu0 %5699
  %5701 = vrot.lane.b32.xlu0 %v5568, 64
  %v5702 = vpop.permute.xlu0 %5701
  %v5705 = vsel %vm210, %v5695, %v5700
  %v5706 = vsel %vm210, %v5696, %v5702
  %v5707 = vsel %vm210, %v5679, 0.0
  %v5708 = vsel %vm210, %v5682, 0.0
  %5709 = vst [vmem:[%s11] sm:$0xff] %v5705
  %5710 = vst [vmem:[%s11 + $0x8] sm:$0xff] %v5707
  %5711 = vst [vmem:[%s11 + $0x10] sm:$0xff] %v5706
  %5712 = vst [vmem:[%s11 + $0x18] sm:$0xff] %v5708
  // Predicated region
  $region46: #{encoder_forward.1} parent=0 // pred_check
    _
  $region47: #{encoder_forward.1} parent=0 // pred_check_branch
    %5714 = sbr.rel (0) target = $region49
  $region48: #{encoder_forward.1} parent=0 // pred_region
    _
  $region49: #{encoder_forward.1} parent=0 // pred_fallthru
    _
  // Predicated region
  $region50: #{encoder_forward.1} parent=0 // pred_check
    _
  $region51: #{encoder_forward.1} parent=0 // pred_check_branch
    %5716 = sbr.rel (0) target = $region53
  $region52: #{encoder_forward.1} parent=0 // pred_region
    _
  $region53: #{encoder_forward.1} parent=0 // pred_fallthru
    _

</llo_original>
